<compile_context>
chip_gen: v7x
topology: tpu7x:2x2x1
jax: 0.10.0
libtpu: 0.0.40
codegen_flags: <defaults>
</compile_context>

<pallas_src>
import jax
import jax.numpy as jnp
import numpy as np
from jax.experimental import pallas as pl
from jax.experimental.pallas import tpu as pltpu

# Whole-array-in-VMEM block spec (no grid -> full blocks, explicit placement).
_VMEM = pl.BlockSpec(memory_space=pltpu.MemorySpace.VMEM)


# ----------------------------------------------------------------------------
# Pallas kernel A/B: lane-dense conv matmul with fused bias + ReLU.
#   W: (OC, K) bf16,  cols: (K, M) bf16,  bias: (OC, 1) f32 -> (OC, M) bf16
# ----------------------------------------------------------------------------
def _conv_mm_kernel(w_ref, c_ref, b_ref, o_ref):
    acc = jnp.dot(w_ref[...], c_ref[...], preferred_element_type=jnp.float32)
    o_ref[...] = jnp.maximum(acc + b_ref[...], 0.0).astype(o_ref.dtype)


def conv_matmul_bias_relu(w2d, cols, bias_col):
    """(OC, K) x (K, M) + bias + ReLU -> (OC, M) bf16.  Single block, no grid."""
    OC = w2d.shape[0]
    M = cols.shape[1]
    return pl.pallas_call(
        _conv_mm_kernel,
        out_shape=jax.ShapeDtypeStruct((OC, M), jnp.bfloat16),
        in_specs=[_VMEM, _VMEM, _VMEM],
        out_specs=_VMEM,
    )(w2d, cols, bias_col)


# ----------------------------------------------------------------------------
# Pallas kernel C: fused conv3 + conv4 + flatten + fc1 + fc2 + fc3 + LogSoftmax.
# Activation layout is (spatial*batch, channel); conv4 taps and the flatten are
# constant selection matmuls (exact gathers through the MXU), so no in-kernel
# reshapes are needed.  All weights/activations are VMEM-resident (< 1 MB).
# ----------------------------------------------------------------------------
def _tail_kernel(c3_ref, w3_ref, b3_ref, p4_ref, w4_ref, b4_ref,
                 r1_ref, w1_ref, b1_ref, w2_ref, b2_ref, w3f_ref, b3f_ref,
                 o_ref):
    # conv3 + ReLU: (B*8*8, 800) @ (800, 32) -> z3 (B*64, 32), rows = (b,oh,ow)
    z3 = jnp.dot(c3_ref[...], w3_ref[...], preferred_element_type=jnp.float32)
    z3 = jnp.maximum(z3 + b3_ref[...], 0.0).astype(jnp.bfloat16)

    # conv4 (5x5, stride 2) + ReLU as 25 gather-then-matmul taps.
    n_taps, m4, _ = p4_ref.shape
    oc4 = w4_ref.shape[2]
    acc4 = jnp.zeros((m4, oc4), jnp.float32)
    for kk in range(n_taps):
        tap = jnp.dot(p4_ref[kk], z3, preferred_element_type=jnp.float32)  # (m4, 32)
        acc4 = acc4 + jnp.dot(tap.astype(jnp.bfloat16), w4_ref[kk],
                              preferred_element_type=jnp.float32)          # (m4, 64)
    y4 = jnp.maximum(acc4 + b4_ref[...], 0.0).astype(jnp.bfloat16)          # (m4, 64)

    # flatten + fc1 + ReLU: fc1 weight is pre-split per spatial position, so
    # the torch `out.view(B, -1)` relayout is folded into the weights.
    n_pos, bsz, _ = r1_ref.shape
    h_dim = w1_ref.shape[2]
    acc1 = jnp.zeros((bsz, h_dim), jnp.float32)
    for s in range(n_pos):
        rows = jnp.dot(r1_ref[s], y4, preferred_element_type=jnp.float32)  # (B, 64)
        acc1 = acc1 + jnp.dot(rows.astype(jnp.bfloat16), w1_ref[s],
                              preferred_element_type=jnp.float32)          # (B, 200)
    h = jnp.maximum(acc1 + b1_ref[...], 0.0).astype(jnp.bfloat16)

    # fc2 + ReLU
    h = jnp.dot(h, w2_ref[...], preferred_element_type=jnp.float32) + b2_ref[...]
    h = jnp.maximum(h, 0.0).astype(jnp.bfloat16)

    # fc3 + LogSoftmax (lane-axis reduction)
    z = jnp.dot(h, w3f_ref[...], preferred_element_type=jnp.float32) + b3f_ref[...]
    z = z - jnp.max(z, axis=-1, keepdims=True)
    o_ref[...] = (z - jnp.log(jnp.sum(jnp.exp(z), axis=-1, keepdims=True))
                  ).astype(o_ref.dtype)


def tail_fused(cols3t, q):
    B = q["r1"].shape[1]
    n_classes = q["w3fct"].shape[1]
    return pl.pallas_call(
        _tail_kernel,
        out_shape=jax.ShapeDtypeStruct((B, n_classes), jnp.float32),
        in_specs=[_VMEM] * 13,
        out_specs=_VMEM,
    )(cols3t, q["w3t"], q["b3"], q["p4"], q["w4t"], q["b4"],
      q["r1"], q["w1t"], q["b1"], q["w2t"], q["b2"], q["w3fct"], q["b3fc"])


# ----------------------------------------------------------------------------
# Plain-JAX glue: im2col in (C, B, H, W) layout and 2x2 max-pool.
# ----------------------------------------------------------------------------
def im2col_cbhw(x, kh, kw):
    """x: (C,B,H,W) -> (C*KH*KW, B*OH*OW) bf16; rows (c,kh,kw), cols (b,oh,ow)."""
    C, B, H, W = x.shape
    oh, ow = H - kh + 1, W - kw + 1
    x = x.astype(jnp.bfloat16)
    taps = [x[:, :, i:i + oh, j:j + ow] for i in range(kh) for j in range(kw)]
    p = jnp.stack(taps, axis=1)                       # (C, KK, B, OH, OW)
    return p.reshape(C * kh * kw, B * oh * ow), oh, ow


def im2col_t_cbhw(x, kh, kw):
    """Transposed im2col: (B*OH*OW, C*KH*KW); rows (b,oh,ow), cols (c,kh,kw)."""
    C, B, H, W = x.shape
    oh, ow = H - kh + 1, W - kw + 1
    x = x.astype(jnp.bfloat16)
    taps = [x[:, :, i:i + oh, j:j + ow] for i in range(kh) for j in range(kw)]
    p = jnp.stack(taps, axis=1)                       # (C, KK, B, OH, OW)
    return jnp.transpose(p, (2, 3, 4, 0, 1)).reshape(B * oh * ow, C * kh * kw)


def maxpool2x2_cbhw(x):
    """MaxPool2d(kernel=(2,2), stride=2), floor mode, on (C, B, H, W)."""
    C, B, H, W = x.shape
    H2, W2 = H // 2, W // 2
    x = x[:, :, :H2 * 2, :W2 * 2].reshape(C, B, H2, 2, W2, 2)
    return x.max(axis=(3, 5))


# ----------------------------------------------------------------------------
# Pack-time constants: conv4 / flatten selection matrices and weight reshapes.
# Done ONCE on the host so the jitted forward sees ready-to-use operands.
# ----------------------------------------------------------------------------
def _conv4_selection(B, s3, s4, k=5, stride=2):
    """(K*K, B*s4*s4, B*s3*s3) 0/1: tap (kh,kw) gathers conv3-output rows."""
    P = np.zeros((k * k, B * s4 * s4, B * s3 * s3), np.float32)
    for kh in range(k):
        for kw in range(k):
            kk = kh * k + kw
            for b in range(B):
                for oh in range(s4):
                    for ow in range(s4):
                        m = (b * s4 + oh) * s4 + ow
                        j = (b * s3 + stride * oh + kh) * s3 + (stride * ow + kw)
                        P[kk, m, j] = 1.0
    return P


def _flatten_selection(B, s4):
    """(s4*s4, B, B*s4*s4) 0/1: picks batch rows of a given spatial position."""
    n = s4 * s4
    R = np.zeros((n, B, B * n), np.float32)
    for s in range(n):
        for b in range(B):
            R[s, b, b * n + s] = 1.0
    return R


def pack_params(p, B, s3, s4):
    """Host-side, one-time rearrangement of params into kernel-ready operands."""
    bf16, f32 = jnp.bfloat16, jnp.float32
    col = lambda b: jnp.asarray(b, f32).reshape(-1, 1)
    row = lambda b: jnp.asarray(b, f32).reshape(1, -1)

    oc4, ic4, k4, _ = p["c4w"].shape
    n_pos = s4 * s4
    # conv4 weight per tap, transposed: (25, IC, OC)
    w4t = jnp.transpose(p["c4w"].reshape(oc4, ic4, k4 * k4), (2, 1, 0)).astype(bf16)
    # fc1 weight split per spatial position (folds the torch flatten order
    # f = oc*n_pos + s into the weights): (n_pos, OC4, 200)
    w1t = jnp.stack([p["f1w"][:, s::n_pos].T for s in range(n_pos)], 0).astype(bf16)

    return {
        "c1w2d": p["c1w"].reshape(p["c1w"].shape[0], -1).astype(bf16), "c1b": col(p["c1b"]),
        "c2w2d": p["c2w"].reshape(p["c2w"].shape[0], -1).astype(bf16), "c2b": col(p["c2b"]),
        "w3t": p["c3w"].reshape(p["c3w"].shape[0], -1).T.astype(bf16), "b3": row(p["c3b"]),
        "p4": jnp.asarray(_conv4_selection(B, s3, s4), bf16),
        "w4t": w4t, "b4": row(p["c4b"]),
        "r1": jnp.asarray(_flatten_selection(B, s4), bf16),
        "w1t": w1t, "b1": row(p["f1b"]),
        "w2t": p["f2w"].T.astype(bf16), "b2": row(p["f2b"]),
        "w3fct": p["f3w"].T.astype(bf16), "b3fc": row(p["f3b"]),
    }


# ----------------------------------------------------------------------------
# LeNet forward: conv1 -> pool -> conv2 -> pool -> [conv3+conv4+FC] fused.
# ----------------------------------------------------------------------------
@jax.jit
def lenet_forward(img, q):
    B = img.shape[0]
    x = jnp.transpose(img, (1, 0, 2, 3))                    # NCHW -> (C,B,H,W)

    cols1, oh, ow = im2col_cbhw(x, 7, 7)                    # Conv2d(1,16,7) + ReLU
    y1 = conv_matmul_bias_relu(q["c1w2d"], cols1, q["c1b"])
    x = maxpool2x2_cbhw(y1.reshape(16, B, oh, ow))          # MaxPool2d(2,2)

    cols2, oh, ow = im2col_cbhw(x, 5, 5)                    # Conv2d(16,32,5) + ReLU
    y2 = conv_matmul_bias_relu(q["c2w2d"], cols2, q["c2b"])
    x = maxpool2x2_cbhw(y2.reshape(32, B, oh, ow))          # MaxPool2d(2,2)

    cols3t = im2col_t_cbhw(x, 5, 5)                         # (B*8*8, 32*25)
    # conv3 + conv4 + flatten + fc1 + fc2 + fc3 + LogSoftmax, single kernel.
    return tail_fused(cols3t, q)


# ----------------------------------------------------------------------------
# Deterministic parameter init (synthetic, not a checkpoint).
# ----------------------------------------------------------------------------
def init_params(key, n_classes, flat_features):
    ks = jax.random.split(key, 14)

    def conv_w(k, oc, ic, kh, kw):
        return jax.random.normal(k, (oc, ic, kh, kw), jnp.float32) / np.sqrt(ic * kh * kw)

    def lin_w(k, out_f, in_f):
        return jax.random.normal(k, (out_f, in_f), jnp.float32) / np.sqrt(in_f)

    def bias(k, n):
        return 0.01 * jax.random.normal(k, (n,), jnp.float32)

    return {
        "c1w": conv_w(ks[0], 16, 1, 7, 7),   "c1b": bias(ks[1], 16),
        "c2w": conv_w(ks[2], 32, 16, 5, 5),  "c2b": bias(ks[3], 32),
        "c3w": conv_w(ks[4], 32, 32, 5, 5),  "c3b": bias(ks[5], 32),
        "c4w": conv_w(ks[6], 64, 32, 5, 5),  "c4b": bias(ks[7], 64),
        "f1w": lin_w(ks[8], 200, flat_features), "f1b": bias(ks[9], 200),
        "f2w": lin_w(ks[10], 200, 200),          "f2b": bias(ks[11], 200),
        "f3w": lin_w(ks[12], n_classes, 200),    "f3b": bias(ks[13], n_classes),
    }


# ----------------------------------------------------------------------------
# Pure-JAX reference (same bf16-operand / f32-accumulate quantization, so the
# comparison isolates the Pallas implementation).
# ----------------------------------------------------------------------------
@jax.jit
def reference_forward(img, p):
    def conv(x, w, b, stride):
        y = jax.lax.conv_general_dilated(
            x.astype(jnp.bfloat16), w.astype(jnp.bfloat16), (stride, stride), "VALID",
            dimension_numbers=("NCHW", "OIHW", "NCHW"),
            preferred_element_type=jnp.float32)
        return jax.nn.relu(y + b[None, :, None, None])

    def pool(x):
        B, C, H, W = x.shape
        return x[:, :, :H // 2 * 2, :W // 2 * 2].reshape(
            B, C, H // 2, 2, W // 2, 2).max(axis=(3, 5))

    def dot_bf16(a, w):
        return jnp.dot(a.astype(jnp.bfloat16), w.astype(jnp.bfloat16),
                       preferred_element_type=jnp.float32)

    x = conv(img, p["c1w"], p["c1b"], 1); x = pool(x)
    x = conv(x, p["c2w"], p["c2b"], 1);   x = pool(x)
    x = conv(x, p["c3w"], p["c3b"], 1)
    x = conv(x, p["c4w"], p["c4b"], 2)
    flat = x.reshape(img.shape[0], -1)
    h = jax.nn.relu(dot_bf16(flat, p["f1w"].T) + p["f1b"])
    h = jax.nn.relu(dot_bf16(h, p["f2w"].T) + p["f2b"])
    logits = dot_bf16(h, p["f3w"].T) + p["f3b"]
    return jax.nn.log_softmax(logits, axis=-1)


if __name__ == "__main__":
    B, C, H, W = 2, 1, 64, 64
    n_classes = 10

    key = jax.random.PRNGKey(0)
    k_img, k_params = jax.random.split(key)
    img = jax.random.normal(k_img, (B, C, H, W), jnp.float32)

    # 64x64 input -> 58 -> 29 -> 25 -> 12 -> 8 -> 2  =>  64*2*2 flattened.
    s3, s4 = 8, 2
    flat_features = 64 * s4 * s4
    params = init_params(k_params, n_classes, flat_features)
    packed = pack_params(params, B=B, s3=s3, s4=s4)   # host-side, once

    out = jax.block_until_ready(lenet_forward(img, packed))
    assert out.shape == (B, n_classes)

    ref = jax.block_until_ready(reference_forward(img, params))
    np.testing.assert_allclose(np.asarray(out), np.asarray(ref), rtol=1e-2, atol=1e-2)

    print("KERNEL_OK")
</pallas_src>

<mosaic_0001>
module attributes {stable_mosaic.version = 11 : i64} {
  func.func @_conv_mm_kernel(%arg0: memref<16x49xbf16, #tpu.memory_space<vmem>>, %arg1: memref<49x6728xbf16, #tpu.memory_space<vmem>>, %arg2: memref<16x1xf32, #tpu.memory_space<vmem>>, %arg3: memref<16x6728xbf16, #tpu.memory_space<vmem>>) attributes {dimension_semantics = [], scalar_prefetch = 0 : i64, scratch_operands = 0 : i64, tpu.core_type = #tpu.core_type<tc>} {
    %c0 = arith.constant 0 : index
    %c0_0 = arith.constant 0 : index
    %0 = vector.load %arg0[%c0, %c0_0] : memref<16x49xbf16, #tpu.memory_space<vmem>>, vector<16x49xbf16>
    %c0_1 = arith.constant 0 : index
    %c0_2 = arith.constant 0 : index
    %1 = vector.load %arg1[%c0_1, %c0_2] : memref<49x6728xbf16, #tpu.memory_space<vmem>>, vector<49x6728xbf16>
    %cst = arith.constant dense<0.000000e+00> : vector<16x6728xf32>
    %2 = tpu.matmul %0, %1, %cst {dimension_numbers = #tpu.dot_dimension_numbers<[1], [0], [0], [1], [0, 0, 1, 1], [], []>} : vector<16x49xbf16>, vector<49x6728xbf16>, vector<16x6728xf32> -> vector<16x6728xf32>
    %c0_3 = arith.constant 0 : index
    %c0_4 = arith.constant 0 : index
    %3 = vector.load %arg2[%c0_3, %c0_4] : memref<16x1xf32, #tpu.memory_space<vmem>>, vector<16x1xf32>
    %4 = vector.broadcast %3 : vector<16x1xf32> to vector<16x6728xf32>
    %5 = arith.addf %2, %4 : vector<16x6728xf32>
    %cst_5 = arith.constant 0.000000e+00 : f32
    %6 = vector.broadcast %cst_5 : f32 to vector<16x6728xf32>
    %7 = arith.maximumf %5, %6 : vector<16x6728xf32>
    %8 = arith.truncf %7 : vector<16x6728xf32> to vector<16x6728xbf16>
    %c0_6 = arith.constant 0 : index
    %c0_7 = arith.constant 0 : index
    %9 = vector.load %arg3[%c0_6, %c0_7] : memref<16x6728xbf16, #tpu.memory_space<vmem>>, vector<16x6728xbf16>
    tpu.vector_store %arg3[%c0_6, %c0_7], %8 {strides = array<i32>} : memref<16x6728xbf16, #tpu.memory_space<vmem>>, vector<16x6728xbf16>,
    return
  }
}

module attributes {stable_mosaic.version = 11 : i64} {
  func.func @_conv_mm_kernel(%arg0: memref<32x400xbf16, #tpu.memory_space<vmem>>, %arg1: memref<400x1250xbf16, #tpu.memory_space<vmem>>, %arg2: memref<32x1xf32, #tpu.memory_space<vmem>>, %arg3: memref<32x1250xbf16, #tpu.memory_space<vmem>>) attributes {dimension_semantics = [], scalar_prefetch = 0 : i64, scratch_operands = 0 : i64, tpu.core_type = #tpu.core_type<tc>} {
    %c0 = arith.constant 0 : index
    %c0_0 = arith.constant 0 : index
    %0 = vector.load %arg0[%c0, %c0_0] : memref<32x400xbf16, #tpu.memory_space<vmem>>, vector<32x400xbf16>
    %c0_1 = arith.constant 0 : index
    %c0_2 = arith.constant 0 : index
    %1 = vector.load %arg1[%c0_1, %c0_2] : memref<400x1250xbf16, #tpu.memory_space<vmem>>, vector<400x1250xbf16>
    %cst = arith.constant dense<0.000000e+00> : vector<32x1250xf32>
    %2 = tpu.matmul %0, %1, %cst {dimension_numbers = #tpu.dot_dimension_numbers<[1], [0], [0], [1], [0, 0, 1, 1], [], []>} : vector<32x400xbf16>, vector<400x1250xbf16>, vector<32x1250xf32> -> vector<32x1250xf32>
    %c0_3 = arith.constant 0 : index
    %c0_4 = arith.constant 0 : index
    %3 = vector.load %arg2[%c0_3, %c0_4] : memref<32x1xf32, #tpu.memory_space<vmem>>, vector<32x1xf32>
    %4 = vector.broadcast %3 : vector<32x1xf32> to vector<32x1250xf32>
    %5 = arith.addf %2, %4 : vector<32x1250xf32>
    %cst_5 = arith.constant 0.000000e+00 : f32
    %6 = vector.broadcast %cst_5 : f32 to vector<32x1250xf32>
    %7 = arith.maximumf %5, %6 : vector<32x1250xf32>
    %8 = arith.truncf %7 : vector<32x1250xf32> to vector<32x1250xbf16>
    %c0_6 = arith.constant 0 : index
    %c0_7 = arith.constant 0 : index
    %9 = vector.load %arg3[%c0_6, %c0_7] : memref<32x1250xbf16, #tpu.memory_space<vmem>>, vector<32x1250xbf16>
    tpu.vector_store %arg3[%c0_6, %c0_7], %8 {strides = array<i32>} : memref<32x1250xbf16, #tpu.memory_space<vmem>>, vector<32x1250xbf16>,
    return
  }
}

module attributes {stable_mosaic.version = 11 : i64} {
  func.func @_tail_kernel(%arg0: memref<128x800xbf16, #tpu.memory_space<vmem>>, %arg1: memref<800x32xbf16, #tpu.memory_space<vmem>>, %arg2: memref<1x32xf32, #tpu.memory_space<vmem>>, %arg3: memref<25x8x128xbf16, #tpu.memory_space<vmem>>, %arg4: memref<25x32x64xbf16, #tpu.memory_space<vmem>>, %arg5: memref<1x64xf32, #tpu.memory_space<vmem>>, %arg6: memref<4x2x8xbf16, #tpu.memory_space<vmem>>, %arg7: memref<4x64x200xbf16, #tpu.memory_space<vmem>>, %arg8: memref<1x200xf32, #tpu.memory_space<vmem>>, %arg9: memref<200x200xbf16, #tpu.memory_space<vmem>>, %arg10: memref<1x200xf32, #tpu.memory_space<vmem>>, %arg11: memref<200x10xbf16, #tpu.memory_space<vmem>>, %arg12: memref<1x10xf32, #tpu.memory_space<vmem>>, %arg13: memref<2x10xf32, #tpu.memory_space<vmem>>) attributes {dimension_semantics = [], scalar_prefetch = 0 : i64, scratch_operands = 0 : i64, tpu.core_type = #tpu.core_type<tc>} {
    %c0 = arith.constant 0 : index
    %c0_0 = arith.constant 0 : index
    %0 = vector.load %arg0[%c0, %c0_0] : memref<128x800xbf16, #tpu.memory_space<vmem>>, vector<128x800xbf16>
    %c0_1 = arith.constant 0 : index
    %c0_2 = arith.constant 0 : index
    %1 = vector.load %arg1[%c0_1, %c0_2] : memref<800x32xbf16, #tpu.memory_space<vmem>>, vector<800x32xbf16>
    %cst = arith.constant dense<0.000000e+00> : vector<128x32xf32>
    %2 = tpu.matmul %0, %1, %cst {dimension_numbers = #tpu.dot_dimension_numbers<[1], [0], [0], [1], [0, 0, 1, 1], [], []>} : vector<128x800xbf16>, vector<800x32xbf16>, vector<128x32xf32> -> vector<128x32xf32>
    %c0_3 = arith.constant 0 : index
    %c0_4 = arith.constant 0 : index
    %3 = vector.load %arg2[%c0_3, %c0_4] : memref<1x32xf32, #tpu.memory_space<vmem>>, vector<1x32xf32>
    %4 = vector.broadcast %3 : vector<1x32xf32> to vector<128x32xf32>
    %5 = arith.addf %2, %4 : vector<128x32xf32>
    %cst_5 = arith.constant 0.000000e+00 : f32
    %6 = vector.broadcast %cst_5 : f32 to vector<128x32xf32>
    %7 = arith.maximumf %5, %6 : vector<128x32xf32>
    %8 = arith.truncf %7 : vector<128x32xf32> to vector<128x32xbf16>
    %cst_6 = arith.constant 0.000000e+00 : f32
    %9 = vector.broadcast %cst_6 : f32 to vector<8x64xf32>
    %c0_7 = arith.constant 0 : index
    %c0_8 = arith.constant 0 : index
    %c0_9 = arith.constant 0 : index
    %10 = vector.load %arg3[%c0_7, %c0_8, %c0_9] : memref<25x8x128xbf16, #tpu.memory_space<vmem>>, vector<1x8x128xbf16>
    %11 = vector.shape_cast %10 : vector<1x8x128xbf16> to vector<8x128xbf16>
    %cst_10 = arith.constant dense<0.000000e+00> : vector<8x32xf32>
    %12 = tpu.matmul %11, %8, %cst_10 {dimension_numbers = #tpu.dot_dimension_numbers<[1], [0], [0], [1], [0, 0, 1, 1], [], []>} : vector<8x128xbf16>, vector<128x32xbf16>, vector<8x32xf32> -> vector<8x32xf32>
    %13 = arith.truncf %12 : vector<8x32xf32> to vector<8x32xbf16>
    %c0_11 = arith.constant 0 : index
    %c0_12 = arith.constant 0 : index
    %c0_13 = arith.constant 0 : index
    %14 = vector.load %arg4[%c0_11, %c0_12, %c0_13] : memref<25x32x64xbf16, #tpu.memory_space<vmem>>, vector<1x32x64xbf16>
    %15 = vector.shape_cast %14 : vector<1x32x64xbf16> to vector<32x64xbf16>
    %cst_14 = arith.constant dense<0.000000e+00> : vector<8x64xf32>
    %16 = tpu.matmul %13, %15, %cst_14 {dimension_numbers = #tpu.dot_dimension_numbers<[1], [0], [0], [1], [0, 0, 1, 1], [], []>} : vector<8x32xbf16>, vector<32x64xbf16>, vector<8x64xf32> -> vector<8x64xf32>
    %17 = arith.addf %9, %16 : vector<8x64xf32>
    %c1 = arith.constant 1 : index
    %c0_15 = arith.constant 0 : index
    %c0_16 = arith.constant 0 : index
    %18 = vector.load %arg3[%c1, %c0_15, %c0_16] : memref<25x8x128xbf16, #tpu.memory_space<vmem>>, vector<1x8x128xbf16>
    %19 = vector.shape_cast %18 : vector<1x8x128xbf16> to vector<8x128xbf16>
    %cst_17 = arith.constant dense<0.000000e+00> : vector<8x32xf32>
    %20 = tpu.matmul %19, %8, %cst_17 {dimension_numbers = #tpu.dot_dimension_numbers<[1], [0], [0], [1], [0, 0, 1, 1], [], []>} : vector<8x128xbf16>, vector<128x32xbf16>, vector<8x32xf32> -> vector<8x32xf32>
    %21 = arith.truncf %20 : vector<8x32xf32> to vector<8x32xbf16>
    %c1_18 = arith.constant 1 : index
    %c0_19 = arith.constant 0 : index
    %c0_20 = arith.constant 0 : index
    %22 = vector.load %arg4[%c1_18, %c0_19, %c0_20] : memref<25x32x64xbf16, #tpu.memory_space<vmem>>, vector<1x32x64xbf16>
    %23 = vector.shape_cast %22 : vector<1x32x64xbf16> to vector<32x64xbf16>
    %cst_21 = arith.constant dense<0.000000e+00> : vector<8x64xf32>
    %24 = tpu.matmul %21, %23, %cst_21 {dimension_numbers = #tpu.dot_dimension_numbers<[1], [0], [0], [1], [0, 0, 1, 1], [], []>} : vector<8x32xbf16>, vector<32x64xbf16>, vector<8x64xf32> -> vector<8x64xf32>
    %25 = arith.addf %17, %24 : vector<8x64xf32>
    %c2 = arith.constant 2 : index
    %c0_22 = arith.constant 0 : index
    %c0_23 = arith.constant 0 : index
    %26 = vector.load %arg3[%c2, %c0_22, %c0_23] : memref<25x8x128xbf16, #tpu.memory_space<vmem>>, vector<1x8x128xbf16>
    %27 = vector.shape_cast %26 : vector<1x8x128xbf16> to vector<8x128xbf16>
    %cst_24 = arith.constant dense<0.000000e+00> : vector<8x32xf32>
    %28 = tpu.matmul %27, %8, %cst_24 {dimension_numbers = #tpu.dot_dimension_numbers<[1], [0], [0], [1], [0, 0, 1, 1], [], []>} : vector<8x128xbf16>, vector<128x32xbf16>, vector<8x32xf32> -> vector<8x32xf32>
    %29 = arith.truncf %28 : vector<8x32xf32> to vector<8x32xbf16>
    %c2_25 = arith.constant 2 : index
    %c0_26 = arith.constant 0 : index
    %c0_27 = arith.constant 0 : index
    %30 = vector.load %arg4[%c2_25, %c0_26, %c0_27] : memref<25x32x64xbf16, #tpu.memory_space<vmem>>, vector<1x32x64xbf16>
    %31 = vector.shape_cast %30 : vector<1x32x64xbf16> to vector<32x64xbf16>
    %cst_28 = arith.constant dense<0.000000e+00> : vector<8x64xf32>
    %32 = tpu.matmul %29, %31, %cst_28 {dimension_numbers = #tpu.dot_dimension_numbers<[1], [0], [0], [1], [0, 0, 1, 1], [], []>} : vector<8x32xbf16>, vector<32x64xbf16>, vector<8x64xf32> -> vector<8x64xf32>
    %33 = arith.addf %25, %32 : vector<8x64xf32>
    %c3 = arith.constant 3 : index
    %c0_29 = arith.constant 0 : index
    %c0_30 = arith.constant 0 : index
    %34 = vector.load %arg3[%c3, %c0_29, %c0_30] : memref<25x8x128xbf16, #tpu.memory_space<vmem>>, vector<1x8x128xbf16>
    %35 = vector.shape_cast %34 : vector<1x8x128xbf16> to vector<8x128xbf16>
    %cst_31 = arith.constant dense<0.000000e+00> : vector<8x32xf32>
    %36 = tpu.matmul %35, %8, %cst_31 {dimension_numbers = #tpu.dot_dimension_numbers<[1], [0], [0], [1], [0, 0, 1, 1], [], []>} : vector<8x128xbf16>, vector<128x32xbf16>, vector<8x32xf32> -> vector<8x32xf32>
    %37 = arith.truncf %36 : vector<8x32xf32> to vector<8x32xbf16>
    %c3_32 = arith.constant 3 : index
    %c0_33 = arith.constant 0 : index
    %c0_34 = arith.constant 0 : index
    %38 = vector.load %arg4[%c3_32, %c0_33, %c0_34] : memref<25x32x64xbf16, #tpu.memory_space<vmem>>, vector<1x32x64xbf16>
    %39 = vector.shape_cast %38 : vector<1x32x64xbf16> to vector<32x64xbf16>
    %cst_35 = arith.constant dense<0.000000e+00> : vector<8x64xf32>
    %40 = tpu.matmul %37, %39, %cst_35 {dimension_numbers = #tpu.dot_dimension_numbers<[1], [0], [0], [1], [0, 0, 1, 1], [], []>} : vector<8x32xbf16>, vector<32x64xbf16>, vector<8x64xf32> -> vector<8x64xf32>
    %41 = arith.addf %33, %40 : vector<8x64xf32>
    %c4 = arith.constant 4 : index
    %c0_36 = arith.constant 0 : index
    %c0_37 = arith.constant 0 : index
    %42 = vector.load %arg3[%c4, %c0_36, %c0_37] : memref<25x8x128xbf16, #tpu.memory_space<vmem>>, vector<1x8x128xbf16>
    %43 = vector.shape_cast %42 : vector<1x8x128xbf16> to vector<8x128xbf16>
    %cst_38 = arith.constant dense<0.000000e+00> : vector<8x32xf32>
    %44 = tpu.matmul %43, %8, %cst_38 {dimension_numbers = #tpu.dot_dimension_numbers<[1], [0], [0], [1], [0, 0, 1, 1], [], []>} : vector<8x128xbf16>, vector<128x32xbf16>, vector<8x32xf32> -> vector<8x32xf32>
    %45 = arith.truncf %44 : vector<8x32xf32> to vector<8x32xbf16>
    %c4_39 = arith.constant 4 : index
    %c0_40 = arith.constant 0 : index
    %c0_41 = arith.constant 0 : index
    %46 = vector.load %arg4[%c4_39, %c0_40, %c0_41] : memref<25x32x64xbf16, #tpu.memory_space<vmem>>, vector<1x32x64xbf16>
    %47 = vector.shape_cast %46 : vector<1x32x64xbf16> to vector<32x64xbf16>
    %cst_42 = arith.constant dense<0.000000e+00> : vector<8x64xf32>
    %48 = tpu.matmul %45, %47, %cst_42 {dimension_numbers = #tpu.dot_dimension_numbers<[1], [0], [0], [1], [0, 0, 1, 1], [], []>} : vector<8x32xbf16>, vector<32x64xbf16>, vector<8x64xf32> -> vector<8x64xf32>
    %49 = arith.addf %41, %48 : vector<8x64xf32>
    %c5 = arith.constant 5 : index
    %c0_43 = arith.constant 0 : index
    %c0_44 = arith.constant 0 : index
    %50 = vector.load %arg3[%c5, %c0_43, %c0_44] : memref<25x8x128xbf16, #tpu.memory_space<vmem>>, vector<1x8x128xbf16>
    %51 = vector.shape_cast %50 : vector<1x8x128xbf16> to vector<8x128xbf16>
    %cst_45 = arith.constant dense<0.000000e+00> : vector<8x32xf32>
    %52 = tpu.matmul %51, %8, %cst_45 {dimension_numbers = #tpu.dot_dimension_numbers<[1], [0], [0], [1], [0, 0, 1, 1], [], []>} : vector<8x128xbf16>, vector<128x32xbf16>, vector<8x32xf32> -> vector<8x32xf32>
    %53 = arith.truncf %52 : vector<8x32xf32> to vector<8x32xbf16>
    %c5_46 = arith.constant 5 : index
    %c0_47 = arith.constant 0 : index
    %c0_48 = arith.constant 0 : index
    %54 = vector.load %arg4[%c5_46, %c0_47, %c0_48] : memref<25x32x64xbf16, #tpu.memory_space<vmem>>, vector<1x32x64xbf16>
    %55 = vector.shape_cast %54 : vector<1x32x64xbf16> to vector<32x64xbf16>
    %cst_49 = arith.constant dense<0.000000e+00> : vector<8x64xf32>
    %56 = tpu.matmul %53, %55, %cst_49 {dimension_numbers = #tpu.dot_dimension_numbers<[1], [0], [0], [1], [0, 0, 1, 1], [], []>} : vector<8x32xbf16>, vector<32x64xbf16>, vector<8x64xf32> -> vector<8x64xf32>
    %57 = arith.addf %49, %56 : vector<8x64xf32>
    %c6 = arith.constant 6 : index
    %c0_50 = arith.constant 0 : index
    %c0_51 = arith.constant 0 : index
    %58 = vector.load %arg3[%c6, %c0_50, %c0_51] : memref<25x8x128xbf16, #tpu.memory_space<vmem>>, vector<1x8x128xbf16>
    %59 = vector.shape_cast %58 : vector<1x8x128xbf16> to vector<8x128xbf16>
    %cst_52 = arith.constant dense<0.000000e+00> : vector<8x32xf32>
    %60 = tpu.matmul %59, %8, %cst_52 {dimension_numbers = #tpu.dot_dimension_numbers<[1], [0], [0], [1], [0, 0, 1, 1], [], []>} : vector<8x128xbf16>, vector<128x32xbf16>, vector<8x32xf32> -> vector<8x32xf32>
    %61 = arith.truncf %60 : vector<8x32xf32> to vector<8x32xbf16>
    %c6_53 = arith.constant 6 : index
    %c0_54 = arith.constant 0 : index
    %c0_55 = arith.constant 0 : index
    %62 = vector.load %arg4[%c6_53, %c0_54, %c0_55] : memref<25x32x64xbf16, #tpu.memory_space<vmem>>, vector<1x32x64xbf16>
    %63 = vector.shape_cast %62 : vector<1x32x64xbf16> to vector<32x64xbf16>
    %cst_56 = arith.constant dense<0.000000e+00> : vector<8x64xf32>
    %64 = tpu.matmul %61, %63, %cst_56 {dimension_numbers = #tpu.dot_dimension_numbers<[1], [0], [0], [1], [0, 0, 1, 1], [], []>} : vector<8x32xbf16>, vector<32x64xbf16>, vector<8x64xf32> -> vector<8x64xf32>
    %65 = arith.addf %57, %64 : vector<8x64xf32>
    %c7 = arith.constant 7 : index
    %c0_57 = arith.constant 0 : index
    %c0_58 = arith.constant 0 : index
    %66 = vector.load %arg3[%c7, %c0_57, %c0_58] : memref<25x8x128xbf16, #tpu.memory_space<vmem>>, vector<1x8x128xbf16>
    %67 = vector.shape_cast %66 : vector<1x8x128xbf16> to vector<8x128xbf16>
    %cst_59 = arith.constant dense<0.000000e+00> : vector<8x32xf32>
    %68 = tpu.matmul %67, %8, %cst_59 {dimension_numbers = #tpu.dot_dimension_numbers<[1], [0], [0], [1], [0, 0, 1, 1], [], []>} : vector<8x128xbf16>, vector<128x32xbf16>, vector<8x32xf32> -> vector<8x32xf32>
    %69 = arith.truncf %68 : vector<8x32xf32> to vector<8x32xbf16>
    %c7_60 = arith.constant 7 : index
    %c0_61 = arith.constant 0 : index
    %c0_62 = arith.constant 0 : index
    %70 = vector.load %arg4[%c7_60, %c0_61, %c0_62] : memref<25x32x64xbf16, #tpu.memory_space<vmem>>, vector<1x32x64xbf16>
    %71 = vector.shape_cast %70 : vector<1x32x64xbf16> to vector<32x64xbf16>
    %cst_63 = arith.constant dense<0.000000e+00> : vector<8x64xf32>
    %72 = tpu.matmul %69, %71, %cst_63 {dimension_numbers = #tpu.dot_dimension_numbers<[1], [0], [0], [1], [0, 0, 1, 1], [], []>} : vector<8x32xbf16>, vector<32x64xbf16>, vector<8x64xf32> -> vector<8x64xf32>
    %73 = arith.addf %65, %72 : vector<8x64xf32>
    %c8 = arith.constant 8 : index
    %c0_64 = arith.constant 0 : index
    %c0_65 = arith.constant 0 : index
    %74 = vector.load %arg3[%c8, %c0_64, %c0_65] : memref<25x8x128xbf16, #tpu.memory_space<vmem>>, vector<1x8x128xbf16>
    %75 = vector.shape_cast %74 : vector<1x8x128xbf16> to vector<8x128xbf16>
    %cst_66 = arith.constant dense<0.000000e+00> : vector<8x32xf32>
    %76 = tpu.matmul %75, %8, %cst_66 {dimension_numbers = #tpu.dot_dimension_numbers<[1], [0], [0], [1], [0, 0, 1, 1], [], []>} : vector<8x128xbf16>, vector<128x32xbf16>, vector<8x32xf32> -> vector<8x32xf32>
    %77 = arith.truncf %76 : vector<8x32xf32> to vector<8x32xbf16>
    %c8_67 = arith.constant 8 : index
    %c0_68 = arith.constant 0 : index
    %c0_69 = arith.constant 0 : index
    %78 = vector.load %arg4[%c8_67, %c0_68, %c0_69] : memref<25x32x64xbf16, #tpu.memory_space<vmem>>, vector<1x32x64xbf16>
    %79 = vector.shape_cast %78 : vector<1x32x64xbf16> to vector<32x64xbf16>
    %cst_70 = arith.constant dense<0.000000e+00> : vector<8x64xf32>
    %80 = tpu.matmul %77, %79, %cst_70 {dimension_numbers = #tpu.dot_dimension_numbers<[1], [0], [0], [1], [0, 0, 1, 1], [], []>} : vector<8x32xbf16>, vector<32x64xbf16>, vector<8x64xf32> -> vector<8x64xf32>
    %81 = arith.addf %73, %80 : vector<8x64xf32>
    %c9 = arith.constant 9 : index
    %c0_71 = arith.constant 0 : index
    %c0_72 = arith.constant 0 : index
    %82 = vector.load %arg3[%c9, %c0_71, %c0_72] : memref<25x8x128xbf16, #tpu.memory_space<vmem>>, vector<1x8x128xbf16>
    %83 = vector.shape_cast %82 : vector<1x8x128xbf16> to vector<8x128xbf16>
    %cst_73 = arith.constant dense<0.000000e+00> : vector<8x32xf32>
    %84 = tpu.matmul %83, %8, %cst_73 {dimension_numbers = #tpu.dot_dimension_numbers<[1], [0], [0], [1], [0, 0, 1, 1], [], []>} : vector<8x128xbf16>, vector<128x32xbf16>, vector<8x32xf32> -> vector<8x32xf32>
    %85 = arith.truncf %84 : vector<8x32xf32> to vector<8x32xbf16>
    %c9_74 = arith.constant 9 : index
    %c0_75 = arith.constant 0 : index
    %c0_76 = arith.constant 0 : index
    %86 = vector.load %arg4[%c9_74, %c0_75, %c0_76] : memref<25x32x64xbf16, #tpu.memory_space<vmem>>, vector<1x32x64xbf16>
    %87 = vector.shape_cast %86 : vector<1x32x64xbf16> to vector<32x64xbf16>
    %cst_77 = arith.constant dense<0.000000e+00> : vector<8x64xf32>
    %88 = tpu.matmul %85, %87, %cst_77 {dimension_numbers = #tpu.dot_dimension_numbers<[1], [0], [0], [1], [0, 0, 1, 1], [], []>} : vector<8x32xbf16>, vector<32x64xbf16>, vector<8x64xf32> -> vector<8x64xf32>
    %89 = arith.addf %81, %88 : vector<8x64xf32>
    %c10 = arith.constant 10 : index
    %c0_78 = arith.constant 0 : index
    %c0_79 = arith.constant 0 : index
    %90 = vector.load %arg3[%c10, %c0_78, %c0_79] : memref<25x8x128xbf16, #tpu.memory_space<vmem>>, vector<1x8x128xbf16>
    %91 = vector.shape_cast %90 : vector<1x8x128xbf16> to vector<8x128xbf16>
    %cst_80 = arith.constant dense<0.000000e+00> : vector<8x32xf32>
    %92 = tpu.matmul %91, %8, %cst_80 {dimension_numbers = #tpu.dot_dimension_numbers<[1], [0], [0], [1], [0, 0, 1, 1], [], []>} : vector<8x128xbf16>, vector<128x32xbf16>, vector<8x32xf32> -> vector<8x32xf32>
    %93 = arith.truncf %92 : vector<8x32xf32> to vector<8x32xbf16>
    %c10_81 = arith.constant 10 : index
    %c0_82 = arith.constant 0 : index
    %c0_83 = arith.constant 0 : index
    %94 = vector.load %arg4[%c10_81, %c0_82, %c0_83] : memref<25x32x64xbf16, #tpu.memory_space<vmem>>, vector<1x32x64xbf16>
    %95 = vector.shape_cast %94 : vector<1x32x64xbf16> to vector<32x64xbf16>
    %cst_84 = arith.constant dense<0.000000e+00> : vector<8x64xf32>
    %96 = tpu.matmul %93, %95, %cst_84 {dimension_numbers = #tpu.dot_dimension_numbers<[1], [0], [0], [1], [0, 0, 1, 1], [], []>} : vector<8x32xbf16>, vector<32x64xbf16>, vector<8x64xf32> -> vector<8x64xf32>
    %97 = arith.addf %89, %96 : vector<8x64xf32>
    %c11 = arith.constant 11 : index
    %c0_85 = arith.constant 0 : index
    %c0_86 = arith.constant 0 : index
    %98 = vector.load %arg3[%c11, %c0_85, %c0_86] : memref<25x8x128xbf16, #tpu.memory_space<vmem>>, vector<1x8x128xbf16>
    %99 = vector.shape_cast %98 : vector<1x8x128xbf16> to vector<8x128xbf16>
    %cst_87 = arith.constant dense<0.000000e+00> : vector<8x32xf32>
    %100 = tpu.matmul %99, %8, %cst_87 {dimension_numbers = #tpu.dot_dimension_numbers<[1], [0], [0], [1], [0, 0, 1, 1], [], []>} : vector<8x128xbf16>, vector<128x32xbf16>, vector<8x32xf32> -> vector<8x32xf32>
    %101 = arith.truncf %100 : vector<8x32xf32> to vector<8x32xbf16>
    %c11_88 = arith.constant 11 : index
    %c0_89 = arith.constant 0 : index
    %c0_90 = arith.constant 0 : index
    %102 = vector.load %arg4[%c11_88, %c0_89, %c0_90] : memref<25x32x64xbf16, #tpu.memory_space<vmem>>, vector<1x32x64xbf16>
    %103 = vector.shape_cast %102 : vector<1x32x64xbf16> to vector<32x64xbf16>
    %cst_91 = arith.constant dense<0.000000e+00> : vector<8x64xf32>
    %104 = tpu.matmul %101, %103, %cst_91 {dimension_numbers = #tpu.dot_dimension_numbers<[1], [0], [0], [1], [0, 0, 1, 1], [], []>} : vector<8x32xbf16>, vector<32x64xbf16>, vector<8x64xf32> -> vector<8x64xf32>
    %105 = arith.addf %97, %104 : vector<8x64xf32>
    %c12 = arith.constant 12 : index
    %c0_92 = arith.constant 0 : index
    %c0_93 = arith.constant 0 : index
    %106 = vector.load %arg3[%c12, %c0_92, %c0_93] : memref<25x8x128xbf16, #tpu.memory_space<vmem>>, vector<1x8x128xbf16>
    %107 = vector.shape_cast %106 : vector<1x8x128xbf16> to vector<8x128xbf16>
    %cst_94 = arith.constant dense<0.000000e+00> : vector<8x32xf32>
    %108 = tpu.matmul %107, %8, %cst_94 {dimension_numbers = #tpu.dot_dimension_numbers<[1], [0], [0], [1], [0, 0, 1, 1], [], []>} : vector<8x128xbf16>, vector<128x32xbf16>, vector<8x32xf32> -> vector<8x32xf32>
    %109 = arith.truncf %108 : vector<8x32xf32> to vector<8x32xbf16>
    %c12_95 = arith.constant 12 : index
    %c0_96 = arith.constant 0 : index
    %c0_97 = arith.constant 0 : index
    %110 = vector.load %arg4[%c12_95, %c0_96, %c0_97] : memref<25x32x64xbf16, #tpu.memory_space<vmem>>, vector<1x32x64xbf16>
    %111 = vector.shape_cast %110 : vector<1x32x64xbf16> to vector<32x64xbf16>
    %cst_98 = arith.constant dense<0.000000e+00> : vector<8x64xf32>
    %112 = tpu.matmul %109, %111, %cst_98 {dimension_numbers = #tpu.dot_dimension_numbers<[1], [0], [0], [1], [0, 0, 1, 1], [], []>} : vector<8x32xbf16>, vector<32x64xbf16>, vector<8x64xf32> -> vector<8x64xf32>
    %113 = arith.addf %105, %112 : vector<8x64xf32>
    %c13 = arith.constant 13 : index
    %c0_99 = arith.constant 0 : index
    %c0_100 = arith.constant 0 : index
    %114 = vector.load %arg3[%c13, %c0_99, %c0_100] : memref<25x8x128xbf16, #tpu.memory_space<vmem>>, vector<1x8x128xbf16>
    %115 = vector.shape_cast %114 : vector<1x8x128xbf16> to vector<8x128xbf16>
    %cst_101 = arith.constant dense<0.000000e+00> : vector<8x32xf32>
    %116 = tpu.matmul %115, %8, %cst_101 {dimension_numbers = #tpu.dot_dimension_numbers<[1], [0], [0], [1], [0, 0, 1, 1], [], []>} : vector<8x128xbf16>, vector<128x32xbf16>, vector<8x32xf32> -> vector<8x32xf32>
    %117 = arith.truncf %116 : vector<8x32xf32> to vector<8x32xbf16>
    %c13_102 = arith.constant 13 : index
    %c0_103 = arith.constant 0 : index
    %c0_104 = arith.constant 0 : index
    %118 = vector.load %arg4[%c13_102, %c0_103, %c0_104] : memref<25x32x64xbf16, #tpu.memory_space<vmem>>, vector<1x32x64xbf16>
    %119 = vector.shape_cast %118 : vector<1x32x64xbf16> to vector<32x64xbf16>
    %cst_105 = arith.constant dense<0.000000e+00> : vector<8x64xf32>
    %120 = tpu.matmul %117, %119, %cst_105 {dimension_numbers = #tpu.dot_dimension_numbers<[1], [0], [0], [1], [0, 0, 1, 1], [], []>} : vector<8x32xbf16>, vector<32x64xbf16>, vector<8x64xf32> -> vector<8x64xf32>
    %121 = arith.addf %113, %120 : vector<8x64xf32>
    %c14 = arith.constant 14 : index
    %c0_106 = arith.constant 0 : index
    %c0_107 = arith.constant 0 : index
    %122 = vector.load %arg3[%c14, %c0_106, %c0_107] : memref<25x8x128xbf16, #tpu.memory_space<vmem>>, vector<1x8x128xbf16>
    %123 = vector.shape_cast %122 : vector<1x8x128xbf16> to vector<8x128xbf16>
    %cst_108 = arith.constant dense<0.000000e+00> : vector<8x32xf32>
    %124 = tpu.matmul %123, %8, %cst_108 {dimension_numbers = #tpu.dot_dimension_numbers<[1], [0], [0], [1], [0, 0, 1, 1], [], []>} : vector<8x128xbf16>, vector<128x32xbf16>, vector<8x32xf32> -> vector<8x32xf32>
    %125 = arith.truncf %124 : vector<8x32xf32> to vector<8x32xbf16>
    %c14_109 = arith.constant 14 : index
    %c0_110 = arith.constant 0 : index
    %c0_111 = arith.constant 0 : index
    %126 = vector.load %arg4[%c14_109, %c0_110, %c0_111] : memref<25x32x64xbf16, #tpu.memory_space<vmem>>, vector<1x32x64xbf16>
    %127 = vector.shape_cast %126 : vector<1x32x64xbf16> to vector<32x64xbf16>
    %cst_112 = arith.constant dense<0.000000e+00> : vector<8x64xf32>
    %128 = tpu.matmul %125, %127, %cst_112 {dimension_numbers = #tpu.dot_dimension_numbers<[1], [0], [0], [1], [0, 0, 1, 1], [], []>} : vector<8x32xbf16>, vector<32x64xbf16>, vector<8x64xf32> -> vector<8x64xf32>
    %129 = arith.addf %121, %128 : vector<8x64xf32>
    %c15 = arith.constant 15 : index
    %c0_113 = arith.constant 0 : index
    %c0_114 = arith.constant 0 : index
    %130 = vector.load %arg3[%c15, %c0_113, %c0_114] : memref<25x8x128xbf16, #tpu.memory_space<vmem>>, vector<1x8x128xbf16>
    %131 = vector.shape_cast %130 : vector<1x8x128xbf16> to vector<8x128xbf16>
    %cst_115 = arith.constant dense<0.000000e+00> : vector<8x32xf32>
    %132 = tpu.matmul %131, %8, %cst_115 {dimension_numbers = #tpu.dot_dimension_numbers<[1], [0], [0], [1], [0, 0, 1, 1], [], []>} : vector<8x128xbf16>, vector<128x32xbf16>, vector<8x32xf32> -> vector<8x32xf32>
    %133 = arith.truncf %132 : vector<8x32xf32> to vector<8x32xbf16>
    %c15_116 = arith.constant 15 : index
    %c0_117 = arith.constant 0 : index
    %c0_118 = arith.constant 0 : index
    %134 = vector.load %arg4[%c15_116, %c0_117, %c0_118] : memref<25x32x64xbf16, #tpu.memory_space<vmem>>, vector<1x32x64xbf16>
    %135 = vector.shape_cast %134 : vector<1x32x64xbf16> to vector<32x64xbf16>
    %cst_119 = arith.constant dense<0.000000e+00> : vector<8x64xf32>
    %136 = tpu.matmul %133, %135, %cst_119 {dimension_numbers = #tpu.dot_dimension_numbers<[1], [0], [0], [1], [0, 0, 1, 1], [], []>} : vector<8x32xbf16>, vector<32x64xbf16>, vector<8x64xf32> -> vector<8x64xf32>
    %137 = arith.addf %129, %136 : vector<8x64xf32>
    %c16 = arith.constant 16 : index
    %c0_120 = arith.constant 0 : index
    %c0_121 = arith.constant 0 : index
    %138 = vector.load %arg3[%c16, %c0_120, %c0_121] : memref<25x8x128xbf16, #tpu.memory_space<vmem>>, vector<1x8x128xbf16>
    %139 = vector.shape_cast %138 : vector<1x8x128xbf16> to vector<8x128xbf16>
    %cst_122 = arith.constant dense<0.000000e+00> : vector<8x32xf32>
    %140 = tpu.matmul %139, %8, %cst_122 {dimension_numbers = #tpu.dot_dimension_numbers<[1], [0], [0], [1], [0, 0, 1, 1], [], []>} : vector<8x128xbf16>, vector<128x32xbf16>, vector<8x32xf32> -> vector<8x32xf32>
    %141 = arith.truncf %140 : vector<8x32xf32> to vector<8x32xbf16>
    %c16_123 = arith.constant 16 : index
    %c0_124 = arith.constant 0 : index
    %c0_125 = arith.constant 0 : index
    %142 = vector.load %arg4[%c16_123, %c0_124, %c0_125] : memref<25x32x64xbf16, #tpu.memory_space<vmem>>, vector<1x32x64xbf16>
    %143 = vector.shape_cast %142 : vector<1x32x64xbf16> to vector<32x64xbf16>
    %cst_126 = arith.constant dense<0.000000e+00> : vector<8x64xf32>
    %144 = tpu.matmul %141, %143, %cst_126 {dimension_numbers = #tpu.dot_dimension_numbers<[1], [0], [0], [1], [0, 0, 1, 1], [], []>} : vector<8x32xbf16>, vector<32x64xbf16>, vector<8x64xf32> -> vector<8x64xf32>
    %145 = arith.addf %137, %144 : vector<8x64xf32>
    %c17 = arith.constant 17 : index
    %c0_127 = arith.constant 0 : index
    %c0_128 = arith.constant 0 : index
    %146 = vector.load %arg3[%c17, %c0_127, %c0_128] : memref<25x8x128xbf16, #tpu.memory_space<vmem>>, vector<1x8x128xbf16>
    %147 = vector.shape_cast %146 : vector<1x8x128xbf16> to vector<8x128xbf16>
    %cst_129 = arith.constant dense<0.000000e+00> : vector<8x32xf32>
    %148 = tpu.matmul %147, %8, %cst_129 {dimension_numbers = #tpu.dot_dimension_numbers<[1], [0], [0], [1], [0, 0, 1, 1], [], []>} : vector<8x128xbf16>, vector<128x32xbf16>, vector<8x32xf32> -> vector<8x32xf32>
    %149 = arith.truncf %148 : vector<8x32xf32> to vector<8x32xbf16>
    %c17_130 = arith.constant 17 : index
    %c0_131 = arith.constant 0 : index
    %c0_132 = arith.constant 0 : index
    %150 = vector.load %arg4[%c17_130, %c0_131, %c0_132] : memref<25x32x64xbf16, #tpu.memory_space<vmem>>, vector<1x32x64xbf16>
    %151 = vector.shape_cast %150 : vector<1x32x64xbf16> to vector<32x64xbf16>
    %cst_133 = arith.constant dense<0.000000e+00> : vector<8x64xf32>
    %152 = tpu.matmul %149, %151, %cst_133 {dimension_numbers = #tpu.dot_dimension_numbers<[1], [0], [0], [1], [0, 0, 1, 1], [], []>} : vector<8x32xbf16>, vector<32x64xbf16>, vector<8x64xf32> -> vector<8x64xf32>
    %153 = arith.addf %145, %152 : vector<8x64xf32>
    %c18 = arith.constant 18 : index
    %c0_134 = arith.constant 0 : index
    %c0_135 = arith.constant 0 : index
    %154 = vector.load %arg3[%c18, %c0_134, %c0_135] : memref<25x8x128xbf16, #tpu.memory_space<vmem>>, vector<1x8x128xbf16>
    %155 = vector.shape_cast %154 : vector<1x8x128xbf16> to vector<8x128xbf16>
    %cst_136 = arith.constant dense<0.000000e+00> : vector<8x32xf32>
    %156 = tpu.matmul %155, %8, %cst_136 {dimension_numbers = #tpu.dot_dimension_numbers<[1], [0], [0], [1], [0, 0, 1, 1], [], []>} : vector<8x128xbf16>, vector<128x32xbf16>, vector<8x32xf32> -> vector<8x32xf32>
    %157 = arith.truncf %156 : vector<8x32xf32> to vector<8x32xbf16>
    %c18_137 = arith.constant 18 : index
    %c0_138 = arith.constant 0 : index
    %c0_139 = arith.constant 0 : index
    %158 = vector.load %arg4[%c18_137, %c0_138, %c0_139] : memref<25x32x64xbf16, #tpu.memory_space<vmem>>, vector<1x32x64xbf16>
    %159 = vector.shape_cast %158 : vector<1x32x64xbf16> to vector<32x64xbf16>
    %cst_140 = arith.constant dense<0.000000e+00> : vector<8x64xf32>
    %160 = tpu.matmul %157, %159, %cst_140 {dimension_numbers = #tpu.dot_dimension_numbers<[1], [0], [0], [1], [0, 0, 1, 1], [], []>} : vector<8x32xbf16>, vector<32x64xbf16>, vector<8x64xf32> -> vector<8x64xf32>
    %161 = arith.addf %153, %160 : vector<8x64xf32>
    %c19 = arith.constant 19 : index
    %c0_141 = arith.constant 0 : index
    %c0_142 = arith.constant 0 : index
    %162 = vector.load %arg3[%c19, %c0_141, %c0_142] : memref<25x8x128xbf16, #tpu.memory_space<vmem>>, vector<1x8x128xbf16>
    %163 = vector.shape_cast %162 : vector<1x8x128xbf16> to vector<8x128xbf16>
    %cst_143 = arith.constant dense<0.000000e+00> : vector<8x32xf32>
    %164 = tpu.matmul %163, %8, %cst_143 {dimension_numbers = #tpu.dot_dimension_numbers<[1], [0], [0], [1], [0, 0, 1, 1], [], []>} : vector<8x128xbf16>, vector<128x32xbf16>, vector<8x32xf32> -> vector<8x32xf32>
    %165 = arith.truncf %164 : vector<8x32xf32> to vector<8x32xbf16>
    %c19_144 = arith.constant 19 : index
    %c0_145 = arith.constant 0 : index
    %c0_146 = arith.constant 0 : index
    %166 = vector.load %arg4[%c19_144, %c0_145, %c0_146] : memref<25x32x64xbf16, #tpu.memory_space<vmem>>, vector<1x32x64xbf16>
    %167 = vector.shape_cast %166 : vector<1x32x64xbf16> to vector<32x64xbf16>
    %cst_147 = arith.constant dense<0.000000e+00> : vector<8x64xf32>
    %168 = tpu.matmul %165, %167, %cst_147 {dimension_numbers = #tpu.dot_dimension_numbers<[1], [0], [0], [1], [0, 0, 1, 1], [], []>} : vector<8x32xbf16>, vector<32x64xbf16>, vector<8x64xf32> -> vector<8x64xf32>
    %169 = arith.addf %161, %168 : vector<8x64xf32>
    %c20 = arith.constant 20 : index
    %c0_148 = arith.constant 0 : index
    %c0_149 = arith.constant 0 : index
    %170 = vector.load %arg3[%c20, %c0_148, %c0_149] : memref<25x8x128xbf16, #tpu.memory_space<vmem>>, vector<1x8x128xbf16>
    %171 = vector.shape_cast %170 : vector<1x8x128xbf16> to vector<8x128xbf16>
    %cst_150 = arith.constant dense<0.000000e+00> : vector<8x32xf32>
    %172 = tpu.matmul %171, %8, %cst_150 {dimension_numbers = #tpu.dot_dimension_numbers<[1], [0], [0], [1], [0, 0, 1, 1], [], []>} : vector<8x128xbf16>, vector<128x32xbf16>, vector<8x32xf32> -> vector<8x32xf32>
    %173 = arith.truncf %172 : vector<8x32xf32> to vector<8x32xbf16>
    %c20_151 = arith.constant 20 : index
    %c0_152 = arith.constant 0 : index
    %c0_153 = arith.constant 0 : index
    %174 = vector.load %arg4[%c20_151, %c0_152, %c0_153] : memref<25x32x64xbf16, #tpu.memory_space<vmem>>, vector<1x32x64xbf16>
    %175 = vector.shape_cast %174 : vector<1x32x64xbf16> to vector<32x64xbf16>
    %cst_154 = arith.constant dense<0.000000e+00> : vector<8x64xf32>
    %176 = tpu.matmul %173, %175, %cst_154 {dimension_numbers = #tpu.dot_dimension_numbers<[1], [0], [0], [1], [0, 0, 1, 1], [], []>} : vector<8x32xbf16>, vector<32x64xbf16>, vector<8x64xf32> -> vector<8x64xf32>
    %177 = arith.addf %169, %176 : vector<8x64xf32>
    %c21 = arith.constant 21 : index
    %c0_155 = arith.constant 0 : index
    %c0_156 = arith.constant 0 : index
    %178 = vector.load %arg3[%c21, %c0_155, %c0_156] : memref<25x8x128xbf16, #tpu.memory_space<vmem>>, vector<1x8x128xbf16>
    %179 = vector.shape_cast %178 : vector<1x8x128xbf16> to vector<8x128xbf16>
    %cst_157 = arith.constant dense<0.000000e+00> : vector<8x32xf32>
    %180 = tpu.matmul %179, %8, %cst_157 {dimension_numbers = #tpu.dot_dimension_numbers<[1], [0], [0], [1], [0, 0, 1, 1], [], []>} : vector<8x128xbf16>, vector<128x32xbf16>, vector<8x32xf32> -> vector<8x32xf32>
    %181 = arith.truncf %180 : vector<8x32xf32> to vector<8x32xbf16>
    %c21_158 = arith.constant 21 : index
    %c0_159 = arith.constant 0 : index
    %c0_160 = arith.constant 0 : index
    %182 = vector.load %arg4[%c21_158, %c0_159, %c0_160] : memref<25x32x64xbf16, #tpu.memory_space<vmem>>, vector<1x32x64xbf16>
    %183 = vector.shape_cast %182 : vector<1x32x64xbf16> to vector<32x64xbf16>
    %cst_161 = arith.constant dense<0.000000e+00> : vector<8x64xf32>
    %184 = tpu.matmul %181, %183, %cst_161 {dimension_numbers = #tpu.dot_dimension_numbers<[1], [0], [0], [1], [0, 0, 1, 1], [], []>} : vector<8x32xbf16>, vector<32x64xbf16>, vector<8x64xf32> -> vector<8x64xf32>
    %185 = arith.addf %177, %184 : vector<8x64xf32>
    %c22 = arith.constant 22 : index
    %c0_162 = arith.constant 0 : index
    %c0_163 = arith.constant 0 : index
    %186 = vector.load %arg3[%c22, %c0_162, %c0_163] : memref<25x8x128xbf16, #tpu.memory_space<vmem>>, vector<1x8x128xbf16>
    %187 = vector.shape_cast %186 : vector<1x8x128xbf16> to vector<8x128xbf16>
    %cst_164 = arith.constant dense<0.000000e+00> : vector<8x32xf32>
    %188 = tpu.matmul %187, %8, %cst_164 {dimension_numbers = #tpu.dot_dimension_numbers<[1], [0], [0], [1], [0, 0, 1, 1], [], []>} : vector<8x128xbf16>, vector<128x32xbf16>, vector<8x32xf32> -> vector<8x32xf32>
    %189 = arith.truncf %188 : vector<8x32xf32> to vector<8x32xbf16>
    %c22_165 = arith.constant 22 : index
    %c0_166 = arith.constant 0 : index
    %c0_167 = arith.constant 0 : index
    %190 = vector.load %arg4[%c22_165, %c0_166, %c0_167] : memref<25x32x64xbf16, #tpu.memory_space<vmem>>, vector<1x32x64xbf16>
    %191 = vector.shape_cast %190 : vector<1x32x64xbf16> to vector<32x64xbf16>
    %cst_168 = arith.constant dense<0.000000e+00> : vector<8x64xf32>
    %192 = tpu.matmul %189, %191, %cst_168 {dimension_numbers = #tpu.dot_dimension_numbers<[1], [0], [0], [1], [0, 0, 1, 1], [], []>} : vector<8x32xbf16>, vector<32x64xbf16>, vector<8x64xf32> -> vector<8x64xf32>
    %193 = arith.addf %185, %192 : vector<8x64xf32>
    %c23 = arith.constant 23 : index
    %c0_169 = arith.constant 0 : index
    %c0_170 = arith.constant 0 : index
    %194 = vector.load %arg3[%c23, %c0_169, %c0_170] : memref<25x8x128xbf16, #tpu.memory_space<vmem>>, vector<1x8x128xbf16>
    %195 = vector.shape_cast %194 : vector<1x8x128xbf16> to vector<8x128xbf16>
    %cst_171 = arith.constant dense<0.000000e+00> : vector<8x32xf32>
    %196 = tpu.matmul %195, %8, %cst_171 {dimension_numbers = #tpu.dot_dimension_numbers<[1], [0], [0], [1], [0, 0, 1, 1], [], []>} : vector<8x128xbf16>, vector<128x32xbf16>, vector<8x32xf32> -> vector<8x32xf32>
    %197 = arith.truncf %196 : vector<8x32xf32> to vector<8x32xbf16>
    %c23_172 = arith.constant 23 : index
    %c0_173 = arith.constant 0 : index
    %c0_174 = arith.constant 0 : index
    %198 = vector.load %arg4[%c23_172, %c0_173, %c0_174] : memref<25x32x64xbf16, #tpu.memory_space<vmem>>, vector<1x32x64xbf16>
    %199 = vector.shape_cast %198 : vector<1x32x64xbf16> to vector<32x64xbf16>
    %cst_175 = arith.constant dense<0.000000e+00> : vector<8x64xf32>
    %200 = tpu.matmul %197, %199, %cst_175 {dimension_numbers = #tpu.dot_dimension_numbers<[1], [0], [0], [1], [0, 0, 1, 1], [], []>} : vector<8x32xbf16>, vector<32x64xbf16>, vector<8x64xf32> -> vector<8x64xf32>
    %201 = arith.addf %193, %200 : vector<8x64xf32>
    %c24 = arith.constant 24 : index
    %c0_176 = arith.constant 0 : index
    %c0_177 = arith.constant 0 : index
    %202 = vector.load %arg3[%c24, %c0_176, %c0_177] : memref<25x8x128xbf16, #tpu.memory_space<vmem>>, vector<1x8x128xbf16>
    %203 = vector.shape_cast %202 : vector<1x8x128xbf16> to vector<8x128xbf16>
    %cst_178 = arith.constant dense<0.000000e+00> : vector<8x32xf32>
    %204 = tpu.matmul %203, %8, %cst_178 {dimension_numbers = #tpu.dot_dimension_numbers<[1], [0], [0], [1], [0, 0, 1, 1], [], []>} : vector<8x128xbf16>, vector<128x32xbf16>, vector<8x32xf32> -> vector<8x32xf32>
    %205 = arith.truncf %204 : vector<8x32xf32> to vector<8x32xbf16>
    %c24_179 = arith.constant 24 : index
    %c0_180 = arith.constant 0 : index
    %c0_181 = arith.constant 0 : index
    %206 = vector.load %arg4[%c24_179, %c0_180, %c0_181] : memref<25x32x64xbf16, #tpu.memory_space<vmem>>, vector<1x32x64xbf16>
    %207 = vector.shape_cast %206 : vector<1x32x64xbf16> to vector<32x64xbf16>
    %cst_182 = arith.constant dense<0.000000e+00> : vector<8x64xf32>
    %208 = tpu.matmul %205, %207, %cst_182 {dimension_numbers = #tpu.dot_dimension_numbers<[1], [0], [0], [1], [0, 0, 1, 1], [], []>} : vector<8x32xbf16>, vector<32x64xbf16>, vector<8x64xf32> -> vector<8x64xf32>
    %209 = arith.addf %201, %208 : vector<8x64xf32>
    %c0_183 = arith.constant 0 : index
    %c0_184 = arith.constant 0 : index
    %210 = vector.load %arg5[%c0_183, %c0_184] : memref<1x64xf32, #tpu.memory_space<vmem>>, vector<1x64xf32>
    %211 = vector.broadcast %210 : vector<1x64xf32> to vector<8x64xf32>
    %212 = arith.addf %209, %211 : vector<8x64xf32>
    %cst_185 = arith.constant 0.000000e+00 : f32
    %213 = vector.broadcast %cst_185 : f32 to vector<8x64xf32>
    %214 = arith.maximumf %212, %213 : vector<8x64xf32>
    %215 = arith.truncf %214 : vector<8x64xf32> to vector<8x64xbf16>
    %cst_186 = arith.constant 0.000000e+00 : f32
    %216 = vector.broadcast %cst_186 : f32 to vector<2x200xf32>
    %c0_187 = arith.constant 0 : index
    %c0_188 = arith.constant 0 : index
    %c0_189 = arith.constant 0 : index
    %217 = vector.load %arg6[%c0_187, %c0_188, %c0_189] : memref<4x2x8xbf16, #tpu.memory_space<vmem>>, vector<1x2x8xbf16>
    %218 = vector.shape_cast %217 : vector<1x2x8xbf16> to vector<2x8xbf16>
    %cst_190 = arith.constant dense<0.000000e+00> : vector<2x64xf32>
    %219 = tpu.matmul %218, %215, %cst_190 {dimension_numbers = #tpu.dot_dimension_numbers<[1], [0], [0], [1], [0, 0, 1, 1], [], []>} : vector<2x8xbf16>, vector<8x64xbf16>, vector<2x64xf32> -> vector<2x64xf32>
    %220 = arith.truncf %219 : vector<2x64xf32> to vector<2x64xbf16>
    %c0_191 = arith.constant 0 : index
    %c0_192 = arith.constant 0 : index
    %c0_193 = arith.constant 0 : index
    %221 = vector.load %arg7[%c0_191, %c0_192, %c0_193] : memref<4x64x200xbf16, #tpu.memory_space<vmem>>, vector<1x64x200xbf16>
    %222 = vector.shape_cast %221 : vector<1x64x200xbf16> to vector<64x200xbf16>
    %cst_194 = arith.constant dense<0.000000e+00> : vector<2x200xf32>
    %223 = tpu.matmul %220, %222, %cst_194 {dimension_numbers = #tpu.dot_dimension_numbers<[1], [0], [0], [1], [0, 0, 1, 1], [], []>} : vector<2x64xbf16>, vector<64x200xbf16>, vector<2x200xf32> -> vector<2x200xf32>
    %224 = arith.addf %216, %223 : vector<2x200xf32>
    %c1_195 = arith.constant 1 : index
    %c0_196 = arith.constant 0 : index
    %c0_197 = arith.constant 0 : index
    %225 = vector.load %arg6[%c1_195, %c0_196, %c0_197] : memref<4x2x8xbf16, #tpu.memory_space<vmem>>, vector<1x2x8xbf16>
    %226 = vector.shape_cast %225 : vector<1x2x8xbf16> to vector<2x8xbf16>
    %cst_198 = arith.constant dense<0.000000e+00> : vector<2x64xf32>
    %227 = tpu.matmul %226, %215, %cst_198 {dimension_numbers = #tpu.dot_dimension_numbers<[1], [0], [0], [1], [0, 0, 1, 1], [], []>} : vector<2x8xbf16>, vector<8x64xbf16>, vector<2x64xf32> -> vector<2x64xf32>
    %228 = arith.truncf %227 : vector<2x64xf32> to vector<2x64xbf16>
    %c1_199 = arith.constant 1 : index
    %c0_200 = arith.constant 0 : index
    %c0_201 = arith.constant 0 : index
    %229 = vector.load %arg7[%c1_199, %c0_200, %c0_201] : memref<4x64x200xbf16, #tpu.memory_space<vmem>>, vector<1x64x200xbf16>
    %230 = vector.shape_cast %229 : vector<1x64x200xbf16> to vector<64x200xbf16>
    %cst_202 = arith.constant dense<0.000000e+00> : vector<2x200xf32>
    %231 = tpu.matmul %228, %230, %cst_202 {dimension_numbers = #tpu.dot_dimension_numbers<[1], [0], [0], [1], [0, 0, 1, 1], [], []>} : vector<2x64xbf16>, vector<64x200xbf16>, vector<2x200xf32> -> vector<2x200xf32>
    %232 = arith.addf %224, %231 : vector<2x200xf32>
    %c2_203 = arith.constant 2 : index
    %c0_204 = arith.constant 0 : index
    %c0_205 = arith.constant 0 : index
    %233 = vector.load %arg6[%c2_203, %c0_204, %c0_205] : memref<4x2x8xbf16, #tpu.memory_space<vmem>>, vector<1x2x8xbf16>
    %234 = vector.shape_cast %233 : vector<1x2x8xbf16> to vector<2x8xbf16>
    %cst_206 = arith.constant dense<0.000000e+00> : vector<2x64xf32>
    %235 = tpu.matmul %234, %215, %cst_206 {dimension_numbers = #tpu.dot_dimension_numbers<[1], [0], [0], [1], [0, 0, 1, 1], [], []>} : vector<2x8xbf16>, vector<8x64xbf16>, vector<2x64xf32> -> vector<2x64xf32>
    %236 = arith.truncf %235 : vector<2x64xf32> to vector<2x64xbf16>
    %c2_207 = arith.constant 2 : index
    %c0_208 = arith.constant 0 : index
    %c0_209 = arith.constant 0 : index
    %237 = vector.load %arg7[%c2_207, %c0_208, %c0_209] : memref<4x64x200xbf16, #tpu.memory_space<vmem>>, vector<1x64x200xbf16>
    %238 = vector.shape_cast %237 : vector<1x64x200xbf16> to vector<64x200xbf16>
    %cst_210 = arith.constant dense<0.000000e+00> : vector<2x200xf32>
    %239 = tpu.matmul %236, %238, %cst_210 {dimension_numbers = #tpu.dot_dimension_numbers<[1], [0], [0], [1], [0, 0, 1, 1], [], []>} : vector<2x64xbf16>, vector<64x200xbf16>, vector<2x200xf32> -> vector<2x200xf32>
    %240 = arith.addf %232, %239 : vector<2x200xf32>
    %c3_211 = arith.constant 3 : index
    %c0_212 = arith.constant 0 : index
    %c0_213 = arith.constant 0 : index
    %241 = vector.load %arg6[%c3_211, %c0_212, %c0_213] : memref<4x2x8xbf16, #tpu.memory_space<vmem>>, vector<1x2x8xbf16>
    %242 = vector.shape_cast %241 : vector<1x2x8xbf16> to vector<2x8xbf16>
    %cst_214 = arith.constant dense<0.000000e+00> : vector<2x64xf32>
    %243 = tpu.matmul %242, %215, %cst_214 {dimension_numbers = #tpu.dot_dimension_numbers<[1], [0], [0], [1], [0, 0, 1, 1], [], []>} : vector<2x8xbf16>, vector<8x64xbf16>, vector<2x64xf32> -> vector<2x64xf32>
    %244 = arith.truncf %243 : vector<2x64xf32> to vector<2x64xbf16>
    %c3_215 = arith.constant 3 : index
    %c0_216 = arith.constant 0 : index
    %c0_217 = arith.constant 0 : index
    %245 = vector.load %arg7[%c3_215, %c0_216, %c0_217] : memref<4x64x200xbf16, #tpu.memory_space<vmem>>, vector<1x64x200xbf16>
    %246 = vector.shape_cast %245 : vector<1x64x200xbf16> to vector<64x200xbf16>
    %cst_218 = arith.constant dense<0.000000e+00> : vector<2x200xf32>
    %247 = tpu.matmul %244, %246, %cst_218 {dimension_numbers = #tpu.dot_dimension_numbers<[1], [0], [0], [1], [0, 0, 1, 1], [], []>} : vector<2x64xbf16>, vector<64x200xbf16>, vector<2x200xf32> -> vector<2x200xf32>
    %248 = arith.addf %240, %247 : vector<2x200xf32>
    %c0_219 = arith.constant 0 : index
    %c0_220 = arith.constant 0 : index
    %249 = vector.load %arg8[%c0_219, %c0_220] : memref<1x200xf32, #tpu.memory_space<vmem>>, vector<1x200xf32>
    %250 = vector.broadcast %249 : vector<1x200xf32> to vector<2x200xf32>
    %251 = arith.addf %248, %250 : vector<2x200xf32>
    %cst_221 = arith.constant 0.000000e+00 : f32
    %252 = vector.broadcast %cst_221 : f32 to vector<2x200xf32>
    %253 = arith.maximumf %251, %252 : vector<2x200xf32>
    %254 = arith.truncf %253 : vector<2x200xf32> to vector<2x200xbf16>
    %c0_222 = arith.constant 0 : index
    %c0_223 = arith.constant 0 : index
    %255 = vector.load %arg9[%c0_222, %c0_223] : memref<200x200xbf16, #tpu.memory_space<vmem>>, vector<200x200xbf16>
    %cst_224 = arith.constant dense<0.000000e+00> : vector<2x200xf32>
    %256 = tpu.matmul %254, %255, %cst_224 {dimension_numbers = #tpu.dot_dimension_numbers<[1], [0], [0], [1], [0, 0, 1, 1], [], []>} : vector<2x200xbf16>, vector<200x200xbf16>, vector<2x200xf32> -> vector<2x200xf32>
    %c0_225 = arith.constant 0 : index
    %c0_226 = arith.constant 0 : index
    %257 = vector.load %arg10[%c0_225, %c0_226] : memref<1x200xf32, #tpu.memory_space<vmem>>, vector<1x200xf32>
    %258 = vector.broadcast %257 : vector<1x200xf32> to vector<2x200xf32>
    %259 = arith.addf %256, %258 : vector<2x200xf32>
    %cst_227 = arith.constant 0.000000e+00 : f32
    %260 = vector.broadcast %cst_227 : f32 to vector<2x200xf32>
    %261 = arith.maximumf %259, %260 : vector<2x200xf32>
    %262 = arith.truncf %261 : vector<2x200xf32> to vector<2x200xbf16>
    %c0_228 = arith.constant 0 : index
    %c0_229 = arith.constant 0 : index
    %263 = vector.load %arg11[%c0_228, %c0_229] : memref<200x10xbf16, #tpu.memory_space<vmem>>, vector<200x10xbf16>
    %cst_230 = arith.constant dense<0.000000e+00> : vector<2x10xf32>
    %264 = tpu.matmul %262, %263, %cst_230 {dimension_numbers = #tpu.dot_dimension_numbers<[1], [0], [0], [1], [0, 0, 1, 1], [], []>} : vector<2x200xbf16>, vector<200x10xbf16>, vector<2x10xf32> -> vector<2x10xf32>
    %c0_231 = arith.constant 0 : index
    %c0_232 = arith.constant 0 : index
    %265 = vector.load %arg12[%c0_231, %c0_232] : memref<1x10xf32, #tpu.memory_space<vmem>>, vector<1x10xf32>
    %266 = vector.broadcast %265 : vector<1x10xf32> to vector<2x10xf32>
    %267 = arith.addf %264, %266 : vector<2x10xf32>
    %cst_233 = arith.constant dense<0xFF800000> : vector<2xf32>
    %268 = vector.multi_reduction <maximumf>, %267, %cst_233 [1] : vector<2x10xf32> to vector<2xf32>
    %269 = vector.shape_cast %268 : vector<2xf32> to vector<2x1xf32>
    %270 = vector.broadcast %269 : vector<2x1xf32> to vector<2x10xf32>
    %271 = arith.subf %267, %270 : vector<2x10xf32>
    %272 = math.exp %271 : vector<2x10xf32>
    %cst_234 = arith.constant dense<0.000000e+00> : vector<2xf32>
    %273 = vector.multi_reduction <add>, %272, %cst_234 [1] : vector<2x10xf32> to vector<2xf32>
    %274 = vector.shape_cast %273 : vector<2xf32> to vector<2x1xf32>
    %275 = math.log %274 : vector<2x1xf32>
    %276 = vector.broadcast %275 : vector<2x1xf32> to vector<2x10xf32>
    %277 = arith.subf %271, %276 : vector<2x10xf32>
    %c0_235 = arith.constant 0 : index
    %c0_236 = arith.constant 0 : index
    %278 = vector.load %arg13[%c0_235, %c0_236] : memref<2x10xf32, #tpu.memory_space<vmem>>, vector<2x10xf32>
    tpu.vector_store %arg13[%c0_235, %c0_236], %277 {strides = array<i32>} : memref<2x10xf32, #tpu.memory_space<vmem>>, vector<2x10xf32>,
    return
  }
}

</mosaic_0001>

<llo_original>
// kernel: lenet_forward.3
$region0: #{lenet_forward.3}
  #allocation0 [shape = 'u32[]', space=smem, size = 0x4, offset = 0x4, fixed_abs, tag = 'smem constant byte address 0x4 - core index']
  #allocation1 [shape = 'u32[144,128]{1,0:T(1,128)}', space=vmem, size = 0x12000, scoped, tag = 'internal scratch']
  %s0 = inlined_call_operand.hbm [shape: bf16[16,49], index: 0, kind: input, shape index: {}]
  %s1 = inlined_call_operand.vmem [shape: bf16[49,6728], index: 1, kind: input, shape index: {}]
  %s2 = inlined_call_operand.vmem [shape: f32[16,1], index: 2, kind: input, shape index: {}]
  %s3 = inlined_call_operand.vmem [shape: bf16[16,6728], index: 3, kind: output, shape index: {}]
  %s4 = sld [smem:[#allocation0]]
  $region26: #{lenet_forward.3} parent=0
    _
  %s6 = ssub.s32 1, %s4
  %s7 = scalar_select 0, %s6, %s4
  $region1: #{lenet_forward.3} parent=0
    #allocation2 [shape = 'u8[4096]{0}', space=vmem, size = 0x1000, scoped, tag = 'input window, operand 0, single buffered']
    #allocation3 [shape = 's32[1]{0}', space=sflag, size = 0x4, scoped, tag = 'scoped memory for lenet_forward.3']
    %8 = vsyncpa [#allocation3], 0
    // Predicated region
    $region2: #{lenet_forward.3} parent=1 // pred_check
      _
    $region3: #{lenet_forward.3} parent=1 // pred_check_branch
      %10 = sbr.rel (0) target = $region5
    $region4: #{lenet_forward.3} parent=1 // pred_region
      %s12 = ssub.s32 128, 128
      %13 = vsyncadd [#allocation3], %s12
      %s14 = sshll.u32 [#allocation2], 4
      %s15 = int_to_ptr.vmem [resolvable:$true] %s14
      %20 = dma.hbm_to_vmem [thread:$0]  %s0, 128, %s15, [#allocation3], 64, 64, 4
    $region5: #{lenet_forward.3} parent=1 // pred_fallthru
      _
    // Predicated region
    $region6: #{lenet_forward.3} parent=1 // pred_check
      _
    $region7: #{lenet_forward.3} parent=1 // pred_check_branch
      %22 = sbr.rel (0) target = $region9
    $region8: #{lenet_forward.3} parent=1 // pred_region
      _
    $region9: #{lenet_forward.3} parent=1 // pred_fallthru
      _
    // Predicated region
    $region10: #{lenet_forward.3} parent=1 // pred_check
      _
    $region11: #{lenet_forward.3} parent=1 // pred_check_branch
      %24 = sbr.rel (0) target = $region13
    $region12: #{lenet_forward.3} parent=1 // pred_region
      _
    $region13: #{lenet_forward.3} parent=1 // pred_fallthru
      _
    // Predicated region
    $region14: #{lenet_forward.3} parent=1 // pred_check
      _
    $region15: #{lenet_forward.3} parent=1 // pred_check_branch
      %26 = sbr.rel (0) target = $region17
    $region16: #{lenet_forward.3} parent=1 // pred_region
      %27 = dma.done [#allocation3], 128
    $region17: #{lenet_forward.3} parent=1 // pred_fallthru
      _
    %v29 = vld [vmem:[#allocation2] sm:$0xf]
    %v30 = vld [vmem:[#allocation2 + $0x4] sm:$0xf]
    %v31 = vld [vmem:[%s1] sm:$0xff]
    %v32 = vld [vmem:[%s1 + $0x8] sm:$0xff]
    %v33 = vld [vmem:[%s1 + $0x10] sm:$0xff]
    %v34 = vld [vmem:[%s1 + $0x18] sm:$0xff]
    %v35 = vld [vmem:[%s1 + $0x20] sm:$0xff]
    %v36 = vld [vmem:[%s1 + $0x28] sm:$0xff]
    %v37 = vld [vmem:[%s1 + $0x30] sm:$0xff]
    %v38 = vld [vmem:[%s1 + $0x38] sm:$0xff]
    %v39 = vld [vmem:[%s1 + $0x40] sm:$0xff]
    %v40 = vld [vmem:[%s1 + $0x48] sm:$0xff]
    %v41 = vld [vmem:[%s1 + $0x50] sm:$0xff]
    %v42 = vld [vmem:[%s1 + $0x58] sm:$0xff]
    %v43 = vld [vmem:[%s1 + $0x60] sm:$0xff]
    %v44 = vld [vmem:[%s1 + $0x68] sm:$0xff]
    %v45 = vld [vmem:[%s1 + $0x70] sm:$0xff]
    %v46 = vld [vmem:[%s1 + $0x78] sm:$0xff]
    %v47 = vld [vmem:[%s1 + $0x80] sm:$0xff]
    %v48 = vld [vmem:[%s1 + $0x88] sm:$0xff]
    %v49 = vld [vmem:[%s1 + $0x90] sm:$0xff]
    %v50 = vld [vmem:[%s1 + $0x98] sm:$0xff]
    %v51 = vld [vmem:[%s1 + $0xa0] sm:$0xff]
    %v52 = vld [vmem:[%s1 + $0xa8] sm:$0xff]
    %v53 = vld [vmem:[%s1 + $0xb0] sm:$0xff]
    %v54 = vld [vmem:[%s1 + $0xb8] sm:$0xff]
    %v55 = vld [vmem:[%s1 + $0xc0] sm:$0xff]
    %v56 = vld [vmem:[%s1 + $0xc8] sm:$0xff]
    %v57 = vld [vmem:[%s1 + $0xd0] sm:$0xf]
    %v58 = vld [vmem:[%s1 + $0xd4] sm:$0xff]
    %v59 = vld [vmem:[%s1 + $0xdc] sm:$0xff]
    %v60 = vld [vmem:[%s1 + $0xe4] sm:$0xff]
    %v61 = vld [vmem:[%s1 + $0xec] sm:$0xff]
    %v62 = vld [vmem:[%s1 + $0xf4] sm:$0xff]
    %v63 = vld [vmem:[%s1 + $0xfc] sm:$0xff]
    %v64 = vld [vmem:[%s1 + $0x104] sm:$0xff]
    %v65 = vld [vmem:[%s1 + $0x10c] sm:$0xff]
    %v66 = vld [vmem:[%s1 + $0x114] sm:$0xff]
    %v67 = vld [vmem:[%s1 + $0x11c] sm:$0xff]
    %v68 = vld [vmem:[%s1 + $0x124] sm:$0xff]
    %v69 = vld [vmem:[%s1 + $0x12c] sm:$0xff]
    %v70 = vld [vmem:[%s1 + $0x134] sm:$0xff]
    %v71 = vld [vmem:[%s1 + $0x13c] sm:$0xff]
    %v72 = vld [vmem:[%s1 + $0x144] sm:$0xff]
    %v73 = vld [vmem:[%s1 + $0x14c] sm:$0xff]
    %v74 = vld [vmem:[%s1 + $0x154] sm:$0xff]
    %v75 = vld [vmem:[%s1 + $0x15c] sm:$0xff]
    %v76 = vld [vmem:[%s1 + $0x164] sm:$0xff]
    %v77 = vld [vmem:[%s1 + $0x16c] sm:$0xff]
    %v78 = vld [vmem:[%s1 + $0x174] sm:$0xff]
    %v79 = vld [vmem:[%s1 + $0x17c] sm:$0xff]
    %v80 = vld [vmem:[%s1 + $0x184] sm:$0xff]
    %v81 = vld [vmem:[%s1 + $0x18c] sm:$0xff]
    %v82 = vld [vmem:[%s1 + $0x194] sm:$0xff]
    %v83 = vld [vmem:[%s1 + $0x19c] sm:$0xff]
    %v84 = vld [vmem:[%s1 + $0x1a4] sm:$0xf]
    %v85 = vld [vmem:[%s1 + $0x1a8] sm:$0xff]
    %v86 = vld [vmem:[%s1 + $0x1b0] sm:$0xff]
    %v87 = vld [vmem:[%s1 + $0x1b8] sm:$0xff]
    %v88 = vld [vmem:[%s1 + $0x1c0] sm:$0xff]
    %v89 = vld [vmem:[%s1 + $0x1c8] sm:$0xff]
    %v90 = vld [vmem:[%s1 + $0x1d0] sm:$0xff]
    %v91 = vld [vmem:[%s1 + $0x1d8] sm:$0xff]
    %v92 = vld [vmem:[%s1 + $0x1e0] sm:$0xff]
    %v93 = vld [vmem:[%s1 + $0x1e8] sm:$0xff]
    %v94 = vld [vmem:[%s1 + $0x1f0] sm:$0xff]
    %v95 = vld [vmem:[%s1 + $0x1f8] sm:$0xff]
    %v96 = vld [vmem:[%s1 + $0x200] sm:$0xff]
    %v97 = vld [vmem:[%s1 + $0x208] sm:$0xff]
    %v98 = vld [vmem:[%s1 + $0x210] sm:$0xff]
    %v99 = vld [vmem:[%s1 + $0x218] sm:$0xff]
    %v100 = vld [vmem:[%s1 + $0x220] sm:$0xff]
    %v101 = vld [vmem:[%s1 + $0x228] sm:$0xff]
    %v102 = vld [vmem:[%s1 + $0x230] sm:$0xff]
    %v103 = vld [vmem:[%s1 + $0x238] sm:$0xff]
    %v104 = vld [vmem:[%s1 + $0x240] sm:$0xff]
    %v105 = vld [vmem:[%s1 + $0x248] sm:$0xff]
    %v106 = vld [vmem:[%s1 + $0x250] sm:$0xff]
    %v107 = vld [vmem:[%s1 + $0x258] sm:$0xff]
    %v108 = vld [vmem:[%s1 + $0x260] sm:$0xff]
    %v109 = vld [vmem:[%s1 + $0x268] sm:$0xff]
    %v110 = vld [vmem:[%s1 + $0x270] sm:$0xff]
    %v111 = vld [vmem:[%s1 + $0x278] sm:$0xf]
    %v112 = vld [vmem:[%s1 + $0x27c] sm:$0xff]
    %v113 = vld [vmem:[%s1 + $0x284] sm:$0xff]
    %v114 = vld [vmem:[%s1 + $0x28c] sm:$0xff]
    %v115 = vld [vmem:[%s1 + $0x294] sm:$0xff]
    %v116 = vld [vmem:[%s1 + $0x29c] sm:$0xff]
    %v117 = vld [vmem:[%s1 + $0x2a4] sm:$0xff]
    %v118 = vld [vmem:[%s1 + $0x2ac] sm:$0xff]
    %v119 = vld [vmem:[%s1 + $0x2b4] sm:$0xff]
    %v120 = vld [vmem:[%s1 + $0x2bc] sm:$0xff]
    %v121 = vld [vmem:[%s1 + $0x2c4] sm:$0xff]
    %v122 = vld [vmem:[%s1 + $0x2cc] sm:$0xff]
    %v123 = vld [vmem:[%s1 + $0x2d4] sm:$0xff]
    %v124 = vld [vmem:[%s1 + $0x2dc] sm:$0xff]
    %v125 = vld [vmem:[%s1 + $0x2e4] sm:$0xff]
    %v126 = vld [vmem:[%s1 + $0x2ec] sm:$0xff]
    %v127 = vld [vmem:[%s1 + $0x2f4] sm:$0xff]
    %v128 = vld [vmem:[%s1 + $0x2fc] sm:$0xff]
    %v129 = vld [vmem:[%s1 + $0x304] sm:$0xff]
    %v130 = vld [vmem:[%s1 + $0x30c] sm:$0xff]
    %v131 = vld [vmem:[%s1 + $0x314] sm:$0xff]
    %v132 = vld [vmem:[%s1 + $0x31c] sm:$0xff]
    %v133 = vld [vmem:[%s1 + $0x324] sm:$0xff]
    %v134 = vld [vmem:[%s1 + $0x32c] sm:$0xff]
    %v135 = vld [vmem:[%s1 + $0x334] sm:$0xff]
    %v136 = vld [vmem:[%s1 + $0x33c] sm:$0xff]
    %v137 = vld [vmem:[%s1 + $0x344] sm:$0xff]
    %v138 = vld [vmem:[%s1 + $0x34c] sm:$0xf]
    %v139 = vld [vmem:[%s1 + $0x350] sm:$0xff]
    %v140 = vld [vmem:[%s1 + $0x358] sm:$0xff]
    %v141 = vld [vmem:[%s1 + $0x360] sm:$0xff]
    %v142 = vld [vmem:[%s1 + $0x368] sm:$0xff]
    %v143 = vld [vmem:[%s1 + $0x370] sm:$0xff]
    %v144 = vld [vmem:[%s1 + $0x378] sm:$0xff]
    %v145 = vld [vmem:[%s1 + $0x380] sm:$0xff]
    %v146 = vld [vmem:[%s1 + $0x388] sm:$0xff]
    %v147 = vld [vmem:[%s1 + $0x390] sm:$0xff]
    %v148 = vld [vmem:[%s1 + $0x398] sm:$0xff]
    %v149 = vld [vmem:[%s1 + $0x3a0] sm:$0xff]
    %v150 = vld [vmem:[%s1 + $0x3a8] sm:$0xff]
    %v151 = vld [vmem:[%s1 + $0x3b0] sm:$0xff]
    %v152 = vld [vmem:[%s1 + $0x3b8] sm:$0xff]
    %v153 = vld [vmem:[%s1 + $0x3c0] sm:$0xff]
    %v154 = vld [vmem:[%s1 + $0x3c8] sm:$0xff]
    %v155 = vld [vmem:[%s1 + $0x3d0] sm:$0xff]
    %v156 = vld [vmem:[%s1 + $0x3d8] sm:$0xff]
    %v157 = vld [vmem:[%s1 + $0x3e0] sm:$0xff]
    %v158 = vld [vmem:[%s1 + $0x3e8] sm:$0xff]
    %v159 = vld [vmem:[%s1 + $0x3f0] sm:$0xff]
    %v160 = vld [vmem:[%s1 + $0x3f8] sm:$0xff]
    %v161 = vld [vmem:[%s1 + $0x400] sm:$0xff]
    %v162 = vld [vmem:[%s1 + $0x408] sm:$0xff]
    %v163 = vld [vmem:[%s1 + $0x410] sm:$0xff]
    %v164 = vld [vmem:[%s1 + $0x418] sm:$0xff]
    %v165 = vld [vmem:[%s1 + $0x420] sm:$0xf]
    %v166 = vld [vmem:[%s1 + $0x424] sm:$0xff]
    %v167 = vld [vmem:[%s1 + $0x42c] sm:$0xff]
    %v168 = vld [vmem:[%s1 + $0x434] sm:$0xff]
    %v169 = vld [vmem:[%s1 + $0x43c] sm:$0xff]
    %v170 = vld [vmem:[%s1 + $0x444] sm:$0xff]
    %v171 = vld [vmem:[%s1 + $0x44c] sm:$0xff]
    %v172 = vld [vmem:[%s1 + $0x454] sm:$0xff]
    %v173 = vld [vmem:[%s1 + $0x45c] sm:$0xff]
    %v174 = vld [vmem:[%s1 + $0x464] sm:$0xff]
    %v175 = vld [vmem:[%s1 + $0x46c] sm:$0xff]
    %v176 = vld [vmem:[%s1 + $0x474] sm:$0xff]
    %v177 = vld [vmem:[%s1 + $0x47c] sm:$0xff]
    %v178 = vld [vmem:[%s1 + $0x484] sm:$0xff]
    %v179 = vld [vmem:[%s1 + $0x48c] sm:$0xff]
    %v180 = vld [vmem:[%s1 + $0x494] sm:$0xff]
    %v181 = vld [vmem:[%s1 + $0x49c] sm:$0xff]
    %v182 = vld [vmem:[%s1 + $0x4a4] sm:$0xff]
    %v183 = vld [vmem:[%s1 + $0x4ac] sm:$0xff]
    %v184 = vld [vmem:[%s1 + $0x4b4] sm:$0xff]
    %v185 = vld [vmem:[%s1 + $0x4bc] sm:$0xff]
    %v186 = vld [vmem:[%s1 + $0x4c4] sm:$0xff]
    %v187 = vld [vmem:[%s1 + $0x4cc] sm:$0xff]
    %v188 = vld [vmem:[%s1 + $0x4d4] sm:$0xff]
    %v189 = vld [vmem:[%s1 + $0x4dc] sm:$0xff]
    %v190 = vld [vmem:[%s1 + $0x4e4] sm:$0xff]
    %v191 = vld [vmem:[%s1 + $0x4ec] sm:$0xff]
    %v192 = vld [vmem:[%s1 + $0x4f4] sm:$0xf]
    %v193 = vld [vmem:[%s1 + $0x4f8] sm:$0x11]
    %v194 = vld [vmem:[%s1 + $0x500] sm:$0x11]
    %v195 = vld [vmem:[%s1 + $0x508] sm:$0x11]
    %v196 = vld [vmem:[%s1 + $0x510] sm:$0x11]
    %v197 = vld [vmem:[%s1 + $0x518] sm:$0x11]
    %v198 = vld [vmem:[%s1 + $0x520] sm:$0x11]
    %v199 = vld [vmem:[%s1 + $0x528] sm:$0x11]
    %v200 = vld [vmem:[%s1 + $0x530] sm:$0x11]
    %v201 = vld [vmem:[%s1 + $0x538] sm:$0x11]
    %v202 = vld [vmem:[%s1 + $0x540] sm:$0x11]
    %v203 = vld [vmem:[%s1 + $0x548] sm:$0x11]
    %v204 = vld [vmem:[%s1 + $0x550] sm:$0x11]
    %v205 = vld [vmem:[%s1 + $0x558] sm:$0x11]
    %v206 = vld [vmem:[%s1 + $0x560] sm:$0x11]
    %v207 = vld [vmem:[%s1 + $0x568] sm:$0x11]
    %v208 = vld [vmem:[%s1 + $0x570] sm:$0x11]
    %v209 = vld [vmem:[%s1 + $0x578] sm:$0x11]
    %v210 = vld [vmem:[%s1 + $0x580] sm:$0x11]
    %v211 = vld [vmem:[%s1 + $0x588] sm:$0x11]
    %v212 = vld [vmem:[%s1 + $0x590] sm:$0x11]
    %v213 = vld [vmem:[%s1 + $0x598] sm:$0x11]
    %v214 = vld [vmem:[%s1 + $0x5a0] sm:$0x11]
    %v215 = vld [vmem:[%s1 + $0x5a8] sm:$0x11]
    %v216 = vld [vmem:[%s1 + $0x5b0] sm:$0x11]
    %v217 = vld [vmem:[%s1 + $0x5b8] sm:$0x11]
    %v218 = vld [vmem:[%s1 + $0x5c0] sm:$0x11]
    %v219 = vld [vmem:[%s1 + $0x5c8] sm:$0x1]
    %v220 = vld [vmem:[%s2] sm:$0xff]
    %v221 = vld [vmem:[%s2 + $0x8] sm:$0xff]
    %223 = vset.pattern.permute.xlu0 0
    %224 = vperm.xlu0 %223, %v220
    %v225 = vpop.permute.xlu0 %224
    %228 = vset.pattern.permute.xlu0 0
    %229 = vperm.xlu0 %228, %v221
    %v230 = vpop.permute.xlu0 %229
    %v234 = vunpack.c.l.b16 %v29
    %v235 = vunpack.c.l.b16 %v30
    %v236 = vpack.c.b16 %v235, %v234
    %v426 = vunpack.c.l.b16 %v31
    %v427 = vunpack.c.h.b16 %v31
    %v428 = vunpack.c.l.b16 %v32
    %v429 = vunpack.c.h.b16 %v32
    %v430 = vunpack.c.l.b16 %v33
    %v431 = vunpack.c.h.b16 %v33
    %v432 = vunpack.c.l.b16 %v34
    %v433 = vunpack.c.h.b16 %v34
    %v434 = vunpack.c.l.b16 %v35
    %v435 = vunpack.c.h.b16 %v35
    %v436 = vunpack.c.l.b16 %v36
    %v437 = vunpack.c.h.b16 %v36
    %v438 = vunpack.c.l.b16 %v37
    %v439 = vunpack.c.h.b16 %v37
    %v440 = vunpack.c.l.b16 %v38
    %v441 = vunpack.c.h.b16 %v38
    %v442 = vunpack.c.l.b16 %v39
    %v443 = vunpack.c.h.b16 %v39
    %v444 = vunpack.c.l.b16 %v40
    %v445 = vunpack.c.h.b16 %v40
    %v446 = vunpack.c.l.b16 %v41
    %v447 = vunpack.c.h.b16 %v41
    %v448 = vunpack.c.l.b16 %v42
    %v449 = vunpack.c.h.b16 %v42
    %v450 = vunpack.c.l.b16 %v43
    %v451 = vunpack.c.h.b16 %v43
    %v452 = vunpack.c.l.b16 %v44
    %v453 = vunpack.c.h.b16 %v44
    %v454 = vunpack.c.l.b16 %v45
    %v455 = vunpack.c.h.b16 %v45
    %v456 = vunpack.c.l.b16 %v46
    %v457 = vunpack.c.h.b16 %v46
    %v458 = vunpack.c.l.b16 %v47
    %v459 = vunpack.c.h.b16 %v47
    %v460 = vunpack.c.l.b16 %v48
    %v461 = vunpack.c.h.b16 %v48
    %v462 = vunpack.c.l.b16 %v49
    %v463 = vunpack.c.h.b16 %v49
    %v464 = vunpack.c.l.b16 %v50
    %v465 = vunpack.c.h.b16 %v50
    %v466 = vunpack.c.l.b16 %v51
    %v467 = vunpack.c.h.b16 %v51
    %v468 = vunpack.c.l.b16 %v52
    %v469 = vunpack.c.h.b16 %v52
    %v470 = vunpack.c.l.b16 %v53
    %v471 = vunpack.c.h.b16 %v53
    %v472 = vunpack.c.l.b16 %v54
    %v473 = vunpack.c.h.b16 %v54
    %v474 = vunpack.c.l.b16 %v55
    %v475 = vunpack.c.h.b16 %v55
    %v476 = vunpack.c.l.b16 %v56
    %v477 = vunpack.c.h.b16 %v56
    %v478 = vunpack.c.l.b16 %v57
    %v479 = vunpack.c.l.b16 %v58
    %v480 = vunpack.c.h.b16 %v58
    %v481 = vunpack.c.l.b16 %v59
    %v482 = vunpack.c.h.b16 %v59
    %v483 = vunpack.c.l.b16 %v60
    %v484 = vunpack.c.h.b16 %v60
    %v485 = vunpack.c.l.b16 %v61
    %v486 = vunpack.c.h.b16 %v61
    %v487 = vunpack.c.l.b16 %v62
    %v488 = vunpack.c.h.b16 %v62
    %v489 = vunpack.c.l.b16 %v63
    %v490 = vunpack.c.h.b16 %v63
    %v491 = vunpack.c.l.b16 %v64
    %v492 = vunpack.c.h.b16 %v64
    %v493 = vunpack.c.l.b16 %v65
    %v494 = vunpack.c.h.b16 %v65
    %v495 = vunpack.c.l.b16 %v66
    %v496 = vunpack.c.h.b16 %v66
    %v497 = vunpack.c.l.b16 %v67
    %v498 = vunpack.c.h.b16 %v67
    %v499 = vunpack.c.l.b16 %v68
    %v500 = vunpack.c.h.b16 %v68
    %v501 = vunpack.c.l.b16 %v69
    %v502 = vunpack.c.h.b16 %v69
    %v503 = vunpack.c.l.b16 %v70
    %v504 = vunpack.c.h.b16 %v70
    %v505 = vunpack.c.l.b16 %v71
    %v506 = vunpack.c.h.b16 %v71
    %v507 = vunpack.c.l.b16 %v72
    %v508 = vunpack.c.h.b16 %v72
    %v509 = vunpack.c.l.b16 %v73
    %v510 = vunpack.c.h.b16 %v73
    %v511 = vunpack.c.l.b16 %v74
    %v512 = vunpack.c.h.b16 %v74
    %v513 = vunpack.c.l.b16 %v75
    %v514 = vunpack.c.h.b16 %v75
    %v515 = vunpack.c.l.b16 %v76
    %v516 = vunpack.c.h.b16 %v76
    %v517 = vunpack.c.l.b16 %v77
    %v518 = vunpack.c.h.b16 %v77
    %v519 = vunpack.c.l.b16 %v78
    %v520 = vunpack.c.h.b16 %v78
    %v521 = vunpack.c.l.b16 %v79
    %v522 = vunpack.c.h.b16 %v79
    %v523 = vunpack.c.l.b16 %v80
    %v524 = vunpack.c.h.b16 %v80
    %v525 = vunpack.c.l.b16 %v81
    %v526 = vunpack.c.h.b16 %v81
    %v527 = vunpack.c.l.b16 %v82
    %v528 = vunpack.c.h.b16 %v82
    %v529 = vunpack.c.l.b16 %v83
    %v530 = vunpack.c.h.b16 %v83
    %v531 = vunpack.c.l.b16 %v84
    %v532 = vunpack.c.l.b16 %v85
    %v533 = vunpack.c.h.b16 %v85
    %v534 = vunpack.c.l.b16 %v86
    %v535 = vunpack.c.h.b16 %v86
    %v536 = vunpack.c.l.b16 %v87
    %v537 = vunpack.c.h.b16 %v87
    %v538 = vunpack.c.l.b16 %v88
    %v539 = vunpack.c.h.b16 %v88
    %v540 = vunpack.c.l.b16 %v89
    %v541 = vunpack.c.h.b16 %v89
    %v542 = vunpack.c.l.b16 %v90
    %v543 = vunpack.c.h.b16 %v90
    %v544 = vunpack.c.l.b16 %v91
    %v545 = vunpack.c.h.b16 %v91
    %v546 = vunpack.c.l.b16 %v92
    %v547 = vunpack.c.h.b16 %v92
    %v548 = vunpack.c.l.b16 %v93
    %v549 = vunpack.c.h.b16 %v93
    %v550 = vunpack.c.l.b16 %v94
    %v551 = vunpack.c.h.b16 %v94
    %v552 = vunpack.c.l.b16 %v95
    %v553 = vunpack.c.h.b16 %v95
    %v554 = vunpack.c.l.b16 %v96
    %v555 = vunpack.c.h.b16 %v96
    %v556 = vunpack.c.l.b16 %v97
    %v557 = vunpack.c.h.b16 %v97
    %v558 = vunpack.c.l.b16 %v98
    %v559 = vunpack.c.h.b16 %v98
    %v560 = vunpack.c.l.b16 %v99
    %v561 = vunpack.c.h.b16 %v99
    %v562 = vunpack.c.l.b16 %v100
    %v563 = vunpack.c.h.b16 %v100
    %v564 = vunpack.c.l.b16 %v101
    %v565 = vunpack.c.h.b16 %v101
    %v566 = vunpack.c.l.b16 %v102
    %v567 = vunpack.c.h.b16 %v102
    %v568 = vunpack.c.l.b16 %v103
    %v569 = vunpack.c.h.b16 %v103
    %v570 = vunpack.c.l.b16 %v104
    %v571 = vunpack.c.h.b16 %v104
    %v572 = vunpack.c.l.b16 %v105
    %v573 = vunpack.c.h.b16 %v105
    %v574 = vunpack.c.l.b16 %v106
    %v575 = vunpack.c.h.b16 %v106
    %v576 = vunpack.c.l.b16 %v107
    %v577 = vunpack.c.h.b16 %v107
    %v578 = vunpack.c.l.b16 %v108
    %v579 = vunpack.c.h.b16 %v108
    %v580 = vunpack.c.l.b16 %v109
    %v581 = vunpack.c.h.b16 %v109
    %v582 = vunpack.c.l.b16 %v110
    %v583 = vunpack.c.h.b16 %v110
    %v584 = vunpack.c.l.b16 %v111
    %v585 = vunpack.c.l.b16 %v112
    %v586 = vunpack.c.h.b16 %v112
    %v587 = vunpack.c.l.b16 %v113
    %v588 = vunpack.c.h.b16 %v113
    %v589 = vunpack.c.l.b16 %v114
    %v590 = vunpack.c.h.b16 %v114
    %v591 = vunpack.c.l.b16 %v115
    %v592 = vunpack.c.h.b16 %v115
    %v593 = vunpack.c.l.b16 %v116
    %v594 = vunpack.c.h.b16 %v116
    %v595 = vunpack.c.l.b16 %v117
    %v596 = vunpack.c.h.b16 %v117
    %v597 = vunpack.c.l.b16 %v118
    %v598 = vunpack.c.h.b16 %v118
    %v599 = vunpack.c.l.b16 %v119
    %v600 = vunpack.c.h.b16 %v119
    %v601 = vunpack.c.l.b16 %v120
    %v602 = vunpack.c.h.b16 %v120
    %v603 = vunpack.c.l.b16 %v121
    %v604 = vunpack.c.h.b16 %v121
    %v605 = vunpack.c.l.b16 %v122
    %v606 = vunpack.c.h.b16 %v122
    %v607 = vunpack.c.l.b16 %v123
    %v608 = vunpack.c.h.b16 %v123
    %v609 = vunpack.c.l.b16 %v124
    %v610 = vunpack.c.h.b16 %v124
    %v611 = vunpack.c.l.b16 %v125
    %v612 = vunpack.c.h.b16 %v125
    %v613 = vunpack.c.l.b16 %v126
    %v614 = vunpack.c.h.b16 %v126
    %v615 = vunpack.c.l.b16 %v127
    %v616 = vunpack.c.h.b16 %v127
    %v617 = vunpack.c.l.b16 %v128
    %v618 = vunpack.c.h.b16 %v128
    %v619 = vunpack.c.l.b16 %v129
    %v620 = vunpack.c.h.b16 %v129
    %v621 = vunpack.c.l.b16 %v130
    %v622 = vunpack.c.h.b16 %v130
    %v623 = vunpack.c.l.b16 %v131
    %v624 = vunpack.c.h.b16 %v131
    %v625 = vunpack.c.l.b16 %v132
    %v626 = vunpack.c.h.b16 %v132
    %v627 = vunpack.c.l.b16 %v133
    %v628 = vunpack.c.h.b16 %v133
    %v629 = vunpack.c.l.b16 %v134
    %v630 = vunpack.c.h.b16 %v134
    %v631 = vunpack.c.l.b16 %v135
    %v632 = vunpack.c.h.b16 %v135
    %v633 = vunpack.c.l.b16 %v136
    %v634 = vunpack.c.h.b16 %v136
    %v635 = vunpack.c.l.b16 %v137
    %v636 = vunpack.c.h.b16 %v137
    %v637 = vunpack.c.l.b16 %v138
    %v638 = vunpack.c.l.b16 %v139
    %v639 = vunpack.c.h.b16 %v139
    %v640 = vunpack.c.l.b16 %v140
    %v641 = vunpack.c.h.b16 %v140
    %v642 = vunpack.c.l.b16 %v141
    %v643 = vunpack.c.h.b16 %v141
    %v644 = vunpack.c.l.b16 %v142
    %v645 = vunpack.c.h.b16 %v142
    %v646 = vunpack.c.l.b16 %v143
    %v647 = vunpack.c.h.b16 %v143
    %v648 = vunpack.c.l.b16 %v144
    %v649 = vunpack.c.h.b16 %v144
    %v650 = vunpack.c.l.b16 %v145
    %v651 = vunpack.c.h.b16 %v145
    %v652 = vunpack.c.l.b16 %v146
    %v653 = vunpack.c.h.b16 %v146
    %v654 = vunpack.c.l.b16 %v147
    %v655 = vunpack.c.h.b16 %v147
    %v656 = vunpack.c.l.b16 %v148
    %v657 = vunpack.c.h.b16 %v148
    %v658 = vunpack.c.l.b16 %v149
    %v659 = vunpack.c.h.b16 %v149
    %v660 = vunpack.c.l.b16 %v150
    %v661 = vunpack.c.h.b16 %v150
    %v662 = vunpack.c.l.b16 %v151
    %v663 = vunpack.c.h.b16 %v151
    %v664 = vunpack.c.l.b16 %v152
    %v665 = vunpack.c.h.b16 %v152
    %v666 = vunpack.c.l.b16 %v153
    %v667 = vunpack.c.h.b16 %v153
    %v668 = vunpack.c.l.b16 %v154
    %v669 = vunpack.c.h.b16 %v154
    %v670 = vunpack.c.l.b16 %v155
    %v671 = vunpack.c.h.b16 %v155
    %v672 = vunpack.c.l.b16 %v156
    %v673 = vunpack.c.h.b16 %v156
    %v674 = vunpack.c.l.b16 %v157
    %v675 = vunpack.c.h.b16 %v157
    %v676 = vunpack.c.l.b16 %v158
    %v677 = vunpack.c.h.b16 %v158
    %v678 = vunpack.c.l.b16 %v159
    %v679 = vunpack.c.h.b16 %v159
    %v680 = vunpack.c.l.b16 %v160
    %v681 = vunpack.c.h.b16 %v160
    %v682 = vunpack.c.l.b16 %v161
    %v683 = vunpack.c.h.b16 %v161
    %v684 = vunpack.c.l.b16 %v162
    %v685 = vunpack.c.h.b16 %v162
    %v686 = vunpack.c.l.b16 %v163
    %v687 = vunpack.c.h.b16 %v163
    %v688 = vunpack.c.l.b16 %v164
    %v689 = vunpack.c.h.b16 %v164
    %v690 = vunpack.c.l.b16 %v165
    %v691 = vunpack.c.l.b16 %v166
    %v692 = vunpack.c.h.b16 %v166
    %v693 = vunpack.c.l.b16 %v167
    %v694 = vunpack.c.h.b16 %v167
    %v695 = vunpack.c.l.b16 %v168
    %v696 = vunpack.c.h.b16 %v168
    %v697 = vunpack.c.l.b16 %v169
    %v698 = vunpack.c.h.b16 %v169
    %v699 = vunpack.c.l.b16 %v170
    %v700 = vunpack.c.h.b16 %v170
    %v701 = vunpack.c.l.b16 %v171
    %v702 = vunpack.c.h.b16 %v171
    %v703 = vunpack.c.l.b16 %v172
    %v704 = vunpack.c.h.b16 %v172
    %v705 = vunpack.c.l.b16 %v173
    %v706 = vunpack.c.h.b16 %v173
    %v707 = vunpack.c.l.b16 %v174
    %v708 = vunpack.c.h.b16 %v174
    %v709 = vunpack.c.l.b16 %v175
    %v710 = vunpack.c.h.b16 %v175
    %v711 = vunpack.c.l.b16 %v176
    %v712 = vunpack.c.h.b16 %v176
    %v713 = vunpack.c.l.b16 %v177
    %v714 = vunpack.c.h.b16 %v177
    %v715 = vunpack.c.l.b16 %v178
    %v716 = vunpack.c.h.b16 %v178
    %v717 = vunpack.c.l.b16 %v179
    %v718 = vunpack.c.h.b16 %v179
    %v719 = vunpack.c.l.b16 %v180
    %v720 = vunpack.c.h.b16 %v180
    %v721 = vunpack.c.l.b16 %v181
    %v722 = vunpack.c.h.b16 %v181
    %v723 = vunpack.c.l.b16 %v182
    %v724 = vunpack.c.h.b16 %v182
    %v725 = vunpack.c.l.b16 %v183
    %v726 = vunpack.c.h.b16 %v183
    %v727 = vunpack.c.l.b16 %v184
    %v728 = vunpack.c.h.b16 %v184
    %v729 = vunpack.c.l.b16 %v185
    %v730 = vunpack.c.h.b16 %v185
    %v731 = vunpack.c.l.b16 %v186
    %v732 = vunpack.c.h.b16 %v186
    %v733 = vunpack.c.l.b16 %v187
    %v734 = vunpack.c.h.b16 %v187
    %v735 = vunpack.c.l.b16 %v188
    %v736 = vunpack.c.h.b16 %v188
    %v737 = vunpack.c.l.b16 %v189
    %v738 = vunpack.c.h.b16 %v189
    %v739 = vunpack.c.l.b16 %v190
    %v740 = vunpack.c.h.b16 %v190
    %v741 = vunpack.c.l.b16 %v191
    %v742 = vunpack.c.h.b16 %v191
    %v743 = vunpack.c.l.b16 %v192
    %v744 = vunpack.c.l.b16 %v193
    %v745 = vunpack.c.h.b16 %v193
    %v746 = vunpack.c.l.b16 %v194
    %v747 = vunpack.c.h.b16 %v194
    %v748 = vunpack.c.l.b16 %v195
    %v749 = vunpack.c.h.b16 %v195
    %v750 = vunpack.c.l.b16 %v196
    %v751 = vunpack.c.h.b16 %v196
    %v752 = vunpack.c.l.b16 %v197
    %v753 = vunpack.c.h.b16 %v197
    %v754 = vunpack.c.l.b16 %v198
    %v755 = vunpack.c.h.b16 %v198
    %v756 = vunpack.c.l.b16 %v199
    %v757 = vunpack.c.h.b16 %v199
    %v758 = vunpack.c.l.b16 %v200
    %v759 = vunpack.c.h.b16 %v200
    %v760 = vunpack.c.l.b16 %v201
    %v761 = vunpack.c.h.b16 %v201
    %v762 = vunpack.c.l.b16 %v202
    %v763 = vunpack.c.h.b16 %v202
    %v764 = vunpack.c.l.b16 %v203
    %v765 = vunpack.c.h.b16 %v203
    %v766 = vunpack.c.l.b16 %v204
    %v767 = vunpack.c.h.b16 %v204
    %v768 = vunpack.c.l.b16 %v205
    %v769 = vunpack.c.h.b16 %v205
    %v770 = vunpack.c.l.b16 %v206
    %v771 = vunpack.c.h.b16 %v206
    %v772 = vunpack.c.l.b16 %v207
    %v773 = vunpack.c.h.b16 %v207
    %v774 = vunpack.c.l.b16 %v208
    %v775 = vunpack.c.h.b16 %v208
    %v776 = vunpack.c.l.b16 %v209
    %v777 = vunpack.c.h.b16 %v209
    %v778 = vunpack.c.l.b16 %v210
    %v779 = vunpack.c.h.b16 %v210
    %v780 = vunpack.c.l.b16 %v211
    %v781 = vunpack.c.h.b16 %v211
    %v782 = vunpack.c.l.b16 %v212
    %v783 = vunpack.c.h.b16 %v212
    %v784 = vunpack.c.l.b16 %v213
    %v785 = vunpack.c.h.b16 %v213
    %v786 = vunpack.c.l.b16 %v214
    %v787 = vunpack.c.h.b16 %v214
    %v788 = vunpack.c.l.b16 %v215
    %v789 = vunpack.c.h.b16 %v215
    %v790 = vunpack.c.l.b16 %v216
    %v791 = vunpack.c.h.b16 %v216
    %v792 = vunpack.c.l.b16 %v217
    %v793 = vunpack.c.h.b16 %v217
    %v794 = vunpack.c.l.b16 %v218
    %v795 = vunpack.c.h.b16 %v218
    %v796 = vunpack.c.l.b16 %v219
    %v797 = vpack.c.b16 %v479, %v426
    %v798 = vpack.c.b16 %v480, %v427
    %v799 = vpack.c.b16 %v481, %v428
    %v800 = vpack.c.b16 %v482, %v429
    %v801 = vpack.c.b16 %v483, %v430
    %v802 = vpack.c.b16 %v484, %v431
    %v803 = vpack.c.b16 %v485, %v432
    %v804 = vpack.c.b16 %v486, %v433
    %v805 = vpack.c.b16 %v487, %v434
    %v806 = vpack.c.b16 %v488, %v435
    %v807 = vpack.c.b16 %v489, %v436
    %v808 = vpack.c.b16 %v490, %v437
    %v809 = vpack.c.b16 %v491, %v438
    %v810 = vpack.c.b16 %v492, %v439
    %v811 = vpack.c.b16 %v493, %v440
    %v812 = vpack.c.b16 %v494, %v441
    %v813 = vpack.c.b16 %v495, %v442
    %v814 = vpack.c.b16 %v496, %v443
    %v815 = vpack.c.b16 %v497, %v444
    %v816 = vpack.c.b16 %v498, %v445
    %v817 = vpack.c.b16 %v499, %v446
    %v818 = vpack.c.b16 %v500, %v447
    %v819 = vpack.c.b16 %v501, %v448
    %v820 = vpack.c.b16 %v502, %v449
    %v821 = vpack.c.b16 %v503, %v450
    %v822 = vpack.c.b16 %v504, %v451
    %v823 = vpack.c.b16 %v505, %v452
    %v824 = vpack.c.b16 %v506, %v453
    %v825 = vpack.c.b16 %v507, %v454
    %v826 = vpack.c.b16 %v508, %v455
    %v827 = vpack.c.b16 %v509, %v456
    %v828 = vpack.c.b16 %v510, %v457
    %v829 = vpack.c.b16 %v511, %v458
    %v830 = vpack.c.b16 %v512, %v459
    %v831 = vpack.c.b16 %v513, %v460
    %v832 = vpack.c.b16 %v514, %v461
    %v833 = vpack.c.b16 %v515, %v462
    %v834 = vpack.c.b16 %v516, %v463
    %v835 = vpack.c.b16 %v517, %v464
    %v836 = vpack.c.b16 %v518, %v465
    %v837 = vpack.c.b16 %v519, %v466
    %v838 = vpack.c.b16 %v520, %v467
    %v839 = vpack.c.b16 %v521, %v468
    %v840 = vpack.c.b16 %v522, %v469
    %v841 = vpack.c.b16 %v523, %v470
    %v842 = vpack.c.b16 %v524, %v471
    %v843 = vpack.c.b16 %v525, %v472
    %v844 = vpack.c.b16 %v526, %v473
    %v845 = vpack.c.b16 %v527, %v474
    %v846 = vpack.c.b16 %v528, %v475
    %v847 = vpack.c.b16 %v529, %v476
    %v848 = vpack.c.b16 %v530, %v477
    %v849 = vpack.c.b16 %v531, %v478
    %v850 = vpack.c.b16 %v585, %v532
    %v851 = vpack.c.b16 %v586, %v533
    %v852 = vpack.c.b16 %v587, %v534
    %v853 = vpack.c.b16 %v588, %v535
    %v854 = vpack.c.b16 %v589, %v536
    %v855 = vpack.c.b16 %v590, %v537
    %v856 = vpack.c.b16 %v591, %v538
    %v857 = vpack.c.b16 %v592, %v539
    %v858 = vpack.c.b16 %v593, %v540
    %v859 = vpack.c.b16 %v594, %v541
    %v860 = vpack.c.b16 %v595, %v542
    %v861 = vpack.c.b16 %v596, %v543
    %v862 = vpack.c.b16 %v597, %v544
    %v863 = vpack.c.b16 %v598, %v545
    %v864 = vpack.c.b16 %v599, %v546
    %v865 = vpack.c.b16 %v600, %v547
    %v866 = vpack.c.b16 %v601, %v548
    %v867 = vpack.c.b16 %v602, %v549
    %v868 = vpack.c.b16 %v603, %v550
    %v869 = vpack.c.b16 %v604, %v551
    %v870 = vpack.c.b16 %v605, %v552
    %v871 = vpack.c.b16 %v606, %v553
    %v872 = vpack.c.b16 %v607, %v554
    %v873 = vpack.c.b16 %v608, %v555
    %v874 = vpack.c.b16 %v609, %v556
    %v875 = vpack.c.b16 %v610, %v557
    %v876 = vpack.c.b16 %v611, %v558
    %v877 = vpack.c.b16 %v612, %v559
    %v878 = vpack.c.b16 %v613, %v560
    %v879 = vpack.c.b16 %v614, %v561
    %v880 = vpack.c.b16 %v615, %v562
    %v881 = vpack.c.b16 %v616, %v563
    %v882 = vpack.c.b16 %v617, %v564
    %v883 = vpack.c.b16 %v618, %v565
    %v884 = vpack.c.b16 %v619, %v566
    %v885 = vpack.c.b16 %v620, %v567
    %v886 = vpack.c.b16 %v621, %v568
    %v887 = vpack.c.b16 %v622, %v569
    %v888 = vpack.c.b16 %v623, %v570
    %v889 = vpack.c.b16 %v624, %v571
    %v890 = vpack.c.b16 %v625, %v572
    %v891 = vpack.c.b16 %v626, %v573
    %v892 = vpack.c.b16 %v627, %v574
    %v893 = vpack.c.b16 %v628, %v575
    %v894 = vpack.c.b16 %v629, %v576
    %v895 = vpack.c.b16 %v630, %v577
    %v896 = vpack.c.b16 %v631, %v578
    %v897 = vpack.c.b16 %v632, %v579
    %v898 = vpack.c.b16 %v633, %v580
    %v899 = vpack.c.b16 %v634, %v581
    %v900 = vpack.c.b16 %v635, %v582
    %v901 = vpack.c.b16 %v636, %v583
    %v902 = vpack.c.b16 %v637, %v584
    %v903 = vpack.c.b16 %v691, %v638
    %v904 = vpack.c.b16 %v692, %v639
    %v905 = vpack.c.b16 %v693, %v640
    %v906 = vpack.c.b16 %v694, %v641
    %v907 = vpack.c.b16 %v695, %v642
    %v908 = vpack.c.b16 %v696, %v643
    %v909 = vpack.c.b16 %v697, %v644
    %v910 = vpack.c.b16 %v698, %v645
    %v911 = vpack.c.b16 %v699, %v646
    %v912 = vpack.c.b16 %v700, %v647
    %v913 = vpack.c.b16 %v701, %v648
    %v914 = vpack.c.b16 %v702, %v649
    %v915 = vpack.c.b16 %v703, %v650
    %v916 = vpack.c.b16 %v704, %v651
    %v917 = vpack.c.b16 %v705, %v652
    %v918 = vpack.c.b16 %v706, %v653
    %v919 = vpack.c.b16 %v707, %v654
    %v920 = vpack.c.b16 %v708, %v655
    %v921 = vpack.c.b16 %v709, %v656
    %v922 = vpack.c.b16 %v710, %v657
    %v923 = vpack.c.b16 %v711, %v658
    %v924 = vpack.c.b16 %v712, %v659
    %v925 = vpack.c.b16 %v713, %v660
    %v926 = vpack.c.b16 %v714, %v661
    %v927 = vpack.c.b16 %v715, %v662
    %v928 = vpack.c.b16 %v716, %v663
    %v929 = vpack.c.b16 %v717, %v664
    %v930 = vpack.c.b16 %v718, %v665
    %v931 = vpack.c.b16 %v719, %v666
    %v932 = vpack.c.b16 %v720, %v667
    %v933 = vpack.c.b16 %v721, %v668
    %v934 = vpack.c.b16 %v722, %v669
    %v935 = vpack.c.b16 %v723, %v670
    %v936 = vpack.c.b16 %v724, %v671
    %v937 = vpack.c.b16 %v725, %v672
    %v938 = vpack.c.b16 %v726, %v673
    %v939 = vpack.c.b16 %v727, %v674
    %v940 = vpack.c.b16 %v728, %v675
    %v941 = vpack.c.b16 %v729, %v676
    %v942 = vpack.c.b16 %v730, %v677
    %v943 = vpack.c.b16 %v731, %v678
    %v944 = vpack.c.b16 %v732, %v679
    %v945 = vpack.c.b16 %v733, %v680
    %v946 = vpack.c.b16 %v734, %v681
    %v947 = vpack.c.b16 %v735, %v682
    %v948 = vpack.c.b16 %v736, %v683
    %v949 = vpack.c.b16 %v737, %v684
    %v950 = vpack.c.b16 %v738, %v685
    %v951 = vpack.c.b16 %v739, %v686
    %v952 = vpack.c.b16 %v740, %v687
    %v953 = vpack.c.b16 %v741, %v688
    %v954 = vpack.c.b16 %v742, %v689
    %v955 = vpack.c.b16 %v743, %v690
    %v956 = vpack.c.b16 %v744, %v744
    %v957 = vpack.c.b16 %v745, %v745
    %v958 = vpack.c.b16 %v746, %v746
    %v959 = vpack.c.b16 %v747, %v747
    %v960 = vpack.c.b16 %v748, %v748
    %v961 = vpack.c.b16 %v749, %v749
    %v962 = vpack.c.b16 %v750, %v750
    %v963 = vpack.c.b16 %v751, %v751
    %v964 = vpack.c.b16 %v752, %v752
    %v965 = vpack.c.b16 %v753, %v753
    %v966 = vpack.c.b16 %v754, %v754
    %v967 = vpack.c.b16 %v755, %v755
    %v968 = vpack.c.b16 %v756, %v756
    %v969 = vpack.c.b16 %v757, %v757
    %v970 = vpack.c.b16 %v758, %v758
    %v971 = vpack.c.b16 %v759, %v759
    %v972 = vpack.c.b16 %v760, %v760
    %v973 = vpack.c.b16 %v761, %v761
    %v974 = vpack.c.b16 %v762, %v762
    %v975 = vpack.c.b16 %v763, %v763
    %v976 = vpack.c.b16 %v764, %v764
    %v977 = vpack.c.b16 %v765, %v765
    %v978 = vpack.c.b16 %v766, %v766
    %v979 = vpack.c.b16 %v767, %v767
    %v980 = vpack.c.b16 %v768, %v768
    %v981 = vpack.c.b16 %v769, %v769
    %v982 = vpack.c.b16 %v770, %v770
    %v983 = vpack.c.b16 %v771, %v771
    %v984 = vpack.c.b16 %v772, %v772
    %v985 = vpack.c.b16 %v773, %v773
    %v986 = vpack.c.b16 %v774, %v774
    %v987 = vpack.c.b16 %v775, %v775
    %v988 = vpack.c.b16 %v776, %v776
    %v989 = vpack.c.b16 %v777, %v777
    %v990 = vpack.c.b16 %v778, %v778
    %v991 = vpack.c.b16 %v779, %v779
    %v992 = vpack.c.b16 %v780, %v780
    %v993 = vpack.c.b16 %v781, %v781
    %v994 = vpack.c.b16 %v782, %v782
    %v995 = vpack.c.b16 %v783, %v783
    %v996 = vpack.c.b16 %v784, %v784
    %v997 = vpack.c.b16 %v785, %v785
    %v998 = vpack.c.b16 %v786, %v786
    %v999 = vpack.c.b16 %v787, %v787
    %v1000 = vpack.c.b16 %v788, %v788
    %v1001 = vpack.c.b16 %v789, %v789
    %v1002 = vpack.c.b16 %v790, %v790
    %v1003 = vpack.c.b16 %v791, %v791
    %v1004 = vpack.c.b16 %v792, %v792
    %v1005 = vpack.c.b16 %v793, %v793
    %v1006 = vpack.c.b16 %v794, %v794
    %v1007 = vpack.c.b16 %v795, %v795
    %v1008 = vpack.c.b16 %v796, %v796
    %vm1168 = vcmask 400384
    %v1170 = vsel %vm1168, %v236, 0
    %vm1172 = vcmask 1040384
    %v1173 = vsel 0, 4294967295, 65535
    %v1174 = vsel %vm1172, %v1173, 0
    %v1176 = vand.u32 %v956, %v1174
    %v1179 = vand.u32 %v957, %v1174
    %v1182 = vand.u32 %v958, %v1174
    %v1185 = vand.u32 %v959, %v1174
    %v1188 = vand.u32 %v960, %v1174
    %v1191 = vand.u32 %v961, %v1174
    %v1194 = vand.u32 %v962, %v1174
    %v1197 = vand.u32 %v963, %v1174
    %v1200 = vand.u32 %v964, %v1174
    %v1203 = vand.u32 %v965, %v1174
    %v1206 = vand.u32 %v966, %v1174
    %v1209 = vand.u32 %v967, %v1174
    %v1212 = vand.u32 %v968, %v1174
    %v1215 = vand.u32 %v969, %v1174
    %v1218 = vand.u32 %v970, %v1174
    %v1221 = vand.u32 %v971, %v1174
    %v1224 = vand.u32 %v972, %v1174
    %v1227 = vand.u32 %v973, %v1174
    %v1230 = vand.u32 %v974, %v1174
    %v1233 = vand.u32 %v975, %v1174
    %v1236 = vand.u32 %v976, %v1174
    %v1239 = vand.u32 %v977, %v1174
    %v1242 = vand.u32 %v978, %v1174
    %v1245 = vand.u32 %v979, %v1174
    %v1248 = vand.u32 %v980, %v1174
    %v1251 = vand.u32 %v981, %v1174
    %v1254 = vand.u32 %v982, %v1174
    %v1257 = vand.u32 %v983, %v1174
    %v1260 = vand.u32 %v984, %v1174
    %v1263 = vand.u32 %v985, %v1174
    %v1266 = vand.u32 %v986, %v1174
    %v1269 = vand.u32 %v987, %v1174
    %v1272 = vand.u32 %v988, %v1174
    %v1275 = vand.u32 %v989, %v1174
    %v1278 = vand.u32 %v990, %v1174
    %v1281 = vand.u32 %v991, %v1174
    %v1284 = vand.u32 %v992, %v1174
    %v1287 = vand.u32 %v993, %v1174
    %v1290 = vand.u32 %v994, %v1174
    %v1293 = vand.u32 %v995, %v1174
    %v1296 = vand.u32 %v996, %v1174
    %v1299 = vand.u32 %v997, %v1174
    %v1302 = vand.u32 %v998, %v1174
    %v1305 = vand.u32 %v999, %v1174
    %v1308 = vand.u32 %v1000, %v1174
    %v1311 = vand.u32 %v1001, %v1174
    %v1314 = vand.u32 %v1002, %v1174
    %v1317 = vand.u32 %v1003, %v1174
    %v1320 = vand.u32 %v1004, %v1174
    %v1323 = vand.u32 %v1005, %v1174
    %v1326 = vand.u32 %v1006, %v1174
    %v1329 = vand.u32 %v1007, %v1174
    %v1332 = vand.u32 %v1008, %v1174
    %1334 = vmatprep.subr.bf16.mxu0 %v798
    %1335 = vmatpush1.bf16.msra.mxu0 %v797
    %1336 = vmatprep.subr.bf16.mxu0 %v851
    %1337 = vmatpush1.bf16.msra.mxu0 %v850
    %1338 = vmatprep.subr.bf16.mxu0 %v904
    %1339 = vmatpush1.bf16.msra.mxu0 %v903
    %1340 = vmatprep.subr.bf16.mxu0 %v1179
    %1341 = vmatpush1.bf16.msra.mxu0 %v1176
    %1342 = vmatprep.subr.bf16.mxu0 0
    %1343 = vmatpush1.bf16.msra.mxu0 0
    %1344 = vmatprep.subr.bf16.mxu0 0
    %1345 = vmatpush1.bf16.msra.mxu0 0
    %1346 = vmatprep.subr.bf16.mxu0 0
    %1347 = vmatpush1.bf16.msra.mxu0 0
    %1348 = vmatprep.subr.bf16.mxu0 0
    %1349 = vmatpush1.bf16.msra.mxu0 0
    %1350 = vmatprep.subr.bf16.mxu0 0
    %1351 = vmatpush1.bf16.msra.mxu0 0
    %1352 = vmatprep.subr.bf16.mxu0 0
    %1353 = vmatpush1.bf16.msra.mxu0 0
    %1354 = vmatprep.subr.bf16.mxu0 0
    %1355 = vmatpush1.bf16.msra.mxu0 0
    %1356 = vmatprep.subr.bf16.mxu0 0
    %1357 = vmatpush1.bf16.msra.mxu0 0
    %1358 = vmatprep.subr.bf16.mxu0 0
    %1359 = vmatpush1.bf16.msra.mxu0 0
    %1360 = vmatprep.subr.bf16.mxu0 0
    %1361 = vmatpush1.bf16.msra.mxu0 0
    %1362 = vmatprep.subr.bf16.mxu0 0
    %1363 = vmatpush1.bf16.msra.mxu0 0
    %1364 = vmatprep.subr.bf16.mxu0 0
    %1365 = vmatpush1.bf16.msra.mxu0 0
    %1366 = vmatprep.mubr.bf16.mxu0 0
    %1367 = vmatmul.mubr.bf16.gmra.mrb[0].mxu0 %v1170
    %v1368 = vpop.f32.mrb[0].mxu0
    %v1369 = vadd.f32 %v225, %v1368
    %v1370 = vpop.f32.mrb[0].mxu0
    %v1371 = vadd.f32 %v225, %v1370
    %v1372 = vpop.f32.mrb[0].mxu0
    %v1373 = vadd.f32 %v230, %v1372
    %v1374 = vpop.f32.mrb[0].mxu0
    %v1375 = vadd.f32 %v230, %v1374
    %1376 = vdwg.mxu0
    %1377 = vmatprep.subr.bf16.mxu0 %v800
    %1378 = vmatpush1.bf16.msra.mxu0 %v799
    %1379 = vmatprep.subr.bf16.mxu0 %v853
    %1380 = vmatpush1.bf16.msra.mxu0 %v852
    %1381 = vmatprep.subr.bf16.mxu0 %v906
    %1382 = vmatpush1.bf16.msra.mxu0 %v905
    %1383 = vmatprep.subr.bf16.mxu0 %v1185
    %1384 = vmatpush1.bf16.msra.mxu0 %v1182
    %1385 = vmatprep.subr.bf16.mxu0 0
    %1386 = vmatpush1.bf16.msra.mxu0 0
    %1387 = vmatprep.subr.bf16.mxu0 0
    %1388 = vmatpush1.bf16.msra.mxu0 0
    %1389 = vmatprep.subr.bf16.mxu0 0
    %1390 = vmatpush1.bf16.msra.mxu0 0
    %1391 = vmatprep.subr.bf16.mxu0 0
    %1392 = vmatpush1.bf16.msra.mxu0 0
    %1393 = vmatprep.subr.bf16.mxu0 0
    %1394 = vmatpush1.bf16.msra.mxu0 0
    %1395 = vmatprep.subr.bf16.mxu0 0
    %1396 = vmatpush1.bf16.msra.mxu0 0
    %1397 = vmatprep.subr.bf16.mxu0 0
    %1398 = vmatpush1.bf16.msra.mxu0 0
    %1399 = vmatprep.subr.bf16.mxu0 0
    %1400 = vmatpush1.bf16.msra.mxu0 0
    %1401 = vmatprep.subr.bf16.mxu0 0
    %1402 = vmatpush1.bf16.msra.mxu0 0
    %1403 = vmatprep.subr.bf16.mxu0 0
    %1404 = vmatpush1.bf16.msra.mxu0 0
    %1405 = vmatprep.subr.bf16.mxu0 0
    %1406 = vmatpush1.bf16.msra.mxu0 0
    %1407 = vmatprep.subr.bf16.mxu0 0
    %1408 = vmatpush1.bf16.msra.mxu0 0
    %1409 = vmatprep.mubr.bf16.mxu0 0
    %1410 = vmatmul.mubr.bf16.gmra.mrb[0].mxu0 %v1170
    %v1411 = vpop.f32.mrb[0].mxu0
    %v1412 = vadd.f32 %v225, %v1411
    %v1413 = vpop.f32.mrb[0].mxu0
    %v1414 = vadd.f32 %v225, %v1413
    %v1415 = vpop.f32.mrb[0].mxu0
    %v1416 = vadd.f32 %v230, %v1415
    %v1417 = vpop.f32.mrb[0].mxu0
    %v1418 = vadd.f32 %v230, %v1417
    %1419 = vdwg.mxu0
    %1420 = vmatprep.subr.bf16.mxu0 %v802
    %1421 = vmatpush1.bf16.msra.mxu0 %v801
    %1422 = vmatprep.subr.bf16.mxu0 %v855
    %1423 = vmatpush1.bf16.msra.mxu0 %v854
    %1424 = vmatprep.subr.bf16.mxu0 %v908
    %1425 = vmatpush1.bf16.msra.mxu0 %v907
    %1426 = vmatprep.subr.bf16.mxu0 %v1191
    %1427 = vmatpush1.bf16.msra.mxu0 %v1188
    %1428 = vmatprep.subr.bf16.mxu0 0
    %1429 = vmatpush1.bf16.msra.mxu0 0
    %1430 = vmatprep.subr.bf16.mxu0 0
    %1431 = vmatpush1.bf16.msra.mxu0 0
    %1432 = vmatprep.subr.bf16.mxu0 0
    %1433 = vmatpush1.bf16.msra.mxu0 0
    %1434 = vmatprep.subr.bf16.mxu0 0
    %1435 = vmatpush1.bf16.msra.mxu0 0
    %1436 = vmatprep.subr.bf16.mxu0 0
    %1437 = vmatpush1.bf16.msra.mxu0 0
    %1438 = vmatprep.subr.bf16.mxu0 0
    %1439 = vmatpush1.bf16.msra.mxu0 0
    %1440 = vmatprep.subr.bf16.mxu0 0
    %1441 = vmatpush1.bf16.msra.mxu0 0
    %1442 = vmatprep.subr.bf16.mxu0 0
    %1443 = vmatpush1.bf16.msra.mxu0 0
    %1444 = vmatprep.subr.bf16.mxu0 0
    %1445 = vmatpush1.bf16.msra.mxu0 0
    %1446 = vmatprep.subr.bf16.mxu0 0
    %1447 = vmatpush1.bf16.msra.mxu0 0
    %1448 = vmatprep.subr.bf16.mxu0 0
    %1449 = vmatpush1.bf16.msra.mxu0 0
    %1450 = vmatprep.subr.bf16.mxu0 0
    %1451 = vmatpush1.bf16.msra.mxu0 0
    %1452 = vmatprep.mubr.bf16.mxu0 0
    %1453 = vmatmul.mubr.bf16.gmra.mrb[0].mxu0 %v1170
    %v1454 = vpop.f32.mrb[0].mxu0
    %v1455 = vadd.f32 %v225, %v1454
    %v1456 = vpop.f32.mrb[0].mxu0
    %v1457 = vadd.f32 %v225, %v1456
    %v1458 = vpop.f32.mrb[0].mxu0
    %v1459 = vadd.f32 %v230, %v1458
    %v1460 = vpop.f32.mrb[0].mxu0
    %v1461 = vadd.f32 %v230, %v1460
    %1462 = vdwg.mxu0
    %1463 = vmatprep.subr.bf16.mxu0 %v804
    %1464 = vmatpush1.bf16.msra.mxu0 %v803
    %1465 = vmatprep.subr.bf16.mxu0 %v857
    %1466 = vmatpush1.bf16.msra.mxu0 %v856
    %1467 = vmatprep.subr.bf16.mxu0 %v910
    %1468 = vmatpush1.bf16.msra.mxu0 %v909
    %1469 = vmatprep.subr.bf16.mxu0 %v1197
    %1470 = vmatpush1.bf16.msra.mxu0 %v1194
    %1471 = vmatprep.subr.bf16.mxu0 0
    %1472 = vmatpush1.bf16.msra.mxu0 0
    %1473 = vmatprep.subr.bf16.mxu0 0
    %1474 = vmatpush1.bf16.msra.mxu0 0
    %1475 = vmatprep.subr.bf16.mxu0 0
    %1476 = vmatpush1.bf16.msra.mxu0 0
    %1477 = vmatprep.subr.bf16.mxu0 0
    %1478 = vmatpush1.bf16.msra.mxu0 0
    %1479 = vmatprep.subr.bf16.mxu0 0
    %1480 = vmatpush1.bf16.msra.mxu0 0
    %1481 = vmatprep.subr.bf16.mxu0 0
    %1482 = vmatpush1.bf16.msra.mxu0 0
    %1483 = vmatprep.subr.bf16.mxu0 0
    %1484 = vmatpush1.bf16.msra.mxu0 0
    %1485 = vmatprep.subr.bf16.mxu0 0
    %1486 = vmatpush1.bf16.msra.mxu0 0
    %1487 = vmatprep.subr.bf16.mxu0 0
    %1488 = vmatpush1.bf16.msra.mxu0 0
    %1489 = vmatprep.subr.bf16.mxu0 0
    %1490 = vmatpush1.bf16.msra.mxu0 0
    %1491 = vmatprep.subr.bf16.mxu0 0
    %1492 = vmatpush1.bf16.msra.mxu0 0
    %1493 = vmatprep.subr.bf16.mxu0 0
    %1494 = vmatpush1.bf16.msra.mxu0 0
    %1495 = vmatprep.mubr.bf16.mxu0 0
    %1496 = vmatmul.mubr.bf16.gmra.mrb[0].mxu0 %v1170
    %v1497 = vpop.f32.mrb[0].mxu0
    %v1498 = vadd.f32 %v225, %v1497
    %v1499 = vpop.f32.mrb[0].mxu0
    %v1500 = vadd.f32 %v225, %v1499
    %v1501 = vpop.f32.mrb[0].mxu0
    %v1502 = vadd.f32 %v230, %v1501
    %v1503 = vpop.f32.mrb[0].mxu0
    %v1504 = vadd.f32 %v230, %v1503
    %1505 = vdwg.mxu0
    %1506 = vmatprep.subr.bf16.mxu0 %v806
    %1507 = vmatpush1.bf16.msra.mxu0 %v805
    %1508 = vmatprep.subr.bf16.mxu0 %v859
    %1509 = vmatpush1.bf16.msra.mxu0 %v858
    %1510 = vmatprep.subr.bf16.mxu0 %v912
    %1511 = vmatpush1.bf16.msra.mxu0 %v911
    %1512 = vmatprep.subr.bf16.mxu0 %v1203
    %1513 = vmatpush1.bf16.msra.mxu0 %v1200
    %1514 = vmatprep.subr.bf16.mxu0 0
    %1515 = vmatpush1.bf16.msra.mxu0 0
    %1516 = vmatprep.subr.bf16.mxu0 0
    %1517 = vmatpush1.bf16.msra.mxu0 0
    %1518 = vmatprep.subr.bf16.mxu0 0
    %1519 = vmatpush1.bf16.msra.mxu0 0
    %1520 = vmatprep.subr.bf16.mxu0 0
    %1521 = vmatpush1.bf16.msra.mxu0 0
    %1522 = vmatprep.subr.bf16.mxu0 0
    %1523 = vmatpush1.bf16.msra.mxu0 0
    %1524 = vmatprep.subr.bf16.mxu0 0
    %1525 = vmatpush1.bf16.msra.mxu0 0
    %1526 = vmatprep.subr.bf16.mxu0 0
    %1527 = vmatpush1.bf16.msra.mxu0 0
    %1528 = vmatprep.subr.bf16.mxu0 0
    %1529 = vmatpush1.bf16.msra.mxu0 0
    %1530 = vmatprep.subr.bf16.mxu0 0
    %1531 = vmatpush1.bf16.msra.mxu0 0
    %1532 = vmatprep.subr.bf16.mxu0 0
    %1533 = vmatpush1.bf16.msra.mxu0 0
    %1534 = vmatprep.subr.bf16.mxu0 0
    %1535 = vmatpush1.bf16.msra.mxu0 0
    %1536 = vmatprep.subr.bf16.mxu0 0
    %1537 = vmatpush1.bf16.msra.mxu0 0
    %1538 = vmatprep.mubr.bf16.mxu0 0
    %1539 = vmatmul.mubr.bf16.gmra.mrb[0].mxu0 %v1170
    %v1540 = vpop.f32.mrb[0].mxu0
    %v1541 = vadd.f32 %v225, %v1540
    %v1542 = vpop.f32.mrb[0].mxu0
    %v1543 = vadd.f32 %v225, %v1542
    %v1544 = vpop.f32.mrb[0].mxu0
    %v1545 = vadd.f32 %v230, %v1544
    %v1546 = vpop.f32.mrb[0].mxu0
    %v1547 = vadd.f32 %v230, %v1546
    %1548 = vdwg.mxu0
    %1549 = vmatprep.subr.bf16.mxu0 %v808
    %1550 = vmatpush1.bf16.msra.mxu0 %v807
    %1551 = vmatprep.subr.bf16.mxu0 %v861
    %1552 = vmatpush1.bf16.msra.mxu0 %v860
    %1553 = vmatprep.subr.bf16.mxu0 %v914
    %1554 = vmatpush1.bf16.msra.mxu0 %v913
    %1555 = vmatprep.subr.bf16.mxu0 %v1209
    %1556 = vmatpush1.bf16.msra.mxu0 %v1206
    %1557 = vmatprep.subr.bf16.mxu0 0
    %1558 = vmatpush1.bf16.msra.mxu0 0
    %1559 = vmatprep.subr.bf16.mxu0 0
    %1560 = vmatpush1.bf16.msra.mxu0 0
    %1561 = vmatprep.subr.bf16.mxu0 0
    %1562 = vmatpush1.bf16.msra.mxu0 0
    %1563 = vmatprep.subr.bf16.mxu0 0
    %1564 = vmatpush1.bf16.msra.mxu0 0
    %1565 = vmatprep.subr.bf16.mxu0 0
    %1566 = vmatpush1.bf16.msra.mxu0 0
    %1567 = vmatprep.subr.bf16.mxu0 0
    %1568 = vmatpush1.bf16.msra.mxu0 0
    %1569 = vmatprep.subr.bf16.mxu0 0
    %1570 = vmatpush1.bf16.msra.mxu0 0
    %1571 = vmatprep.subr.bf16.mxu0 0
    %1572 = vmatpush1.bf16.msra.mxu0 0
    %1573 = vmatprep.subr.bf16.mxu0 0
    %1574 = vmatpush1.bf16.msra.mxu0 0
    %1575 = vmatprep.subr.bf16.mxu0 0
    %1576 = vmatpush1.bf16.msra.mxu0 0
    %1577 = vmatprep.subr.bf16.mxu0 0
    %1578 = vmatpush1.bf16.msra.mxu0 0
    %1579 = vmatprep.subr.bf16.mxu0 0
    %1580 = vmatpush1.bf16.msra.mxu0 0
    %1581 = vmatprep.mubr.bf16.mxu0 0
    %1582 = vmatmul.mubr.bf16.gmra.mrb[0].mxu0 %v1170
    %v1583 = vpop.f32.mrb[0].mxu0
    %v1584 = vadd.f32 %v225, %v1583
    %v1585 = vpop.f32.mrb[0].mxu0
    %v1586 = vadd.f32 %v225, %v1585
    %v1587 = vpop.f32.mrb[0].mxu0
    %v1588 = vadd.f32 %v230, %v1587
    %v1589 = vpop.f32.mrb[0].mxu0
    %v1590 = vadd.f32 %v230, %v1589
    %1591 = vdwg.mxu0
    %1592 = vmatprep.subr.bf16.mxu0 %v810
    %1593 = vmatpush1.bf16.msra.mxu0 %v809
    %1594 = vmatprep.subr.bf16.mxu0 %v863
    %1595 = vmatpush1.bf16.msra.mxu0 %v862
    %1596 = vmatprep.subr.bf16.mxu0 %v916
    %1597 = vmatpush1.bf16.msra.mxu0 %v915
    %1598 = vmatprep.subr.bf16.mxu0 %v1215
    %1599 = vmatpush1.bf16.msra.mxu0 %v1212
    %1600 = vmatprep.subr.bf16.mxu0 0
    %1601 = vmatpush1.bf16.msra.mxu0 0
    %1602 = vmatprep.subr.bf16.mxu0 0
    %1603 = vmatpush1.bf16.msra.mxu0 0
    %1604 = vmatprep.subr.bf16.mxu0 0
    %1605 = vmatpush1.bf16.msra.mxu0 0
    %1606 = vmatprep.subr.bf16.mxu0 0
    %1607 = vmatpush1.bf16.msra.mxu0 0
    %1608 = vmatprep.subr.bf16.mxu0 0
    %1609 = vmatpush1.bf16.msra.mxu0 0
    %1610 = vmatprep.subr.bf16.mxu0 0
    %1611 = vmatpush1.bf16.msra.mxu0 0
    %1612 = vmatprep.subr.bf16.mxu0 0
    %1613 = vmatpush1.bf16.msra.mxu0 0
    %1614 = vmatprep.subr.bf16.mxu0 0
    %1615 = vmatpush1.bf16.msra.mxu0 0
    %1616 = vmatprep.subr.bf16.mxu0 0
    %1617 = vmatpush1.bf16.msra.mxu0 0
    %1618 = vmatprep.subr.bf16.mxu0 0
    %1619 = vmatpush1.bf16.msra.mxu0 0
    %1620 = vmatprep.subr.bf16.mxu0 0
    %1621 = vmatpush1.bf16.msra.mxu0 0
    %1622 = vmatprep.subr.bf16.mxu0 0
    %1623 = vmatpush1.bf16.msra.mxu0 0
    %1624 = vmatprep.mubr.bf16.mxu0 0
    %1625 = vmatmul.mubr.bf16.gmra.mrb[0].mxu0 %v1170
    %v1626 = vpop.f32.mrb[0].mxu0
    %v1627 = vadd.f32 %v225, %v1626
    %v1628 = vpop.f32.mrb[0].mxu0
    %v1629 = vadd.f32 %v225, %v1628
    %v1630 = vpop.f32.mrb[0].mxu0
    %v1631 = vadd.f32 %v230, %v1630
    %v1632 = vpop.f32.mrb[0].mxu0
    %v1633 = vadd.f32 %v230, %v1632
    %1634 = vdwg.mxu0
    %1635 = vmatprep.subr.bf16.mxu0 %v812
    %1636 = vmatpush1.bf16.msra.mxu0 %v811
    %1637 = vmatprep.subr.bf16.mxu0 %v865
    %1638 = vmatpush1.bf16.msra.mxu0 %v864
    %1639 = vmatprep.subr.bf16.mxu0 %v918
    %1640 = vmatpush1.bf16.msra.mxu0 %v917
    %1641 = vmatprep.subr.bf16.mxu0 %v1221
    %1642 = vmatpush1.bf16.msra.mxu0 %v1218
    %1643 = vmatprep.subr.bf16.mxu0 0
    %1644 = vmatpush1.bf16.msra.mxu0 0
    %1645 = vmatprep.subr.bf16.mxu0 0
    %1646 = vmatpush1.bf16.msra.mxu0 0
    %1647 = vmatprep.subr.bf16.mxu0 0
    %1648 = vmatpush1.bf16.msra.mxu0 0
    %1649 = vmatprep.subr.bf16.mxu0 0
    %1650 = vmatpush1.bf16.msra.mxu0 0
    %1651 = vmatprep.subr.bf16.mxu0 0
    %1652 = vmatpush1.bf16.msra.mxu0 0
    %1653 = vmatprep.subr.bf16.mxu0 0
    %1654 = vmatpush1.bf16.msra.mxu0 0
    %1655 = vmatprep.subr.bf16.mxu0 0
    %1656 = vmatpush1.bf16.msra.mxu0 0
    %1657 = vmatprep.subr.bf16.mxu0 0
    %1658 = vmatpush1.bf16.msra.mxu0 0
    %1659 = vmatprep.subr.bf16.mxu0 0
    %1660 = vmatpush1.bf16.msra.mxu0 0
    %1661 = vmatprep.subr.bf16.mxu0 0
    %1662 = vmatpush1.bf16.msra.mxu0 0
    %1663 = vmatprep.subr.bf16.mxu0 0
    %1664 = vmatpush1.bf16.msra.mxu0 0
    %1665 = vmatprep.subr.bf16.mxu0 0
    %1666 = vmatpush1.bf16.msra.mxu0 0
    %1667 = vmatprep.mubr.bf16.mxu0 0
    %1668 = vmatmul.mubr.bf16.gmra.mrb[0].mxu0 %v1170
    %v1669 = vpop.f32.mrb[0].mxu0
    %v1670 = vadd.f32 %v225, %v1669
    %v1671 = vpop.f32.mrb[0].mxu0
    %v1672 = vadd.f32 %v225, %v1671
    %v1673 = vpop.f32.mrb[0].mxu0
    %v1674 = vadd.f32 %v230, %v1673
    %v1675 = vpop.f32.mrb[0].mxu0
    %v1676 = vadd.f32 %v230, %v1675
    %1677 = vdwg.mxu0
    %1678 = vmatprep.subr.bf16.mxu0 %v814
    %1679 = vmatpush1.bf16.msra.mxu0 %v813
    %1680 = vmatprep.subr.bf16.mxu0 %v867
    %1681 = vmatpush1.bf16.msra.mxu0 %v866
    %1682 = vmatprep.subr.bf16.mxu0 %v920
    %1683 = vmatpush1.bf16.msra.mxu0 %v919
    %1684 = vmatprep.subr.bf16.mxu0 %v1227
    %1685 = vmatpush1.bf16.msra.mxu0 %v1224
    %1686 = vmatprep.subr.bf16.mxu0 0
    %1687 = vmatpush1.bf16.msra.mxu0 0
    %1688 = vmatprep.subr.bf16.mxu0 0
    %1689 = vmatpush1.bf16.msra.mxu0 0
    %1690 = vmatprep.subr.bf16.mxu0 0
    %1691 = vmatpush1.bf16.msra.mxu0 0
    %1692 = vmatprep.subr.bf16.mxu0 0
    %1693 = vmatpush1.bf16.msra.mxu0 0
    %1694 = vmatprep.subr.bf16.mxu0 0
    %1695 = vmatpush1.bf16.msra.mxu0 0
    %1696 = vmatprep.subr.bf16.mxu0 0
    %1697 = vmatpush1.bf16.msra.mxu0 0
    %1698 = vmatprep.subr.bf16.mxu0 0
    %1699 = vmatpush1.bf16.msra.mxu0 0
    %1700 = vmatprep.subr.bf16.mxu0 0
    %1701 = vmatpush1.bf16.msra.mxu0 0
    %1702 = vmatprep.subr.bf16.mxu0 0
    %1703 = vmatpush1.bf16.msra.mxu0 0
    %1704 = vmatprep.subr.bf16.mxu0 0
    %1705 = vmatpush1.bf16.msra.mxu0 0
    %1706 = vmatprep.subr.bf16.mxu0 0
    %1707 = vmatpush1.bf16.msra.mxu0 0
    %1708 = vmatprep.subr.bf16.mxu0 0
    %1709 = vmatpush1.bf16.msra.mxu0 0
    %1710 = vmatprep.mubr.bf16.mxu0 0
    %1711 = vmatmul.mubr.bf16.gmra.mrb[0].mxu0 %v1170
    %v1712 = vpop.f32.mrb[0].mxu0
    %v1713 = vadd.f32 %v225, %v1712
    %v1714 = vpop.f32.mrb[0].mxu0
    %v1715 = vadd.f32 %v225, %v1714
    %v1716 = vpop.f32.mrb[0].mxu0
    %v1717 = vadd.f32 %v230, %v1716
    %v1718 = vpop.f32.mrb[0].mxu0
    %v1719 = vadd.f32 %v230, %v1718
    %1720 = vdwg.mxu0
    %1721 = vmatprep.subr.bf16.mxu0 %v816
    %1722 = vmatpush1.bf16.msra.mxu0 %v815
    %1723 = vmatprep.subr.bf16.mxu0 %v869
    %1724 = vmatpush1.bf16.msra.mxu0 %v868
    %1725 = vmatprep.subr.bf16.mxu0 %v922
    %1726 = vmatpush1.bf16.msra.mxu0 %v921
    %1727 = vmatprep.subr.bf16.mxu0 %v1233
    %1728 = vmatpush1.bf16.msra.mxu0 %v1230
    %1729 = vmatprep.subr.bf16.mxu0 0
    %1730 = vmatpush1.bf16.msra.mxu0 0
    %1731 = vmatprep.subr.bf16.mxu0 0
    %1732 = vmatpush1.bf16.msra.mxu0 0
    %1733 = vmatprep.subr.bf16.mxu0 0
    %1734 = vmatpush1.bf16.msra.mxu0 0
    %1735 = vmatprep.subr.bf16.mxu0 0
    %1736 = vmatpush1.bf16.msra.mxu0 0
    %1737 = vmatprep.subr.bf16.mxu0 0
    %1738 = vmatpush1.bf16.msra.mxu0 0
    %1739 = vmatprep.subr.bf16.mxu0 0
    %1740 = vmatpush1.bf16.msra.mxu0 0
    %1741 = vmatprep.subr.bf16.mxu0 0
    %1742 = vmatpush1.bf16.msra.mxu0 0
    %1743 = vmatprep.subr.bf16.mxu0 0
    %1744 = vmatpush1.bf16.msra.mxu0 0
    %1745 = vmatprep.subr.bf16.mxu0 0
    %1746 = vmatpush1.bf16.msra.mxu0 0
    %1747 = vmatprep.subr.bf16.mxu0 0
    %1748 = vmatpush1.bf16.msra.mxu0 0
    %1749 = vmatprep.subr.bf16.mxu0 0
    %1750 = vmatpush1.bf16.msra.mxu0 0
    %1751 = vmatprep.subr.bf16.mxu0 0
    %1752 = vmatpush1.bf16.msra.mxu0 0
    %1753 = vmatprep.mubr.bf16.mxu0 0
    %1754 = vmatmul.mubr.bf16.gmra.mrb[0].mxu0 %v1170
    %v1755 = vpop.f32.mrb[0].mxu0
    %v1756 = vadd.f32 %v225, %v1755
    %v1757 = vpop.f32.mrb[0].mxu0
    %v1758 = vadd.f32 %v225, %v1757
    %v1759 = vpop.f32.mrb[0].mxu0
    %v1760 = vadd.f32 %v230, %v1759
    %v1761 = vpop.f32.mrb[0].mxu0
    %v1762 = vadd.f32 %v230, %v1761
    %1763 = vdwg.mxu0
    %1764 = vmatprep.subr.bf16.mxu0 %v818
    %1765 = vmatpush1.bf16.msra.mxu0 %v817
    %1766 = vmatprep.subr.bf16.mxu0 %v871
    %1767 = vmatpush1.bf16.msra.mxu0 %v870
    %1768 = vmatprep.subr.bf16.mxu0 %v924
    %1769 = vmatpush1.bf16.msra.mxu0 %v923
    %1770 = vmatprep.subr.bf16.mxu0 %v1239
    %1771 = vmatpush1.bf16.msra.mxu0 %v1236
    %1772 = vmatprep.subr.bf16.mxu0 0
    %1773 = vmatpush1.bf16.msra.mxu0 0
    %1774 = vmatprep.subr.bf16.mxu0 0
    %1775 = vmatpush1.bf16.msra.mxu0 0
    %1776 = vmatprep.subr.bf16.mxu0 0
    %1777 = vmatpush1.bf16.msra.mxu0 0
    %1778 = vmatprep.subr.bf16.mxu0 0
    %1779 = vmatpush1.bf16.msra.mxu0 0
    %1780 = vmatprep.subr.bf16.mxu0 0
    %1781 = vmatpush1.bf16.msra.mxu0 0
    %1782 = vmatprep.subr.bf16.mxu0 0
    %1783 = vmatpush1.bf16.msra.mxu0 0
    %1784 = vmatprep.subr.bf16.mxu0 0
    %1785 = vmatpush1.bf16.msra.mxu0 0
    %1786 = vmatprep.subr.bf16.mxu0 0
    %1787 = vmatpush1.bf16.msra.mxu0 0
    %1788 = vmatprep.subr.bf16.mxu0 0
    %1789 = vmatpush1.bf16.msra.mxu0 0
    %1790 = vmatprep.subr.bf16.mxu0 0
    %1791 = vmatpush1.bf16.msra.mxu0 0
    %1792 = vmatprep.subr.bf16.mxu0 0
    %1793 = vmatpush1.bf16.msra.mxu0 0
    %1794 = vmatprep.subr.bf16.mxu0 0
    %1795 = vmatpush1.bf16.msra.mxu0 0
    %1796 = vmatprep.mubr.bf16.mxu0 0
    %1797 = vmatmul.mubr.bf16.gmra.mrb[0].mxu0 %v1170
    %v1798 = vpop.f32.mrb[0].mxu0
    %v1799 = vadd.f32 %v225, %v1798
    %v1800 = vpop.f32.mrb[0].mxu0
    %v1801 = vadd.f32 %v225, %v1800
    %v1802 = vpop.f32.mrb[0].mxu0
    %v1803 = vadd.f32 %v230, %v1802
    %v1804 = vpop.f32.mrb[0].mxu0
    %v1805 = vadd.f32 %v230, %v1804
    %1806 = vdwg.mxu0
    %1807 = vmatprep.subr.bf16.mxu0 %v820
    %1808 = vmatpush1.bf16.msra.mxu0 %v819
    %1809 = vmatprep.subr.bf16.mxu0 %v873
    %1810 = vmatpush1.bf16.msra.mxu0 %v872
    %1811 = vmatprep.subr.bf16.mxu0 %v926
    %1812 = vmatpush1.bf16.msra.mxu0 %v925
    %1813 = vmatprep.subr.bf16.mxu0 %v1245
    %1814 = vmatpush1.bf16.msra.mxu0 %v1242
    %1815 = vmatprep.subr.bf16.mxu0 0
    %1816 = vmatpush1.bf16.msra.mxu0 0
    %1817 = vmatprep.subr.bf16.mxu0 0
    %1818 = vmatpush1.bf16.msra.mxu0 0
    %1819 = vmatprep.subr.bf16.mxu0 0
    %1820 = vmatpush1.bf16.msra.mxu0 0
    %1821 = vmatprep.subr.bf16.mxu0 0
    %1822 = vmatpush1.bf16.msra.mxu0 0
    %1823 = vmatprep.subr.bf16.mxu0 0
    %1824 = vmatpush1.bf16.msra.mxu0 0
    %1825 = vmatprep.subr.bf16.mxu0 0
    %1826 = vmatpush1.bf16.msra.mxu0 0
    %1827 = vmatprep.subr.bf16.mxu0 0
    %1828 = vmatpush1.bf16.msra.mxu0 0
    %1829 = vmatprep.subr.bf16.mxu0 0
    %1830 = vmatpush1.bf16.msra.mxu0 0
    %1831 = vmatprep.subr.bf16.mxu0 0
    %1832 = vmatpush1.bf16.msra.mxu0 0
    %1833 = vmatprep.subr.bf16.mxu0 0
    %1834 = vmatpush1.bf16.msra.mxu0 0
    %1835 = vmatprep.subr.bf16.mxu0 0
    %1836 = vmatpush1.bf16.msra.mxu0 0
    %1837 = vmatprep.subr.bf16.mxu0 0
    %1838 = vmatpush1.bf16.msra.mxu0 0
    %1839 = vmatprep.mubr.bf16.mxu0 0
    %1840 = vmatmul.mubr.bf16.gmra.mrb[0].mxu0 %v1170
    %v1841 = vpop.f32.mrb[0].mxu0
    %v1842 = vadd.f32 %v225, %v1841
    %v1843 = vpop.f32.mrb[0].mxu0
    %v1844 = vadd.f32 %v225, %v1843
    %v1845 = vpop.f32.mrb[0].mxu0
    %v1846 = vadd.f32 %v230, %v1845
    %v1847 = vpop.f32.mrb[0].mxu0
    %v1848 = vadd.f32 %v230, %v1847
    %1849 = vdwg.mxu0
    %1850 = vmatprep.subr.bf16.mxu0 %v822
    %1851 = vmatpush1.bf16.msra.mxu0 %v821
    %1852 = vmatprep.subr.bf16.mxu0 %v875
    %1853 = vmatpush1.bf16.msra.mxu0 %v874
    %1854 = vmatprep.subr.bf16.mxu0 %v928
    %1855 = vmatpush1.bf16.msra.mxu0 %v927
    %1856 = vmatprep.subr.bf16.mxu0 %v1251
    %1857 = vmatpush1.bf16.msra.mxu0 %v1248
    %1858 = vmatprep.subr.bf16.mxu0 0
    %1859 = vmatpush1.bf16.msra.mxu0 0
    %1860 = vmatprep.subr.bf16.mxu0 0
    %1861 = vmatpush1.bf16.msra.mxu0 0
    %1862 = vmatprep.subr.bf16.mxu0 0
    %1863 = vmatpush1.bf16.msra.mxu0 0
    %1864 = vmatprep.subr.bf16.mxu0 0
    %1865 = vmatpush1.bf16.msra.mxu0 0
    %1866 = vmatprep.subr.bf16.mxu0 0
    %1867 = vmatpush1.bf16.msra.mxu0 0
    %1868 = vmatprep.subr.bf16.mxu0 0
    %1869 = vmatpush1.bf16.msra.mxu0 0
    %1870 = vmatprep.subr.bf16.mxu0 0
    %1871 = vmatpush1.bf16.msra.mxu0 0
    %1872 = vmatprep.subr.bf16.mxu0 0
    %1873 = vmatpush1.bf16.msra.mxu0 0
    %1874 = vmatprep.subr.bf16.mxu0 0
    %1875 = vmatpush1.bf16.msra.mxu0 0
    %1876 = vmatprep.subr.bf16.mxu0 0
    %1877 = vmatpush1.bf16.msra.mxu0 0
    %1878 = vmatprep.subr.bf16.mxu0 0
    %1879 = vmatpush1.bf16.msra.mxu0 0
    %1880 = vmatprep.subr.bf16.mxu0 0
    %1881 = vmatpush1.bf16.msra.mxu0 0
    %1882 = vmatprep.mubr.bf16.mxu0 0
    %1883 = vmatmul.mubr.bf16.gmra.mrb[0].mxu0 %v1170
    %v1884 = vpop.f32.mrb[0].mxu0
    %v1885 = vadd.f32 %v225, %v1884
    %v1886 = vpop.f32.mrb[0].mxu0
    %v1887 = vadd.f32 %v225, %v1886
    %v1888 = vpop.f32.mrb[0].mxu0
    %v1889 = vadd.f32 %v230, %v1888
    %v1890 = vpop.f32.mrb[0].mxu0
    %v1891 = vadd.f32 %v230, %v1890
    %1892 = vdwg.mxu0
    %1893 = vmatprep.subr.bf16.mxu0 %v824
    %1894 = vmatpush1.bf16.msra.mxu0 %v823
    %1895 = vmatprep.subr.bf16.mxu0 %v877
    %1896 = vmatpush1.bf16.msra.mxu0 %v876
    %1897 = vmatprep.subr.bf16.mxu0 %v930
    %1898 = vmatpush1.bf16.msra.mxu0 %v929
    %1899 = vmatprep.subr.bf16.mxu0 %v1257
    %1900 = vmatpush1.bf16.msra.mxu0 %v1254
    %1901 = vmatprep.subr.bf16.mxu0 0
    %1902 = vmatpush1.bf16.msra.mxu0 0
    %1903 = vmatprep.subr.bf16.mxu0 0
    %1904 = vmatpush1.bf16.msra.mxu0 0
    %1905 = vmatprep.subr.bf16.mxu0 0
    %1906 = vmatpush1.bf16.msra.mxu0 0
    %1907 = vmatprep.subr.bf16.mxu0 0
    %1908 = vmatpush1.bf16.msra.mxu0 0
    %1909 = vmatprep.subr.bf16.mxu0 0
    %1910 = vmatpush1.bf16.msra.mxu0 0
    %1911 = vmatprep.subr.bf16.mxu0 0
    %1912 = vmatpush1.bf16.msra.mxu0 0
    %1913 = vmatprep.subr.bf16.mxu0 0
    %1914 = vmatpush1.bf16.msra.mxu0 0
    %1915 = vmatprep.subr.bf16.mxu0 0
    %1916 = vmatpush1.bf16.msra.mxu0 0
    %1917 = vmatprep.subr.bf16.mxu0 0
    %1918 = vmatpush1.bf16.msra.mxu0 0
    %1919 = vmatprep.subr.bf16.mxu0 0
    %1920 = vmatpush1.bf16.msra.mxu0 0
    %1921 = vmatprep.subr.bf16.mxu0 0
    %1922 = vmatpush1.bf16.msra.mxu0 0
    %1923 = vmatprep.subr.bf16.mxu0 0
    %1924 = vmatpush1.bf16.msra.mxu0 0
    %1925 = vmatprep.mubr.bf16.mxu0 0
    %1926 = vmatmul.mubr.bf16.gmra.mrb[0].mxu0 %v1170
    %v1927 = vpop.f32.mrb[0].mxu0
    %v1928 = vadd.f32 %v225, %v1927
    %v1929 = vpop.f32.mrb[0].mxu0
    %v1930 = vadd.f32 %v225, %v1929
    %v1931 = vpop.f32.mrb[0].mxu0
    %v1932 = vadd.f32 %v230, %v1931
    %v1933 = vpop.f32.mrb[0].mxu0
    %v1934 = vadd.f32 %v230, %v1933
    %1935 = vdwg.mxu0
    %1936 = vmatprep.subr.bf16.mxu0 %v826
    %1937 = vmatpush1.bf16.msra.mxu0 %v825
    %1938 = vmatprep.subr.bf16.mxu0 %v879
    %1939 = vmatpush1.bf16.msra.mxu0 %v878
    %1940 = vmatprep.subr.bf16.mxu0 %v932
    %1941 = vmatpush1.bf16.msra.mxu0 %v931
    %1942 = vmatprep.subr.bf16.mxu0 %v1263
    %1943 = vmatpush1.bf16.msra.mxu0 %v1260
    %1944 = vmatprep.subr.bf16.mxu0 0
    %1945 = vmatpush1.bf16.msra.mxu0 0
    %1946 = vmatprep.subr.bf16.mxu0 0
    %1947 = vmatpush1.bf16.msra.mxu0 0
    %1948 = vmatprep.subr.bf16.mxu0 0
    %1949 = vmatpush1.bf16.msra.mxu0 0
    %1950 = vmatprep.subr.bf16.mxu0 0
    %1951 = vmatpush1.bf16.msra.mxu0 0
    %1952 = vmatprep.subr.bf16.mxu0 0
    %1953 = vmatpush1.bf16.msra.mxu0 0
    %1954 = vmatprep.subr.bf16.mxu0 0
    %1955 = vmatpush1.bf16.msra.mxu0 0
    %1956 = vmatprep.subr.bf16.mxu0 0
    %1957 = vmatpush1.bf16.msra.mxu0 0
    %1958 = vmatprep.subr.bf16.mxu0 0
    %1959 = vmatpush1.bf16.msra.mxu0 0
    %1960 = vmatprep.subr.bf16.mxu0 0
    %1961 = vmatpush1.bf16.msra.mxu0 0
    %1962 = vmatprep.subr.bf16.mxu0 0
    %1963 = vmatpush1.bf16.msra.mxu0 0
    %1964 = vmatprep.subr.bf16.mxu0 0
    %1965 = vmatpush1.bf16.msra.mxu0 0
    %1966 = vmatprep.subr.bf16.mxu0 0
    %1967 = vmatpush1.bf16.msra.mxu0 0
    %1968 = vmatprep.mubr.bf16.mxu0 0
    %1969 = vmatmul.mubr.bf16.gmra.mrb[0].mxu0 %v1170
    %v1970 = vpop.f32.mrb[0].mxu0
    %v1971 = vadd.f32 %v225, %v1970
    %v1972 = vpop.f32.mrb[0].mxu0
    %v1973 = vadd.f32 %v225, %v1972
    %v1974 = vpop.f32.mrb[0].mxu0
    %v1975 = vadd.f32 %v230, %v1974
    %v1976 = vpop.f32.mrb[0].mxu0
    %v1977 = vadd.f32 %v230, %v1976
    %1978 = vdwg.mxu0
    %1979 = vmatprep.subr.bf16.mxu0 %v828
    %1980 = vmatpush1.bf16.msra.mxu0 %v827
    %1981 = vmatprep.subr.bf16.mxu0 %v881
    %1982 = vmatpush1.bf16.msra.mxu0 %v880
    %1983 = vmatprep.subr.bf16.mxu0 %v934
    %1984 = vmatpush1.bf16.msra.mxu0 %v933
    %1985 = vmatprep.subr.bf16.mxu0 %v1269
    %1986 = vmatpush1.bf16.msra.mxu0 %v1266
    %1987 = vmatprep.subr.bf16.mxu0 0
    %1988 = vmatpush1.bf16.msra.mxu0 0
    %1989 = vmatprep.subr.bf16.mxu0 0
    %1990 = vmatpush1.bf16.msra.mxu0 0
    %1991 = vmatprep.subr.bf16.mxu0 0
    %1992 = vmatpush1.bf16.msra.mxu0 0
    %1993 = vmatprep.subr.bf16.mxu0 0
    %1994 = vmatpush1.bf16.msra.mxu0 0
    %1995 = vmatprep.subr.bf16.mxu0 0
    %1996 = vmatpush1.bf16.msra.mxu0 0
    %1997 = vmatprep.subr.bf16.mxu0 0
    %1998 = vmatpush1.bf16.msra.mxu0 0
    %1999 = vmatprep.subr.bf16.mxu0 0
    %2000 = vmatpush1.bf16.msra.mxu0 0
    %2001 = vmatprep.subr.bf16.mxu0 0
    %2002 = vmatpush1.bf16.msra.mxu0 0
    %2003 = vmatprep.subr.bf16.mxu0 0
    %2004 = vmatpush1.bf16.msra.mxu0 0
    %2005 = vmatprep.subr.bf16.mxu0 0
    %2006 = vmatpush1.bf16.msra.mxu0 0
    %2007 = vmatprep.subr.bf16.mxu0 0
    %2008 = vmatpush1.bf16.msra.mxu0 0
    %2009 = vmatprep.subr.bf16.mxu0 0
    %2010 = vmatpush1.bf16.msra.mxu0 0
    %2011 = vmatprep.mubr.bf16.mxu0 0
    %2012 = vmatmul.mubr.bf16.gmra.mrb[0].mxu0 %v1170
    %v2013 = vpop.f32.mrb[0].mxu0
    %v2014 = vadd.f32 %v225, %v2013
    %v2015 = vpop.f32.mrb[0].mxu0
    %v2016 = vadd.f32 %v225, %v2015
    %v2017 = vpop.f32.mrb[0].mxu0
    %v2018 = vadd.f32 %v230, %v2017
    %v2019 = vpop.f32.mrb[0].mxu0
    %v2020 = vadd.f32 %v230, %v2019
    %2021 = vdwg.mxu0
    %2022 = vmatprep.subr.bf16.mxu0 %v830
    %2023 = vmatpush1.bf16.msra.mxu0 %v829
    %2024 = vmatprep.subr.bf16.mxu0 %v883
    %2025 = vmatpush1.bf16.msra.mxu0 %v882
    %2026 = vmatprep.subr.bf16.mxu0 %v936
    %2027 = vmatpush1.bf16.msra.mxu0 %v935
    %2028 = vmatprep.subr.bf16.mxu0 %v1275
    %2029 = vmatpush1.bf16.msra.mxu0 %v1272
    %2030 = vmatprep.subr.bf16.mxu0 0
    %2031 = vmatpush1.bf16.msra.mxu0 0
    %2032 = vmatprep.subr.bf16.mxu0 0
    %2033 = vmatpush1.bf16.msra.mxu0 0
    %2034 = vmatprep.subr.bf16.mxu0 0
    %2035 = vmatpush1.bf16.msra.mxu0 0
    %2036 = vmatprep.subr.bf16.mxu0 0
    %2037 = vmatpush1.bf16.msra.mxu0 0
    %2038 = vmatprep.subr.bf16.mxu0 0
    %2039 = vmatpush1.bf16.msra.mxu0 0
    %2040 = vmatprep.subr.bf16.mxu0 0
    %2041 = vmatpush1.bf16.msra.mxu0 0
    %2042 = vmatprep.subr.bf16.mxu0 0
    %2043 = vmatpush1.bf16.msra.mxu0 0
    %2044 = vmatprep.subr.bf16.mxu0 0
    %2045 = vmatpush1.bf16.msra.mxu0 0
    %2046 = vmatprep.subr.bf16.mxu0 0
    %2047 = vmatpush1.bf16.msra.mxu0 0
    %2048 = vmatprep.subr.bf16.mxu0 0
    %2049 = vmatpush1.bf16.msra.mxu0 0
    %2050 = vmatprep.subr.bf16.mxu0 0
    %2051 = vmatpush1.bf16.msra.mxu0 0
    %2052 = vmatprep.subr.bf16.mxu0 0
    %2053 = vmatpush1.bf16.msra.mxu0 0
    %2054 = vmatprep.mubr.bf16.mxu0 0
    %2055 = vmatmul.mubr.bf16.gmra.mrb[0].mxu0 %v1170
    %v2056 = vpop.f32.mrb[0].mxu0
    %v2057 = vadd.f32 %v225, %v2056
    %v2058 = vpop.f32.mrb[0].mxu0
    %v2059 = vadd.f32 %v225, %v2058
    %v2060 = vpop.f32.mrb[0].mxu0
    %v2061 = vadd.f32 %v230, %v2060
    %v2062 = vpop.f32.mrb[0].mxu0
    %v2063 = vadd.f32 %v230, %v2062
    %2064 = vdwg.mxu0
    %2065 = vmatprep.subr.bf16.mxu0 %v832
    %2066 = vmatpush1.bf16.msra.mxu0 %v831
    %2067 = vmatprep.subr.bf16.mxu0 %v885
    %2068 = vmatpush1.bf16.msra.mxu0 %v884
    %2069 = vmatprep.subr.bf16.mxu0 %v938
    %2070 = vmatpush1.bf16.msra.mxu0 %v937
    %2071 = vmatprep.subr.bf16.mxu0 %v1281
    %2072 = vmatpush1.bf16.msra.mxu0 %v1278
    %2073 = vmatprep.subr.bf16.mxu0 0
    %2074 = vmatpush1.bf16.msra.mxu0 0
    %2075 = vmatprep.subr.bf16.mxu0 0
    %2076 = vmatpush1.bf16.msra.mxu0 0
    %2077 = vmatprep.subr.bf16.mxu0 0
    %2078 = vmatpush1.bf16.msra.mxu0 0
    %2079 = vmatprep.subr.bf16.mxu0 0
    %2080 = vmatpush1.bf16.msra.mxu0 0
    %2081 = vmatprep.subr.bf16.mxu0 0
    %2082 = vmatpush1.bf16.msra.mxu0 0
    %2083 = vmatprep.subr.bf16.mxu0 0
    %2084 = vmatpush1.bf16.msra.mxu0 0
    %2085 = vmatprep.subr.bf16.mxu0 0
    %2086 = vmatpush1.bf16.msra.mxu0 0
    %2087 = vmatprep.subr.bf16.mxu0 0
    %2088 = vmatpush1.bf16.msra.mxu0 0
    %2089 = vmatprep.subr.bf16.mxu0 0
    %2090 = vmatpush1.bf16.msra.mxu0 0
    %2091 = vmatprep.subr.bf16.mxu0 0
    %2092 = vmatpush1.bf16.msra.mxu0 0
    %2093 = vmatprep.subr.bf16.mxu0 0
    %2094 = vmatpush1.bf16.msra.mxu0 0
    %2095 = vmatprep.subr.bf16.mxu0 0
    %2096 = vmatpush1.bf16.msra.mxu0 0
    %2097 = vmatprep.mubr.bf16.mxu0 0
    %2098 = vmatmul.mubr.bf16.gmra.mrb[0].mxu0 %v1170
    %v2099 = vpop.f32.mrb[0].mxu0
    %v2100 = vadd.f32 %v225, %v2099
    %v2101 = vpop.f32.mrb[0].mxu0
    %v2102 = vadd.f32 %v225, %v2101
    %v2103 = vpop.f32.mrb[0].mxu0
    %v2104 = vadd.f32 %v230, %v2103
    %v2105 = vpop.f32.mrb[0].mxu0
    %v2106 = vadd.f32 %v230, %v2105
    %2107 = vdwg.mxu0
    %2108 = vmatprep.subr.bf16.mxu0 %v834
    %2109 = vmatpush1.bf16.msra.mxu0 %v833
    %2110 = vmatprep.subr.bf16.mxu0 %v887
    %2111 = vmatpush1.bf16.msra.mxu0 %v886
    %2112 = vmatprep.subr.bf16.mxu0 %v940
    %2113 = vmatpush1.bf16.msra.mxu0 %v939
    %2114 = vmatprep.subr.bf16.mxu0 %v1287
    %2115 = vmatpush1.bf16.msra.mxu0 %v1284
    %2116 = vmatprep.subr.bf16.mxu0 0
    %2117 = vmatpush1.bf16.msra.mxu0 0
    %2118 = vmatprep.subr.bf16.mxu0 0
    %2119 = vmatpush1.bf16.msra.mxu0 0
    %2120 = vmatprep.subr.bf16.mxu0 0
    %2121 = vmatpush1.bf16.msra.mxu0 0
    %2122 = vmatprep.subr.bf16.mxu0 0
    %2123 = vmatpush1.bf16.msra.mxu0 0
    %2124 = vmatprep.subr.bf16.mxu0 0
    %2125 = vmatpush1.bf16.msra.mxu0 0
    %2126 = vmatprep.subr.bf16.mxu0 0
    %2127 = vmatpush1.bf16.msra.mxu0 0
    %2128 = vmatprep.subr.bf16.mxu0 0
    %2129 = vmatpush1.bf16.msra.mxu0 0
    %2130 = vmatprep.subr.bf16.mxu0 0
    %2131 = vmatpush1.bf16.msra.mxu0 0
    %2132 = vmatprep.subr.bf16.mxu0 0
    %2133 = vmatpush1.bf16.msra.mxu0 0
    %2134 = vmatprep.subr.bf16.mxu0 0
    %2135 = vmatpush1.bf16.msra.mxu0 0
    %2136 = vmatprep.subr.bf16.mxu0 0
    %2137 = vmatpush1.bf16.msra.mxu0 0
    %2138 = vmatprep.subr.bf16.mxu0 0
    %2139 = vmatpush1.bf16.msra.mxu0 0
    %2140 = vmatprep.mubr.bf16.mxu0 0
    %2141 = vmatmul.mubr.bf16.gmra.mrb[0].mxu0 %v1170
    %v2142 = vpop.f32.mrb[0].mxu0
    %v2143 = vadd.f32 %v225, %v2142
    %v2144 = vpop.f32.mrb[0].mxu0
    %v2145 = vadd.f32 %v225, %v2144
    %v2146 = vpop.f32.mrb[0].mxu0
    %v2147 = vadd.f32 %v230, %v2146
    %v2148 = vpop.f32.mrb[0].mxu0
    %v2149 = vadd.f32 %v230, %v2148
    %2150 = vdwg.mxu0
    %2151 = vmatprep.subr.bf16.mxu0 %v836
    %2152 = vmatpush1.bf16.msra.mxu0 %v835
    %2153 = vmatprep.subr.bf16.mxu0 %v889
    %2154 = vmatpush1.bf16.msra.mxu0 %v888
    %2155 = vmatprep.subr.bf16.mxu0 %v942
    %2156 = vmatpush1.bf16.msra.mxu0 %v941
    %2157 = vmatprep.subr.bf16.mxu0 %v1293
    %2158 = vmatpush1.bf16.msra.mxu0 %v1290
    %2159 = vmatprep.subr.bf16.mxu0 0
    %2160 = vmatpush1.bf16.msra.mxu0 0
    %2161 = vmatprep.subr.bf16.mxu0 0
    %2162 = vmatpush1.bf16.msra.mxu0 0
    %2163 = vmatprep.subr.bf16.mxu0 0
    %2164 = vmatpush1.bf16.msra.mxu0 0
    %2165 = vmatprep.subr.bf16.mxu0 0
    %2166 = vmatpush1.bf16.msra.mxu0 0
    %2167 = vmatprep.subr.bf16.mxu0 0
    %2168 = vmatpush1.bf16.msra.mxu0 0
    %2169 = vmatprep.subr.bf16.mxu0 0
    %2170 = vmatpush1.bf16.msra.mxu0 0
    %2171 = vmatprep.subr.bf16.mxu0 0
    %2172 = vmatpush1.bf16.msra.mxu0 0
    %2173 = vmatprep.subr.bf16.mxu0 0
    %2174 = vmatpush1.bf16.msra.mxu0 0
    %2175 = vmatprep.subr.bf16.mxu0 0
    %2176 = vmatpush1.bf16.msra.mxu0 0
    %2177 = vmatprep.subr.bf16.mxu0 0
    %2178 = vmatpush1.bf16.msra.mxu0 0
    %2179 = vmatprep.subr.bf16.mxu0 0
    %2180 = vmatpush1.bf16.msra.mxu0 0
    %2181 = vmatprep.subr.bf16.mxu0 0
    %2182 = vmatpush1.bf16.msra.mxu0 0
    %2183 = vmatprep.mubr.bf16.mxu0 0
    %2184 = vmatmul.mubr.bf16.gmra.mrb[0].mxu0 %v1170
    %v2185 = vpop.f32.mrb[0].mxu0
    %v2186 = vadd.f32 %v225, %v2185
    %v2187 = vpop.f32.mrb[0].mxu0
    %v2188 = vadd.f32 %v225, %v2187
    %v2189 = vpop.f32.mrb[0].mxu0
    %v2190 = vadd.f32 %v230, %v2189
    %v2191 = vpop.f32.mrb[0].mxu0
    %v2192 = vadd.f32 %v230, %v2191
    %2193 = vdwg.mxu0
    %2194 = vmatprep.subr.bf16.mxu0 %v838
    %2195 = vmatpush1.bf16.msra.mxu0 %v837
    %2196 = vmatprep.subr.bf16.mxu0 %v891
    %2197 = vmatpush1.bf16.msra.mxu0 %v890
    %2198 = vmatprep.subr.bf16.mxu0 %v944
    %2199 = vmatpush1.bf16.msra.mxu0 %v943
    %2200 = vmatprep.subr.bf16.mxu0 %v1299
    %2201 = vmatpush1.bf16.msra.mxu0 %v1296
    %2202 = vmatprep.subr.bf16.mxu0 0
    %2203 = vmatpush1.bf16.msra.mxu0 0
    %2204 = vmatprep.subr.bf16.mxu0 0
    %2205 = vmatpush1.bf16.msra.mxu0 0
    %2206 = vmatprep.subr.bf16.mxu0 0
    %2207 = vmatpush1.bf16.msra.mxu0 0
    %2208 = vmatprep.subr.bf16.mxu0 0
    %2209 = vmatpush1.bf16.msra.mxu0 0
    %2210 = vmatprep.subr.bf16.mxu0 0
    %2211 = vmatpush1.bf16.msra.mxu0 0
    %2212 = vmatprep.subr.bf16.mxu0 0
    %2213 = vmatpush1.bf16.msra.mxu0 0
    %2214 = vmatprep.subr.bf16.mxu0 0
    %2215 = vmatpush1.bf16.msra.mxu0 0
    %2216 = vmatprep.subr.bf16.mxu0 0
    %2217 = vmatpush1.bf16.msra.mxu0 0
    %2218 = vmatprep.subr.bf16.mxu0 0
    %2219 = vmatpush1.bf16.msra.mxu0 0
    %2220 = vmatprep.subr.bf16.mxu0 0
    %2221 = vmatpush1.bf16.msra.mxu0 0
    %2222 = vmatprep.subr.bf16.mxu0 0
    %2223 = vmatpush1.bf16.msra.mxu0 0
    %2224 = vmatprep.subr.bf16.mxu0 0
    %2225 = vmatpush1.bf16.msra.mxu0 0
    %2226 = vmatprep.mubr.bf16.mxu0 0
    %2227 = vmatmul.mubr.bf16.gmra.mrb[0].mxu0 %v1170
    %v2228 = vpop.f32.mrb[0].mxu0
    %v2229 = vadd.f32 %v225, %v2228
    %v2230 = vpop.f32.mrb[0].mxu0
    %v2231 = vadd.f32 %v225, %v2230
    %v2232 = vpop.f32.mrb[0].mxu0
    %v2233 = vadd.f32 %v230, %v2232
    %v2234 = vpop.f32.mrb[0].mxu0
    %v2235 = vadd.f32 %v230, %v2234
    %2236 = vdwg.mxu0
    %2237 = vmatprep.subr.bf16.mxu0 %v840
    %2238 = vmatpush1.bf16.msra.mxu0 %v839
    %2239 = vmatprep.subr.bf16.mxu0 %v893
    %2240 = vmatpush1.bf16.msra.mxu0 %v892
    %2241 = vmatprep.subr.bf16.mxu0 %v946
    %2242 = vmatpush1.bf16.msra.mxu0 %v945
    %2243 = vmatprep.subr.bf16.mxu0 %v1305
    %2244 = vmatpush1.bf16.msra.mxu0 %v1302
    %2245 = vmatprep.subr.bf16.mxu0 0
    %2246 = vmatpush1.bf16.msra.mxu0 0
    %2247 = vmatprep.subr.bf16.mxu0 0
    %2248 = vmatpush1.bf16.msra.mxu0 0
    %2249 = vmatprep.subr.bf16.mxu0 0
    %2250 = vmatpush1.bf16.msra.mxu0 0
    %2251 = vmatprep.subr.bf16.mxu0 0
    %2252 = vmatpush1.bf16.msra.mxu0 0
    %2253 = vmatprep.subr.bf16.mxu0 0
    %2254 = vmatpush1.bf16.msra.mxu0 0
    %2255 = vmatprep.subr.bf16.mxu0 0
    %2256 = vmatpush1.bf16.msra.mxu0 0
    %2257 = vmatprep.subr.bf16.mxu0 0
    %2258 = vmatpush1.bf16.msra.mxu0 0
    %2259 = vmatprep.subr.bf16.mxu0 0
    %2260 = vmatpush1.bf16.msra.mxu0 0
    %2261 = vmatprep.subr.bf16.mxu0 0
    %2262 = vmatpush1.bf16.msra.mxu0 0
    %2263 = vmatprep.subr.bf16.mxu0 0
    %2264 = vmatpush1.bf16.msra.mxu0 0
    %2265 = vmatprep.subr.bf16.mxu0 0
    %2266 = vmatpush1.bf16.msra.mxu0 0
    %2267 = vmatprep.subr.bf16.mxu0 0
    %2268 = vmatpush1.bf16.msra.mxu0 0
    %2269 = vmatprep.mubr.bf16.mxu0 0
    %2270 = vmatmul.mubr.bf16.gmra.mrb[0].mxu0 %v1170
    %v2271 = vpop.f32.mrb[0].mxu0
    %v2272 = vadd.f32 %v225, %v2271
    %v2273 = vpop.f32.mrb[0].mxu0
    %v2274 = vadd.f32 %v225, %v2273
    %v2275 = vpop.f32.mrb[0].mxu0
    %v2276 = vadd.f32 %v230, %v2275
    %v2277 = vpop.f32.mrb[0].mxu0
    %v2278 = vadd.f32 %v230, %v2277
    %2279 = vdwg.mxu0
    %2280 = vmatprep.subr.bf16.mxu0 %v842
    %2281 = vmatpush1.bf16.msra.mxu0 %v841
    %2282 = vmatprep.subr.bf16.mxu0 %v895
    %2283 = vmatpush1.bf16.msra.mxu0 %v894
    %2284 = vmatprep.subr.bf16.mxu0 %v948
    %2285 = vmatpush1.bf16.msra.mxu0 %v947
    %2286 = vmatprep.subr.bf16.mxu0 %v1311
    %2287 = vmatpush1.bf16.msra.mxu0 %v1308
    %2288 = vmatprep.subr.bf16.mxu0 0
    %2289 = vmatpush1.bf16.msra.mxu0 0
    %2290 = vmatprep.subr.bf16.mxu0 0
    %2291 = vmatpush1.bf16.msra.mxu0 0
    %2292 = vmatprep.subr.bf16.mxu0 0
    %2293 = vmatpush1.bf16.msra.mxu0 0
    %2294 = vmatprep.subr.bf16.mxu0 0
    %2295 = vmatpush1.bf16.msra.mxu0 0
    %2296 = vmatprep.subr.bf16.mxu0 0
    %2297 = vmatpush1.bf16.msra.mxu0 0
    %2298 = vmatprep.subr.bf16.mxu0 0
    %2299 = vmatpush1.bf16.msra.mxu0 0
    %2300 = vmatprep.subr.bf16.mxu0 0
    %2301 = vmatpush1.bf16.msra.mxu0 0
    %2302 = vmatprep.subr.bf16.mxu0 0
    %2303 = vmatpush1.bf16.msra.mxu0 0
    %2304 = vmatprep.subr.bf16.mxu0 0
    %2305 = vmatpush1.bf16.msra.mxu0 0
    %2306 = vmatprep.subr.bf16.mxu0 0
    %2307 = vmatpush1.bf16.msra.mxu0 0
    %2308 = vmatprep.subr.bf16.mxu0 0
    %2309 = vmatpush1.bf16.msra.mxu0 0
    %2310 = vmatprep.subr.bf16.mxu0 0
    %2311 = vmatpush1.bf16.msra.mxu0 0
    %2312 = vmatprep.mubr.bf16.mxu0 0
    %2313 = vmatmul.mubr.bf16.gmra.mrb[0].mxu0 %v1170
    %v2314 = vpop.f32.mrb[0].mxu0
    %v2315 = vadd.f32 %v225, %v2314
    %v2316 = vpop.f32.mrb[0].mxu0
    %v2317 = vadd.f32 %v225, %v2316
    %v2318 = vpop.f32.mrb[0].mxu0
    %v2319 = vadd.f32 %v230, %v2318
    %v2320 = vpop.f32.mrb[0].mxu0
    %v2321 = vadd.f32 %v230, %v2320
    %2322 = vdwg.mxu0
    %2323 = vmatprep.subr.bf16.mxu0 %v844
    %2324 = vmatpush1.bf16.msra.mxu0 %v843
    %2325 = vmatprep.subr.bf16.mxu0 %v897
    %2326 = vmatpush1.bf16.msra.mxu0 %v896
    %2327 = vmatprep.subr.bf16.mxu0 %v950
    %2328 = vmatpush1.bf16.msra.mxu0 %v949
    %2329 = vmatprep.subr.bf16.mxu0 %v1317
    %2330 = vmatpush1.bf16.msra.mxu0 %v1314
    %2331 = vmatprep.subr.bf16.mxu0 0
    %2332 = vmatpush1.bf16.msra.mxu0 0
    %2333 = vmatprep.subr.bf16.mxu0 0
    %2334 = vmatpush1.bf16.msra.mxu0 0
    %2335 = vmatprep.subr.bf16.mxu0 0
    %2336 = vmatpush1.bf16.msra.mxu0 0
    %2337 = vmatprep.subr.bf16.mxu0 0
    %2338 = vmatpush1.bf16.msra.mxu0 0
    %2339 = vmatprep.subr.bf16.mxu0 0
    %2340 = vmatpush1.bf16.msra.mxu0 0
    %2341 = vmatprep.subr.bf16.mxu0 0
    %2342 = vmatpush1.bf16.msra.mxu0 0
    %2343 = vmatprep.subr.bf16.mxu0 0
    %2344 = vmatpush1.bf16.msra.mxu0 0
    %2345 = vmatprep.subr.bf16.mxu0 0
    %2346 = vmatpush1.bf16.msra.mxu0 0
    %2347 = vmatprep.subr.bf16.mxu0 0
    %2348 = vmatpush1.bf16.msra.mxu0 0
    %2349 = vmatprep.subr.bf16.mxu0 0
    %2350 = vmatpush1.bf16.msra.mxu0 0
    %2351 = vmatprep.subr.bf16.mxu0 0
    %2352 = vmatpush1.bf16.msra.mxu0 0
    %2353 = vmatprep.subr.bf16.mxu0 0
    %2354 = vmatpush1.bf16.msra.mxu0 0
    %2355 = vmatprep.mubr.bf16.mxu0 0
    %2356 = vmatmul.mubr.bf16.gmra.mrb[0].mxu0 %v1170
    %v2357 = vpop.f32.mrb[0].mxu0
    %v2358 = vadd.f32 %v225, %v2357
    %v2359 = vpop.f32.mrb[0].mxu0
    %v2360 = vadd.f32 %v225, %v2359
    %v2361 = vpop.f32.mrb[0].mxu0
    %v2362 = vadd.f32 %v230, %v2361
    %v2363 = vpop.f32.mrb[0].mxu0
    %v2364 = vadd.f32 %v230, %v2363
    %2365 = vdwg.mxu0
    %2366 = vmatprep.subr.bf16.mxu0 %v846
    %2367 = vmatpush1.bf16.msra.mxu0 %v845
    %2368 = vmatprep.subr.bf16.mxu0 %v899
    %2369 = vmatpush1.bf16.msra.mxu0 %v898
    %2370 = vmatprep.subr.bf16.mxu0 %v952
    %2371 = vmatpush1.bf16.msra.mxu0 %v951
    %2372 = vmatprep.subr.bf16.mxu0 %v1323
    %2373 = vmatpush1.bf16.msra.mxu0 %v1320
    %2374 = vmatprep.subr.bf16.mxu0 0
    %2375 = vmatpush1.bf16.msra.mxu0 0
    %2376 = vmatprep.subr.bf16.mxu0 0
    %2377 = vmatpush1.bf16.msra.mxu0 0
    %2378 = vmatprep.subr.bf16.mxu0 0
    %2379 = vmatpush1.bf16.msra.mxu0 0
    %2380 = vmatprep.subr.bf16.mxu0 0
    %2381 = vmatpush1.bf16.msra.mxu0 0
    %2382 = vmatprep.subr.bf16.mxu0 0
    %2383 = vmatpush1.bf16.msra.mxu0 0
    %2384 = vmatprep.subr.bf16.mxu0 0
    %2385 = vmatpush1.bf16.msra.mxu0 0
    %2386 = vmatprep.subr.bf16.mxu0 0
    %2387 = vmatpush1.bf16.msra.mxu0 0
    %2388 = vmatprep.subr.bf16.mxu0 0
    %2389 = vmatpush1.bf16.msra.mxu0 0
    %2390 = vmatprep.subr.bf16.mxu0 0
    %2391 = vmatpush1.bf16.msra.mxu0 0
    %2392 = vmatprep.subr.bf16.mxu0 0
    %2393 = vmatpush1.bf16.msra.mxu0 0
    %2394 = vmatprep.subr.bf16.mxu0 0
    %2395 = vmatpush1.bf16.msra.mxu0 0
    %2396 = vmatprep.subr.bf16.mxu0 0
    %2397 = vmatpush1.bf16.msra.mxu0 0
    %2398 = vmatprep.mubr.bf16.mxu0 0
    %2399 = vmatmul.mubr.bf16.gmra.mrb[0].mxu0 %v1170
    %v2400 = vpop.f32.mrb[0].mxu0
    %v2401 = vadd.f32 %v225, %v2400
    %v2402 = vpop.f32.mrb[0].mxu0
    %v2403 = vadd.f32 %v225, %v2402
    %v2404 = vpop.f32.mrb[0].mxu0
    %v2405 = vadd.f32 %v230, %v2404
    %v2406 = vpop.f32.mrb[0].mxu0
    %v2407 = vadd.f32 %v230, %v2406
    %2408 = vdwg.mxu0
    %2409 = vmatprep.subr.bf16.mxu0 %v848
    %2410 = vmatpush1.bf16.msra.mxu0 %v847
    %2411 = vmatprep.subr.bf16.mxu0 %v901
    %2412 = vmatpush1.bf16.msra.mxu0 %v900
    %2413 = vmatprep.subr.bf16.mxu0 %v954
    %2414 = vmatpush1.bf16.msra.mxu0 %v953
    %2415 = vmatprep.subr.bf16.mxu0 %v1329
    %2416 = vmatpush1.bf16.msra.mxu0 %v1326
    %2417 = vmatprep.subr.bf16.mxu0 0
    %2418 = vmatpush1.bf16.msra.mxu0 0
    %2419 = vmatprep.subr.bf16.mxu0 0
    %2420 = vmatpush1.bf16.msra.mxu0 0
    %2421 = vmatprep.subr.bf16.mxu0 0
    %2422 = vmatpush1.bf16.msra.mxu0 0
    %2423 = vmatprep.subr.bf16.mxu0 0
    %2424 = vmatpush1.bf16.msra.mxu0 0
    %2425 = vmatprep.subr.bf16.mxu0 0
    %2426 = vmatpush1.bf16.msra.mxu0 0
    %2427 = vmatprep.subr.bf16.mxu0 0
    %2428 = vmatpush1.bf16.msra.mxu0 0
    %2429 = vmatprep.subr.bf16.mxu0 0
    %2430 = vmatpush1.bf16.msra.mxu0 0
    %2431 = vmatprep.subr.bf16.mxu0 0
    %2432 = vmatpush1.bf16.msra.mxu0 0
    %2433 = vmatprep.subr.bf16.mxu0 0
    %2434 = vmatpush1.bf16.msra.mxu0 0
    %2435 = vmatprep.subr.bf16.mxu0 0
    %2436 = vmatpush1.bf16.msra.mxu0 0
    %2437 = vmatprep.subr.bf16.mxu0 0
    %2438 = vmatpush1.bf16.msra.mxu0 0
    %2439 = vmatprep.subr.bf16.mxu0 0
    %2440 = vmatpush1.bf16.msra.mxu0 0
    %2441 = vmatprep.mubr.bf16.mxu0 0
    %2442 = vmatmul.mubr.bf16.gmra.mrb[0].mxu0 %v1170
    %v2443 = vpop.f32.mrb[0].mxu0
    %v2444 = vadd.f32 %v225, %v2443
    %v2445 = vpop.f32.mrb[0].mxu0
    %v2446 = vadd.f32 %v225, %v2445
    %v2447 = vpop.f32.mrb[0].mxu0
    %v2448 = vadd.f32 %v230, %v2447
    %v2449 = vpop.f32.mrb[0].mxu0
    %v2450 = vadd.f32 %v230, %v2449
    %2451 = vdwg.mxu0
    %2452 = vmatprep.subr.bf16.mxu0 0
    %2453 = vmatpush1.bf16.msra.mxu0 %v849
    %2454 = vmatprep.subr.bf16.mxu0 0
    %2455 = vmatpush1.bf16.msra.mxu0 %v902
    %2456 = vmatprep.subr.bf16.mxu0 0
    %2457 = vmatpush1.bf16.msra.mxu0 %v955
    %2458 = vmatprep.subr.bf16.mxu0 0
    %2459 = vmatpush1.bf16.msra.mxu0 %v1332
    %2460 = vmatprep.subr.bf16.mxu0 0
    %2461 = vmatpush1.bf16.msra.mxu0 0
    %2462 = vmatprep.subr.bf16.mxu0 0
    %2463 = vmatpush1.bf16.msra.mxu0 0
    %2464 = vmatprep.subr.bf16.mxu0 0
    %2465 = vmatpush1.bf16.msra.mxu0 0
    %2466 = vmatprep.subr.bf16.mxu0 0
    %2467 = vmatpush1.bf16.msra.mxu0 0
    %2468 = vmatprep.subr.bf16.mxu0 0
    %2469 = vmatpush1.bf16.msra.mxu0 0
    %2470 = vmatprep.subr.bf16.mxu0 0
    %2471 = vmatpush1.bf16.msra.mxu0 0
    %2472 = vmatprep.subr.bf16.mxu0 0
    %2473 = vmatpush1.bf16.msra.mxu0 0
    %2474 = vmatprep.subr.bf16.mxu0 0
    %2475 = vmatpush1.bf16.msra.mxu0 0
    %2476 = vmatprep.subr.bf16.mxu0 0
    %2477 = vmatpush1.bf16.msra.mxu0 0
    %2478 = vmatprep.subr.bf16.mxu0 0
    %2479 = vmatpush1.bf16.msra.mxu0 0
    %2480 = vmatprep.subr.bf16.mxu0 0
    %2481 = vmatpush1.bf16.msra.mxu0 0
    %2482 = vmatprep.subr.bf16.mxu0 0
    %2483 = vmatpush1.bf16.msra.mxu0 0
    %2484 = vmatprep.mubr.bf16.mxu0 0
    %2485 = vmatmul.mubr.bf16.gmra.mrb[0].mxu0 %v1170
    %v2486 = vpop.f32.mrb[0].mxu0
    %v2487 = vadd.f32 %v225, %v2486
    %v2488 = vpop.f32.mrb[0].mxu0
    %v2489 = vpop.f32.mrb[0].mxu0
    %v2490 = vadd.f32 %v230, %v2489
    %v2491 = vpop.f32.mrb[0].mxu0
    %2492 = vdwg.mxu0
    %v2493 = vmax.f32 %v1369, 0.0
    %v2494 = vmax.f32 %v1371, 0.0
    %v2495 = vmax.f32 %v1412, 0.0
    %v2496 = vmax.f32 %v1414, 0.0
    %v2497 = vmax.f32 %v1455, 0.0
    %v2498 = vmax.f32 %v1457, 0.0
    %v2499 = vmax.f32 %v1498, 0.0
    %v2500 = vmax.f32 %v1500, 0.0
    %v2501 = vmax.f32 %v1541, 0.0
    %v2502 = vmax.f32 %v1543, 0.0
    %v2503 = vmax.f32 %v1584, 0.0
    %v2504 = vmax.f32 %v1586, 0.0
    %v2505 = vmax.f32 %v1627, 0.0
    %v2506 = vmax.f32 %v1629, 0.0
    %v2507 = vmax.f32 %v1670, 0.0
    %v2508 = vmax.f32 %v1672, 0.0
    %v2509 = vmax.f32 %v1713, 0.0
    %v2510 = vmax.f32 %v1715, 0.0
    %v2511 = vmax.f32 %v1756, 0.0
    %v2512 = vmax.f32 %v1758, 0.0
    %v2513 = vmax.f32 %v1799, 0.0
    %v2514 = vmax.f32 %v1801, 0.0
    %v2515 = vmax.f32 %v1842, 0.0
    %v2516 = vmax.f32 %v1844, 0.0
    %v2517 = vmax.f32 %v1885, 0.0
    %v2518 = vmax.f32 %v1887, 0.0
    %v2519 = vmax.f32 %v1928, 0.0
    %v2520 = vmax.f32 %v1930, 0.0
    %v2521 = vmax.f32 %v1971, 0.0
    %v2522 = vmax.f32 %v1973, 0.0
    %v2523 = vmax.f32 %v2014, 0.0
    %v2524 = vmax.f32 %v2016, 0.0
    %v2525 = vmax.f32 %v2057, 0.0
    %v2526 = vmax.f32 %v2059, 0.0
    %v2527 = vmax.f32 %v2100, 0.0
    %v2528 = vmax.f32 %v2102, 0.0
    %v2529 = vmax.f32 %v2143, 0.0
    %v2530 = vmax.f32 %v2145, 0.0
    %v2531 = vmax.f32 %v2186, 0.0
    %v2532 = vmax.f32 %v2188, 0.0
    %v2533 = vmax.f32 %v2229, 0.0
    %v2534 = vmax.f32 %v2231, 0.0
    %v2535 = vmax.f32 %v2272, 0.0
    %v2536 = vmax.f32 %v2274, 0.0
    %v2537 = vmax.f32 %v2315, 0.0
    %v2538 = vmax.f32 %v2317, 0.0
    %v2539 = vmax.f32 %v2358, 0.0
    %v2540 = vmax.f32 %v2360, 0.0
    %v2541 = vmax.f32 %v2401, 0.0
    %v2542 = vmax.f32 %v2403, 0.0
    %v2543 = vmax.f32 %v2444, 0.0
    %v2544 = vmax.f32 %v2446, 0.0
    %v2545 = vmax.f32 %v2487, 0.0
    %v2546 = vmax.f32 %v1373, 0.0
    %v2547 = vmax.f32 %v1375, 0.0
    %v2548 = vmax.f32 %v1416, 0.0
    %v2549 = vmax.f32 %v1418, 0.0
    %v2550 = vmax.f32 %v1459, 0.0
    %v2551 = vmax.f32 %v1461, 0.0
    %v2552 = vmax.f32 %v1502, 0.0
    %v2553 = vmax.f32 %v1504, 0.0
    %v2554 = vmax.f32 %v1545, 0.0
    %v2555 = vmax.f32 %v1547, 0.0
    %v2556 = vmax.f32 %v1588, 0.0
    %v2557 = vmax.f32 %v1590, 0.0
    %v2558 = vmax.f32 %v1631, 0.0
    %v2559 = vmax.f32 %v1633, 0.0
    %v2560 = vmax.f32 %v1674, 0.0
    %v2561 = vmax.f32 %v1676, 0.0
    %v2562 = vmax.f32 %v1717, 0.0
    %v2563 = vmax.f32 %v1719, 0.0
    %v2564 = vmax.f32 %v1760, 0.0
    %v2565 = vmax.f32 %v1762, 0.0
    %v2566 = vmax.f32 %v1803, 0.0
    %v2567 = vmax.f32 %v1805, 0.0
    %v2568 = vmax.f32 %v1846, 0.0
    %v2569 = vmax.f32 %v1848, 0.0
    %v2570 = vmax.f32 %v1889, 0.0
    %v2571 = vmax.f32 %v1891, 0.0
    %v2572 = vmax.f32 %v1932, 0.0
    %v2573 = vmax.f32 %v1934, 0.0
    %v2574 = vmax.f32 %v1975, 0.0
    %v2575 = vmax.f32 %v1977, 0.0
    %v2576 = vmax.f32 %v2018, 0.0
    %v2577 = vmax.f32 %v2020, 0.0
    %v2578 = vmax.f32 %v2061, 0.0
    %v2579 = vmax.f32 %v2063, 0.0
    %v2580 = vmax.f32 %v2104, 0.0
    %v2581 = vmax.f32 %v2106, 0.0
    %v2582 = vmax.f32 %v2147, 0.0
    %v2583 = vmax.f32 %v2149, 0.0
    %v2584 = vmax.f32 %v2190, 0.0
    %v2585 = vmax.f32 %v2192, 0.0
    %v2586 = vmax.f32 %v2233, 0.0
    %v2587 = vmax.f32 %v2235, 0.0
    %v2588 = vmax.f32 %v2276, 0.0
    %v2589 = vmax.f32 %v2278, 0.0
    %v2590 = vmax.f32 %v2319, 0.0
    %v2591 = vmax.f32 %v2321, 0.0
    %v2592 = vmax.f32 %v2362, 0.0
    %v2593 = vmax.f32 %v2364, 0.0
    %v2594 = vmax.f32 %v2405, 0.0
    %v2595 = vmax.f32 %v2407, 0.0
    %v2596 = vmax.f32 %v2448, 0.0
    %v2597 = vmax.f32 %v2450, 0.0
    %v2598 = vmax.f32 %v2490, 0.0
    %v2599 = vpack.c.bf16 %v2546, %v2493
    %v2600 = vpack.c.bf16 %v2547, %v2494
    %v2601 = vpack.c.bf16 %v2548, %v2495
    %v2602 = vpack.c.bf16 %v2549, %v2496
    %v2603 = vpack.c.bf16 %v2550, %v2497
    %v2604 = vpack.c.bf16 %v2551, %v2498
    %v2605 = vpack.c.bf16 %v2552, %v2499
    %v2606 = vpack.c.bf16 %v2553, %v2500
    %v2607 = vpack.c.bf16 %v2554, %v2501
    %v2608 = vpack.c.bf16 %v2555, %v2502
    %v2609 = vpack.c.bf16 %v2556, %v2503
    %v2610 = vpack.c.bf16 %v2557, %v2504
    %v2611 = vpack.c.bf16 %v2558, %v2505
    %v2612 = vpack.c.bf16 %v2559, %v2506
    %v2613 = vpack.c.bf16 %v2560, %v2507
    %v2614 = vpack.c.bf16 %v2561, %v2508
    %v2615 = vpack.c.bf16 %v2562, %v2509
    %v2616 = vpack.c.bf16 %v2563, %v2510
    %v2617 = vpack.c.bf16 %v2564, %v2511
    %v2618 = vpack.c.bf16 %v2565, %v2512
    %v2619 = vpack.c.bf16 %v2566, %v2513
    %v2620 = vpack.c.bf16 %v2567, %v2514
    %v2621 = vpack.c.bf16 %v2568, %v2515
    %v2622 = vpack.c.bf16 %v2569, %v2516
    %v2623 = vpack.c.bf16 %v2570, %v2517
    %v2624 = vpack.c.bf16 %v2571, %v2518
    %v2625 = vpack.c.bf16 %v2572, %v2519
    %v2626 = vpack.c.bf16 %v2573, %v2520
    %v2627 = vpack.c.bf16 %v2574, %v2521
    %v2628 = vpack.c.bf16 %v2575, %v2522
    %v2629 = vpack.c.bf16 %v2576, %v2523
    %v2630 = vpack.c.bf16 %v2577, %v2524
    %v2631 = vpack.c.bf16 %v2578, %v2525
    %v2632 = vpack.c.bf16 %v2579, %v2526
    %v2633 = vpack.c.bf16 %v2580, %v2527
    %v2634 = vpack.c.bf16 %v2581, %v2528
    %v2635 = vpack.c.bf16 %v2582, %v2529
    %v2636 = vpack.c.bf16 %v2583, %v2530
    %v2637 = vpack.c.bf16 %v2584, %v2531
    %v2638 = vpack.c.bf16 %v2585, %v2532
    %v2639 = vpack.c.bf16 %v2586, %v2533
    %v2640 = vpack.c.bf16 %v2587, %v2534
    %v2641 = vpack.c.bf16 %v2588, %v2535
    %v2642 = vpack.c.bf16 %v2589, %v2536
    %v2643 = vpack.c.bf16 %v2590, %v2537
    %v2644 = vpack.c.bf16 %v2591, %v2538
    %v2645 = vpack.c.bf16 %v2592, %v2539
    %v2646 = vpack.c.bf16 %v2593, %v2540
    %v2647 = vpack.c.bf16 %v2594, %v2541
    %v2648 = vpack.c.bf16 %v2595, %v2542
    %v2649 = vpack.c.bf16 %v2596, %v2543
    %v2650 = vpack.c.bf16 %v2597, %v2544
    %v2651 = vpack.c.bf16 %v2598, %v2545
    %v2705 = vunpack.c.l.b16 %v2599
    %v2706 = vunpack.c.l.b16 %v2600
    %v2707 = vunpack.c.l.b16 %v2601
    %v2708 = vunpack.c.l.b16 %v2602
    %v2709 = vunpack.c.l.b16 %v2603
    %v2710 = vunpack.c.l.b16 %v2604
    %v2711 = vunpack.c.l.b16 %v2605
    %v2712 = vunpack.c.l.b16 %v2606
    %v2713 = vunpack.c.l.b16 %v2607
    %v2714 = vunpack.c.l.b16 %v2608
    %v2715 = vunpack.c.l.b16 %v2609
    %v2716 = vunpack.c.l.b16 %v2610
    %v2717 = vunpack.c.l.b16 %v2611
    %v2718 = vunpack.c.l.b16 %v2612
    %v2719 = vunpack.c.l.b16 %v2613
    %v2720 = vunpack.c.l.b16 %v2614
    %v2721 = vunpack.c.l.b16 %v2615
    %v2722 = vunpack.c.l.b16 %v2616
    %v2723 = vunpack.c.l.b16 %v2617
    %v2724 = vunpack.c.l.b16 %v2618
    %v2725 = vunpack.c.l.b16 %v2619
    %v2726 = vunpack.c.l.b16 %v2620
    %v2727 = vunpack.c.l.b16 %v2621
    %v2728 = vunpack.c.l.b16 %v2622
    %v2729 = vunpack.c.l.b16 %v2623
    %v2730 = vunpack.c.l.b16 %v2624
    %v2731 = vunpack.c.l.b16 %v2625
    %v2732 = vunpack.c.l.b16 %v2626
    %v2733 = vunpack.c.l.b16 %v2627
    %v2734 = vunpack.c.l.b16 %v2628
    %v2735 = vunpack.c.l.b16 %v2629
    %v2736 = vunpack.c.l.b16 %v2630
    %v2737 = vunpack.c.l.b16 %v2631
    %v2738 = vunpack.c.l.b16 %v2632
    %v2739 = vunpack.c.l.b16 %v2633
    %v2740 = vunpack.c.l.b16 %v2634
    %v2741 = vunpack.c.l.b16 %v2635
    %v2742 = vunpack.c.l.b16 %v2636
    %v2743 = vunpack.c.l.b16 %v2637
    %v2744 = vunpack.c.l.b16 %v2638
    %v2745 = vunpack.c.l.b16 %v2639
    %v2746 = vunpack.c.l.b16 %v2640
    %v2747 = vunpack.c.l.b16 %v2641
    %v2748 = vunpack.c.l.b16 %v2642
    %v2749 = vunpack.c.l.b16 %v2643
    %v2750 = vunpack.c.l.b16 %v2644
    %v2751 = vunpack.c.l.b16 %v2645
    %v2752 = vunpack.c.l.b16 %v2646
    %v2753 = vunpack.c.l.b16 %v2647
    %v2754 = vunpack.c.l.b16 %v2648
    %v2755 = vunpack.c.l.b16 %v2649
    %v2756 = vunpack.c.l.b16 %v2650
    %v2757 = vunpack.c.l.b16 %v2651
    %v2758 = vunpack.c.h.b16 %v2599
    %v2759 = vunpack.c.h.b16 %v2600
    %v2760 = vunpack.c.h.b16 %v2601
    %v2761 = vunpack.c.h.b16 %v2602
    %v2762 = vunpack.c.h.b16 %v2603
    %v2763 = vunpack.c.h.b16 %v2604
    %v2764 = vunpack.c.h.b16 %v2605
    %v2765 = vunpack.c.h.b16 %v2606
    %v2766 = vunpack.c.h.b16 %v2607
    %v2767 = vunpack.c.h.b16 %v2608
    %v2768 = vunpack.c.h.b16 %v2609
    %v2769 = vunpack.c.h.b16 %v2610
    %v2770 = vunpack.c.h.b16 %v2611
    %v2771 = vunpack.c.h.b16 %v2612
    %v2772 = vunpack.c.h.b16 %v2613
    %v2773 = vunpack.c.h.b16 %v2614
    %v2774 = vunpack.c.h.b16 %v2615
    %v2775 = vunpack.c.h.b16 %v2616
    %v2776 = vunpack.c.h.b16 %v2617
    %v2777 = vunpack.c.h.b16 %v2618
    %v2778 = vunpack.c.h.b16 %v2619
    %v2779 = vunpack.c.h.b16 %v2620
    %v2780 = vunpack.c.h.b16 %v2621
    %v2781 = vunpack.c.h.b16 %v2622
    %v2782 = vunpack.c.h.b16 %v2623
    %v2783 = vunpack.c.h.b16 %v2624
    %v2784 = vunpack.c.h.b16 %v2625
    %v2785 = vunpack.c.h.b16 %v2626
    %v2786 = vunpack.c.h.b16 %v2627
    %v2787 = vunpack.c.h.b16 %v2628
    %v2788 = vunpack.c.h.b16 %v2629
    %v2789 = vunpack.c.h.b16 %v2630
    %v2790 = vunpack.c.h.b16 %v2631
    %v2791 = vunpack.c.h.b16 %v2632
    %v2792 = vunpack.c.h.b16 %v2633
    %v2793 = vunpack.c.h.b16 %v2634
    %v2794 = vunpack.c.h.b16 %v2635
    %v2795 = vunpack.c.h.b16 %v2636
    %v2796 = vunpack.c.h.b16 %v2637
    %v2797 = vunpack.c.h.b16 %v2638
    %v2798 = vunpack.c.h.b16 %v2639
    %v2799 = vunpack.c.h.b16 %v2640
    %v2800 = vunpack.c.h.b16 %v2641
    %v2801 = vunpack.c.h.b16 %v2642
    %v2802 = vunpack.c.h.b16 %v2643
    %v2803 = vunpack.c.h.b16 %v2644
    %v2804 = vunpack.c.h.b16 %v2645
    %v2805 = vunpack.c.h.b16 %v2646
    %v2806 = vunpack.c.h.b16 %v2647
    %v2807 = vunpack.c.h.b16 %v2648
    %v2808 = vunpack.c.h.b16 %v2649
    %v2809 = vunpack.c.h.b16 %v2650
    %v2810 = vunpack.c.h.b16 %v2651
    %v2811 = vpack.c.b16 %v2706, %v2705
    %v2812 = vpack.c.b16 %v2708, %v2707
    %v2813 = vpack.c.b16 %v2710, %v2709
    %v2814 = vpack.c.b16 %v2712, %v2711
    %v2815 = vpack.c.b16 %v2714, %v2713
    %v2816 = vpack.c.b16 %v2716, %v2715
    %v2817 = vpack.c.b16 %v2718, %v2717
    %v2818 = vpack.c.b16 %v2720, %v2719
    %v2819 = vpack.c.b16 %v2722, %v2721
    %v2820 = vpack.c.b16 %v2724, %v2723
    %v2821 = vpack.c.b16 %v2726, %v2725
    %v2822 = vpack.c.b16 %v2728, %v2727
    %v2823 = vpack.c.b16 %v2730, %v2729
    %v2824 = vpack.c.b16 %v2732, %v2731
    %v2825 = vpack.c.b16 %v2734, %v2733
    %v2826 = vpack.c.b16 %v2736, %v2735
    %v2827 = vpack.c.b16 %v2738, %v2737
    %v2828 = vpack.c.b16 %v2740, %v2739
    %v2829 = vpack.c.b16 %v2742, %v2741
    %v2830 = vpack.c.b16 %v2744, %v2743
    %v2831 = vpack.c.b16 %v2746, %v2745
    %v2832 = vpack.c.b16 %v2748, %v2747
    %v2833 = vpack.c.b16 %v2750, %v2749
    %v2834 = vpack.c.b16 %v2752, %v2751
    %v2835 = vpack.c.b16 %v2754, %v2753
    %v2836 = vpack.c.b16 %v2756, %v2755
    %v2837 = vpack.c.b16 %v2757, %v2757
    %v2838 = vpack.c.b16 %v2759, %v2758
    %v2839 = vpack.c.b16 %v2761, %v2760
    %v2840 = vpack.c.b16 %v2763, %v2762
    %v2841 = vpack.c.b16 %v2765, %v2764
    %v2842 = vpack.c.b16 %v2767, %v2766
    %v2843 = vpack.c.b16 %v2769, %v2768
    %v2844 = vpack.c.b16 %v2771, %v2770
    %v2845 = vpack.c.b16 %v2773, %v2772
    %v2846 = vpack.c.b16 %v2775, %v2774
    %v2847 = vpack.c.b16 %v2777, %v2776
    %v2848 = vpack.c.b16 %v2779, %v2778
    %v2849 = vpack.c.b16 %v2781, %v2780
    %v2850 = vpack.c.b16 %v2783, %v2782
    %v2851 = vpack.c.b16 %v2785, %v2784
    %v2852 = vpack.c.b16 %v2787, %v2786
    %v2853 = vpack.c.b16 %v2789, %v2788
    %v2854 = vpack.c.b16 %v2791, %v2790
    %v2855 = vpack.c.b16 %v2793, %v2792
    %v2856 = vpack.c.b16 %v2795, %v2794
    %v2857 = vpack.c.b16 %v2797, %v2796
    %v2858 = vpack.c.b16 %v2799, %v2798
    %v2859 = vpack.c.b16 %v2801, %v2800
    %v2860 = vpack.c.b16 %v2803, %v2802
    %v2861 = vpack.c.b16 %v2805, %v2804
    %v2862 = vpack.c.b16 %v2807, %v2806
    %v2863 = vpack.c.b16 %v2809, %v2808
    %v2864 = vpack.c.b16 %v2810, %v2810
    %2919 = vst [vmem:[%s3] sm:$0xff] %v2811
    %2920 = vst [vmem:[%s3 + $0x8] sm:$0xff] %v2812
    %2921 = vst [vmem:[%s3 + $0x10] sm:$0xff] %v2813
    %2922 = vst [vmem:[%s3 + $0x18] sm:$0xff] %v2814
    %2923 = vst [vmem:[%s3 + $0x20] sm:$0xff] %v2815
    %2924 = vst [vmem:[%s3 + $0x28] sm:$0xff] %v2816
    %2925 = vst [vmem:[%s3 + $0x30] sm:$0xff] %v2817
    %2926 = vst [vmem:[%s3 + $0x38] sm:$0xff] %v2818
    %2927 = vst [vmem:[%s3 + $0x40] sm:$0xff] %v2819
    %2928 = vst [vmem:[%s3 + $0x48] sm:$0xff] %v2820
    %2929 = vst [vmem:[%s3 + $0x50] sm:$0xff] %v2821
    %2930 = vst [vmem:[%s3 + $0x58] sm:$0xff] %v2822
    %2931 = vst [vmem:[%s3 + $0x60] sm:$0xff] %v2823
    %2932 = vst [vmem:[%s3 + $0x68] sm:$0xff] %v2824
    %2933 = vst [vmem:[%s3 + $0x70] sm:$0xff] %v2825
    %2934 = vst [vmem:[%s3 + $0x78] sm:$0xff] %v2826
    %2935 = vst [vmem:[%s3 + $0x80] sm:$0xff] %v2827
    %2936 = vst [vmem:[%s3 + $0x88] sm:$0xff] %v2828
    %2937 = vst [vmem:[%s3 + $0x90] sm:$0xff] %v2829
    %2938 = vst [vmem:[%s3 + $0x98] sm:$0xff] %v2830
    %2939 = vst [vmem:[%s3 + $0xa0] sm:$0xff] %v2831
    %2940 = vst [vmem:[%s3 + $0xa8] sm:$0xff] %v2832
    %2941 = vst [vmem:[%s3 + $0xb0] sm:$0xff] %v2833
    %2942 = vst [vmem:[%s3 + $0xb8] sm:$0xff] %v2834
    %2943 = vst [vmem:[%s3 + $0xc0] sm:$0xff] %v2835
    %2944 = vst [vmem:[%s3 + $0xc8] sm:$0xff] %v2836
    %vm2945 = vcmask 584704
    %2946 = vst.msk [vmem:[%s3 + $0xd0] sm:$0xf] %vm2945, %v2837
    %2947 = vst [vmem:[%s3 + $0xd4] sm:$0xff] %v2838
    %2948 = vst [vmem:[%s3 + $0xdc] sm:$0xff] %v2839
    %2949 = vst [vmem:[%s3 + $0xe4] sm:$0xff] %v2840
    %2950 = vst [vmem:[%s3 + $0xec] sm:$0xff] %v2841
    %2951 = vst [vmem:[%s3 + $0xf4] sm:$0xff] %v2842
    %2952 = vst [vmem:[%s3 + $0xfc] sm:$0xff] %v2843
    %2953 = vst [vmem:[%s3 + $0x104] sm:$0xff] %v2844
    %2954 = vst [vmem:[%s3 + $0x10c] sm:$0xff] %v2845
    %2955 = vst [vmem:[%s3 + $0x114] sm:$0xff] %v2846
    %2956 = vst [vmem:[%s3 + $0x11c] sm:$0xff] %v2847
    %2957 = vst [vmem:[%s3 + $0x124] sm:$0xff] %v2848
    %2958 = vst [vmem:[%s3 + $0x12c] sm:$0xff] %v2849
    %2959 = vst [vmem:[%s3 + $0x134] sm:$0xff] %v2850
    %2960 = vst [vmem:[%s3 + $0x13c] sm:$0xff] %v2851
    %2961 = vst [vmem:[%s3 + $0x144] sm:$0xff] %v2852
    %2962 = vst [vmem:[%s3 + $0x14c] sm:$0xff] %v2853
    %2963 = vst [vmem:[%s3 + $0x154] sm:$0xff] %v2854
    %2964 = vst [vmem:[%s3 + $0x15c] sm:$0xff] %v2855
    %2965 = vst [vmem:[%s3 + $0x164] sm:$0xff] %v2856
    %2966 = vst [vmem:[%s3 + $0x16c] sm:$0xff] %v2857
    %2967 = vst [vmem:[%s3 + $0x174] sm:$0xff] %v2858
    %2968 = vst [vmem:[%s3 + $0x17c] sm:$0xff] %v2859
    %2969 = vst [vmem:[%s3 + $0x184] sm:$0xff] %v2860
    %2970 = vst [vmem:[%s3 + $0x18c] sm:$0xff] %v2861
    %2971 = vst [vmem:[%s3 + $0x194] sm:$0xff] %v2862
    %2972 = vst [vmem:[%s3 + $0x19c] sm:$0xff] %v2863
    %2973 = vst.msk [vmem:[%s3 + $0x1a4] sm:$0xf] %vm2945, %v2864
    // Predicated region
    $region18: #{lenet_forward.3} parent=1 // pred_check
      _
    $region19: #{lenet_forward.3} parent=1 // pred_check_branch
      %2975 = sbr.rel (0) target = $region21
    $region20: #{lenet_forward.3} parent=1 // pred_region
      _
    $region21: #{lenet_forward.3} parent=1 // pred_fallthru
      _
    // Predicated region
    $region22: #{lenet_forward.3} parent=1 // pred_check
      _
    $region23: #{lenet_forward.3} parent=1 // pred_check_branch
      %2977 = sbr.rel (0) target = $region25
    $region24: #{lenet_forward.3} parent=1 // pred_region
      _
    $region25: #{lenet_forward.3} parent=1 // pred_fallthru
      _
    %2978 = vsyncpa [#allocation3], 1

// kernel: lenet_forward.4
$region0: #{lenet_forward.4}
  #allocation0 [shape = 'u32[]', space=smem, size = 0x4, offset = 0x4, fixed_abs, tag = 'smem constant byte address 0x4 - core index']
  #allocation1 [shape = 'u32[144,128]{1,0:T(1,128)}', space=vmem, size = 0x12000, scoped, tag = 'internal scratch']
  %s0 = inlined_call_operand.vmem [shape: bf16[32,400], index: 0, kind: input, shape index: {}]
  %s1 = inlined_call_operand.vmem [shape: bf16[400,1250], index: 1, kind: input, shape index: {}]
  %s2 = inlined_call_operand.vmem [shape: f32[32,1], index: 2, kind: input, shape index: {}]
  %s3 = inlined_call_operand.vmem [shape: bf16[32,1250], index: 3, kind: output, shape index: {}]
  %s4 = sld [smem:[#allocation0]]
  $region22: #{lenet_forward.4} parent=0
    _
  %s6 = ssub.s32 1, %s4
  %s7 = scalar_select 0, %s6, %s4
  // Predicated region
  $region2: #{lenet_forward.4} parent=0 // pred_check
    _
  $region3: #{lenet_forward.4} parent=0 // pred_check_branch
    %9 = sbr.rel (0) target = $region5
  $region4: #{lenet_forward.4} parent=0 // pred_region
    _
  $region5: #{lenet_forward.4} parent=0 // pred_fallthru
    _
  // Predicated region
  $region6: #{lenet_forward.4} parent=0 // pred_check
    _
  $region7: #{lenet_forward.4} parent=0 // pred_check_branch
    %11 = sbr.rel (0) target = $region9
  $region8: #{lenet_forward.4} parent=0 // pred_region
    _
  $region9: #{lenet_forward.4} parent=0 // pred_fallthru
    _
  // Predicated region
  $region10: #{lenet_forward.4} parent=0 // pred_check
    _
  $region11: #{lenet_forward.4} parent=0 // pred_check_branch
    %13 = sbr.rel (0) target = $region13
  $region12: #{lenet_forward.4} parent=0 // pred_region
    _
  $region13: #{lenet_forward.4} parent=0 // pred_fallthru
    _
  %v15 = vld [vmem:[%s0] sm:$0xff]
  %v16 = vld [vmem:[%s0 + $0x8] sm:$0xff]
  %v17 = vld [vmem:[%s0 + $0x10] sm:$0xff]
  %v18 = vld [vmem:[%s0 + $0x18] sm:$0xff]
  %v19 = vld [vmem:[%s0 + $0x20] sm:$0xff]
  %v20 = vld [vmem:[%s0 + $0x28] sm:$0xff]
  %v21 = vld [vmem:[%s0 + $0x30] sm:$0xff]
  %v22 = vld [vmem:[%s0 + $0x38] sm:$0xff]
  %v23 = vld [vmem:[%s1] sm:$0xff]
  %v24 = vld [vmem:[%s1 + $0x8] sm:$0xff]
  %v25 = vld [vmem:[%s1 + $0x10] sm:$0xff]
  %v26 = vld [vmem:[%s1 + $0x18] sm:$0xff]
  %v27 = vld [vmem:[%s1 + $0x20] sm:$0xff]
  %v28 = vld [vmem:[%s1 + $0x28] sm:$0xff]
  %v29 = vld [vmem:[%s1 + $0x30] sm:$0xff]
  %v30 = vld [vmem:[%s1 + $0x38] sm:$0xff]
  %v31 = vld [vmem:[%s1 + $0x40] sm:$0xff]
  %v32 = vld [vmem:[%s1 + $0x48] sm:$0xff]
  %v33 = vld [vmem:[%s1 + $0x50] sm:$0xff]
  %v34 = vld [vmem:[%s1 + $0x58] sm:$0xff]
  %v35 = vld [vmem:[%s1 + $0x60] sm:$0xff]
  %v36 = vld [vmem:[%s1 + $0x68] sm:$0xff]
  %v37 = vld [vmem:[%s1 + $0x70] sm:$0xff]
  %v38 = vld [vmem:[%s1 + $0x78] sm:$0xff]
  %v39 = vld [vmem:[%s1 + $0x80] sm:$0xff]
  %v40 = vld [vmem:[%s1 + $0x88] sm:$0xff]
  %v41 = vld [vmem:[%s1 + $0x90] sm:$0xff]
  %v42 = vld [vmem:[%s1 + $0x98] sm:$0xff]
  %v43 = vld [vmem:[%s1 + $0xa0] sm:$0xff]
  %v44 = vld [vmem:[%s1 + $0xa8] sm:$0xff]
  %v45 = vld [vmem:[%s1 + $0xb0] sm:$0xff]
  %v46 = vld [vmem:[%s1 + $0xb8] sm:$0xff]
  %v47 = vld [vmem:[%s1 + $0xc0] sm:$0xff]
  %v48 = vld [vmem:[%s1 + $0xc8] sm:$0xff]
  %v49 = vld [vmem:[%s1 + $0xd0] sm:$0xff]
  %v50 = vld [vmem:[%s1 + $0xd8] sm:$0xff]
  %v51 = vld [vmem:[%s1 + $0xe0] sm:$0xff]
  %v52 = vld [vmem:[%s1 + $0xe8] sm:$0xff]
  %v53 = vld [vmem:[%s1 + $0xf0] sm:$0xff]
  %v54 = vld [vmem:[%s1 + $0xf8] sm:$0xff]
  %v55 = vld [vmem:[%s1 + $0x100] sm:$0xff]
  %v56 = vld [vmem:[%s1 + $0x108] sm:$0xff]
  %v57 = vld [vmem:[%s1 + $0x110] sm:$0xff]
  %v58 = vld [vmem:[%s1 + $0x118] sm:$0xff]
  %v59 = vld [vmem:[%s1 + $0x120] sm:$0xff]
  %v60 = vld [vmem:[%s1 + $0x128] sm:$0xff]
  %v61 = vld [vmem:[%s1 + $0x130] sm:$0xff]
  %v62 = vld [vmem:[%s1 + $0x138] sm:$0xff]
  %v63 = vld [vmem:[%s1 + $0x140] sm:$0xff]
  %v64 = vld [vmem:[%s1 + $0x148] sm:$0xff]
  %v65 = vld [vmem:[%s1 + $0x150] sm:$0xff]
  %v66 = vld [vmem:[%s1 + $0x158] sm:$0xff]
  %v67 = vld [vmem:[%s1 + $0x160] sm:$0xff]
  %v68 = vld [vmem:[%s1 + $0x168] sm:$0xff]
  %v69 = vld [vmem:[%s1 + $0x170] sm:$0xff]
  %v70 = vld [vmem:[%s1 + $0x178] sm:$0xff]
  %v71 = vld [vmem:[%s1 + $0x180] sm:$0xff]
  %v72 = vld [vmem:[%s1 + $0x188] sm:$0xff]
  %v73 = vld [vmem:[%s1 + $0x190] sm:$0xff]
  %v74 = vld [vmem:[%s1 + $0x198] sm:$0xff]
  %v75 = vld [vmem:[%s1 + $0x1a0] sm:$0xff]
  %v76 = vld [vmem:[%s1 + $0x1a8] sm:$0xff]
  %v77 = vld [vmem:[%s1 + $0x1b0] sm:$0xff]
  %v78 = vld [vmem:[%s1 + $0x1b8] sm:$0xff]
  %v79 = vld [vmem:[%s1 + $0x1c0] sm:$0xff]
  %v80 = vld [vmem:[%s1 + $0x1c8] sm:$0xff]
  %v81 = vld [vmem:[%s1 + $0x1d0] sm:$0xff]
  %v82 = vld [vmem:[%s1 + $0x1d8] sm:$0xff]
  %v83 = vld [vmem:[%s1 + $0x1e0] sm:$0xff]
  %v84 = vld [vmem:[%s1 + $0x1e8] sm:$0xff]
  %v85 = vld [vmem:[%s1 + $0x1f0] sm:$0xff]
  %v86 = vld [vmem:[%s1 + $0x1f8] sm:$0xff]
  %v87 = vld [vmem:[%s1 + $0x200] sm:$0xff]
  %v88 = vld [vmem:[%s1 + $0x208] sm:$0xff]
  %v89 = vld [vmem:[%s1 + $0x210] sm:$0xff]
  %v90 = vld [vmem:[%s1 + $0x218] sm:$0xff]
  %v91 = vld [vmem:[%s1 + $0x220] sm:$0xff]
  %v92 = vld [vmem:[%s1 + $0x228] sm:$0xff]
  %v93 = vld [vmem:[%s1 + $0x230] sm:$0xff]
  %v94 = vld [vmem:[%s1 + $0x238] sm:$0xff]
  %v95 = vld [vmem:[%s1 + $0x240] sm:$0xff]
  %v96 = vld [vmem:[%s1 + $0x248] sm:$0xff]
  %v97 = vld [vmem:[%s1 + $0x250] sm:$0xff]
  %v98 = vld [vmem:[%s1 + $0x258] sm:$0xff]
  %v99 = vld [vmem:[%s1 + $0x260] sm:$0xff]
  %v100 = vld [vmem:[%s1 + $0x268] sm:$0xff]
  %v101 = vld [vmem:[%s1 + $0x270] sm:$0xff]
  %v102 = vld [vmem:[%s1 + $0x278] sm:$0xff]
  %v103 = vld [vmem:[%s1 + $0x280] sm:$0xff]
  %v104 = vld [vmem:[%s1 + $0x288] sm:$0xff]
  %v105 = vld [vmem:[%s1 + $0x290] sm:$0xff]
  %v106 = vld [vmem:[%s1 + $0x298] sm:$0xff]
  %v107 = vld [vmem:[%s1 + $0x2a0] sm:$0xff]
  %v108 = vld [vmem:[%s1 + $0x2a8] sm:$0xff]
  %v109 = vld [vmem:[%s1 + $0x2b0] sm:$0xff]
  %v110 = vld [vmem:[%s1 + $0x2b8] sm:$0xff]
  %v111 = vld [vmem:[%s1 + $0x2c0] sm:$0xff]
  %v112 = vld [vmem:[%s1 + $0x2c8] sm:$0xff]
  %v113 = vld [vmem:[%s1 + $0x2d0] sm:$0xff]
  %v114 = vld [vmem:[%s1 + $0x2d8] sm:$0xff]
  %v115 = vld [vmem:[%s1 + $0x2e0] sm:$0xff]
  %v116 = vld [vmem:[%s1 + $0x2e8] sm:$0xff]
  %v117 = vld [vmem:[%s1 + $0x2f0] sm:$0xff]
  %v118 = vld [vmem:[%s1 + $0x2f8] sm:$0xff]
  %v119 = vld [vmem:[%s1 + $0x300] sm:$0xff]
  %v120 = vld [vmem:[%s1 + $0x308] sm:$0xff]
  %v121 = vld [vmem:[%s1 + $0x310] sm:$0xff]
  %v122 = vld [vmem:[%s1 + $0x318] sm:$0xff]
  %v123 = vld [vmem:[%s1 + $0x320] sm:$0xff]
  %v124 = vld [vmem:[%s1 + $0x328] sm:$0xff]
  %v125 = vld [vmem:[%s1 + $0x330] sm:$0xff]
  %v126 = vld [vmem:[%s1 + $0x338] sm:$0xff]
  %v127 = vld [vmem:[%s1 + $0x340] sm:$0xff]
  %v128 = vld [vmem:[%s1 + $0x348] sm:$0xff]
  %v129 = vld [vmem:[%s1 + $0x350] sm:$0xff]
  %v130 = vld [vmem:[%s1 + $0x358] sm:$0xff]
  %v131 = vld [vmem:[%s1 + $0x360] sm:$0xff]
  %v132 = vld [vmem:[%s1 + $0x368] sm:$0xff]
  %v133 = vld [vmem:[%s1 + $0x370] sm:$0xff]
  %v134 = vld [vmem:[%s1 + $0x378] sm:$0xff]
  %v135 = vld [vmem:[%s1 + $0x380] sm:$0xff]
  %v136 = vld [vmem:[%s1 + $0x388] sm:$0xff]
  %v137 = vld [vmem:[%s1 + $0x390] sm:$0xff]
  %v138 = vld [vmem:[%s1 + $0x398] sm:$0xff]
  %v139 = vld [vmem:[%s1 + $0x3a0] sm:$0xff]
  %v140 = vld [vmem:[%s1 + $0x3a8] sm:$0xff]
  %v141 = vld [vmem:[%s1 + $0x3b0] sm:$0xff]
  %v142 = vld [vmem:[%s1 + $0x3b8] sm:$0xff]
  %v143 = vld [vmem:[%s1 + $0x3c0] sm:$0xff]
  %v144 = vld [vmem:[%s1 + $0x3c8] sm:$0xff]
  %v145 = vld [vmem:[%s1 + $0x3d0] sm:$0xff]
  %v146 = vld [vmem:[%s1 + $0x3d8] sm:$0xff]
  %v147 = vld [vmem:[%s1 + $0x3e0] sm:$0xff]
  %v148 = vld [vmem:[%s1 + $0x3e8] sm:$0xff]
  %v149 = vld [vmem:[%s1 + $0x3f0] sm:$0xff]
  %v150 = vld [vmem:[%s1 + $0x3f8] sm:$0xff]
  %v151 = vld [vmem:[%s1 + $0x400] sm:$0xff]
  %v152 = vld [vmem:[%s1 + $0x408] sm:$0xff]
  %v153 = vld [vmem:[%s1 + $0x410] sm:$0xff]
  %v154 = vld [vmem:[%s1 + $0x418] sm:$0xff]
  %v155 = vld [vmem:[%s1 + $0x420] sm:$0xff]
  %v156 = vld [vmem:[%s1 + $0x428] sm:$0xff]
  %v157 = vld [vmem:[%s1 + $0x430] sm:$0xff]
  %v158 = vld [vmem:[%s1 + $0x438] sm:$0xff]
  %v159 = vld [vmem:[%s1 + $0x440] sm:$0xff]
  %v160 = vld [vmem:[%s1 + $0x448] sm:$0xff]
  %v161 = vld [vmem:[%s1 + $0x450] sm:$0xff]
  %v162 = vld [vmem:[%s1 + $0x458] sm:$0xff]
  %v163 = vld [vmem:[%s1 + $0x460] sm:$0xff]
  %v164 = vld [vmem:[%s1 + $0x468] sm:$0xff]
  %v165 = vld [vmem:[%s1 + $0x470] sm:$0xff]
  %v166 = vld [vmem:[%s1 + $0x478] sm:$0xff]
  %v167 = vld [vmem:[%s1 + $0x480] sm:$0xff]
  %v168 = vld [vmem:[%s1 + $0x488] sm:$0xff]
  %v169 = vld [vmem:[%s1 + $0x490] sm:$0xff]
  %v170 = vld [vmem:[%s1 + $0x498] sm:$0xff]
  %v171 = vld [vmem:[%s1 + $0x4a0] sm:$0xff]
  %v172 = vld [vmem:[%s1 + $0x4a8] sm:$0xff]
  %v173 = vld [vmem:[%s1 + $0x4b0] sm:$0xff]
  %v174 = vld [vmem:[%s1 + $0x4b8] sm:$0xff]
  %v175 = vld [vmem:[%s1 + $0x4c0] sm:$0xff]
  %v176 = vld [vmem:[%s1 + $0x4c8] sm:$0xff]
  %v177 = vld [vmem:[%s1 + $0x4d0] sm:$0xff]
  %v178 = vld [vmem:[%s1 + $0x4d8] sm:$0xff]
  %v179 = vld [vmem:[%s1 + $0x4e0] sm:$0xff]
  %v180 = vld [vmem:[%s1 + $0x4e8] sm:$0xff]
  %v181 = vld [vmem:[%s1 + $0x4f0] sm:$0xff]
  %v182 = vld [vmem:[%s1 + $0x4f8] sm:$0xff]
  %v183 = vld [vmem:[%s1 + $0x500] sm:$0xff]
  %v184 = vld [vmem:[%s1 + $0x508] sm:$0xff]
  %v185 = vld [vmem:[%s1 + $0x510] sm:$0xff]
  %v186 = vld [vmem:[%s1 + $0x518] sm:$0xff]
  %v187 = vld [vmem:[%s1 + $0x520] sm:$0xff]
  %v188 = vld [vmem:[%s1 + $0x528] sm:$0xff]
  %v189 = vld [vmem:[%s1 + $0x530] sm:$0xff]
  %v190 = vld [vmem:[%s1 + $0x538] sm:$0xff]
  %v191 = vld [vmem:[%s1 + $0x540] sm:$0xff]
  %v192 = vld [vmem:[%s1 + $0x548] sm:$0xff]
  %v193 = vld [vmem:[%s1 + $0x550] sm:$0xff]
  %v194 = vld [vmem:[%s1 + $0x558] sm:$0xff]
  %v195 = vld [vmem:[%s1 + $0x560] sm:$0xff]
  %v196 = vld [vmem:[%s1 + $0x568] sm:$0xff]
  %v197 = vld [vmem:[%s1 + $0x570] sm:$0xff]
  %v198 = vld [vmem:[%s1 + $0x578] sm:$0xff]
  %v199 = vld [vmem:[%s1 + $0x580] sm:$0xff]
  %v200 = vld [vmem:[%s1 + $0x588] sm:$0xff]
  %v201 = vld [vmem:[%s1 + $0x590] sm:$0xff]
  %v202 = vld [vmem:[%s1 + $0x598] sm:$0xff]
  %v203 = vld [vmem:[%s1 + $0x5a0] sm:$0xff]
  %v204 = vld [vmem:[%s1 + $0x5a8] sm:$0xff]
  %v205 = vld [vmem:[%s1 + $0x5b0] sm:$0xff]
  %v206 = vld [vmem:[%s1 + $0x5b8] sm:$0xff]
  %v207 = vld [vmem:[%s1 + $0x5c0] sm:$0xff]
  %v208 = vld [vmem:[%s1 + $0x5c8] sm:$0xff]
  %v209 = vld [vmem:[%s1 + $0x5d0] sm:$0xff]
  %v210 = vld [vmem:[%s1 + $0x5d8] sm:$0xff]
  %v211 = vld [vmem:[%s1 + $0x5e0] sm:$0xff]
  %v212 = vld [vmem:[%s1 + $0x5e8] sm:$0xff]
  %v213 = vld [vmem:[%s1 + $0x5f0] sm:$0xff]
  %v214 = vld [vmem:[%s1 + $0x5f8] sm:$0xff]
  %v215 = vld [vmem:[%s1 + $0x600] sm:$0xff]
  %v216 = vld [vmem:[%s1 + $0x608] sm:$0xff]
  %v217 = vld [vmem:[%s1 + $0x610] sm:$0xff]
  %v218 = vld [vmem:[%s1 + $0x618] sm:$0xff]
  %v219 = vld [vmem:[%s1 + $0x620] sm:$0xff]
  %v220 = vld [vmem:[%s1 + $0x628] sm:$0xff]
  %v221 = vld [vmem:[%s1 + $0x630] sm:$0xff]
  %v222 = vld [vmem:[%s1 + $0x638] sm:$0xff]
  %v223 = vld [vmem:[%s1 + $0x640] sm:$0xff]
  %v224 = vld [vmem:[%s1 + $0x648] sm:$0xff]
  %v225 = vld [vmem:[%s1 + $0x650] sm:$0xff]
  %v226 = vld [vmem:[%s1 + $0x658] sm:$0xff]
  %v227 = vld [vmem:[%s1 + $0x660] sm:$0xff]
  %v228 = vld [vmem:[%s1 + $0x668] sm:$0xff]
  %v229 = vld [vmem:[%s1 + $0x670] sm:$0xff]
  %v230 = vld [vmem:[%s1 + $0x678] sm:$0xff]
  %v231 = vld [vmem:[%s1 + $0x680] sm:$0xff]
  %v232 = vld [vmem:[%s1 + $0x688] sm:$0xff]
  %v233 = vld [vmem:[%s1 + $0x690] sm:$0xff]
  %v234 = vld [vmem:[%s1 + $0x698] sm:$0xff]
  %v235 = vld [vmem:[%s1 + $0x6a0] sm:$0xff]
  %v236 = vld [vmem:[%s1 + $0x6a8] sm:$0xff]
  %v237 = vld [vmem:[%s1 + $0x6b0] sm:$0xff]
  %v238 = vld [vmem:[%s1 + $0x6b8] sm:$0xff]
  %v239 = vld [vmem:[%s1 + $0x6c0] sm:$0xff]
  %v240 = vld [vmem:[%s1 + $0x6c8] sm:$0xff]
  %v241 = vld [vmem:[%s1 + $0x6d0] sm:$0xff]
  %v242 = vld [vmem:[%s1 + $0x6d8] sm:$0xff]
  %v243 = vld [vmem:[%s1 + $0x6e0] sm:$0xff]
  %v244 = vld [vmem:[%s1 + $0x6e8] sm:$0xff]
  %v245 = vld [vmem:[%s1 + $0x6f0] sm:$0xff]
  %v246 = vld [vmem:[%s1 + $0x6f8] sm:$0xff]
  %v247 = vld [vmem:[%s1 + $0x700] sm:$0xff]
  %v248 = vld [vmem:[%s1 + $0x708] sm:$0xff]
  %v249 = vld [vmem:[%s1 + $0x710] sm:$0xff]
  %v250 = vld [vmem:[%s1 + $0x718] sm:$0xff]
  %v251 = vld [vmem:[%s1 + $0x720] sm:$0xff]
  %v252 = vld [vmem:[%s1 + $0x728] sm:$0xff]
  %v253 = vld [vmem:[%s1 + $0x730] sm:$0xff]
  %v254 = vld [vmem:[%s1 + $0x738] sm:$0xff]
  %v255 = vld [vmem:[%s1 + $0x740] sm:$0xff]
  %v256 = vld [vmem:[%s1 + $0x748] sm:$0xff]
  %v257 = vld [vmem:[%s1 + $0x750] sm:$0xff]
  %v258 = vld [vmem:[%s1 + $0x758] sm:$0xff]
  %v259 = vld [vmem:[%s1 + $0x760] sm:$0xff]
  %v260 = vld [vmem:[%s1 + $0x768] sm:$0xff]
  %v261 = vld [vmem:[%s1 + $0x770] sm:$0xff]
  %v262 = vld [vmem:[%s1 + $0x778] sm:$0xff]
  %v263 = vld [vmem:[%s1 + $0x780] sm:$0xff]
  %v264 = vld [vmem:[%s1 + $0x788] sm:$0xff]
  %v265 = vld [vmem:[%s1 + $0x790] sm:$0xff]
  %v266 = vld [vmem:[%s1 + $0x798] sm:$0xff]
  %v267 = vld [vmem:[%s1 + $0x7a0] sm:$0xff]
  %v268 = vld [vmem:[%s1 + $0x7a8] sm:$0xff]
  %v269 = vld [vmem:[%s1 + $0x7b0] sm:$0xff]
  %v270 = vld [vmem:[%s1 + $0x7b8] sm:$0xff]
  %v271 = vld [vmem:[%s1 + $0x7c0] sm:$0xff]
  %v272 = vld [vmem:[%s1 + $0x7c8] sm:$0xff]
  %v273 = vld [vmem:[%s2] sm:$0xff]
  %v274 = vld [vmem:[%s2 + $0x8] sm:$0xff]
  %v275 = vld [vmem:[%s2 + $0x10] sm:$0xff]
  %v276 = vld [vmem:[%s2 + $0x18] sm:$0xff]
  %278 = vset.pattern.permute.xlu0 0
  %279 = vperm.xlu0 %278, %v273
  %v280 = vpop.permute.xlu0 %279
  %283 = vset.pattern.permute.xlu0 0
  %284 = vperm.xlu0 %283, %v274
  %v285 = vpop.permute.xlu0 %284
  %288 = vset.pattern.permute.xlu0 0
  %289 = vperm.xlu0 %288, %v275
  %v290 = vpop.permute.xlu0 %289
  %293 = vset.pattern.permute.xlu0 0
  %294 = vperm.xlu0 %293, %v276
  %v295 = vpop.permute.xlu0 %294
  %v305 = vunpack.c.l.b16 %v15
  %v306 = vunpack.c.h.b16 %v15
  %v307 = vunpack.c.l.b16 %v16
  %v308 = vunpack.c.h.b16 %v16
  %v309 = vunpack.c.l.b16 %v17
  %v310 = vunpack.c.h.b16 %v17
  %v311 = vunpack.c.l.b16 %v18
  %v312 = vunpack.c.h.b16 %v18
  %v313 = vunpack.c.l.b16 %v19
  %v314 = vunpack.c.h.b16 %v19
  %v315 = vunpack.c.l.b16 %v20
  %v316 = vunpack.c.h.b16 %v20
  %v317 = vunpack.c.l.b16 %v21
  %v318 = vunpack.c.h.b16 %v21
  %v319 = vunpack.c.l.b16 %v22
  %v320 = vunpack.c.h.b16 %v22
  %v321 = vpack.c.b16 %v309, %v305
  %v322 = vpack.c.b16 %v310, %v306
  %v323 = vpack.c.b16 %v311, %v307
  %v324 = vpack.c.b16 %v312, %v308
  %v325 = vpack.c.b16 %v317, %v313
  %v326 = vpack.c.b16 %v318, %v314
  %v327 = vpack.c.b16 %v319, %v315
  %v328 = vpack.c.b16 %v320, %v316
  %v585 = vunpack.c.l.b16 %v23
  %v586 = vunpack.c.h.b16 %v23
  %v587 = vunpack.c.l.b16 %v24
  %v588 = vunpack.c.h.b16 %v24
  %v589 = vunpack.c.l.b16 %v25
  %v590 = vunpack.c.h.b16 %v25
  %v591 = vunpack.c.l.b16 %v26
  %v592 = vunpack.c.h.b16 %v26
  %v593 = vunpack.c.l.b16 %v27
  %v594 = vunpack.c.h.b16 %v27
  %v595 = vunpack.c.l.b16 %v28
  %v596 = vunpack.c.h.b16 %v28
  %v597 = vunpack.c.l.b16 %v29
  %v598 = vunpack.c.h.b16 %v29
  %v599 = vunpack.c.l.b16 %v30
  %v600 = vunpack.c.h.b16 %v30
  %v601 = vunpack.c.l.b16 %v31
  %v602 = vunpack.c.h.b16 %v31
  %v603 = vunpack.c.l.b16 %v32
  %v604 = vunpack.c.h.b16 %v32
  %v605 = vunpack.c.l.b16 %v33
  %v606 = vunpack.c.h.b16 %v33
  %v607 = vunpack.c.l.b16 %v34
  %v608 = vunpack.c.h.b16 %v34
  %v609 = vunpack.c.l.b16 %v35
  %v610 = vunpack.c.h.b16 %v35
  %v611 = vunpack.c.l.b16 %v36
  %v612 = vunpack.c.h.b16 %v36
  %v613 = vunpack.c.l.b16 %v37
  %v614 = vunpack.c.h.b16 %v37
  %v615 = vunpack.c.l.b16 %v38
  %v616 = vunpack.c.h.b16 %v38
  %v617 = vunpack.c.l.b16 %v39
  %v618 = vunpack.c.h.b16 %v39
  %v619 = vunpack.c.l.b16 %v40
  %v620 = vunpack.c.h.b16 %v40
  %v621 = vunpack.c.l.b16 %v41
  %v622 = vunpack.c.h.b16 %v41
  %v623 = vunpack.c.l.b16 %v42
  %v624 = vunpack.c.h.b16 %v42
  %v625 = vunpack.c.l.b16 %v43
  %v626 = vunpack.c.h.b16 %v43
  %v627 = vunpack.c.l.b16 %v44
  %v628 = vunpack.c.h.b16 %v44
  %v629 = vunpack.c.l.b16 %v45
  %v630 = vunpack.c.h.b16 %v45
  %v631 = vunpack.c.l.b16 %v46
  %v632 = vunpack.c.h.b16 %v46
  %v633 = vunpack.c.l.b16 %v47
  %v634 = vunpack.c.h.b16 %v47
  %v635 = vunpack.c.l.b16 %v48
  %v636 = vunpack.c.h.b16 %v48
  %v637 = vunpack.c.l.b16 %v49
  %v638 = vunpack.c.h.b16 %v49
  %v639 = vunpack.c.l.b16 %v50
  %v640 = vunpack.c.h.b16 %v50
  %v641 = vunpack.c.l.b16 %v51
  %v642 = vunpack.c.h.b16 %v51
  %v643 = vunpack.c.l.b16 %v52
  %v644 = vunpack.c.h.b16 %v52
  %v645 = vunpack.c.l.b16 %v53
  %v646 = vunpack.c.h.b16 %v53
  %v647 = vunpack.c.l.b16 %v54
  %v648 = vunpack.c.h.b16 %v54
  %v649 = vunpack.c.l.b16 %v55
  %v650 = vunpack.c.h.b16 %v55
  %v651 = vunpack.c.l.b16 %v56
  %v652 = vunpack.c.h.b16 %v56
  %v653 = vunpack.c.l.b16 %v57
  %v654 = vunpack.c.h.b16 %v57
  %v655 = vunpack.c.l.b16 %v58
  %v656 = vunpack.c.h.b16 %v58
  %v657 = vunpack.c.l.b16 %v59
  %v658 = vunpack.c.h.b16 %v59
  %v659 = vunpack.c.l.b16 %v60
  %v660 = vunpack.c.h.b16 %v60
  %v661 = vunpack.c.l.b16 %v61
  %v662 = vunpack.c.h.b16 %v61
  %v663 = vunpack.c.l.b16 %v62
  %v664 = vunpack.c.h.b16 %v62
  %v665 = vunpack.c.l.b16 %v63
  %v666 = vunpack.c.h.b16 %v63
  %v667 = vunpack.c.l.b16 %v64
  %v668 = vunpack.c.h.b16 %v64
  %v669 = vunpack.c.l.b16 %v65
  %v670 = vunpack.c.h.b16 %v65
  %v671 = vunpack.c.l.b16 %v66
  %v672 = vunpack.c.h.b16 %v66
  %v673 = vunpack.c.l.b16 %v67
  %v674 = vunpack.c.h.b16 %v67
  %v675 = vunpack.c.l.b16 %v68
  %v676 = vunpack.c.h.b16 %v68
  %v677 = vunpack.c.l.b16 %v69
  %v678 = vunpack.c.h.b16 %v69
  %v679 = vunpack.c.l.b16 %v70
  %v680 = vunpack.c.h.b16 %v70
  %v681 = vunpack.c.l.b16 %v71
  %v682 = vunpack.c.h.b16 %v71
  %v683 = vunpack.c.l.b16 %v72
  %v684 = vunpack.c.h.b16 %v72
  %v685 = vunpack.c.l.b16 %v73
  %v686 = vunpack.c.h.b16 %v73
  %v687 = vunpack.c.l.b16 %v74
  %v688 = vunpack.c.h.b16 %v74
  %v689 = vunpack.c.l.b16 %v75
  %v690 = vunpack.c.h.b16 %v75
  %v691 = vunpack.c.l.b16 %v76
  %v692 = vunpack.c.h.b16 %v76
  %v693 = vunpack.c.l.b16 %v77
  %v694 = vunpack.c.h.b16 %v77
  %v695 = vunpack.c.l.b16 %v78
  %v696 = vunpack.c.h.b16 %v78
  %v697 = vunpack.c.l.b16 %v79
  %v698 = vunpack.c.h.b16 %v79
  %v699 = vunpack.c.l.b16 %v80
  %v700 = vunpack.c.h.b16 %v80
  %v701 = vunpack.c.l.b16 %v81
  %v702 = vunpack.c.h.b16 %v81
  %v703 = vunpack.c.l.b16 %v82
  %v704 = vunpack.c.h.b16 %v82
  %v705 = vunpack.c.l.b16 %v83
  %v706 = vunpack.c.h.b16 %v83
  %v707 = vunpack.c.l.b16 %v84
  %v708 = vunpack.c.h.b16 %v84
  %v709 = vunpack.c.l.b16 %v85
  %v710 = vunpack.c.h.b16 %v85
  %v711 = vunpack.c.l.b16 %v86
  %v712 = vunpack.c.h.b16 %v86
  %v713 = vunpack.c.l.b16 %v87
  %v714 = vunpack.c.h.b16 %v87
  %v715 = vunpack.c.l.b16 %v88
  %v716 = vunpack.c.h.b16 %v88
  %v717 = vunpack.c.l.b16 %v89
  %v718 = vunpack.c.h.b16 %v89
  %v719 = vunpack.c.l.b16 %v90
  %v720 = vunpack.c.h.b16 %v90
  %v721 = vunpack.c.l.b16 %v91
  %v722 = vunpack.c.h.b16 %v91
  %v723 = vunpack.c.l.b16 %v92
  %v724 = vunpack.c.h.b16 %v92
  %v725 = vunpack.c.l.b16 %v93
  %v726 = vunpack.c.h.b16 %v93
  %v727 = vunpack.c.l.b16 %v94
  %v728 = vunpack.c.h.b16 %v94
  %v729 = vunpack.c.l.b16 %v95
  %v730 = vunpack.c.h.b16 %v95
  %v731 = vunpack.c.l.b16 %v96
  %v732 = vunpack.c.h.b16 %v96
  %v733 = vunpack.c.l.b16 %v97
  %v734 = vunpack.c.h.b16 %v97
  %v735 = vunpack.c.l.b16 %v98
  %v736 = vunpack.c.h.b16 %v98
  %v737 = vunpack.c.l.b16 %v99
  %v738 = vunpack.c.h.b16 %v99
  %v739 = vunpack.c.l.b16 %v100
  %v740 = vunpack.c.h.b16 %v100
  %v741 = vunpack.c.l.b16 %v101
  %v742 = vunpack.c.h.b16 %v101
  %v743 = vunpack.c.l.b16 %v102
  %v744 = vunpack.c.h.b16 %v102
  %v745 = vunpack.c.l.b16 %v103
  %v746 = vunpack.c.h.b16 %v103
  %v747 = vunpack.c.l.b16 %v104
  %v748 = vunpack.c.h.b16 %v104
  %v749 = vunpack.c.l.b16 %v105
  %v750 = vunpack.c.h.b16 %v105
  %v751 = vunpack.c.l.b16 %v106
  %v752 = vunpack.c.h.b16 %v106
  %v753 = vunpack.c.l.b16 %v107
  %v754 = vunpack.c.h.b16 %v107
  %v755 = vunpack.c.l.b16 %v108
  %v756 = vunpack.c.h.b16 %v108
  %v757 = vunpack.c.l.b16 %v109
  %v758 = vunpack.c.h.b16 %v109
  %v759 = vunpack.c.l.b16 %v110
  %v760 = vunpack.c.h.b16 %v110
  %v761 = vunpack.c.l.b16 %v111
  %v762 = vunpack.c.h.b16 %v111
  %v763 = vunpack.c.l.b16 %v112
  %v764 = vunpack.c.h.b16 %v112
  %v765 = vunpack.c.l.b16 %v113
  %v766 = vunpack.c.h.b16 %v113
  %v767 = vunpack.c.l.b16 %v114
  %v768 = vunpack.c.h.b16 %v114
  %v769 = vunpack.c.l.b16 %v115
  %v770 = vunpack.c.h.b16 %v115
  %v771 = vunpack.c.l.b16 %v116
  %v772 = vunpack.c.h.b16 %v116
  %v773 = vunpack.c.l.b16 %v117
  %v774 = vunpack.c.h.b16 %v117
  %v775 = vunpack.c.l.b16 %v118
  %v776 = vunpack.c.h.b16 %v118
  %v777 = vunpack.c.l.b16 %v119
  %v778 = vunpack.c.h.b16 %v119
  %v779 = vunpack.c.l.b16 %v120
  %v780 = vunpack.c.h.b16 %v120
  %v781 = vunpack.c.l.b16 %v121
  %v782 = vunpack.c.h.b16 %v121
  %v783 = vunpack.c.l.b16 %v122
  %v784 = vunpack.c.h.b16 %v122
  %v785 = vunpack.c.l.b16 %v123
  %v786 = vunpack.c.h.b16 %v123
  %v787 = vunpack.c.l.b16 %v124
  %v788 = vunpack.c.h.b16 %v124
  %v789 = vunpack.c.l.b16 %v125
  %v790 = vunpack.c.h.b16 %v125
  %v791 = vunpack.c.l.b16 %v126
  %v792 = vunpack.c.h.b16 %v126
  %v793 = vunpack.c.l.b16 %v127
  %v794 = vunpack.c.h.b16 %v127
  %v795 = vunpack.c.l.b16 %v128
  %v796 = vunpack.c.h.b16 %v128
  %v797 = vunpack.c.l.b16 %v129
  %v798 = vunpack.c.h.b16 %v129
  %v799 = vunpack.c.l.b16 %v130
  %v800 = vunpack.c.h.b16 %v130
  %v801 = vunpack.c.l.b16 %v131
  %v802 = vunpack.c.h.b16 %v131
  %v803 = vunpack.c.l.b16 %v132
  %v804 = vunpack.c.h.b16 %v132
  %v805 = vunpack.c.l.b16 %v133
  %v806 = vunpack.c.h.b16 %v133
  %v807 = vunpack.c.l.b16 %v134
  %v808 = vunpack.c.h.b16 %v134
  %v809 = vunpack.c.l.b16 %v135
  %v810 = vunpack.c.h.b16 %v135
  %v811 = vunpack.c.l.b16 %v136
  %v812 = vunpack.c.h.b16 %v136
  %v813 = vunpack.c.l.b16 %v137
  %v814 = vunpack.c.h.b16 %v137
  %v815 = vunpack.c.l.b16 %v138
  %v816 = vunpack.c.h.b16 %v138
  %v817 = vunpack.c.l.b16 %v139
  %v818 = vunpack.c.h.b16 %v139
  %v819 = vunpack.c.l.b16 %v140
  %v820 = vunpack.c.h.b16 %v140
  %v821 = vunpack.c.l.b16 %v141
  %v822 = vunpack.c.h.b16 %v141
  %v823 = vunpack.c.l.b16 %v142
  %v824 = vunpack.c.h.b16 %v142
  %v825 = vunpack.c.l.b16 %v143
  %v826 = vunpack.c.h.b16 %v143
  %v827 = vunpack.c.l.b16 %v144
  %v828 = vunpack.c.h.b16 %v144
  %v829 = vunpack.c.l.b16 %v145
  %v830 = vunpack.c.h.b16 %v145
  %v831 = vunpack.c.l.b16 %v146
  %v832 = vunpack.c.h.b16 %v146
  %v833 = vunpack.c.l.b16 %v147
  %v834 = vunpack.c.h.b16 %v147
  %v835 = vunpack.c.l.b16 %v148
  %v836 = vunpack.c.h.b16 %v148
  %v837 = vunpack.c.l.b16 %v149
  %v838 = vunpack.c.h.b16 %v149
  %v839 = vunpack.c.l.b16 %v150
  %v840 = vunpack.c.h.b16 %v150
  %v841 = vunpack.c.l.b16 %v151
  %v842 = vunpack.c.h.b16 %v151
  %v843 = vunpack.c.l.b16 %v152
  %v844 = vunpack.c.h.b16 %v152
  %v845 = vunpack.c.l.b16 %v153
  %v846 = vunpack.c.h.b16 %v153
  %v847 = vunpack.c.l.b16 %v154
  %v848 = vunpack.c.h.b16 %v154
  %v849 = vunpack.c.l.b16 %v155
  %v850 = vunpack.c.h.b16 %v155
  %v851 = vunpack.c.l.b16 %v156
  %v852 = vunpack.c.h.b16 %v156
  %v853 = vunpack.c.l.b16 %v157
  %v854 = vunpack.c.h.b16 %v157
  %v855 = vunpack.c.l.b16 %v158
  %v856 = vunpack.c.h.b16 %v158
  %v857 = vunpack.c.l.b16 %v159
  %v858 = vunpack.c.h.b16 %v159
  %v859 = vunpack.c.l.b16 %v160
  %v860 = vunpack.c.h.b16 %v160
  %v861 = vunpack.c.l.b16 %v161
  %v862 = vunpack.c.h.b16 %v161
  %v863 = vunpack.c.l.b16 %v162
  %v864 = vunpack.c.h.b16 %v162
  %v865 = vunpack.c.l.b16 %v163
  %v866 = vunpack.c.h.b16 %v163
  %v867 = vunpack.c.l.b16 %v164
  %v868 = vunpack.c.h.b16 %v164
  %v869 = vunpack.c.l.b16 %v165
  %v870 = vunpack.c.h.b16 %v165
  %v871 = vunpack.c.l.b16 %v166
  %v872 = vunpack.c.h.b16 %v166
  %v873 = vunpack.c.l.b16 %v167
  %v874 = vunpack.c.h.b16 %v167
  %v875 = vunpack.c.l.b16 %v168
  %v876 = vunpack.c.h.b16 %v168
  %v877 = vunpack.c.l.b16 %v169
  %v878 = vunpack.c.h.b16 %v169
  %v879 = vunpack.c.l.b16 %v170
  %v880 = vunpack.c.h.b16 %v170
  %v881 = vunpack.c.l.b16 %v171
  %v882 = vunpack.c.h.b16 %v171
  %v883 = vunpack.c.l.b16 %v172
  %v884 = vunpack.c.h.b16 %v172
  %v885 = vunpack.c.l.b16 %v173
  %v886 = vunpack.c.h.b16 %v173
  %v887 = vunpack.c.l.b16 %v174
  %v888 = vunpack.c.h.b16 %v174
  %v889 = vunpack.c.l.b16 %v175
  %v890 = vunpack.c.h.b16 %v175
  %v891 = vunpack.c.l.b16 %v176
  %v892 = vunpack.c.h.b16 %v176
  %v893 = vunpack.c.l.b16 %v177
  %v894 = vunpack.c.h.b16 %v177
  %v895 = vunpack.c.l.b16 %v178
  %v896 = vunpack.c.h.b16 %v178
  %v897 = vunpack.c.l.b16 %v179
  %v898 = vunpack.c.h.b16 %v179
  %v899 = vunpack.c.l.b16 %v180
  %v900 = vunpack.c.h.b16 %v180
  %v901 = vunpack.c.l.b16 %v181
  %v902 = vunpack.c.h.b16 %v181
  %v903 = vunpack.c.l.b16 %v182
  %v904 = vunpack.c.h.b16 %v182
  %v905 = vunpack.c.l.b16 %v183
  %v906 = vunpack.c.h.b16 %v183
  %v907 = vunpack.c.l.b16 %v184
  %v908 = vunpack.c.h.b16 %v184
  %v909 = vunpack.c.l.b16 %v185
  %v910 = vunpack.c.h.b16 %v185
  %v911 = vunpack.c.l.b16 %v186
  %v912 = vunpack.c.h.b16 %v186
  %v913 = vunpack.c.l.b16 %v187
  %v914 = vunpack.c.h.b16 %v187
  %v915 = vunpack.c.l.b16 %v188
  %v916 = vunpack.c.h.b16 %v188
  %v917 = vunpack.c.l.b16 %v189
  %v918 = vunpack.c.h.b16 %v189
  %v919 = vunpack.c.l.b16 %v190
  %v920 = vunpack.c.h.b16 %v190
  %v921 = vunpack.c.l.b16 %v191
  %v922 = vunpack.c.h.b16 %v191
  %v923 = vunpack.c.l.b16 %v192
  %v924 = vunpack.c.h.b16 %v192
  %v925 = vunpack.c.l.b16 %v193
  %v926 = vunpack.c.h.b16 %v193
  %v927 = vunpack.c.l.b16 %v194
  %v928 = vunpack.c.h.b16 %v194
  %v929 = vunpack.c.l.b16 %v195
  %v930 = vunpack.c.h.b16 %v195
  %v931 = vunpack.c.l.b16 %v196
  %v932 = vunpack.c.h.b16 %v196
  %v933 = vunpack.c.l.b16 %v197
  %v934 = vunpack.c.h.b16 %v197
  %v935 = vunpack.c.l.b16 %v198
  %v936 = vunpack.c.h.b16 %v198
  %v937 = vunpack.c.l.b16 %v199
  %v938 = vunpack.c.h.b16 %v199
  %v939 = vunpack.c.l.b16 %v200
  %v940 = vunpack.c.h.b16 %v200
  %v941 = vunpack.c.l.b16 %v201
  %v942 = vunpack.c.h.b16 %v201
  %v943 = vunpack.c.l.b16 %v202
  %v944 = vunpack.c.h.b16 %v202
  %v945 = vunpack.c.l.b16 %v203
  %v946 = vunpack.c.h.b16 %v203
  %v947 = vunpack.c.l.b16 %v204
  %v948 = vunpack.c.h.b16 %v204
  %v949 = vunpack.c.l.b16 %v205
  %v950 = vunpack.c.h.b16 %v205
  %v951 = vunpack.c.l.b16 %v206
  %v952 = vunpack.c.h.b16 %v206
  %v953 = vunpack.c.l.b16 %v207
  %v954 = vunpack.c.h.b16 %v207
  %v955 = vunpack.c.l.b16 %v208
  %v956 = vunpack.c.h.b16 %v208
  %v957 = vunpack.c.l.b16 %v209
  %v958 = vunpack.c.h.b16 %v209
  %v959 = vunpack.c.l.b16 %v210
  %v960 = vunpack.c.h.b16 %v210
  %v961 = vunpack.c.l.b16 %v211
  %v962 = vunpack.c.h.b16 %v211
  %v963 = vunpack.c.l.b16 %v212
  %v964 = vunpack.c.h.b16 %v212
  %v965 = vunpack.c.l.b16 %v213
  %v966 = vunpack.c.h.b16 %v213
  %v967 = vunpack.c.l.b16 %v214
  %v968 = vunpack.c.h.b16 %v214
  %v969 = vunpack.c.l.b16 %v215
  %v970 = vunpack.c.h.b16 %v215
  %v971 = vunpack.c.l.b16 %v216
  %v972 = vunpack.c.h.b16 %v216
  %v973 = vunpack.c.l.b16 %v217
  %v974 = vunpack.c.h.b16 %v217
  %v975 = vunpack.c.l.b16 %v218
  %v976 = vunpack.c.h.b16 %v218
  %v977 = vunpack.c.l.b16 %v219
  %v978 = vunpack.c.h.b16 %v219
  %v979 = vunpack.c.l.b16 %v220
  %v980 = vunpack.c.h.b16 %v220
  %v981 = vunpack.c.l.b16 %v221
  %v982 = vunpack.c.h.b16 %v221
  %v983 = vunpack.c.l.b16 %v222
  %v984 = vunpack.c.h.b16 %v222
  %v985 = vunpack.c.l.b16 %v223
  %v986 = vunpack.c.h.b16 %v223
  %v987 = vunpack.c.l.b16 %v224
  %v988 = vunpack.c.h.b16 %v224
  %v989 = vunpack.c.l.b16 %v225
  %v990 = vunpack.c.h.b16 %v225
  %v991 = vunpack.c.l.b16 %v226
  %v992 = vunpack.c.h.b16 %v226
  %v993 = vunpack.c.l.b16 %v227
  %v994 = vunpack.c.h.b16 %v227
  %v995 = vunpack.c.l.b16 %v228
  %v996 = vunpack.c.h.b16 %v228
  %v997 = vunpack.c.l.b16 %v229
  %v998 = vunpack.c.h.b16 %v229
  %v999 = vunpack.c.l.b16 %v230
  %v1000 = vunpack.c.h.b16 %v230
  %v1001 = vunpack.c.l.b16 %v231
  %v1002 = vunpack.c.h.b16 %v231
  %v1003 = vunpack.c.l.b16 %v232
  %v1004 = vunpack.c.h.b16 %v232
  %v1005 = vunpack.c.l.b16 %v233
  %v1006 = vunpack.c.h.b16 %v233
  %v1007 = vunpack.c.l.b16 %v234
  %v1008 = vunpack.c.h.b16 %v234
  %v1009 = vunpack.c.l.b16 %v235
  %v1010 = vunpack.c.h.b16 %v235
  %v1011 = vunpack.c.l.b16 %v236
  %v1012 = vunpack.c.h.b16 %v236
  %v1013 = vunpack.c.l.b16 %v237
  %v1014 = vunpack.c.h.b16 %v237
  %v1015 = vunpack.c.l.b16 %v238
  %v1016 = vunpack.c.h.b16 %v238
  %v1017 = vunpack.c.l.b16 %v239
  %v1018 = vunpack.c.h.b16 %v239
  %v1019 = vunpack.c.l.b16 %v240
  %v1020 = vunpack.c.h.b16 %v240
  %v1021 = vunpack.c.l.b16 %v241
  %v1022 = vunpack.c.h.b16 %v241
  %v1023 = vunpack.c.l.b16 %v242
  %v1024 = vunpack.c.h.b16 %v242
  %v1025 = vunpack.c.l.b16 %v243
  %v1026 = vunpack.c.h.b16 %v243
  %v1027 = vunpack.c.l.b16 %v244
  %v1028 = vunpack.c.h.b16 %v244
  %v1029 = vunpack.c.l.b16 %v245
  %v1030 = vunpack.c.h.b16 %v245
  %v1031 = vunpack.c.l.b16 %v246
  %v1032 = vunpack.c.h.b16 %v246
  %v1033 = vunpack.c.l.b16 %v247
  %v1034 = vunpack.c.h.b16 %v247
  %v1035 = vunpack.c.l.b16 %v248
  %v1036 = vunpack.c.h.b16 %v248
  %v1037 = vunpack.c.l.b16 %v249
  %v1038 = vunpack.c.h.b16 %v249
  %v1039 = vunpack.c.l.b16 %v250
  %v1040 = vunpack.c.h.b16 %v250
  %v1041 = vunpack.c.l.b16 %v251
  %v1042 = vunpack.c.h.b16 %v251
  %v1043 = vunpack.c.l.b16 %v252
  %v1044 = vunpack.c.h.b16 %v252
  %v1045 = vunpack.c.l.b16 %v253
  %v1046 = vunpack.c.h.b16 %v253
  %v1047 = vunpack.c.l.b16 %v254
  %v1048 = vunpack.c.h.b16 %v254
  %v1049 = vunpack.c.l.b16 %v255
  %v1050 = vunpack.c.h.b16 %v255
  %v1051 = vunpack.c.l.b16 %v256
  %v1052 = vunpack.c.h.b16 %v256
  %v1053 = vunpack.c.l.b16 %v257
  %v1054 = vunpack.c.h.b16 %v257
  %v1055 = vunpack.c.l.b16 %v258
  %v1056 = vunpack.c.h.b16 %v258
  %v1057 = vunpack.c.l.b16 %v259
  %v1058 = vunpack.c.h.b16 %v259
  %v1059 = vunpack.c.l.b16 %v260
  %v1060 = vunpack.c.h.b16 %v260
  %v1061 = vunpack.c.l.b16 %v261
  %v1062 = vunpack.c.h.b16 %v261
  %v1063 = vunpack.c.l.b16 %v262
  %v1064 = vunpack.c.h.b16 %v262
  %v1065 = vunpack.c.l.b16 %v263
  %v1066 = vunpack.c.h.b16 %v263
  %v1067 = vunpack.c.l.b16 %v264
  %v1068 = vunpack.c.h.b16 %v264
  %v1069 = vunpack.c.l.b16 %v265
  %v1070 = vunpack.c.h.b16 %v265
  %v1071 = vunpack.c.l.b16 %v266
  %v1072 = vunpack.c.h.b16 %v266
  %v1073 = vunpack.c.l.b16 %v267
  %v1074 = vunpack.c.h.b16 %v267
  %v1075 = vunpack.c.l.b16 %v268
  %v1076 = vunpack.c.h.b16 %v268
  %v1077 = vunpack.c.l.b16 %v269
  %v1078 = vunpack.c.h.b16 %v269
  %v1079 = vunpack.c.l.b16 %v270
  %v1080 = vunpack.c.h.b16 %v270
  %v1081 = vunpack.c.l.b16 %v271
  %v1082 = vunpack.c.h.b16 %v271
  %v1083 = vunpack.c.l.b16 %v272
  %v1084 = vunpack.c.h.b16 %v272
  %v1085 = vpack.c.b16 %v595, %v585
  %v1086 = vpack.c.b16 %v596, %v586
  %v1087 = vpack.c.b16 %v597, %v587
  %v1088 = vpack.c.b16 %v598, %v588
  %v1089 = vpack.c.b16 %v599, %v589
  %v1090 = vpack.c.b16 %v600, %v590
  %v1091 = vpack.c.b16 %v601, %v591
  %v1092 = vpack.c.b16 %v602, %v592
  %v1093 = vpack.c.b16 %v603, %v593
  %v1094 = vpack.c.b16 %v604, %v594
  %v1095 = vpack.c.b16 %v615, %v605
  %v1096 = vpack.c.b16 %v616, %v606
  %v1097 = vpack.c.b16 %v617, %v607
  %v1098 = vpack.c.b16 %v618, %v608
  %v1099 = vpack.c.b16 %v619, %v609
  %v1100 = vpack.c.b16 %v620, %v610
  %v1101 = vpack.c.b16 %v621, %v611
  %v1102 = vpack.c.b16 %v622, %v612
  %v1103 = vpack.c.b16 %v623, %v613
  %v1104 = vpack.c.b16 %v624, %v614
  %v1105 = vpack.c.b16 %v635, %v625
  %v1106 = vpack.c.b16 %v636, %v626
  %v1107 = vpack.c.b16 %v637, %v627
  %v1108 = vpack.c.b16 %v638, %v628
  %v1109 = vpack.c.b16 %v639, %v629
  %v1110 = vpack.c.b16 %v640, %v630
  %v1111 = vpack.c.b16 %v641, %v631
  %v1112 = vpack.c.b16 %v642, %v632
  %v1113 = vpack.c.b16 %v643, %v633
  %v1114 = vpack.c.b16 %v644, %v634
  %v1115 = vpack.c.b16 %v655, %v645
  %v1116 = vpack.c.b16 %v656, %v646
  %v1117 = vpack.c.b16 %v657, %v647
  %v1118 = vpack.c.b16 %v658, %v648
  %v1119 = vpack.c.b16 %v659, %v649
  %v1120 = vpack.c.b16 %v660, %v650
  %v1121 = vpack.c.b16 %v661, %v651
  %v1122 = vpack.c.b16 %v662, %v652
  %v1123 = vpack.c.b16 %v663, %v653
  %v1124 = vpack.c.b16 %v664, %v654
  %v1125 = vpack.c.b16 %v675, %v665
  %v1126 = vpack.c.b16 %v676, %v666
  %v1127 = vpack.c.b16 %v677, %v667
  %v1128 = vpack.c.b16 %v678, %v668
  %v1129 = vpack.c.b16 %v679, %v669
  %v1130 = vpack.c.b16 %v680, %v670
  %v1131 = vpack.c.b16 %v681, %v671
  %v1132 = vpack.c.b16 %v682, %v672
  %v1133 = vpack.c.b16 %v683, %v673
  %v1134 = vpack.c.b16 %v684, %v674
  %v1135 = vpack.c.b16 %v695, %v685
  %v1136 = vpack.c.b16 %v696, %v686
  %v1137 = vpack.c.b16 %v697, %v687
  %v1138 = vpack.c.b16 %v698, %v688
  %v1139 = vpack.c.b16 %v699, %v689
  %v1140 = vpack.c.b16 %v700, %v690
  %v1141 = vpack.c.b16 %v701, %v691
  %v1142 = vpack.c.b16 %v702, %v692
  %v1143 = vpack.c.b16 %v703, %v693
  %v1144 = vpack.c.b16 %v704, %v694
  %v1145 = vpack.c.b16 %v715, %v705
  %v1146 = vpack.c.b16 %v716, %v706
  %v1147 = vpack.c.b16 %v717, %v707
  %v1148 = vpack.c.b16 %v718, %v708
  %v1149 = vpack.c.b16 %v719, %v709
  %v1150 = vpack.c.b16 %v720, %v710
  %v1151 = vpack.c.b16 %v721, %v711
  %v1152 = vpack.c.b16 %v722, %v712
  %v1153 = vpack.c.b16 %v723, %v713
  %v1154 = vpack.c.b16 %v724, %v714
  %v1155 = vpack.c.b16 %v735, %v725
  %v1156 = vpack.c.b16 %v736, %v726
  %v1157 = vpack.c.b16 %v737, %v727
  %v1158 = vpack.c.b16 %v738, %v728
  %v1159 = vpack.c.b16 %v739, %v729
  %v1160 = vpack.c.b16 %v740, %v730
  %v1161 = vpack.c.b16 %v741, %v731
  %v1162 = vpack.c.b16 %v742, %v732
  %v1163 = vpack.c.b16 %v743, %v733
  %v1164 = vpack.c.b16 %v744, %v734
  %v1165 = vpack.c.b16 %v755, %v745
  %v1166 = vpack.c.b16 %v756, %v746
  %v1167 = vpack.c.b16 %v757, %v747
  %v1168 = vpack.c.b16 %v758, %v748
  %v1169 = vpack.c.b16 %v759, %v749
  %v1170 = vpack.c.b16 %v760, %v750
  %v1171 = vpack.c.b16 %v761, %v751
  %v1172 = vpack.c.b16 %v762, %v752
  %v1173 = vpack.c.b16 %v763, %v753
  %v1174 = vpack.c.b16 %v764, %v754
  %v1175 = vpack.c.b16 %v775, %v765
  %v1176 = vpack.c.b16 %v776, %v766
  %v1177 = vpack.c.b16 %v777, %v767
  %v1178 = vpack.c.b16 %v778, %v768
  %v1179 = vpack.c.b16 %v779, %v769
  %v1180 = vpack.c.b16 %v780, %v770
  %v1181 = vpack.c.b16 %v781, %v771
  %v1182 = vpack.c.b16 %v782, %v772
  %v1183 = vpack.c.b16 %v783, %v773
  %v1184 = vpack.c.b16 %v784, %v774
  %v1185 = vpack.c.b16 %v795, %v785
  %v1186 = vpack.c.b16 %v796, %v786
  %v1187 = vpack.c.b16 %v797, %v787
  %v1188 = vpack.c.b16 %v798, %v788
  %v1189 = vpack.c.b16 %v799, %v789
  %v1190 = vpack.c.b16 %v800, %v790
  %v1191 = vpack.c.b16 %v801, %v791
  %v1192 = vpack.c.b16 %v802, %v792
  %v1193 = vpack.c.b16 %v803, %v793
  %v1194 = vpack.c.b16 %v804, %v794
  %v1195 = vpack.c.b16 %v815, %v805
  %v1196 = vpack.c.b16 %v816, %v806
  %v1197 = vpack.c.b16 %v817, %v807
  %v1198 = vpack.c.b16 %v818, %v808
  %v1199 = vpack.c.b16 %v819, %v809
  %v1200 = vpack.c.b16 %v820, %v810
  %v1201 = vpack.c.b16 %v821, %v811
  %v1202 = vpack.c.b16 %v822, %v812
  %v1203 = vpack.c.b16 %v823, %v813
  %v1204 = vpack.c.b16 %v824, %v814
  %v1205 = vpack.c.b16 %v835, %v825
  %v1206 = vpack.c.b16 %v836, %v826
  %v1207 = vpack.c.b16 %v837, %v827
  %v1208 = vpack.c.b16 %v838, %v828
  %v1209 = vpack.c.b16 %v839, %v829
  %v1210 = vpack.c.b16 %v840, %v830
  %v1211 = vpack.c.b16 %v841, %v831
  %v1212 = vpack.c.b16 %v842, %v832
  %v1213 = vpack.c.b16 %v843, %v833
  %v1214 = vpack.c.b16 %v844, %v834
  %v1215 = vpack.c.b16 %v855, %v845
  %v1216 = vpack.c.b16 %v856, %v846
  %v1217 = vpack.c.b16 %v857, %v847
  %v1218 = vpack.c.b16 %v858, %v848
  %v1219 = vpack.c.b16 %v859, %v849
  %v1220 = vpack.c.b16 %v860, %v850
  %v1221 = vpack.c.b16 %v861, %v851
  %v1222 = vpack.c.b16 %v862, %v852
  %v1223 = vpack.c.b16 %v863, %v853
  %v1224 = vpack.c.b16 %v864, %v854
  %v1225 = vpack.c.b16 %v875, %v865
  %v1226 = vpack.c.b16 %v876, %v866
  %v1227 = vpack.c.b16 %v877, %v867
  %v1228 = vpack.c.b16 %v878, %v868
  %v1229 = vpack.c.b16 %v879, %v869
  %v1230 = vpack.c.b16 %v880, %v870
  %v1231 = vpack.c.b16 %v881, %v871
  %v1232 = vpack.c.b16 %v882, %v872
  %v1233 = vpack.c.b16 %v883, %v873
  %v1234 = vpack.c.b16 %v884, %v874
  %v1235 = vpack.c.b16 %v895, %v885
  %v1236 = vpack.c.b16 %v896, %v886
  %v1237 = vpack.c.b16 %v897, %v887
  %v1238 = vpack.c.b16 %v898, %v888
  %v1239 = vpack.c.b16 %v899, %v889
  %v1240 = vpack.c.b16 %v900, %v890
  %v1241 = vpack.c.b16 %v901, %v891
  %v1242 = vpack.c.b16 %v902, %v892
  %v1243 = vpack.c.b16 %v903, %v893
  %v1244 = vpack.c.b16 %v904, %v894
  %v1245 = vpack.c.b16 %v915, %v905
  %v1246 = vpack.c.b16 %v916, %v906
  %v1247 = vpack.c.b16 %v917, %v907
  %v1248 = vpack.c.b16 %v918, %v908
  %v1249 = vpack.c.b16 %v919, %v909
  %v1250 = vpack.c.b16 %v920, %v910
  %v1251 = vpack.c.b16 %v921, %v911
  %v1252 = vpack.c.b16 %v922, %v912
  %v1253 = vpack.c.b16 %v923, %v913
  %v1254 = vpack.c.b16 %v924, %v914
  %v1255 = vpack.c.b16 %v935, %v925
  %v1256 = vpack.c.b16 %v936, %v926
  %v1257 = vpack.c.b16 %v937, %v927
  %v1258 = vpack.c.b16 %v938, %v928
  %v1259 = vpack.c.b16 %v939, %v929
  %v1260 = vpack.c.b16 %v940, %v930
  %v1261 = vpack.c.b16 %v941, %v931
  %v1262 = vpack.c.b16 %v942, %v932
  %v1263 = vpack.c.b16 %v943, %v933
  %v1264 = vpack.c.b16 %v944, %v934
  %v1265 = vpack.c.b16 %v955, %v945
  %v1266 = vpack.c.b16 %v956, %v946
  %v1267 = vpack.c.b16 %v957, %v947
  %v1268 = vpack.c.b16 %v958, %v948
  %v1269 = vpack.c.b16 %v959, %v949
  %v1270 = vpack.c.b16 %v960, %v950
  %v1271 = vpack.c.b16 %v961, %v951
  %v1272 = vpack.c.b16 %v962, %v952
  %v1273 = vpack.c.b16 %v963, %v953
  %v1274 = vpack.c.b16 %v964, %v954
  %v1275 = vpack.c.b16 %v975, %v965
  %v1276 = vpack.c.b16 %v976, %v966
  %v1277 = vpack.c.b16 %v977, %v967
  %v1278 = vpack.c.b16 %v978, %v968
  %v1279 = vpack.c.b16 %v979, %v969
  %v1280 = vpack.c.b16 %v980, %v970
  %v1281 = vpack.c.b16 %v981, %v971
  %v1282 = vpack.c.b16 %v982, %v972
  %v1283 = vpack.c.b16 %v983, %v973
  %v1284 = vpack.c.b16 %v984, %v974
  %v1285 = vpack.c.b16 %v995, %v985
  %v1286 = vpack.c.b16 %v996, %v986
  %v1287 = vpack.c.b16 %v997, %v987
  %v1288 = vpack.c.b16 %v998, %v988
  %v1289 = vpack.c.b16 %v999, %v989
  %v1290 = vpack.c.b16 %v1000, %v990
  %v1291 = vpack.c.b16 %v1001, %v991
  %v1292 = vpack.c.b16 %v1002, %v992
  %v1293 = vpack.c.b16 %v1003, %v993
  %v1294 = vpack.c.b16 %v1004, %v994
  %v1295 = vpack.c.b16 %v1015, %v1005
  %v1296 = vpack.c.b16 %v1016, %v1006
  %v1297 = vpack.c.b16 %v1017, %v1007
  %v1298 = vpack.c.b16 %v1018, %v1008
  %v1299 = vpack.c.b16 %v1019, %v1009
  %v1300 = vpack.c.b16 %v1020, %v1010
  %v1301 = vpack.c.b16 %v1021, %v1011
  %v1302 = vpack.c.b16 %v1022, %v1012
  %v1303 = vpack.c.b16 %v1023, %v1013
  %v1304 = vpack.c.b16 %v1024, %v1014
  %v1305 = vpack.c.b16 %v1035, %v1025
  %v1306 = vpack.c.b16 %v1036, %v1026
  %v1307 = vpack.c.b16 %v1037, %v1027
  %v1308 = vpack.c.b16 %v1038, %v1028
  %v1309 = vpack.c.b16 %v1039, %v1029
  %v1310 = vpack.c.b16 %v1040, %v1030
  %v1311 = vpack.c.b16 %v1041, %v1031
  %v1312 = vpack.c.b16 %v1042, %v1032
  %v1313 = vpack.c.b16 %v1043, %v1033
  %v1314 = vpack.c.b16 %v1044, %v1034
  %v1315 = vpack.c.b16 %v1055, %v1045
  %v1316 = vpack.c.b16 %v1056, %v1046
  %v1317 = vpack.c.b16 %v1057, %v1047
  %v1318 = vpack.c.b16 %v1058, %v1048
  %v1319 = vpack.c.b16 %v1059, %v1049
  %v1320 = vpack.c.b16 %v1060, %v1050
  %v1321 = vpack.c.b16 %v1061, %v1051
  %v1322 = vpack.c.b16 %v1062, %v1052
  %v1323 = vpack.c.b16 %v1063, %v1053
  %v1324 = vpack.c.b16 %v1064, %v1054
  %v1325 = vpack.c.b16 %v1075, %v1065
  %v1326 = vpack.c.b16 %v1076, %v1066
  %v1327 = vpack.c.b16 %v1077, %v1067
  %v1328 = vpack.c.b16 %v1078, %v1068
  %v1329 = vpack.c.b16 %v1079, %v1069
  %v1330 = vpack.c.b16 %v1080, %v1070
  %v1331 = vpack.c.b16 %v1081, %v1071
  %v1332 = vpack.c.b16 %v1082, %v1072
  %v1333 = vpack.c.b16 %v1083, %v1073
  %v1334 = vpack.c.b16 %v1084, %v1074
  %vm1585 = vcmask 130048
  %v1587 = vsel %vm1585, %v324, 0
  %v1590 = vsel %vm1585, %v328, 0
  %1592 = vmatprep.subr.bf16.mxu0 %v1086
  %1593 = vmatpush1.bf16.msra.mxu0 %v1085
  %1594 = vmatprep.subr.bf16.mxu0 %v1096
  %1595 = vmatpush1.bf16.msra.mxu0 %v1095
  %1596 = vmatprep.subr.bf16.mxu0 %v1106
  %1597 = vmatpush1.bf16.msra.mxu0 %v1105
  %1598 = vmatprep.subr.bf16.mxu0 %v1116
  %1599 = vmatpush1.bf16.msra.mxu0 %v1115
  %1600 = vmatprep.subr.bf16.mxu0 %v1126
  %1601 = vmatpush1.bf16.msra.mxu0 %v1125
  %1602 = vmatprep.subr.bf16.mxu0 %v1136
  %1603 = vmatpush1.bf16.msra.mxu0 %v1135
  %1604 = vmatprep.subr.bf16.mxu0 %v1146
  %1605 = vmatpush1.bf16.msra.mxu0 %v1145
  %1606 = vmatprep.subr.bf16.mxu0 %v1156
  %1607 = vmatpush1.bf16.msra.mxu0 %v1155
  %1608 = vmatprep.subr.bf16.mxu0 %v1166
  %1609 = vmatpush1.bf16.msra.mxu0 %v1165
  %1610 = vmatprep.subr.bf16.mxu0 %v1176
  %1611 = vmatpush1.bf16.msra.mxu0 %v1175
  %1612 = vmatprep.subr.bf16.mxu0 %v1186
  %1613 = vmatpush1.bf16.msra.mxu0 %v1185
  %1614 = vmatprep.subr.bf16.mxu0 %v1196
  %1615 = vmatpush1.bf16.msra.mxu0 %v1195
  %1616 = vmatprep.subr.bf16.mxu0 %v1206
  %1617 = vmatpush1.bf16.msra.mxu0 %v1205
  %1618 = vmatprep.subr.bf16.mxu0 %v1216
  %1619 = vmatpush1.bf16.msra.mxu0 %v1215
  %1620 = vmatprep.subr.bf16.mxu0 %v1226
  %1621 = vmatpush1.bf16.msra.mxu0 %v1225
  %1622 = vmatprep.subr.bf16.mxu0 %v1236
  %1623 = vmatpush1.bf16.msra.mxu0 %v1235
  %1624 = vmatprep.mubr.bf16.mxu0 %v322
  %1625 = vmatmul.mubr.bf16.gmra.mrb[0].mxu0 %v321
  %v1626 = vpop.f32.mrb[0].mxu0
  %v1627 = vadd.f32 %v280, %v1626
  %v1628 = vpop.f32.mrb[0].mxu0
  %v1629 = vadd.f32 %v280, %v1628
  %v1630 = vpop.f32.mrb[0].mxu0
  %v1631 = vadd.f32 %v285, %v1630
  %v1632 = vpop.f32.mrb[0].mxu0
  %v1633 = vadd.f32 %v285, %v1632
  %1634 = vmatprep.mubr.bf16.mxu0 %v326
  %1635 = vmatmul.mubr.bf16.gmra.mrb[0].mxu0 %v325
  %v1636 = vpop.f32.mrb[0].mxu0
  %v1637 = vadd.f32 %v290, %v1636
  %v1638 = vpop.f32.mrb[0].mxu0
  %v1639 = vadd.f32 %v290, %v1638
  %v1640 = vpop.f32.mrb[0].mxu0
  %v1641 = vadd.f32 %v295, %v1640
  %v1642 = vpop.f32.mrb[0].mxu0
  %v1643 = vadd.f32 %v295, %v1642
  %1644 = vdwg.mxu0
  %1645 = vmatprep.subr.bf16.mxu0 %v1246
  %1646 = vmatpush1.bf16.msra.mxu0 %v1245
  %1647 = vmatprep.subr.bf16.mxu0 %v1256
  %1648 = vmatpush1.bf16.msra.mxu0 %v1255
  %1649 = vmatprep.subr.bf16.mxu0 %v1266
  %1650 = vmatpush1.bf16.msra.mxu0 %v1265
  %1651 = vmatprep.subr.bf16.mxu0 %v1276
  %1652 = vmatpush1.bf16.msra.mxu0 %v1275
  %1653 = vmatprep.subr.bf16.mxu0 %v1286
  %1654 = vmatpush1.bf16.msra.mxu0 %v1285
  %1655 = vmatprep.subr.bf16.mxu0 %v1296
  %1656 = vmatpush1.bf16.msra.mxu0 %v1295
  %1657 = vmatprep.subr.bf16.mxu0 %v1306
  %1658 = vmatpush1.bf16.msra.mxu0 %v1305
  %1659 = vmatprep.subr.bf16.mxu0 %v1316
  %1660 = vmatpush1.bf16.msra.mxu0 %v1315
  %1661 = vmatprep.subr.bf16.mxu0 %v1326
  %1662 = vmatpush1.bf16.msra.mxu0 %v1325
  %1663 = vmatprep.subr.bf16.mxu0 0
  %1664 = vmatpush1.bf16.msra.mxu0 0
  %1665 = vmatprep.subr.bf16.mxu0 0
  %1666 = vmatpush1.bf16.msra.mxu0 0
  %1667 = vmatprep.subr.bf16.mxu0 0
  %1668 = vmatpush1.bf16.msra.mxu0 0
  %1669 = vmatprep.subr.bf16.mxu0 0
  %1670 = vmatpush1.bf16.msra.mxu0 0
  %1671 = vmatprep.subr.bf16.mxu0 0
  %1672 = vmatpush1.bf16.msra.mxu0 0
  %1673 = vmatprep.subr.bf16.mxu0 0
  %1674 = vmatpush1.bf16.msra.mxu0 0
  %1675 = vmatprep.subr.bf16.mxu0 0
  %1676 = vmatpush1.bf16.msra.mxu0 0
  %1677 = vmatprep.mubr.bf16.mxu0 %v1587
  %1678 = vmatmul.mubr.bf16.gmra.mrb[0].mxu0 %v323
  %v1679 = vpop.f32.mrb[0].mxu0
  %v1680 = vadd.f32 %v1627, %v1679
  %v1681 = vpop.f32.mrb[0].mxu0
  %v1682 = vadd.f32 %v1629, %v1681
  %v1683 = vpop.f32.mrb[0].mxu0
  %v1684 = vadd.f32 %v1631, %v1683
  %v1685 = vpop.f32.mrb[0].mxu0
  %v1686 = vadd.f32 %v1633, %v1685
  %1687 = vmatprep.mubr.bf16.mxu0 %v1590
  %1688 = vmatmul.mubr.bf16.gmra.mrb[0].mxu0 %v327
  %v1689 = vpop.f32.mrb[0].mxu0
  %v1690 = vadd.f32 %v1637, %v1689
  %v1691 = vpop.f32.mrb[0].mxu0
  %v1692 = vadd.f32 %v1639, %v1691
  %v1693 = vpop.f32.mrb[0].mxu0
  %v1694 = vadd.f32 %v1641, %v1693
  %v1695 = vpop.f32.mrb[0].mxu0
  %v1696 = vadd.f32 %v1643, %v1695
  %1697 = vdwg.mxu0
  %1698 = vmatprep.subr.bf16.mxu0 %v1088
  %1699 = vmatpush1.bf16.msra.mxu0 %v1087
  %1700 = vmatprep.subr.bf16.mxu0 %v1098
  %1701 = vmatpush1.bf16.msra.mxu0 %v1097
  %1702 = vmatprep.subr.bf16.mxu0 %v1108
  %1703 = vmatpush1.bf16.msra.mxu0 %v1107
  %1704 = vmatprep.subr.bf16.mxu0 %v1118
  %1705 = vmatpush1.bf16.msra.mxu0 %v1117
  %1706 = vmatprep.subr.bf16.mxu0 %v1128
  %1707 = vmatpush1.bf16.msra.mxu0 %v1127
  %1708 = vmatprep.subr.bf16.mxu0 %v1138
  %1709 = vmatpush1.bf16.msra.mxu0 %v1137
  %1710 = vmatprep.subr.bf16.mxu0 %v1148
  %1711 = vmatpush1.bf16.msra.mxu0 %v1147
  %1712 = vmatprep.subr.bf16.mxu0 %v1158
  %1713 = vmatpush1.bf16.msra.mxu0 %v1157
  %1714 = vmatprep.subr.bf16.mxu0 %v1168
  %1715 = vmatpush1.bf16.msra.mxu0 %v1167
  %1716 = vmatprep.subr.bf16.mxu0 %v1178
  %1717 = vmatpush1.bf16.msra.mxu0 %v1177
  %1718 = vmatprep.subr.bf16.mxu0 %v1188
  %1719 = vmatpush1.bf16.msra.mxu0 %v1187
  %1720 = vmatprep.subr.bf16.mxu0 %v1198
  %1721 = vmatpush1.bf16.msra.mxu0 %v1197
  %1722 = vmatprep.subr.bf16.mxu0 %v1208
  %1723 = vmatpush1.bf16.msra.mxu0 %v1207
  %1724 = vmatprep.subr.bf16.mxu0 %v1218
  %1725 = vmatpush1.bf16.msra.mxu0 %v1217
  %1726 = vmatprep.subr.bf16.mxu0 %v1228
  %1727 = vmatpush1.bf16.msra.mxu0 %v1227
  %1728 = vmatprep.subr.bf16.mxu0 %v1238
  %1729 = vmatpush1.bf16.msra.mxu0 %v1237
  %1730 = vmatprep.mubr.bf16.mxu0 %v322
  %1731 = vmatmul.mubr.bf16.gmra.mrb[0].mxu0 %v321
  %v1732 = vpop.f32.mrb[0].mxu0
  %v1733 = vadd.f32 %v280, %v1732
  %v1734 = vpop.f32.mrb[0].mxu0
  %v1735 = vadd.f32 %v280, %v1734
  %v1736 = vpop.f32.mrb[0].mxu0
  %v1737 = vadd.f32 %v285, %v1736
  %v1738 = vpop.f32.mrb[0].mxu0
  %v1739 = vadd.f32 %v285, %v1738
  %1740 = vmatprep.mubr.bf16.mxu0 %v326
  %1741 = vmatmul.mubr.bf16.gmra.mrb[0].mxu0 %v325
  %v1742 = vpop.f32.mrb[0].mxu0
  %v1743 = vadd.f32 %v290, %v1742
  %v1744 = vpop.f32.mrb[0].mxu0
  %v1745 = vadd.f32 %v290, %v1744
  %v1746 = vpop.f32.mrb[0].mxu0
  %v1747 = vadd.f32 %v295, %v1746
  %v1748 = vpop.f32.mrb[0].mxu0
  %v1749 = vadd.f32 %v295, %v1748
  %1750 = vdwg.mxu0
  %1751 = vmatprep.subr.bf16.mxu0 %v1248
  %1752 = vmatpush1.bf16.msra.mxu0 %v1247
  %1753 = vmatprep.subr.bf16.mxu0 %v1258
  %1754 = vmatpush1.bf16.msra.mxu0 %v1257
  %1755 = vmatprep.subr.bf16.mxu0 %v1268
  %1756 = vmatpush1.bf16.msra.mxu0 %v1267
  %1757 = vmatprep.subr.bf16.mxu0 %v1278
  %1758 = vmatpush1.bf16.msra.mxu0 %v1277
  %1759 = vmatprep.subr.bf16.mxu0 %v1288
  %1760 = vmatpush1.bf16.msra.mxu0 %v1287
  %1761 = vmatprep.subr.bf16.mxu0 %v1298
  %1762 = vmatpush1.bf16.msra.mxu0 %v1297
  %1763 = vmatprep.subr.bf16.mxu0 %v1308
  %1764 = vmatpush1.bf16.msra.mxu0 %v1307
  %1765 = vmatprep.subr.bf16.mxu0 %v1318
  %1766 = vmatpush1.bf16.msra.mxu0 %v1317
  %1767 = vmatprep.subr.bf16.mxu0 %v1328
  %1768 = vmatpush1.bf16.msra.mxu0 %v1327
  %1769 = vmatprep.subr.bf16.mxu0 0
  %1770 = vmatpush1.bf16.msra.mxu0 0
  %1771 = vmatprep.subr.bf16.mxu0 0
  %1772 = vmatpush1.bf16.msra.mxu0 0
  %1773 = vmatprep.subr.bf16.mxu0 0
  %1774 = vmatpush1.bf16.msra.mxu0 0
  %1775 = vmatprep.subr.bf16.mxu0 0
  %1776 = vmatpush1.bf16.msra.mxu0 0
  %1777 = vmatprep.subr.bf16.mxu0 0
  %1778 = vmatpush1.bf16.msra.mxu0 0
  %1779 = vmatprep.subr.bf16.mxu0 0
  %1780 = vmatpush1.bf16.msra.mxu0 0
  %1781 = vmatprep.subr.bf16.mxu0 0
  %1782 = vmatpush1.bf16.msra.mxu0 0
  %1783 = vmatprep.mubr.bf16.mxu0 %v1587
  %1784 = vmatmul.mubr.bf16.gmra.mrb[0].mxu0 %v323
  %v1785 = vpop.f32.mrb[0].mxu0
  %v1786 = vadd.f32 %v1733, %v1785
  %v1787 = vpop.f32.mrb[0].mxu0
  %v1788 = vadd.f32 %v1735, %v1787
  %v1789 = vpop.f32.mrb[0].mxu0
  %v1790 = vadd.f32 %v1737, %v1789
  %v1791 = vpop.f32.mrb[0].mxu0
  %v1792 = vadd.f32 %v1739, %v1791
  %1793 = vmatprep.mubr.bf16.mxu0 %v1590
  %1794 = vmatmul.mubr.bf16.gmra.mrb[0].mxu0 %v327
  %v1795 = vpop.f32.mrb[0].mxu0
  %v1796 = vadd.f32 %v1743, %v1795
  %v1797 = vpop.f32.mrb[0].mxu0
  %v1798 = vadd.f32 %v1745, %v1797
  %v1799 = vpop.f32.mrb[0].mxu0
  %v1800 = vadd.f32 %v1747, %v1799
  %v1801 = vpop.f32.mrb[0].mxu0
  %v1802 = vadd.f32 %v1749, %v1801
  %1803 = vdwg.mxu0
  %1804 = vmatprep.subr.bf16.mxu0 %v1090
  %1805 = vmatpush1.bf16.msra.mxu0 %v1089
  %1806 = vmatprep.subr.bf16.mxu0 %v1100
  %1807 = vmatpush1.bf16.msra.mxu0 %v1099
  %1808 = vmatprep.subr.bf16.mxu0 %v1110
  %1809 = vmatpush1.bf16.msra.mxu0 %v1109
  %1810 = vmatprep.subr.bf16.mxu0 %v1120
  %1811 = vmatpush1.bf16.msra.mxu0 %v1119
  %1812 = vmatprep.subr.bf16.mxu0 %v1130
  %1813 = vmatpush1.bf16.msra.mxu0 %v1129
  %1814 = vmatprep.subr.bf16.mxu0 %v1140
  %1815 = vmatpush1.bf16.msra.mxu0 %v1139
  %1816 = vmatprep.subr.bf16.mxu0 %v1150
  %1817 = vmatpush1.bf16.msra.mxu0 %v1149
  %1818 = vmatprep.subr.bf16.mxu0 %v1160
  %1819 = vmatpush1.bf16.msra.mxu0 %v1159
  %1820 = vmatprep.subr.bf16.mxu0 %v1170
  %1821 = vmatpush1.bf16.msra.mxu0 %v1169
  %1822 = vmatprep.subr.bf16.mxu0 %v1180
  %1823 = vmatpush1.bf16.msra.mxu0 %v1179
  %1824 = vmatprep.subr.bf16.mxu0 %v1190
  %1825 = vmatpush1.bf16.msra.mxu0 %v1189
  %1826 = vmatprep.subr.bf16.mxu0 %v1200
  %1827 = vmatpush1.bf16.msra.mxu0 %v1199
  %1828 = vmatprep.subr.bf16.mxu0 %v1210
  %1829 = vmatpush1.bf16.msra.mxu0 %v1209
  %1830 = vmatprep.subr.bf16.mxu0 %v1220
  %1831 = vmatpush1.bf16.msra.mxu0 %v1219
  %1832 = vmatprep.subr.bf16.mxu0 %v1230
  %1833 = vmatpush1.bf16.msra.mxu0 %v1229
  %1834 = vmatprep.subr.bf16.mxu0 %v1240
  %1835 = vmatpush1.bf16.msra.mxu0 %v1239
  %1836 = vmatprep.mubr.bf16.mxu0 %v322
  %1837 = vmatmul.mubr.bf16.gmra.mrb[0].mxu0 %v321
  %v1838 = vpop.f32.mrb[0].mxu0
  %v1839 = vadd.f32 %v280, %v1838
  %v1840 = vpop.f32.mrb[0].mxu0
  %v1841 = vadd.f32 %v280, %v1840
  %v1842 = vpop.f32.mrb[0].mxu0
  %v1843 = vadd.f32 %v285, %v1842
  %v1844 = vpop.f32.mrb[0].mxu0
  %v1845 = vadd.f32 %v285, %v1844
  %1846 = vmatprep.mubr.bf16.mxu0 %v326
  %1847 = vmatmul.mubr.bf16.gmra.mrb[0].mxu0 %v325
  %v1848 = vpop.f32.mrb[0].mxu0
  %v1849 = vadd.f32 %v290, %v1848
  %v1850 = vpop.f32.mrb[0].mxu0
  %v1851 = vadd.f32 %v290, %v1850
  %v1852 = vpop.f32.mrb[0].mxu0
  %v1853 = vadd.f32 %v295, %v1852
  %v1854 = vpop.f32.mrb[0].mxu0
  %v1855 = vadd.f32 %v295, %v1854
  %1856 = vdwg.mxu0
  %1857 = vmatprep.subr.bf16.mxu0 %v1250
  %1858 = vmatpush1.bf16.msra.mxu0 %v1249
  %1859 = vmatprep.subr.bf16.mxu0 %v1260
  %1860 = vmatpush1.bf16.msra.mxu0 %v1259
  %1861 = vmatprep.subr.bf16.mxu0 %v1270
  %1862 = vmatpush1.bf16.msra.mxu0 %v1269
  %1863 = vmatprep.subr.bf16.mxu0 %v1280
  %1864 = vmatpush1.bf16.msra.mxu0 %v1279
  %1865 = vmatprep.subr.bf16.mxu0 %v1290
  %1866 = vmatpush1.bf16.msra.mxu0 %v1289
  %1867 = vmatprep.subr.bf16.mxu0 %v1300
  %1868 = vmatpush1.bf16.msra.mxu0 %v1299
  %1869 = vmatprep.subr.bf16.mxu0 %v1310
  %1870 = vmatpush1.bf16.msra.mxu0 %v1309
  %1871 = vmatprep.subr.bf16.mxu0 %v1320
  %1872 = vmatpush1.bf16.msra.mxu0 %v1319
  %1873 = vmatprep.subr.bf16.mxu0 %v1330
  %1874 = vmatpush1.bf16.msra.mxu0 %v1329
  %1875 = vmatprep.subr.bf16.mxu0 0
  %1876 = vmatpush1.bf16.msra.mxu0 0
  %1877 = vmatprep.subr.bf16.mxu0 0
  %1878 = vmatpush1.bf16.msra.mxu0 0
  %1879 = vmatprep.subr.bf16.mxu0 0
  %1880 = vmatpush1.bf16.msra.mxu0 0
  %1881 = vmatprep.subr.bf16.mxu0 0
  %1882 = vmatpush1.bf16.msra.mxu0 0
  %1883 = vmatprep.subr.bf16.mxu0 0
  %1884 = vmatpush1.bf16.msra.mxu0 0
  %1885 = vmatprep.subr.bf16.mxu0 0
  %1886 = vmatpush1.bf16.msra.mxu0 0
  %1887 = vmatprep.subr.bf16.mxu0 0
  %1888 = vmatpush1.bf16.msra.mxu0 0
  %1889 = vmatprep.mubr.bf16.mxu0 %v1587
  %1890 = vmatmul.mubr.bf16.gmra.mrb[0].mxu0 %v323
  %v1891 = vpop.f32.mrb[0].mxu0
  %v1892 = vadd.f32 %v1839, %v1891
  %v1893 = vpop.f32.mrb[0].mxu0
  %v1894 = vadd.f32 %v1841, %v1893
  %v1895 = vpop.f32.mrb[0].mxu0
  %v1896 = vadd.f32 %v1843, %v1895
  %v1897 = vpop.f32.mrb[0].mxu0
  %v1898 = vadd.f32 %v1845, %v1897
  %1899 = vmatprep.mubr.bf16.mxu0 %v1590
  %1900 = vmatmul.mubr.bf16.gmra.mrb[0].mxu0 %v327
  %v1901 = vpop.f32.mrb[0].mxu0
  %v1902 = vadd.f32 %v1849, %v1901
  %v1903 = vpop.f32.mrb[0].mxu0
  %v1904 = vadd.f32 %v1851, %v1903
  %v1905 = vpop.f32.mrb[0].mxu0
  %v1906 = vadd.f32 %v1853, %v1905
  %v1907 = vpop.f32.mrb[0].mxu0
  %v1908 = vadd.f32 %v1855, %v1907
  %1909 = vdwg.mxu0
  %1910 = vmatprep.subr.bf16.mxu0 %v1092
  %1911 = vmatpush1.bf16.msra.mxu0 %v1091
  %1912 = vmatprep.subr.bf16.mxu0 %v1102
  %1913 = vmatpush1.bf16.msra.mxu0 %v1101
  %1914 = vmatprep.subr.bf16.mxu0 %v1112
  %1915 = vmatpush1.bf16.msra.mxu0 %v1111
  %1916 = vmatprep.subr.bf16.mxu0 %v1122
  %1917 = vmatpush1.bf16.msra.mxu0 %v1121
  %1918 = vmatprep.subr.bf16.mxu0 %v1132
  %1919 = vmatpush1.bf16.msra.mxu0 %v1131
  %1920 = vmatprep.subr.bf16.mxu0 %v1142
  %1921 = vmatpush1.bf16.msra.mxu0 %v1141
  %1922 = vmatprep.subr.bf16.mxu0 %v1152
  %1923 = vmatpush1.bf16.msra.mxu0 %v1151
  %1924 = vmatprep.subr.bf16.mxu0 %v1162
  %1925 = vmatpush1.bf16.msra.mxu0 %v1161
  %1926 = vmatprep.subr.bf16.mxu0 %v1172
  %1927 = vmatpush1.bf16.msra.mxu0 %v1171
  %1928 = vmatprep.subr.bf16.mxu0 %v1182
  %1929 = vmatpush1.bf16.msra.mxu0 %v1181
  %1930 = vmatprep.subr.bf16.mxu0 %v1192
  %1931 = vmatpush1.bf16.msra.mxu0 %v1191
  %1932 = vmatprep.subr.bf16.mxu0 %v1202
  %1933 = vmatpush1.bf16.msra.mxu0 %v1201
  %1934 = vmatprep.subr.bf16.mxu0 %v1212
  %1935 = vmatpush1.bf16.msra.mxu0 %v1211
  %1936 = vmatprep.subr.bf16.mxu0 %v1222
  %1937 = vmatpush1.bf16.msra.mxu0 %v1221
  %1938 = vmatprep.subr.bf16.mxu0 %v1232
  %1939 = vmatpush1.bf16.msra.mxu0 %v1231
  %1940 = vmatprep.subr.bf16.mxu0 %v1242
  %1941 = vmatpush1.bf16.msra.mxu0 %v1241
  %1942 = vmatprep.mubr.bf16.mxu0 %v322
  %1943 = vmatmul.mubr.bf16.gmra.mrb[0].mxu0 %v321
  %v1944 = vpop.f32.mrb[0].mxu0
  %v1945 = vadd.f32 %v280, %v1944
  %v1946 = vpop.f32.mrb[0].mxu0
  %v1947 = vadd.f32 %v280, %v1946
  %v1948 = vpop.f32.mrb[0].mxu0
  %v1949 = vadd.f32 %v285, %v1948
  %v1950 = vpop.f32.mrb[0].mxu0
  %v1951 = vadd.f32 %v285, %v1950
  %1952 = vmatprep.mubr.bf16.mxu0 %v326
  %1953 = vmatmul.mubr.bf16.gmra.mrb[0].mxu0 %v325
  %v1954 = vpop.f32.mrb[0].mxu0
  %v1955 = vadd.f32 %v290, %v1954
  %v1956 = vpop.f32.mrb[0].mxu0
  %v1957 = vadd.f32 %v290, %v1956
  %v1958 = vpop.f32.mrb[0].mxu0
  %v1959 = vadd.f32 %v295, %v1958
  %v1960 = vpop.f32.mrb[0].mxu0
  %v1961 = vadd.f32 %v295, %v1960
  %1962 = vdwg.mxu0
  %1963 = vmatprep.subr.bf16.mxu0 %v1252
  %1964 = vmatpush1.bf16.msra.mxu0 %v1251
  %1965 = vmatprep.subr.bf16.mxu0 %v1262
  %1966 = vmatpush1.bf16.msra.mxu0 %v1261
  %1967 = vmatprep.subr.bf16.mxu0 %v1272
  %1968 = vmatpush1.bf16.msra.mxu0 %v1271
  %1969 = vmatprep.subr.bf16.mxu0 %v1282
  %1970 = vmatpush1.bf16.msra.mxu0 %v1281
  %1971 = vmatprep.subr.bf16.mxu0 %v1292
  %1972 = vmatpush1.bf16.msra.mxu0 %v1291
  %1973 = vmatprep.subr.bf16.mxu0 %v1302
  %1974 = vmatpush1.bf16.msra.mxu0 %v1301
  %1975 = vmatprep.subr.bf16.mxu0 %v1312
  %1976 = vmatpush1.bf16.msra.mxu0 %v1311
  %1977 = vmatprep.subr.bf16.mxu0 %v1322
  %1978 = vmatpush1.bf16.msra.mxu0 %v1321
  %1979 = vmatprep.subr.bf16.mxu0 %v1332
  %1980 = vmatpush1.bf16.msra.mxu0 %v1331
  %1981 = vmatprep.subr.bf16.mxu0 0
  %1982 = vmatpush1.bf16.msra.mxu0 0
  %1983 = vmatprep.subr.bf16.mxu0 0
  %1984 = vmatpush1.bf16.msra.mxu0 0
  %1985 = vmatprep.subr.bf16.mxu0 0
  %1986 = vmatpush1.bf16.msra.mxu0 0
  %1987 = vmatprep.subr.bf16.mxu0 0
  %1988 = vmatpush1.bf16.msra.mxu0 0
  %1989 = vmatprep.subr.bf16.mxu0 0
  %1990 = vmatpush1.bf16.msra.mxu0 0
  %1991 = vmatprep.subr.bf16.mxu0 0
  %1992 = vmatpush1.bf16.msra.mxu0 0
  %1993 = vmatprep.subr.bf16.mxu0 0
  %1994 = vmatpush1.bf16.msra.mxu0 0
  %1995 = vmatprep.mubr.bf16.mxu0 %v1587
  %1996 = vmatmul.mubr.bf16.gmra.mrb[0].mxu0 %v323
  %v1997 = vpop.f32.mrb[0].mxu0
  %v1998 = vadd.f32 %v1945, %v1997
  %v1999 = vpop.f32.mrb[0].mxu0
  %v2000 = vadd.f32 %v1947, %v1999
  %v2001 = vpop.f32.mrb[0].mxu0
  %v2002 = vadd.f32 %v1949, %v2001
  %v2003 = vpop.f32.mrb[0].mxu0
  %v2004 = vadd.f32 %v1951, %v2003
  %2005 = vmatprep.mubr.bf16.mxu0 %v1590
  %2006 = vmatmul.mubr.bf16.gmra.mrb[0].mxu0 %v327
  %v2007 = vpop.f32.mrb[0].mxu0
  %v2008 = vadd.f32 %v1955, %v2007
  %v2009 = vpop.f32.mrb[0].mxu0
  %v2010 = vadd.f32 %v1957, %v2009
  %v2011 = vpop.f32.mrb[0].mxu0
  %v2012 = vadd.f32 %v1959, %v2011
  %v2013 = vpop.f32.mrb[0].mxu0
  %v2014 = vadd.f32 %v1961, %v2013
  %2015 = vdwg.mxu0
  %2016 = vmatprep.subr.bf16.mxu0 %v1094
  %2017 = vmatpush1.bf16.msra.mxu0 %v1093
  %2018 = vmatprep.subr.bf16.mxu0 %v1104
  %2019 = vmatpush1.bf16.msra.mxu0 %v1103
  %2020 = vmatprep.subr.bf16.mxu0 %v1114
  %2021 = vmatpush1.bf16.msra.mxu0 %v1113
  %2022 = vmatprep.subr.bf16.mxu0 %v1124
  %2023 = vmatpush1.bf16.msra.mxu0 %v1123
  %2024 = vmatprep.subr.bf16.mxu0 %v1134
  %2025 = vmatpush1.bf16.msra.mxu0 %v1133
  %2026 = vmatprep.subr.bf16.mxu0 %v1144
  %2027 = vmatpush1.bf16.msra.mxu0 %v1143
  %2028 = vmatprep.subr.bf16.mxu0 %v1154
  %2029 = vmatpush1.bf16.msra.mxu0 %v1153
  %2030 = vmatprep.subr.bf16.mxu0 %v1164
  %2031 = vmatpush1.bf16.msra.mxu0 %v1163
  %2032 = vmatprep.subr.bf16.mxu0 %v1174
  %2033 = vmatpush1.bf16.msra.mxu0 %v1173
  %2034 = vmatprep.subr.bf16.mxu0 %v1184
  %2035 = vmatpush1.bf16.msra.mxu0 %v1183
  %2036 = vmatprep.subr.bf16.mxu0 %v1194
  %2037 = vmatpush1.bf16.msra.mxu0 %v1193
  %2038 = vmatprep.subr.bf16.mxu0 %v1204
  %2039 = vmatpush1.bf16.msra.mxu0 %v1203
  %2040 = vmatprep.subr.bf16.mxu0 %v1214
  %2041 = vmatpush1.bf16.msra.mxu0 %v1213
  %2042 = vmatprep.subr.bf16.mxu0 %v1224
  %2043 = vmatpush1.bf16.msra.mxu0 %v1223
  %2044 = vmatprep.subr.bf16.mxu0 %v1234
  %2045 = vmatpush1.bf16.msra.mxu0 %v1233
  %2046 = vmatprep.subr.bf16.mxu0 %v1244
  %2047 = vmatpush1.bf16.msra.mxu0 %v1243
  %2048 = vmatprep.mubr.bf16.mxu0 %v322
  %2049 = vmatmul.mubr.bf16.gmra.mrb[0].mxu0 %v321
  %v2050 = vpop.f32.mrb[0].mxu0
  %v2051 = vadd.f32 %v280, %v2050
  %v2052 = vpop.f32.mrb[0].mxu0
  %v2053 = vadd.f32 %v280, %v2052
  %v2054 = vpop.f32.mrb[0].mxu0
  %v2055 = vadd.f32 %v285, %v2054
  %v2056 = vpop.f32.mrb[0].mxu0
  %v2057 = vadd.f32 %v285, %v2056
  %2058 = vmatprep.mubr.bf16.mxu0 %v326
  %2059 = vmatmul.mubr.bf16.gmra.mrb[0].mxu0 %v325
  %v2060 = vpop.f32.mrb[0].mxu0
  %v2061 = vadd.f32 %v290, %v2060
  %v2062 = vpop.f32.mrb[0].mxu0
  %v2063 = vadd.f32 %v290, %v2062
  %v2064 = vpop.f32.mrb[0].mxu0
  %v2065 = vadd.f32 %v295, %v2064
  %v2066 = vpop.f32.mrb[0].mxu0
  %v2067 = vadd.f32 %v295, %v2066
  %2068 = vdwg.mxu0
  %2069 = vmatprep.subr.bf16.mxu0 %v1254
  %2070 = vmatpush1.bf16.msra.mxu0 %v1253
  %2071 = vmatprep.subr.bf16.mxu0 %v1264
  %2072 = vmatpush1.bf16.msra.mxu0 %v1263
  %2073 = vmatprep.subr.bf16.mxu0 %v1274
  %2074 = vmatpush1.bf16.msra.mxu0 %v1273
  %2075 = vmatprep.subr.bf16.mxu0 %v1284
  %2076 = vmatpush1.bf16.msra.mxu0 %v1283
  %2077 = vmatprep.subr.bf16.mxu0 %v1294
  %2078 = vmatpush1.bf16.msra.mxu0 %v1293
  %2079 = vmatprep.subr.bf16.mxu0 %v1304
  %2080 = vmatpush1.bf16.msra.mxu0 %v1303
  %2081 = vmatprep.subr.bf16.mxu0 %v1314
  %2082 = vmatpush1.bf16.msra.mxu0 %v1313
  %2083 = vmatprep.subr.bf16.mxu0 %v1324
  %2084 = vmatpush1.bf16.msra.mxu0 %v1323
  %2085 = vmatprep.subr.bf16.mxu0 %v1334
  %2086 = vmatpush1.bf16.msra.mxu0 %v1333
  %2087 = vmatprep.subr.bf16.mxu0 0
  %2088 = vmatpush1.bf16.msra.mxu0 0
  %2089 = vmatprep.subr.bf16.mxu0 0
  %2090 = vmatpush1.bf16.msra.mxu0 0
  %2091 = vmatprep.subr.bf16.mxu0 0
  %2092 = vmatpush1.bf16.msra.mxu0 0
  %2093 = vmatprep.subr.bf16.mxu0 0
  %2094 = vmatpush1.bf16.msra.mxu0 0
  %2095 = vmatprep.subr.bf16.mxu0 0
  %2096 = vmatpush1.bf16.msra.mxu0 0
  %2097 = vmatprep.subr.bf16.mxu0 0
  %2098 = vmatpush1.bf16.msra.mxu0 0
  %2099 = vmatprep.subr.bf16.mxu0 0
  %2100 = vmatpush1.bf16.msra.mxu0 0
  %2101 = vmatprep.mubr.bf16.mxu0 %v1587
  %2102 = vmatmul.mubr.bf16.gmra.mrb[0].mxu0 %v323
  %v2103 = vpop.f32.mrb[0].mxu0
  %v2104 = vadd.f32 %v2051, %v2103
  %v2105 = vpop.f32.mrb[0].mxu0
  %v2106 = vadd.f32 %v2053, %v2105
  %v2107 = vpop.f32.mrb[0].mxu0
  %v2108 = vadd.f32 %v2055, %v2107
  %v2109 = vpop.f32.mrb[0].mxu0
  %v2110 = vadd.f32 %v2057, %v2109
  %2111 = vmatprep.mubr.bf16.mxu0 %v1590
  %2112 = vmatmul.mubr.bf16.gmra.mrb[0].mxu0 %v327
  %v2113 = vpop.f32.mrb[0].mxu0
  %v2114 = vadd.f32 %v2061, %v2113
  %v2115 = vpop.f32.mrb[0].mxu0
  %v2116 = vadd.f32 %v2063, %v2115
  %v2117 = vpop.f32.mrb[0].mxu0
  %v2118 = vadd.f32 %v2065, %v2117
  %v2119 = vpop.f32.mrb[0].mxu0
  %v2120 = vadd.f32 %v2067, %v2119
  %2121 = vdwg.mxu0
  %v2122 = vmax.f32 %v1680, 0.0
  %v2123 = vmax.f32 %v1682, 0.0
  %v2124 = vmax.f32 %v1786, 0.0
  %v2125 = vmax.f32 %v1788, 0.0
  %v2126 = vmax.f32 %v1892, 0.0
  %v2127 = vmax.f32 %v1894, 0.0
  %v2128 = vmax.f32 %v1998, 0.0
  %v2129 = vmax.f32 %v2000, 0.0
  %v2130 = vmax.f32 %v2104, 0.0
  %v2131 = vmax.f32 %v2106, 0.0
  %v2132 = vmax.f32 %v1684, 0.0
  %v2133 = vmax.f32 %v1686, 0.0
  %v2134 = vmax.f32 %v1790, 0.0
  %v2135 = vmax.f32 %v1792, 0.0
  %v2136 = vmax.f32 %v1896, 0.0
  %v2137 = vmax.f32 %v1898, 0.0
  %v2138 = vmax.f32 %v2002, 0.0
  %v2139 = vmax.f32 %v2004, 0.0
  %v2140 = vmax.f32 %v2108, 0.0
  %v2141 = vmax.f32 %v2110, 0.0
  %v2142 = vmax.f32 %v1690, 0.0
  %v2143 = vmax.f32 %v1692, 0.0
  %v2144 = vmax.f32 %v1796, 0.0
  %v2145 = vmax.f32 %v1798, 0.0
  %v2146 = vmax.f32 %v1902, 0.0
  %v2147 = vmax.f32 %v1904, 0.0
  %v2148 = vmax.f32 %v2008, 0.0
  %v2149 = vmax.f32 %v2010, 0.0
  %v2150 = vmax.f32 %v2114, 0.0
  %v2151 = vmax.f32 %v2116, 0.0
  %v2152 = vmax.f32 %v1694, 0.0
  %v2153 = vmax.f32 %v1696, 0.0
  %v2154 = vmax.f32 %v1800, 0.0
  %v2155 = vmax.f32 %v1802, 0.0
  %v2156 = vmax.f32 %v1906, 0.0
  %v2157 = vmax.f32 %v1908, 0.0
  %v2158 = vmax.f32 %v2012, 0.0
  %v2159 = vmax.f32 %v2014, 0.0
  %v2160 = vmax.f32 %v2118, 0.0
  %v2161 = vmax.f32 %v2120, 0.0
  %v2162 = vpack.c.bf16 %v2132, %v2122
  %v2163 = vpack.c.bf16 %v2133, %v2123
  %v2164 = vpack.c.bf16 %v2134, %v2124
  %v2165 = vpack.c.bf16 %v2135, %v2125
  %v2166 = vpack.c.bf16 %v2136, %v2126
  %v2167 = vpack.c.bf16 %v2137, %v2127
  %v2168 = vpack.c.bf16 %v2138, %v2128
  %v2169 = vpack.c.bf16 %v2139, %v2129
  %v2170 = vpack.c.bf16 %v2140, %v2130
  %v2171 = vpack.c.bf16 %v2141, %v2131
  %v2172 = vpack.c.bf16 %v2152, %v2142
  %v2173 = vpack.c.bf16 %v2153, %v2143
  %v2174 = vpack.c.bf16 %v2154, %v2144
  %v2175 = vpack.c.bf16 %v2155, %v2145
  %v2176 = vpack.c.bf16 %v2156, %v2146
  %v2177 = vpack.c.bf16 %v2157, %v2147
  %v2178 = vpack.c.bf16 %v2158, %v2148
  %v2179 = vpack.c.bf16 %v2159, %v2149
  %v2180 = vpack.c.bf16 %v2160, %v2150
  %v2181 = vpack.c.bf16 %v2161, %v2151
  %v2202 = vunpack.c.l.b16 %v2162
  %v2203 = vunpack.c.l.b16 %v2163
  %v2204 = vunpack.c.l.b16 %v2164
  %v2205 = vunpack.c.l.b16 %v2165
  %v2206 = vunpack.c.l.b16 %v2166
  %v2207 = vunpack.c.l.b16 %v2167
  %v2208 = vunpack.c.l.b16 %v2168
  %v2209 = vunpack.c.l.b16 %v2169
  %v2210 = vunpack.c.l.b16 %v2170
  %v2211 = vunpack.c.l.b16 %v2171
  %v2212 = vunpack.c.h.b16 %v2162
  %v2213 = vunpack.c.h.b16 %v2163
  %v2214 = vunpack.c.h.b16 %v2164
  %v2215 = vunpack.c.h.b16 %v2165
  %v2216 = vunpack.c.h.b16 %v2166
  %v2217 = vunpack.c.h.b16 %v2167
  %v2218 = vunpack.c.h.b16 %v2168
  %v2219 = vunpack.c.h.b16 %v2169
  %v2220 = vunpack.c.h.b16 %v2170
  %v2221 = vunpack.c.h.b16 %v2171
  %v2222 = vunpack.c.l.b16 %v2172
  %v2223 = vunpack.c.l.b16 %v2173
  %v2224 = vunpack.c.l.b16 %v2174
  %v2225 = vunpack.c.l.b16 %v2175
  %v2226 = vunpack.c.l.b16 %v2176
  %v2227 = vunpack.c.l.b16 %v2177
  %v2228 = vunpack.c.l.b16 %v2178
  %v2229 = vunpack.c.l.b16 %v2179
  %v2230 = vunpack.c.l.b16 %v2180
  %v2231 = vunpack.c.l.b16 %v2181
  %v2232 = vunpack.c.h.b16 %v2172
  %v2233 = vunpack.c.h.b16 %v2173
  %v2234 = vunpack.c.h.b16 %v2174
  %v2235 = vunpack.c.h.b16 %v2175
  %v2236 = vunpack.c.h.b16 %v2176
  %v2237 = vunpack.c.h.b16 %v2177
  %v2238 = vunpack.c.h.b16 %v2178
  %v2239 = vunpack.c.h.b16 %v2179
  %v2240 = vunpack.c.h.b16 %v2180
  %v2241 = vunpack.c.h.b16 %v2181
  %v2242 = vpack.c.b16 %v2203, %v2202
  %v2243 = vpack.c.b16 %v2205, %v2204
  %v2244 = vpack.c.b16 %v2207, %v2206
  %v2245 = vpack.c.b16 %v2209, %v2208
  %v2246 = vpack.c.b16 %v2211, %v2210
  %v2247 = vpack.c.b16 %v2213, %v2212
  %v2248 = vpack.c.b16 %v2215, %v2214
  %v2249 = vpack.c.b16 %v2217, %v2216
  %v2250 = vpack.c.b16 %v2219, %v2218
  %v2251 = vpack.c.b16 %v2221, %v2220
  %v2252 = vpack.c.b16 %v2223, %v2222
  %v2253 = vpack.c.b16 %v2225, %v2224
  %v2254 = vpack.c.b16 %v2227, %v2226
  %v2255 = vpack.c.b16 %v2229, %v2228
  %v2256 = vpack.c.b16 %v2231, %v2230
  %v2257 = vpack.c.b16 %v2233, %v2232
  %v2258 = vpack.c.b16 %v2235, %v2234
  %v2259 = vpack.c.b16 %v2237, %v2236
  %v2260 = vpack.c.b16 %v2239, %v2238
  %v2261 = vpack.c.b16 %v2241, %v2240
  %2282 = vst [vmem:[%s3] sm:$0xff] %v2242
  %2283 = vst [vmem:[%s3 + $0x8] sm:$0xff] %v2243
  %2284 = vst [vmem:[%s3 + $0x10] sm:$0xff] %v2244
  %2285 = vst [vmem:[%s3 + $0x18] sm:$0xff] %v2245
  %vm2286 = vcmask 1043456
  %vm2287 = vcmask 801796
  %vm2288 = vmor %vm2287, %vm2286
  %2289 = vst.msk [vmem:[%s3 + $0x20] sm:$0xff] %vm2288, %v2246
  %2290 = vst [vmem:[%s3 + $0x28] sm:$0xff] %v2247
  %2291 = vst [vmem:[%s3 + $0x30] sm:$0xff] %v2248
  %2292 = vst [vmem:[%s3 + $0x38] sm:$0xff] %v2249
  %2293 = vst [vmem:[%s3 + $0x40] sm:$0xff] %v2250
  %2294 = vst.msk [vmem:[%s3 + $0x48] sm:$0xff] %vm2288, %v2251
  %2295 = vst [vmem:[%s3 + $0x50] sm:$0xff] %v2252
  %2296 = vst [vmem:[%s3 + $0x58] sm:$0xff] %v2253
  %2297 = vst [vmem:[%s3 + $0x60] sm:$0xff] %v2254
  %2298 = vst [vmem:[%s3 + $0x68] sm:$0xff] %v2255
  %2299 = vst.msk [vmem:[%s3 + $0x70] sm:$0xff] %vm2288, %v2256
  %2300 = vst [vmem:[%s3 + $0x78] sm:$0xff] %v2257
  %2301 = vst [vmem:[%s3 + $0x80] sm:$0xff] %v2258
  %2302 = vst [vmem:[%s3 + $0x88] sm:$0xff] %v2259
  %2303 = vst [vmem:[%s3 + $0x90] sm:$0xff] %v2260
  %2304 = vst.msk [vmem:[%s3 + $0x98] sm:$0xff] %vm2288, %v2261
  // Predicated region
  $region14: #{lenet_forward.4} parent=0 // pred_check
    _
  $region15: #{lenet_forward.4} parent=0 // pred_check_branch
    %2306 = sbr.rel (0) target = $region17
  $region16: #{lenet_forward.4} parent=0 // pred_region
    _
  $region17: #{lenet_forward.4} parent=0 // pred_fallthru
    _
  // Predicated region
  $region18: #{lenet_forward.4} parent=0 // pred_check
    _
  $region19: #{lenet_forward.4} parent=0 // pred_check_branch
    %2308 = sbr.rel (0) target = $region21
  $region20: #{lenet_forward.4} parent=0 // pred_region
    _
  $region21: #{lenet_forward.4} parent=0 // pred_fallthru
    _

// kernel: lenet_forward.5
$region0: #{lenet_forward.5}
  #allocation0 [shape = 'u32[]', space=smem, size = 0x4, offset = 0x4, fixed_abs, tag = 'smem constant byte address 0x4 - core index']
  #allocation1 [shape = 'u32[144,128]{1,0:T(1,128)}', space=vmem, size = 0x12000, scoped, tag = 'internal scratch']
  %s0 = inlined_call_operand.vmem [shape: bf16[128,800], index: 0, kind: input, shape index: {}]
  %s1 = inlined_call_operand.vmem [shape: bf16[800,32], index: 1, kind: input, shape index: {}]
  %s2 = inlined_call_operand.vmem [shape: f32[1,32], index: 2, kind: input, shape index: {}]
  %s3 = inlined_call_operand.vmem [shape: bf16[25,8,128], index: 3, kind: input, shape index: {}]
  %s4 = inlined_call_operand.vmem [shape: bf16[25,32,64], index: 4, kind: input, shape index: {}]
  %s5 = inlined_call_operand.vmem [shape: f32[1,64], index: 5, kind: input, shape index: {}]
  %s6 = inlined_call_operand.vmem [shape: bf16[4,2,8], index: 6, kind: input, shape index: {}]
  %s7 = inlined_call_operand.vmem [shape: bf16[4,64,200], index: 7, kind: input, shape index: {}]
  %s8 = inlined_call_operand.vmem [shape: f32[1,200], index: 8, kind: input, shape index: {}]
  %s9 = inlined_call_operand.vmem [shape: bf16[200,200], index: 9, kind: input, shape index: {}]
  %s10 = inlined_call_operand.vmem [shape: f32[1,200], index: 10, kind: input, shape index: {}]
  %s11 = inlined_call_operand.vmem [shape: bf16[200,10], index: 11, kind: input, shape index: {}]
  %s12 = inlined_call_operand.vmem [shape: f32[1,10], index: 12, kind: input, shape index: {}]
  %s13 = inlined_call_operand.hbm [shape: f32[2,10], index: 13, kind: output, shape index: {}]
  %s14 = sld [smem:[#allocation0]]
  $region62: #{lenet_forward.5} parent=0
    _
  %s16 = ssub.s32 1, %s14
  %s17 = scalar_select 0, %s16, %s14
  $region1: #{lenet_forward.5} parent=0
    #allocation2 [shape = 'u8[1024]{0}', space=vmem, size = 0x400, scoped, tag = 'output window, operand 0, single buffered']
    #allocation3 [shape = 's32[1]{0}', space=sflag, size = 0x4, scoped, tag = 'scoped memory for lenet_forward.5']
    %18 = vsyncpa [#allocation3], 0
    // Predicated region
    $region2: #{lenet_forward.5} parent=1 // pred_check
      _
    $region3: #{lenet_forward.5} parent=1 // pred_check_branch
      %20 = sbr.rel (0) target = $region5
    $region4: #{lenet_forward.5} parent=1 // pred_region
      _
    $region5: #{lenet_forward.5} parent=1 // pred_fallthru
      _
    // Predicated region
    $region6: #{lenet_forward.5} parent=1 // pred_check
      _
    $region7: #{lenet_forward.5} parent=1 // pred_check_branch
      %22 = sbr.rel (0) target = $region9
    $region8: #{lenet_forward.5} parent=1 // pred_region
      _
    $region9: #{lenet_forward.5} parent=1 // pred_fallthru
      _
    // Predicated region
    $region10: #{lenet_forward.5} parent=1 // pred_check
      _
    $region11: #{lenet_forward.5} parent=1 // pred_check_branch
      %24 = sbr.rel (0) target = $region13
    $region12: #{lenet_forward.5} parent=1 // pred_region
      _
    $region13: #{lenet_forward.5} parent=1 // pred_fallthru
      _
    // Predicated region
    $region14: #{lenet_forward.5} parent=1 // pred_check
      _
    $region15: #{lenet_forward.5} parent=1 // pred_check_branch
      %26 = sbr.rel (0) target = $region17
    $region16: #{lenet_forward.5} parent=1 // pred_region
      _
    $region17: #{lenet_forward.5} parent=1 // pred_fallthru
      _
    // Predicated region
    $region18: #{lenet_forward.5} parent=1 // pred_check
      _
    $region19: #{lenet_forward.5} parent=1 // pred_check_branch
      %28 = sbr.rel (0) target = $region21
    $region20: #{lenet_forward.5} parent=1 // pred_region
      _
    $region21: #{lenet_forward.5} parent=1 // pred_fallthru
      _
    // Predicated region
    $region22: #{lenet_forward.5} parent=1 // pred_check
      _
    $region23: #{lenet_forward.5} parent=1 // pred_check_branch
      %30 = sbr.rel (0) target = $region25
    $region24: #{lenet_forward.5} parent=1 // pred_region
      _
    $region25: #{lenet_forward.5} parent=1 // pred_fallthru
      _
    // Predicated region
    $region26: #{lenet_forward.5} parent=1 // pred_check
      _
    $region27: #{lenet_forward.5} parent=1 // pred_check_branch
      %32 = sbr.rel (0) target = $region29
    $region28: #{lenet_forward.5} parent=1 // pred_region
      _
    $region29: #{lenet_forward.5} parent=1 // pred_fallthru
      _
    // Predicated region
    $region30: #{lenet_forward.5} parent=1 // pred_check
      _
    $region31: #{lenet_forward.5} parent=1 // pred_check_branch
      %34 = sbr.rel (0) target = $region33
    $region32: #{lenet_forward.5} parent=1 // pred_region
      _
    $region33: #{lenet_forward.5} parent=1 // pred_fallthru
      _
    // Predicated region
    $region34: #{lenet_forward.5} parent=1 // pred_check
      _
    $region35: #{lenet_forward.5} parent=1 // pred_check_branch
      %36 = sbr.rel (0) target = $region37
    $region36: #{lenet_forward.5} parent=1 // pred_region
      _
    $region37: #{lenet_forward.5} parent=1 // pred_fallthru
      _
    // Predicated region
    $region38: #{lenet_forward.5} parent=1 // pred_check
      _
    $region39: #{lenet_forward.5} parent=1 // pred_check_branch
      %38 = sbr.rel (0) target = $region41
    $region40: #{lenet_forward.5} parent=1 // pred_region
      _
    $region41: #{lenet_forward.5} parent=1 // pred_fallthru
      _
    // Predicated region
    $region42: #{lenet_forward.5} parent=1 // pred_check
      _
    $region43: #{lenet_forward.5} parent=1 // pred_check_branch
      %40 = sbr.rel (0) target = $region45
    $region44: #{lenet_forward.5} parent=1 // pred_region
      _
    $region45: #{lenet_forward.5} parent=1 // pred_fallthru
      _
    // Predicated region
    $region46: #{lenet_forward.5} parent=1 // pred_check
      _
    $region47: #{lenet_forward.5} parent=1 // pred_check_branch
      %42 = sbr.rel (0) target = $region49
    $region48: #{lenet_forward.5} parent=1 // pred_region
      _
    $region49: #{lenet_forward.5} parent=1 // pred_fallthru
      _
    // Predicated region
    $region50: #{lenet_forward.5} parent=1 // pred_check
      _
    $region51: #{lenet_forward.5} parent=1 // pred_check_branch
      %44 = sbr.rel (0) target = $region53
    $region52: #{lenet_forward.5} parent=1 // pred_region
      _
    $region53: #{lenet_forward.5} parent=1 // pred_fallthru
      _
    %v46 = vld [vmem:[%s0] sm:$0xff]
    %v47 = vld [vmem:[%s0 + $0x8] sm:$0xff]
    %v48 = vld [vmem:[%s0 + $0x10] sm:$0xff]
    %v49 = vld [vmem:[%s0 + $0x18] sm:$0xf]
    %v50 = vld [vmem:[%s0 + $0x1c] sm:$0xff]
    %v51 = vld [vmem:[%s0 + $0x24] sm:$0xff]
    %v52 = vld [vmem:[%s0 + $0x2c] sm:$0xff]
    %v53 = vld [vmem:[%s0 + $0x34] sm:$0xf]
    %v54 = vld [vmem:[%s0 + $0x38] sm:$0xff]
    %v55 = vld [vmem:[%s0 + $0x40] sm:$0xff]
    %v56 = vld [vmem:[%s0 + $0x48] sm:$0xff]
    %v57 = vld [vmem:[%s0 + $0x50] sm:$0xf]
    %v58 = vld [vmem:[%s0 + $0x54] sm:$0xff]
    %v59 = vld [vmem:[%s0 + $0x5c] sm:$0xff]
    %v60 = vld [vmem:[%s0 + $0x64] sm:$0xff]
    %v61 = vld [vmem:[%s0 + $0x6c] sm:$0xf]
    %v62 = vld [vmem:[%s0 + $0x70] sm:$0xff]
    %v63 = vld [vmem:[%s0 + $0x78] sm:$0xff]
    %v64 = vld [vmem:[%s0 + $0x80] sm:$0xff]
    %v65 = vld [vmem:[%s0 + $0x88] sm:$0xf]
    %v66 = vld [vmem:[%s0 + $0x8c] sm:$0xff]
    %v67 = vld [vmem:[%s0 + $0x94] sm:$0xff]
    %v68 = vld [vmem:[%s0 + $0x9c] sm:$0xff]
    %v69 = vld [vmem:[%s0 + $0xa4] sm:$0xf]
    %v70 = vld [vmem:[%s0 + $0xa8] sm:$0xff]
    %v71 = vld [vmem:[%s0 + $0xb0] sm:$0xff]
    %v72 = vld [vmem:[%s0 + $0xb8] sm:$0xff]
    %v73 = vld [vmem:[%s0 + $0xc0] sm:$0xf]
    %v74 = vld [vmem:[%s0 + $0xc4] sm:$0xff]
    %v75 = vld [vmem:[%s0 + $0xcc] sm:$0xff]
    %v76 = vld [vmem:[%s0 + $0xd4] sm:$0xff]
    %v77 = vld [vmem:[%s0 + $0xdc] sm:$0xf]
    %v78 = vld [vmem:[%s0 + $0xe0] sm:$0xff]
    %v79 = vld [vmem:[%s0 + $0xe8] sm:$0xff]
    %v80 = vld [vmem:[%s0 + $0xf0] sm:$0xff]
    %v81 = vld [vmem:[%s0 + $0xf8] sm:$0xf]
    %v82 = vld [vmem:[%s0 + $0xfc] sm:$0xff]
    %v83 = vld [vmem:[%s0 + $0x104] sm:$0xff]
    %v84 = vld [vmem:[%s0 + $0x10c] sm:$0xff]
    %v85 = vld [vmem:[%s0 + $0x114] sm:$0xf]
    %v86 = vld [vmem:[%s0 + $0x118] sm:$0xff]
    %v87 = vld [vmem:[%s0 + $0x120] sm:$0xff]
    %v88 = vld [vmem:[%s0 + $0x128] sm:$0xff]
    %v89 = vld [vmem:[%s0 + $0x130] sm:$0xf]
    %v90 = vld [vmem:[%s0 + $0x134] sm:$0xff]
    %v91 = vld [vmem:[%s0 + $0x13c] sm:$0xff]
    %v92 = vld [vmem:[%s0 + $0x144] sm:$0xff]
    %v93 = vld [vmem:[%s0 + $0x14c] sm:$0xf]
    %v94 = vld [vmem:[%s0 + $0x150] sm:$0xff]
    %v95 = vld [vmem:[%s0 + $0x158] sm:$0xff]
    %v96 = vld [vmem:[%s0 + $0x160] sm:$0xff]
    %v97 = vld [vmem:[%s0 + $0x168] sm:$0xf]
    %v98 = vld [vmem:[%s0 + $0x16c] sm:$0xff]
    %v99 = vld [vmem:[%s0 + $0x174] sm:$0xff]
    %v100 = vld [vmem:[%s0 + $0x17c] sm:$0xff]
    %v101 = vld [vmem:[%s0 + $0x184] sm:$0xf]
    %v102 = vld [vmem:[%s0 + $0x188] sm:$0xff]
    %v103 = vld [vmem:[%s0 + $0x190] sm:$0xff]
    %v104 = vld [vmem:[%s0 + $0x198] sm:$0xff]
    %v105 = vld [vmem:[%s0 + $0x1a0] sm:$0xf]
    %v106 = vld [vmem:[%s0 + $0x1a4] sm:$0xff]
    %v107 = vld [vmem:[%s0 + $0x1ac] sm:$0xff]
    %v108 = vld [vmem:[%s0 + $0x1b4] sm:$0xff]
    %v109 = vld [vmem:[%s0 + $0x1bc] sm:$0xf]
    %v110 = vld [vmem:[%s1] sm:$0xf]
    %v111 = vld [vmem:[%s1 + $0x4] sm:$0xf]
    %v112 = vld [vmem:[%s1 + $0x8] sm:$0xf]
    %v113 = vld [vmem:[%s1 + $0xc] sm:$0xf]
    %v114 = vld [vmem:[%s1 + $0x10] sm:$0xf]
    %v115 = vld [vmem:[%s1 + $0x14] sm:$0xf]
    %v116 = vld [vmem:[%s1 + $0x18] sm:$0xf]
    %v117 = vld [vmem:[%s1 + $0x1c] sm:$0xf]
    %v118 = vld [vmem:[%s1 + $0x20] sm:$0xf]
    %v119 = vld [vmem:[%s1 + $0x24] sm:$0xf]
    %v120 = vld [vmem:[%s1 + $0x28] sm:$0xf]
    %v121 = vld [vmem:[%s1 + $0x2c] sm:$0xf]
    %v122 = vld [vmem:[%s1 + $0x30] sm:$0xf]
    %v123 = vld [vmem:[%s1 + $0x34] sm:$0xf]
    %v124 = vld [vmem:[%s1 + $0x38] sm:$0xf]
    %v125 = vld [vmem:[%s1 + $0x3c] sm:$0xf]
    %v126 = vld [vmem:[%s1 + $0x40] sm:$0xf]
    %v127 = vld [vmem:[%s1 + $0x44] sm:$0xf]
    %v128 = vld [vmem:[%s1 + $0x48] sm:$0xf]
    %v129 = vld [vmem:[%s1 + $0x4c] sm:$0xf]
    %v130 = vld [vmem:[%s1 + $0x50] sm:$0xf]
    %v131 = vld [vmem:[%s1 + $0x54] sm:$0xf]
    %v132 = vld [vmem:[%s1 + $0x58] sm:$0xf]
    %v133 = vld [vmem:[%s1 + $0x5c] sm:$0xf]
    %v134 = vld [vmem:[%s1 + $0x60] sm:$0xf]
    %v135 = vld [vmem:[%s1 + $0x64] sm:$0xf]
    %v136 = vld [vmem:[%s1 + $0x68] sm:$0xf]
    %v137 = vld [vmem:[%s1 + $0x6c] sm:$0xf]
    %v138 = vld [vmem:[%s1 + $0x70] sm:$0xf]
    %v139 = vld [vmem:[%s1 + $0x74] sm:$0xf]
    %v140 = vld [vmem:[%s1 + $0x78] sm:$0xf]
    %v141 = vld [vmem:[%s1 + $0x7c] sm:$0xf]
    %v142 = vld [vmem:[%s1 + $0x80] sm:$0xf]
    %v143 = vld [vmem:[%s1 + $0x84] sm:$0xf]
    %v144 = vld [vmem:[%s1 + $0x88] sm:$0xf]
    %v145 = vld [vmem:[%s1 + $0x8c] sm:$0xf]
    %v146 = vld [vmem:[%s1 + $0x90] sm:$0xf]
    %v147 = vld [vmem:[%s1 + $0x94] sm:$0xf]
    %v148 = vld [vmem:[%s1 + $0x98] sm:$0xf]
    %v149 = vld [vmem:[%s1 + $0x9c] sm:$0xf]
    %v150 = vld [vmem:[%s1 + $0xa0] sm:$0xf]
    %v151 = vld [vmem:[%s1 + $0xa4] sm:$0xf]
    %v152 = vld [vmem:[%s1 + $0xa8] sm:$0xf]
    %v153 = vld [vmem:[%s1 + $0xac] sm:$0xf]
    %v154 = vld [vmem:[%s1 + $0xb0] sm:$0xf]
    %v155 = vld [vmem:[%s1 + $0xb4] sm:$0xf]
    %v156 = vld [vmem:[%s1 + $0xb8] sm:$0xf]
    %v157 = vld [vmem:[%s1 + $0xbc] sm:$0xf]
    %v158 = vld [vmem:[%s1 + $0xc0] sm:$0xf]
    %v159 = vld [vmem:[%s1 + $0xc4] sm:$0xf]
    %v160 = vld [vmem:[%s1 + $0xc8] sm:$0xf]
    %v161 = vld [vmem:[%s1 + $0xcc] sm:$0xf]
    %v162 = vld [vmem:[%s1 + $0xd0] sm:$0xf]
    %v163 = vld [vmem:[%s1 + $0xd4] sm:$0xf]
    %v164 = vld [vmem:[%s1 + $0xd8] sm:$0xf]
    %v165 = vld [vmem:[%s1 + $0xdc] sm:$0xf]
    %v166 = vld [vmem:[%s1 + $0xe0] sm:$0xf]
    %v167 = vld [vmem:[%s1 + $0xe4] sm:$0xf]
    %v168 = vld [vmem:[%s1 + $0xe8] sm:$0xf]
    %v169 = vld [vmem:[%s1 + $0xec] sm:$0xf]
    %v170 = vld [vmem:[%s1 + $0xf0] sm:$0xf]
    %v171 = vld [vmem:[%s1 + $0xf4] sm:$0xf]
    %v172 = vld [vmem:[%s1 + $0xf8] sm:$0xf]
    %v173 = vld [vmem:[%s1 + $0xfc] sm:$0xf]
    %v174 = vld [vmem:[%s1 + $0x100] sm:$0xf]
    %v175 = vld [vmem:[%s1 + $0x104] sm:$0xf]
    %v176 = vld [vmem:[%s1 + $0x108] sm:$0xf]
    %v177 = vld [vmem:[%s1 + $0x10c] sm:$0xf]
    %v178 = vld [vmem:[%s1 + $0x110] sm:$0xf]
    %v179 = vld [vmem:[%s1 + $0x114] sm:$0xf]
    %v180 = vld [vmem:[%s1 + $0x118] sm:$0xf]
    %v181 = vld [vmem:[%s1 + $0x11c] sm:$0xf]
    %v182 = vld [vmem:[%s1 + $0x120] sm:$0xf]
    %v183 = vld [vmem:[%s1 + $0x124] sm:$0xf]
    %v184 = vld [vmem:[%s1 + $0x128] sm:$0xf]
    %v185 = vld [vmem:[%s1 + $0x12c] sm:$0xf]
    %v186 = vld [vmem:[%s1 + $0x130] sm:$0xf]
    %v187 = vld [vmem:[%s1 + $0x134] sm:$0xf]
    %v188 = vld [vmem:[%s1 + $0x138] sm:$0xf]
    %v189 = vld [vmem:[%s1 + $0x13c] sm:$0xf]
    %v190 = vld [vmem:[%s1 + $0x140] sm:$0xf]
    %v191 = vld [vmem:[%s1 + $0x144] sm:$0xf]
    %v192 = vld [vmem:[%s1 + $0x148] sm:$0xf]
    %v193 = vld [vmem:[%s1 + $0x14c] sm:$0xf]
    %v194 = vld [vmem:[%s1 + $0x150] sm:$0xf]
    %v195 = vld [vmem:[%s1 + $0x154] sm:$0xf]
    %v196 = vld [vmem:[%s1 + $0x158] sm:$0xf]
    %v197 = vld [vmem:[%s1 + $0x15c] sm:$0xf]
    %v198 = vld [vmem:[%s1 + $0x160] sm:$0xf]
    %v199 = vld [vmem:[%s1 + $0x164] sm:$0xf]
    %v200 = vld [vmem:[%s1 + $0x168] sm:$0xf]
    %v201 = vld [vmem:[%s1 + $0x16c] sm:$0xf]
    %v202 = vld [vmem:[%s1 + $0x170] sm:$0xf]
    %v203 = vld [vmem:[%s1 + $0x174] sm:$0xf]
    %v204 = vld [vmem:[%s1 + $0x178] sm:$0xf]
    %v205 = vld [vmem:[%s1 + $0x17c] sm:$0xf]
    %v206 = vld [vmem:[%s1 + $0x180] sm:$0xf]
    %v207 = vld [vmem:[%s1 + $0x184] sm:$0xf]
    %v208 = vld [vmem:[%s1 + $0x188] sm:$0xf]
    %v209 = vld [vmem:[%s1 + $0x18c] sm:$0xf]
    %v210 = vld [vmem:[%s2] sm:$0x1]
    %v212 = vlaneseq
    %v213 = vshrl.u32 %v212, 7
    %v214 = vsub.s32 0, %v213
    %v215 = vrot.slane %v210, %v214
    %v281 = vunpack.c.l.b16 %v46
    %v282 = vunpack.c.h.b16 %v46
    %v283 = vunpack.c.l.b16 %v47
    %v284 = vunpack.c.h.b16 %v47
    %v285 = vunpack.c.l.b16 %v48
    %v286 = vunpack.c.h.b16 %v48
    %v287 = vunpack.c.l.b16 %v49
    %v288 = vunpack.c.l.b16 %v50
    %v289 = vunpack.c.h.b16 %v50
    %v290 = vunpack.c.l.b16 %v51
    %v291 = vunpack.c.h.b16 %v51
    %v292 = vunpack.c.l.b16 %v52
    %v293 = vunpack.c.h.b16 %v52
    %v294 = vunpack.c.l.b16 %v53
    %v295 = vunpack.c.l.b16 %v54
    %v296 = vunpack.c.h.b16 %v54
    %v297 = vunpack.c.l.b16 %v55
    %v298 = vunpack.c.h.b16 %v55
    %v299 = vunpack.c.l.b16 %v56
    %v300 = vunpack.c.h.b16 %v56
    %v301 = vunpack.c.l.b16 %v57
    %v302 = vunpack.c.l.b16 %v58
    %v303 = vunpack.c.h.b16 %v58
    %v304 = vunpack.c.l.b16 %v59
    %v305 = vunpack.c.h.b16 %v59
    %v306 = vunpack.c.l.b16 %v60
    %v307 = vunpack.c.h.b16 %v60
    %v308 = vunpack.c.l.b16 %v61
    %v309 = vunpack.c.l.b16 %v62
    %v310 = vunpack.c.h.b16 %v62
    %v311 = vunpack.c.l.b16 %v63
    %v312 = vunpack.c.h.b16 %v63
    %v313 = vunpack.c.l.b16 %v64
    %v314 = vunpack.c.h.b16 %v64
    %v315 = vunpack.c.l.b16 %v65
    %v316 = vunpack.c.l.b16 %v66
    %v317 = vunpack.c.h.b16 %v66
    %v318 = vunpack.c.l.b16 %v67
    %v319 = vunpack.c.h.b16 %v67
    %v320 = vunpack.c.l.b16 %v68
    %v321 = vunpack.c.h.b16 %v68
    %v322 = vunpack.c.l.b16 %v69
    %v323 = vunpack.c.l.b16 %v70
    %v324 = vunpack.c.h.b16 %v70
    %v325 = vunpack.c.l.b16 %v71
    %v326 = vunpack.c.h.b16 %v71
    %v327 = vunpack.c.l.b16 %v72
    %v328 = vunpack.c.h.b16 %v72
    %v329 = vunpack.c.l.b16 %v73
    %v330 = vunpack.c.l.b16 %v74
    %v331 = vunpack.c.h.b16 %v74
    %v332 = vunpack.c.l.b16 %v75
    %v333 = vunpack.c.h.b16 %v75
    %v334 = vunpack.c.l.b16 %v76
    %v335 = vunpack.c.h.b16 %v76
    %v336 = vunpack.c.l.b16 %v77
    %v337 = vunpack.c.l.b16 %v78
    %v338 = vunpack.c.h.b16 %v78
    %v339 = vunpack.c.l.b16 %v79
    %v340 = vunpack.c.h.b16 %v79
    %v341 = vunpack.c.l.b16 %v80
    %v342 = vunpack.c.h.b16 %v80
    %v343 = vunpack.c.l.b16 %v81
    %v344 = vunpack.c.l.b16 %v82
    %v345 = vunpack.c.h.b16 %v82
    %v346 = vunpack.c.l.b16 %v83
    %v347 = vunpack.c.h.b16 %v83
    %v348 = vunpack.c.l.b16 %v84
    %v349 = vunpack.c.h.b16 %v84
    %v350 = vunpack.c.l.b16 %v85
    %v351 = vunpack.c.l.b16 %v86
    %v352 = vunpack.c.h.b16 %v86
    %v353 = vunpack.c.l.b16 %v87
    %v354 = vunpack.c.h.b16 %v87
    %v355 = vunpack.c.l.b16 %v88
    %v356 = vunpack.c.h.b16 %v88
    %v357 = vunpack.c.l.b16 %v89
    %v358 = vunpack.c.l.b16 %v90
    %v359 = vunpack.c.h.b16 %v90
    %v360 = vunpack.c.l.b16 %v91
    %v361 = vunpack.c.h.b16 %v91
    %v362 = vunpack.c.l.b16 %v92
    %v363 = vunpack.c.h.b16 %v92
    %v364 = vunpack.c.l.b16 %v93
    %v365 = vunpack.c.l.b16 %v94
    %v366 = vunpack.c.h.b16 %v94
    %v367 = vunpack.c.l.b16 %v95
    %v368 = vunpack.c.h.b16 %v95
    %v369 = vunpack.c.l.b16 %v96
    %v370 = vunpack.c.h.b16 %v96
    %v371 = vunpack.c.l.b16 %v97
    %v372 = vunpack.c.l.b16 %v98
    %v373 = vunpack.c.h.b16 %v98
    %v374 = vunpack.c.l.b16 %v99
    %v375 = vunpack.c.h.b16 %v99
    %v376 = vunpack.c.l.b16 %v100
    %v377 = vunpack.c.h.b16 %v100
    %v378 = vunpack.c.l.b16 %v101
    %v379 = vunpack.c.l.b16 %v102
    %v380 = vunpack.c.h.b16 %v102
    %v381 = vunpack.c.l.b16 %v103
    %v382 = vunpack.c.h.b16 %v103
    %v383 = vunpack.c.l.b16 %v104
    %v384 = vunpack.c.h.b16 %v104
    %v385 = vunpack.c.l.b16 %v105
    %v386 = vunpack.c.l.b16 %v106
    %v387 = vunpack.c.h.b16 %v106
    %v388 = vunpack.c.l.b16 %v107
    %v389 = vunpack.c.h.b16 %v107
    %v390 = vunpack.c.l.b16 %v108
    %v391 = vunpack.c.h.b16 %v108
    %v392 = vunpack.c.l.b16 %v109
    %v393 = vpack.c.b16 %v288, %v281
    %v394 = vpack.c.b16 %v289, %v282
    %v395 = vpack.c.b16 %v290, %v283
    %v396 = vpack.c.b16 %v291, %v284
    %v397 = vpack.c.b16 %v292, %v285
    %v398 = vpack.c.b16 %v293, %v286
    %v399 = vpack.c.b16 %v294, %v287
    %v400 = vpack.c.b16 %v302, %v295
    %v401 = vpack.c.b16 %v303, %v296
    %v402 = vpack.c.b16 %v304, %v297
    %v403 = vpack.c.b16 %v305, %v298
    %v404 = vpack.c.b16 %v306, %v299
    %v405 = vpack.c.b16 %v307, %v300
    %v406 = vpack.c.b16 %v308, %v301
    %v407 = vpack.c.b16 %v316, %v309
    %v408 = vpack.c.b16 %v317, %v310
    %v409 = vpack.c.b16 %v318, %v311
    %v410 = vpack.c.b16 %v319, %v312
    %v411 = vpack.c.b16 %v320, %v313
    %v412 = vpack.c.b16 %v321, %v314
    %v413 = vpack.c.b16 %v322, %v315
    %v414 = vpack.c.b16 %v330, %v323
    %v415 = vpack.c.b16 %v331, %v324
    %v416 = vpack.c.b16 %v332, %v325
    %v417 = vpack.c.b16 %v333, %v326
    %v418 = vpack.c.b16 %v334, %v327
    %v419 = vpack.c.b16 %v335, %v328
    %v420 = vpack.c.b16 %v336, %v329
    %v421 = vpack.c.b16 %v344, %v337
    %v422 = vpack.c.b16 %v345, %v338
    %v423 = vpack.c.b16 %v346, %v339
    %v424 = vpack.c.b16 %v347, %v340
    %v425 = vpack.c.b16 %v348, %v341
    %v426 = vpack.c.b16 %v349, %v342
    %v427 = vpack.c.b16 %v350, %v343
    %v428 = vpack.c.b16 %v358, %v351
    %v429 = vpack.c.b16 %v359, %v352
    %v430 = vpack.c.b16 %v360, %v353
    %v431 = vpack.c.b16 %v361, %v354
    %v432 = vpack.c.b16 %v362, %v355
    %v433 = vpack.c.b16 %v363, %v356
    %v434 = vpack.c.b16 %v364, %v357
    %v435 = vpack.c.b16 %v372, %v365
    %v436 = vpack.c.b16 %v373, %v366
    %v437 = vpack.c.b16 %v374, %v367
    %v438 = vpack.c.b16 %v375, %v368
    %v439 = vpack.c.b16 %v376, %v369
    %v440 = vpack.c.b16 %v377, %v370
    %v441 = vpack.c.b16 %v378, %v371
    %v442 = vpack.c.b16 %v386, %v379
    %v443 = vpack.c.b16 %v387, %v380
    %v444 = vpack.c.b16 %v388, %v381
    %v445 = vpack.c.b16 %v389, %v382
    %v446 = vpack.c.b16 %v390, %v383
    %v447 = vpack.c.b16 %v391, %v384
    %v448 = vpack.c.b16 %v392, %v385
    %v597 = vunpack.c.l.b16 %v110
    %v598 = vunpack.c.l.b16 %v111
    %v599 = vunpack.c.l.b16 %v112
    %v600 = vunpack.c.l.b16 %v113
    %v601 = vunpack.c.l.b16 %v114
    %v602 = vunpack.c.l.b16 %v115
    %v603 = vunpack.c.l.b16 %v116
    %v604 = vunpack.c.l.b16 %v117
    %v605 = vunpack.c.l.b16 %v118
    %v606 = vunpack.c.l.b16 %v119
    %v607 = vunpack.c.l.b16 %v120
    %v608 = vunpack.c.l.b16 %v121
    %v609 = vunpack.c.l.b16 %v122
    %v610 = vunpack.c.l.b16 %v123
    %v611 = vunpack.c.l.b16 %v124
    %v612 = vunpack.c.l.b16 %v125
    %v613 = vunpack.c.l.b16 %v126
    %v614 = vunpack.c.l.b16 %v127
    %v615 = vunpack.c.l.b16 %v128
    %v616 = vunpack.c.l.b16 %v129
    %v617 = vunpack.c.l.b16 %v130
    %v618 = vunpack.c.l.b16 %v131
    %v619 = vunpack.c.l.b16 %v132
    %v620 = vunpack.c.l.b16 %v133
    %v621 = vunpack.c.l.b16 %v134
    %v622 = vunpack.c.l.b16 %v135
    %v623 = vunpack.c.l.b16 %v136
    %v624 = vunpack.c.l.b16 %v137
    %v625 = vunpack.c.l.b16 %v138
    %v626 = vunpack.c.l.b16 %v139
    %v627 = vunpack.c.l.b16 %v140
    %v628 = vunpack.c.l.b16 %v141
    %v629 = vunpack.c.l.b16 %v142
    %v630 = vunpack.c.l.b16 %v143
    %v631 = vunpack.c.l.b16 %v144
    %v632 = vunpack.c.l.b16 %v145
    %v633 = vunpack.c.l.b16 %v146
    %v634 = vunpack.c.l.b16 %v147
    %v635 = vunpack.c.l.b16 %v148
    %v636 = vunpack.c.l.b16 %v149
    %v637 = vunpack.c.l.b16 %v150
    %v638 = vunpack.c.l.b16 %v151
    %v639 = vunpack.c.l.b16 %v152
    %v640 = vunpack.c.l.b16 %v153
    %v641 = vunpack.c.l.b16 %v154
    %v642 = vunpack.c.l.b16 %v155
    %v643 = vunpack.c.l.b16 %v156
    %v644 = vunpack.c.l.b16 %v157
    %v645 = vunpack.c.l.b16 %v158
    %v646 = vunpack.c.l.b16 %v159
    %v647 = vunpack.c.l.b16 %v160
    %v648 = vunpack.c.l.b16 %v161
    %v649 = vunpack.c.l.b16 %v162
    %v650 = vunpack.c.l.b16 %v163
    %v651 = vunpack.c.l.b16 %v164
    %v652 = vunpack.c.l.b16 %v165
    %v653 = vunpack.c.l.b16 %v166
    %v654 = vunpack.c.l.b16 %v167
    %v655 = vunpack.c.l.b16 %v168
    %v656 = vunpack.c.l.b16 %v169
    %v657 = vunpack.c.l.b16 %v170
    %v658 = vunpack.c.l.b16 %v171
    %v659 = vunpack.c.l.b16 %v172
    %v660 = vunpack.c.l.b16 %v173
    %v661 = vunpack.c.l.b16 %v174
    %v662 = vunpack.c.l.b16 %v175
    %v663 = vunpack.c.l.b16 %v176
    %v664 = vunpack.c.l.b16 %v177
    %v665 = vunpack.c.l.b16 %v178
    %v666 = vunpack.c.l.b16 %v179
    %v667 = vunpack.c.l.b16 %v180
    %v668 = vunpack.c.l.b16 %v181
    %v669 = vunpack.c.l.b16 %v182
    %v670 = vunpack.c.l.b16 %v183
    %v671 = vunpack.c.l.b16 %v184
    %v672 = vunpack.c.l.b16 %v185
    %v673 = vunpack.c.l.b16 %v186
    %v674 = vunpack.c.l.b16 %v187
    %v675 = vunpack.c.l.b16 %v188
    %v676 = vunpack.c.l.b16 %v189
    %v677 = vunpack.c.l.b16 %v190
    %v678 = vunpack.c.l.b16 %v191
    %v679 = vunpack.c.l.b16 %v192
    %v680 = vunpack.c.l.b16 %v193
    %v681 = vunpack.c.l.b16 %v194
    %v682 = vunpack.c.l.b16 %v195
    %v683 = vunpack.c.l.b16 %v196
    %v684 = vunpack.c.l.b16 %v197
    %v685 = vunpack.c.l.b16 %v198
    %v686 = vunpack.c.l.b16 %v199
    %v687 = vunpack.c.l.b16 %v200
    %v688 = vunpack.c.l.b16 %v201
    %v689 = vunpack.c.l.b16 %v202
    %v690 = vunpack.c.l.b16 %v203
    %v691 = vunpack.c.l.b16 %v204
    %v692 = vunpack.c.l.b16 %v205
    %v693 = vunpack.c.l.b16 %v206
    %v694 = vunpack.c.l.b16 %v207
    %v695 = vunpack.c.l.b16 %v208
    %v696 = vunpack.c.l.b16 %v209
    %v697 = vpack.c.b16 %v598, %v597
    %v698 = vpack.c.b16 %v600, %v599
    %v699 = vpack.c.b16 %v602, %v601
    %v700 = vpack.c.b16 %v604, %v603
    %v701 = vpack.c.b16 %v606, %v605
    %v702 = vpack.c.b16 %v608, %v607
    %v703 = vpack.c.b16 %v610, %v609
    %v704 = vpack.c.b16 %v612, %v611
    %v705 = vpack.c.b16 %v614, %v613
    %v706 = vpack.c.b16 %v616, %v615
    %v707 = vpack.c.b16 %v618, %v617
    %v708 = vpack.c.b16 %v620, %v619
    %v709 = vpack.c.b16 %v622, %v621
    %v710 = vpack.c.b16 %v624, %v623
    %v711 = vpack.c.b16 %v626, %v625
    %v712 = vpack.c.b16 %v628, %v627
    %v713 = vpack.c.b16 %v630, %v629
    %v714 = vpack.c.b16 %v632, %v631
    %v715 = vpack.c.b16 %v634, %v633
    %v716 = vpack.c.b16 %v636, %v635
    %v717 = vpack.c.b16 %v638, %v637
    %v718 = vpack.c.b16 %v640, %v639
    %v719 = vpack.c.b16 %v642, %v641
    %v720 = vpack.c.b16 %v644, %v643
    %v721 = vpack.c.b16 %v646, %v645
    %v722 = vpack.c.b16 %v648, %v647
    %v723 = vpack.c.b16 %v650, %v649
    %v724 = vpack.c.b16 %v652, %v651
    %v725 = vpack.c.b16 %v654, %v653
    %v726 = vpack.c.b16 %v656, %v655
    %v727 = vpack.c.b16 %v658, %v657
    %v728 = vpack.c.b16 %v660, %v659
    %v729 = vpack.c.b16 %v662, %v661
    %v730 = vpack.c.b16 %v664, %v663
    %v731 = vpack.c.b16 %v666, %v665
    %v732 = vpack.c.b16 %v668, %v667
    %v733 = vpack.c.b16 %v670, %v669
    %v734 = vpack.c.b16 %v672, %v671
    %v735 = vpack.c.b16 %v674, %v673
    %v736 = vpack.c.b16 %v676, %v675
    %v737 = vpack.c.b16 %v678, %v677
    %v738 = vpack.c.b16 %v680, %v679
    %v739 = vpack.c.b16 %v682, %v681
    %v740 = vpack.c.b16 %v684, %v683
    %v741 = vpack.c.b16 %v686, %v685
    %v742 = vpack.c.b16 %v688, %v687
    %v743 = vpack.c.b16 %v690, %v689
    %v744 = vpack.c.b16 %v692, %v691
    %v745 = vpack.c.b16 %v694, %v693
    %v746 = vpack.c.b16 %v696, %v695
    %vm797 = vcmask 261120
    %v799 = vsel %vm797, %v399, 0
    %v802 = vsel %vm797, %v406, 0
    %v805 = vsel %vm797, %v413, 0
    %v808 = vsel %vm797, %v420, 0
    %v811 = vsel %vm797, %v427, 0
    %v814 = vsel %vm797, %v434, 0
    %v817 = vsel %vm797, %v441, 0
    %v820 = vsel %vm797, %v448, 0
    %822 = vmatprep.subr.bf16.mxu0 0
    %823 = vmatpush1.bf16.msra.mxu0 %v697
    %824 = vmatprep.subr.bf16.mxu0 0
    %825 = vmatpush1.bf16.msra.mxu0 %v698
    %826 = vmatprep.subr.bf16.mxu0 0
    %827 = vmatpush1.bf16.msra.mxu0 %v699
    %828 = vmatprep.subr.bf16.mxu0 0
    %829 = vmatpush1.bf16.msra.mxu0 %v700
    %830 = vmatprep.subr.bf16.mxu0 0
    %831 = vmatpush1.bf16.msra.mxu0 %v701
    %832 = vmatprep.subr.bf16.mxu0 0
    %833 = vmatpush1.bf16.msra.mxu0 %v702
    %834 = vmatprep.subr.bf16.mxu0 0
    %835 = vmatpush1.bf16.msra.mxu0 %v703
    %836 = vmatprep.subr.bf16.mxu0 0
    %837 = vmatpush1.bf16.msra.mxu0 %v704
    %838 = vmatprep.subr.bf16.mxu0 0
    %839 = vmatpush1.bf16.msra.mxu0 %v705
    %840 = vmatprep.subr.bf16.mxu0 0
    %841 = vmatpush1.bf16.msra.mxu0 %v706
    %842 = vmatprep.subr.bf16.mxu0 0
    %843 = vmatpush1.bf16.msra.mxu0 %v707
    %844 = vmatprep.subr.bf16.mxu0 0
    %845 = vmatpush1.bf16.msra.mxu0 %v708
    %846 = vmatprep.subr.bf16.mxu0 0
    %847 = vmatpush1.bf16.msra.mxu0 %v709
    %848 = vmatprep.subr.bf16.mxu0 0
    %849 = vmatpush1.bf16.msra.mxu0 %v710
    %850 = vmatprep.subr.bf16.mxu0 0
    %851 = vmatpush1.bf16.msra.mxu0 %v711
    %852 = vmatprep.subr.bf16.mxu0 0
    %853 = vmatpush1.bf16.msra.mxu0 %v712
    %854 = vmatprep.mubr.bf16.mxu0 %v394
    %855 = vmatmul.mubr.bf16.gmra.mrb[0].mxu0 %v393
    %v856 = vpop.f32.mrb[0].mxu0
    %v857 = vadd.f32 %v215, %v856
    %v858 = vpop.f32.mrb[0].mxu0
    %v859 = vpop.f32.mrb[0].mxu0
    %v860 = vadd.f32 %v215, %v859
    %v861 = vpop.f32.mrb[0].mxu0
    %862 = vmatprep.mubr.bf16.mxu0 %v401
    %863 = vmatmul.mubr.bf16.gmra.mrb[0].mxu0 %v400
    %v864 = vpop.f32.mrb[0].mxu0
    %v865 = vadd.f32 %v215, %v864
    %v866 = vpop.f32.mrb[0].mxu0
    %v867 = vpop.f32.mrb[0].mxu0
    %v868 = vadd.f32 %v215, %v867
    %v869 = vpop.f32.mrb[0].mxu0
    %870 = vmatprep.mubr.bf16.mxu0 %v408
    %871 = vmatmul.mubr.bf16.gmra.mrb[0].mxu0 %v407
    %v872 = vpop.f32.mrb[0].mxu0
    %v873 = vadd.f32 %v215, %v872
    %v874 = vpop.f32.mrb[0].mxu0
    %v875 = vpop.f32.mrb[0].mxu0
    %v876 = vadd.f32 %v215, %v875
    %v877 = vpop.f32.mrb[0].mxu0
    %878 = vmatprep.mubr.bf16.mxu0 %v415
    %879 = vmatmul.mubr.bf16.gmra.mrb[0].mxu0 %v414
    %v880 = vpop.f32.mrb[0].mxu0
    %v881 = vadd.f32 %v215, %v880
    %v882 = vpop.f32.mrb[0].mxu0
    %v883 = vpop.f32.mrb[0].mxu0
    %v884 = vadd.f32 %v215, %v883
    %v885 = vpop.f32.mrb[0].mxu0
    %886 = vmatprep.mubr.bf16.mxu0 %v422
    %887 = vmatmul.mubr.bf16.gmra.mrb[0].mxu0 %v421
    %v888 = vpop.f32.mrb[0].mxu0
    %v889 = vadd.f32 %v215, %v888
    %v890 = vpop.f32.mrb[0].mxu0
    %v891 = vpop.f32.mrb[0].mxu0
    %v892 = vadd.f32 %v215, %v891
    %v893 = vpop.f32.mrb[0].mxu0
    %894 = vmatprep.mubr.bf16.mxu0 %v429
    %895 = vmatmul.mubr.bf16.gmra.mrb[0].mxu0 %v428
    %v896 = vpop.f32.mrb[0].mxu0
    %v897 = vadd.f32 %v215, %v896
    %v898 = vpop.f32.mrb[0].mxu0
    %v899 = vpop.f32.mrb[0].mxu0
    %v900 = vadd.f32 %v215, %v899
    %v901 = vpop.f32.mrb[0].mxu0
    %902 = vmatprep.mubr.bf16.mxu0 %v436
    %903 = vmatmul.mubr.bf16.gmra.mrb[0].mxu0 %v435
    %v904 = vpop.f32.mrb[0].mxu0
    %v905 = vadd.f32 %v215, %v904
    %v906 = vpop.f32.mrb[0].mxu0
    %v907 = vpop.f32.mrb[0].mxu0
    %v908 = vadd.f32 %v215, %v907
    %v909 = vpop.f32.mrb[0].mxu0
    %910 = vmatprep.mubr.bf16.mxu0 %v443
    %911 = vmatmul.mubr.bf16.gmra.mrb[0].mxu0 %v442
    %v912 = vpop.f32.mrb[0].mxu0
    %v913 = vadd.f32 %v215, %v912
    %v914 = vpop.f32.mrb[0].mxu0
    %v915 = vpop.f32.mrb[0].mxu0
    %v916 = vadd.f32 %v215, %v915
    %v917 = vpop.f32.mrb[0].mxu0
    %918 = vdwg.mxu0
    %919 = vmatprep.subr.bf16.mxu0 0
    %920 = vmatpush1.bf16.msra.mxu0 %v713
    %921 = vmatprep.subr.bf16.mxu0 0
    %922 = vmatpush1.bf16.msra.mxu0 %v714
    %923 = vmatprep.subr.bf16.mxu0 0
    %924 = vmatpush1.bf16.msra.mxu0 %v715
    %925 = vmatprep.subr.bf16.mxu0 0
    %926 = vmatpush1.bf16.msra.mxu0 %v716
    %927 = vmatprep.subr.bf16.mxu0 0
    %928 = vmatpush1.bf16.msra.mxu0 %v717
    %929 = vmatprep.subr.bf16.mxu0 0
    %930 = vmatpush1.bf16.msra.mxu0 %v718
    %931 = vmatprep.subr.bf16.mxu0 0
    %932 = vmatpush1.bf16.msra.mxu0 %v719
    %933 = vmatprep.subr.bf16.mxu0 0
    %934 = vmatpush1.bf16.msra.mxu0 %v720
    %935 = vmatprep.subr.bf16.mxu0 0
    %936 = vmatpush1.bf16.msra.mxu0 %v721
    %937 = vmatprep.subr.bf16.mxu0 0
    %938 = vmatpush1.bf16.msra.mxu0 %v722
    %939 = vmatprep.subr.bf16.mxu0 0
    %940 = vmatpush1.bf16.msra.mxu0 %v723
    %941 = vmatprep.subr.bf16.mxu0 0
    %942 = vmatpush1.bf16.msra.mxu0 %v724
    %943 = vmatprep.subr.bf16.mxu0 0
    %944 = vmatpush1.bf16.msra.mxu0 %v725
    %945 = vmatprep.subr.bf16.mxu0 0
    %946 = vmatpush1.bf16.msra.mxu0 %v726
    %947 = vmatprep.subr.bf16.mxu0 0
    %948 = vmatpush1.bf16.msra.mxu0 %v727
    %949 = vmatprep.subr.bf16.mxu0 0
    %950 = vmatpush1.bf16.msra.mxu0 %v728
    %951 = vmatprep.mubr.bf16.mxu0 %v396
    %952 = vmatmul.mubr.bf16.gmra.mrb[0].mxu0 %v395
    %v953 = vpop.f32.mrb[0].mxu0
    %v954 = vadd.f32 %v857, %v953
    %v955 = vpop.f32.mrb[0].mxu0
    %v956 = vpop.f32.mrb[0].mxu0
    %v957 = vadd.f32 %v860, %v956
    %v958 = vpop.f32.mrb[0].mxu0
    %959 = vmatprep.mubr.bf16.mxu0 %v403
    %960 = vmatmul.mubr.bf16.gmra.mrb[0].mxu0 %v402
    %v961 = vpop.f32.mrb[0].mxu0
    %v962 = vadd.f32 %v865, %v961
    %v963 = vpop.f32.mrb[0].mxu0
    %v964 = vpop.f32.mrb[0].mxu0
    %v965 = vadd.f32 %v868, %v964
    %v966 = vpop.f32.mrb[0].mxu0
    %967 = vmatprep.mubr.bf16.mxu0 %v410
    %968 = vmatmul.mubr.bf16.gmra.mrb[0].mxu0 %v409
    %v969 = vpop.f32.mrb[0].mxu0
    %v970 = vadd.f32 %v873, %v969
    %v971 = vpop.f32.mrb[0].mxu0
    %v972 = vpop.f32.mrb[0].mxu0
    %v973 = vadd.f32 %v876, %v972
    %v974 = vpop.f32.mrb[0].mxu0
    %975 = vmatprep.mubr.bf16.mxu0 %v417
    %976 = vmatmul.mubr.bf16.gmra.mrb[0].mxu0 %v416
    %v977 = vpop.f32.mrb[0].mxu0
    %v978 = vadd.f32 %v881, %v977
    %v979 = vpop.f32.mrb[0].mxu0
    %v980 = vpop.f32.mrb[0].mxu0
    %v981 = vadd.f32 %v884, %v980
    %v982 = vpop.f32.mrb[0].mxu0
    %983 = vmatprep.mubr.bf16.mxu0 %v424
    %984 = vmatmul.mubr.bf16.gmra.mrb[0].mxu0 %v423
    %v985 = vpop.f32.mrb[0].mxu0
    %v986 = vadd.f32 %v889, %v985
    %v987 = vpop.f32.mrb[0].mxu0
    %v988 = vpop.f32.mrb[0].mxu0
    %v989 = vadd.f32 %v892, %v988
    %v990 = vpop.f32.mrb[0].mxu0
    %991 = vmatprep.mubr.bf16.mxu0 %v431
    %992 = vmatmul.mubr.bf16.gmra.mrb[0].mxu0 %v430
    %v993 = vpop.f32.mrb[0].mxu0
    %v994 = vadd.f32 %v897, %v993
    %v995 = vpop.f32.mrb[0].mxu0
    %v996 = vpop.f32.mrb[0].mxu0
    %v997 = vadd.f32 %v900, %v996
    %v998 = vpop.f32.mrb[0].mxu0
    %999 = vmatprep.mubr.bf16.mxu0 %v438
    %1000 = vmatmul.mubr.bf16.gmra.mrb[0].mxu0 %v437
    %v1001 = vpop.f32.mrb[0].mxu0
    %v1002 = vadd.f32 %v905, %v1001
    %v1003 = vpop.f32.mrb[0].mxu0
    %v1004 = vpop.f32.mrb[0].mxu0
    %v1005 = vadd.f32 %v908, %v1004
    %v1006 = vpop.f32.mrb[0].mxu0
    %1007 = vmatprep.mubr.bf16.mxu0 %v445
    %1008 = vmatmul.mubr.bf16.gmra.mrb[0].mxu0 %v444
    %v1009 = vpop.f32.mrb[0].mxu0
    %v1010 = vadd.f32 %v913, %v1009
    %v1011 = vpop.f32.mrb[0].mxu0
    %v1012 = vpop.f32.mrb[0].mxu0
    %v1013 = vadd.f32 %v916, %v1012
    %v1014 = vpop.f32.mrb[0].mxu0
    %1015 = vdwg.mxu0
    %1016 = vmatprep.subr.bf16.mxu0 0
    %1017 = vmatpush1.bf16.msra.mxu0 %v729
    %1018 = vmatprep.subr.bf16.mxu0 0
    %1019 = vmatpush1.bf16.msra.mxu0 %v730
    %1020 = vmatprep.subr.bf16.mxu0 0
    %1021 = vmatpush1.bf16.msra.mxu0 %v731
    %1022 = vmatprep.subr.bf16.mxu0 0
    %1023 = vmatpush1.bf16.msra.mxu0 %v732
    %1024 = vmatprep.subr.bf16.mxu0 0
    %1025 = vmatpush1.bf16.msra.mxu0 %v733
    %1026 = vmatprep.subr.bf16.mxu0 0
    %1027 = vmatpush1.bf16.msra.mxu0 %v734
    %1028 = vmatprep.subr.bf16.mxu0 0
    %1029 = vmatpush1.bf16.msra.mxu0 %v735
    %1030 = vmatprep.subr.bf16.mxu0 0
    %1031 = vmatpush1.bf16.msra.mxu0 %v736
    %1032 = vmatprep.subr.bf16.mxu0 0
    %1033 = vmatpush1.bf16.msra.mxu0 %v737
    %1034 = vmatprep.subr.bf16.mxu0 0
    %1035 = vmatpush1.bf16.msra.mxu0 %v738
    %1036 = vmatprep.subr.bf16.mxu0 0
    %1037 = vmatpush1.bf16.msra.mxu0 %v739
    %1038 = vmatprep.subr.bf16.mxu0 0
    %1039 = vmatpush1.bf16.msra.mxu0 %v740
    %1040 = vmatprep.subr.bf16.mxu0 0
    %1041 = vmatpush1.bf16.msra.mxu0 %v741
    %1042 = vmatprep.subr.bf16.mxu0 0
    %1043 = vmatpush1.bf16.msra.mxu0 %v742
    %1044 = vmatprep.subr.bf16.mxu0 0
    %1045 = vmatpush1.bf16.msra.mxu0 %v743
    %1046 = vmatprep.subr.bf16.mxu0 0
    %1047 = vmatpush1.bf16.msra.mxu0 %v744
    %1048 = vmatprep.mubr.bf16.mxu0 %v398
    %1049 = vmatmul.mubr.bf16.gmra.mrb[0].mxu0 %v397
    %v1050 = vpop.f32.mrb[0].mxu0
    %v1051 = vadd.f32 %v954, %v1050
    %v1052 = vpop.f32.mrb[0].mxu0
    %v1053 = vpop.f32.mrb[0].mxu0
    %v1054 = vadd.f32 %v957, %v1053
    %v1055 = vpop.f32.mrb[0].mxu0
    %1056 = vmatprep.mubr.bf16.mxu0 %v405
    %1057 = vmatmul.mubr.bf16.gmra.mrb[0].mxu0 %v404
    %v1058 = vpop.f32.mrb[0].mxu0
    %v1059 = vadd.f32 %v962, %v1058
    %v1060 = vpop.f32.mrb[0].mxu0
    %v1061 = vpop.f32.mrb[0].mxu0
    %v1062 = vadd.f32 %v965, %v1061
    %v1063 = vpop.f32.mrb[0].mxu0
    %1064 = vmatprep.mubr.bf16.mxu0 %v412
    %1065 = vmatmul.mubr.bf16.gmra.mrb[0].mxu0 %v411
    %v1066 = vpop.f32.mrb[0].mxu0
    %v1067 = vadd.f32 %v970, %v1066
    %v1068 = vpop.f32.mrb[0].mxu0
    %v1069 = vpop.f32.mrb[0].mxu0
    %v1070 = vadd.f32 %v973, %v1069
    %v1071 = vpop.f32.mrb[0].mxu0
    %1072 = vmatprep.mubr.bf16.mxu0 %v419
    %1073 = vmatmul.mubr.bf16.gmra.mrb[0].mxu0 %v418
    %v1074 = vpop.f32.mrb[0].mxu0
    %v1075 = vadd.f32 %v978, %v1074
    %v1076 = vpop.f32.mrb[0].mxu0
    %v1077 = vpop.f32.mrb[0].mxu0
    %v1078 = vadd.f32 %v981, %v1077
    %v1079 = vpop.f32.mrb[0].mxu0
    %1080 = vmatprep.mubr.bf16.mxu0 %v426
    %1081 = vmatmul.mubr.bf16.gmra.mrb[0].mxu0 %v425
    %v1082 = vpop.f32.mrb[0].mxu0
    %v1083 = vadd.f32 %v986, %v1082
    %v1084 = vpop.f32.mrb[0].mxu0
    %v1085 = vpop.f32.mrb[0].mxu0
    %v1086 = vadd.f32 %v989, %v1085
    %v1087 = vpop.f32.mrb[0].mxu0
    %1088 = vmatprep.mubr.bf16.mxu0 %v433
    %1089 = vmatmul.mubr.bf16.gmra.mrb[0].mxu0 %v432
    %v1090 = vpop.f32.mrb[0].mxu0
    %v1091 = vadd.f32 %v994, %v1090
    %v1092 = vpop.f32.mrb[0].mxu0
    %v1093 = vpop.f32.mrb[0].mxu0
    %v1094 = vadd.f32 %v997, %v1093
    %v1095 = vpop.f32.mrb[0].mxu0
    %1096 = vmatprep.mubr.bf16.mxu0 %v440
    %1097 = vmatmul.mubr.bf16.gmra.mrb[0].mxu0 %v439
    %v1098 = vpop.f32.mrb[0].mxu0
    %v1099 = vadd.f32 %v1002, %v1098
    %v1100 = vpop.f32.mrb[0].mxu0
    %v1101 = vpop.f32.mrb[0].mxu0
    %v1102 = vadd.f32 %v1005, %v1101
    %v1103 = vpop.f32.mrb[0].mxu0
    %1104 = vmatprep.mubr.bf16.mxu0 %v447
    %1105 = vmatmul.mubr.bf16.gmra.mrb[0].mxu0 %v446
    %v1106 = vpop.f32.mrb[0].mxu0
    %v1107 = vadd.f32 %v1010, %v1106
    %v1108 = vpop.f32.mrb[0].mxu0
    %v1109 = vpop.f32.mrb[0].mxu0
    %v1110 = vadd.f32 %v1013, %v1109
    %v1111 = vpop.f32.mrb[0].mxu0
    %1112 = vdwg.mxu0
    %1113 = vmatprep.subr.bf16.mxu0 0
    %1114 = vmatpush1.bf16.msra.mxu0 %v745
    %1115 = vmatprep.subr.bf16.mxu0 0
    %1116 = vmatpush1.bf16.msra.mxu0 %v746
    %1117 = vmatprep.subr.bf16.mxu0 0
    %1118 = vmatpush1.bf16.msra.mxu0 0
    %1119 = vmatprep.subr.bf16.mxu0 0
    %1120 = vmatpush1.bf16.msra.mxu0 0
    %1121 = vmatprep.subr.bf16.mxu0 0
    %1122 = vmatpush1.bf16.msra.mxu0 0
    %1123 = vmatprep.subr.bf16.mxu0 0
    %1124 = vmatpush1.bf16.msra.mxu0 0
    %1125 = vmatprep.subr.bf16.mxu0 0
    %1126 = vmatpush1.bf16.msra.mxu0 0
    %1127 = vmatprep.subr.bf16.mxu0 0
    %1128 = vmatpush1.bf16.msra.mxu0 0
    %1129 = vmatprep.subr.bf16.mxu0 0
    %1130 = vmatpush1.bf16.msra.mxu0 0
    %1131 = vmatprep.subr.bf16.mxu0 0
    %1132 = vmatpush1.bf16.msra.mxu0 0
    %1133 = vmatprep.subr.bf16.mxu0 0
    %1134 = vmatpush1.bf16.msra.mxu0 0
    %1135 = vmatprep.subr.bf16.mxu0 0
    %1136 = vmatpush1.bf16.msra.mxu0 0
    %1137 = vmatprep.subr.bf16.mxu0 0
    %1138 = vmatpush1.bf16.msra.mxu0 0
    %1139 = vmatprep.subr.bf16.mxu0 0
    %1140 = vmatpush1.bf16.msra.mxu0 0
    %1141 = vmatprep.subr.bf16.mxu0 0
    %1142 = vmatpush1.bf16.msra.mxu0 0
    %1143 = vmatprep.subr.bf16.mxu0 0
    %1144 = vmatpush1.bf16.msra.mxu0 0
    %1145 = vmatprep.mubr.bf16.mxu0 0
    %1146 = vmatmul.mubr.bf16.gmra.mrb[0].mxu0 %v799
    %v1147 = vpop.f32.mrb[0].mxu0
    %v1148 = vadd.f32 %v1051, %v1147
    %v1149 = vpop.f32.mrb[0].mxu0
    %v1150 = vpop.f32.mrb[0].mxu0
    %v1151 = vadd.f32 %v1054, %v1150
    %v1152 = vpop.f32.mrb[0].mxu0
    %1153 = vmatprep.mubr.bf16.mxu0 0
    %1154 = vmatmul.mubr.bf16.gmra.mrb[0].mxu0 %v802
    %v1155 = vpop.f32.mrb[0].mxu0
    %v1156 = vadd.f32 %v1059, %v1155
    %v1157 = vpop.f32.mrb[0].mxu0
    %v1158 = vpop.f32.mrb[0].mxu0
    %v1159 = vadd.f32 %v1062, %v1158
    %v1160 = vpop.f32.mrb[0].mxu0
    %1161 = vmatprep.mubr.bf16.mxu0 0
    %1162 = vmatmul.mubr.bf16.gmra.mrb[0].mxu0 %v805
    %v1163 = vpop.f32.mrb[0].mxu0
    %v1164 = vadd.f32 %v1067, %v1163
    %v1165 = vpop.f32.mrb[0].mxu0
    %v1166 = vpop.f32.mrb[0].mxu0
    %v1167 = vadd.f32 %v1070, %v1166
    %v1168 = vpop.f32.mrb[0].mxu0
    %1169 = vmatprep.mubr.bf16.mxu0 0
    %1170 = vmatmul.mubr.bf16.gmra.mrb[0].mxu0 %v808
    %v1171 = vpop.f32.mrb[0].mxu0
    %v1172 = vadd.f32 %v1075, %v1171
    %v1173 = vpop.f32.mrb[0].mxu0
    %v1174 = vpop.f32.mrb[0].mxu0
    %v1175 = vadd.f32 %v1078, %v1174
    %v1176 = vpop.f32.mrb[0].mxu0
    %1177 = vmatprep.mubr.bf16.mxu0 0
    %1178 = vmatmul.mubr.bf16.gmra.mrb[0].mxu0 %v811
    %v1179 = vpop.f32.mrb[0].mxu0
    %v1180 = vadd.f32 %v1083, %v1179
    %v1181 = vpop.f32.mrb[0].mxu0
    %v1182 = vpop.f32.mrb[0].mxu0
    %v1183 = vadd.f32 %v1086, %v1182
    %v1184 = vpop.f32.mrb[0].mxu0
    %1185 = vmatprep.mubr.bf16.mxu0 0
    %1186 = vmatmul.mubr.bf16.gmra.mrb[0].mxu0 %v814
    %v1187 = vpop.f32.mrb[0].mxu0
    %v1188 = vadd.f32 %v1091, %v1187
    %v1189 = vpop.f32.mrb[0].mxu0
    %v1190 = vpop.f32.mrb[0].mxu0
    %v1191 = vadd.f32 %v1094, %v1190
    %v1192 = vpop.f32.mrb[0].mxu0
    %1193 = vmatprep.mubr.bf16.mxu0 0
    %1194 = vmatmul.mubr.bf16.gmra.mrb[0].mxu0 %v817
    %v1195 = vpop.f32.mrb[0].mxu0
    %v1196 = vadd.f32 %v1099, %v1195
    %v1197 = vpop.f32.mrb[0].mxu0
    %v1198 = vpop.f32.mrb[0].mxu0
    %v1199 = vadd.f32 %v1102, %v1198
    %v1200 = vpop.f32.mrb[0].mxu0
    %1201 = vmatprep.mubr.bf16.mxu0 0
    %1202 = vmatmul.mubr.bf16.gmra.mrb[0].mxu0 %v820
    %v1203 = vpop.f32.mrb[0].mxu0
    %v1204 = vadd.f32 %v1107, %v1203
    %v1205 = vpop.f32.mrb[0].mxu0
    %v1206 = vpop.f32.mrb[0].mxu0
    %v1207 = vadd.f32 %v1110, %v1206
    %v1208 = vpop.f32.mrb[0].mxu0
    %1209 = vdwg.mxu0
    %v1210 = vmax.f32 %v1148, 0.0
    %v1211 = vmax.f32 %v1151, 0.0
    %v1212 = vmax.f32 %v1156, 0.0
    %v1213 = vmax.f32 %v1159, 0.0
    %v1214 = vmax.f32 %v1164, 0.0
    %v1215 = vmax.f32 %v1167, 0.0
    %v1216 = vmax.f32 %v1172, 0.0
    %v1217 = vmax.f32 %v1175, 0.0
    %v1218 = vmax.f32 %v1180, 0.0
    %v1219 = vmax.f32 %v1183, 0.0
    %v1220 = vmax.f32 %v1188, 0.0
    %v1221 = vmax.f32 %v1191, 0.0
    %v1222 = vmax.f32 %v1196, 0.0
    %v1223 = vmax.f32 %v1199, 0.0
    %v1224 = vmax.f32 %v1204, 0.0
    %v1225 = vmax.f32 %v1207, 0.0
    %v1226 = vpack.c.bf16 %v1211, %v1210
    %v1227 = vpack.c.bf16 %v1213, %v1212
    %v1228 = vpack.c.bf16 %v1215, %v1214
    %v1229 = vpack.c.bf16 %v1217, %v1216
    %v1230 = vpack.c.bf16 %v1219, %v1218
    %v1231 = vpack.c.bf16 %v1221, %v1220
    %v1232 = vpack.c.bf16 %v1223, %v1222
    %v1233 = vpack.c.bf16 %v1225, %v1224
    %v1234 = vld [vmem:[%s3] sm:$0xf]
    %1235 = vmatprep.subr.bf16.mxu0 0
    %1236 = vmatpush1.bf16.msra.mxu0 %v1226
    %1237 = vmatprep.subr.bf16.mxu0 0
    %1238 = vmatpush1.bf16.msra.mxu0 %v1227
    %1239 = vmatprep.subr.bf16.mxu0 0
    %1240 = vmatpush1.bf16.msra.mxu0 %v1228
    %1241 = vmatprep.subr.bf16.mxu0 0
    %1242 = vmatpush1.bf16.msra.mxu0 %v1229
    %1243 = vmatprep.subr.bf16.mxu0 0
    %1244 = vmatpush1.bf16.msra.mxu0 %v1230
    %1245 = vmatprep.subr.bf16.mxu0 0
    %1246 = vmatpush1.bf16.msra.mxu0 %v1231
    %1247 = vmatprep.subr.bf16.mxu0 0
    %1248 = vmatpush1.bf16.msra.mxu0 %v1232
    %1249 = vmatprep.subr.bf16.mxu0 0
    %1250 = vmatpush1.bf16.msra.mxu0 %v1233
    %1251 = vmatprep.subr.bf16.mxu0 0
    %1252 = vmatpush1.bf16.msra.mxu0 0
    %1253 = vmatprep.subr.bf16.mxu0 0
    %1254 = vmatpush1.bf16.msra.mxu0 0
    %1255 = vmatprep.subr.bf16.mxu0 0
    %1256 = vmatpush1.bf16.msra.mxu0 0
    %1257 = vmatprep.subr.bf16.mxu0 0
    %1258 = vmatpush1.bf16.msra.mxu0 0
    %1259 = vmatprep.subr.bf16.mxu0 0
    %1260 = vmatpush1.bf16.msra.mxu0 0
    %1261 = vmatprep.subr.bf16.mxu0 0
    %1262 = vmatpush1.bf16.msra.mxu0 0
    %1263 = vmatprep.subr.bf16.mxu0 0
    %1264 = vmatpush1.bf16.msra.mxu0 0
    %1265 = vmatprep.subr.bf16.mxu0 0
    %1266 = vmatpush1.bf16.msra.mxu0 0
    %1267 = vmatprep.mubr.bf16.mxu0 0
    %1268 = vmatmul.mubr.bf16.gmra.mrb[0].mxu0 %v1234
    %v1269 = vpop.f32.mrb[0].mxu0
    %v1270 = vadd.f32 0.0, %v1269
    %v1271 = vpop.f32.mrb[0].mxu0
    %v1272 = vpop.f32.mrb[0].mxu0
    %v1273 = vpop.f32.mrb[0].mxu0
    %1274 = vdwg.mxu0
    %v1275 = vpack.c.bf16 %v1270, %v1270
    %v1276 = vld [vmem:[%s4] sm:$0xf]
    %v1277 = vld [vmem:[%s4 + $0x4] sm:$0xf]
    %v1278 = vld [vmem:[%s4 + $0x8] sm:$0xf]
    %v1279 = vld [vmem:[%s4 + $0xc] sm:$0xf]
    %s1280 = scalar_lea.vmem %s3, 4
    %v1281 = vld [vmem:[%s1280] sm:$0xf]
    %1282 = vmatprep.subr.bf16.mxu0 0
    %1283 = vmatpush1.bf16.msra.mxu0 %v1226
    %1284 = vmatprep.subr.bf16.mxu0 0
    %1285 = vmatpush1.bf16.msra.mxu0 %v1227
    %1286 = vmatprep.subr.bf16.mxu0 0
    %1287 = vmatpush1.bf16.msra.mxu0 %v1228
    %1288 = vmatprep.subr.bf16.mxu0 0
    %1289 = vmatpush1.bf16.msra.mxu0 %v1229
    %1290 = vmatprep.subr.bf16.mxu0 0
    %1291 = vmatpush1.bf16.msra.mxu0 %v1230
    %1292 = vmatprep.subr.bf16.mxu0 0
    %1293 = vmatpush1.bf16.msra.mxu0 %v1231
    %1294 = vmatprep.subr.bf16.mxu0 0
    %1295 = vmatpush1.bf16.msra.mxu0 %v1232
    %1296 = vmatprep.subr.bf16.mxu0 0
    %1297 = vmatpush1.bf16.msra.mxu0 %v1233
    %1298 = vmatprep.subr.bf16.mxu0 0
    %1299 = vmatpush1.bf16.msra.mxu0 0
    %1300 = vmatprep.subr.bf16.mxu0 0
    %1301 = vmatpush1.bf16.msra.mxu0 0
    %1302 = vmatprep.subr.bf16.mxu0 0
    %1303 = vmatpush1.bf16.msra.mxu0 0
    %1304 = vmatprep.subr.bf16.mxu0 0
    %1305 = vmatpush1.bf16.msra.mxu0 0
    %1306 = vmatprep.subr.bf16.mxu0 0
    %1307 = vmatpush1.bf16.msra.mxu0 0
    %1308 = vmatprep.subr.bf16.mxu0 0
    %1309 = vmatpush1.bf16.msra.mxu0 0
    %1310 = vmatprep.subr.bf16.mxu0 0
    %1311 = vmatpush1.bf16.msra.mxu0 0
    %1312 = vmatprep.subr.bf16.mxu0 0
    %1313 = vmatpush1.bf16.msra.mxu0 0
    %1314 = vmatprep.mubr.bf16.mxu0 0
    %1315 = vmatmul.mubr.bf16.gmra.mrb[0].mxu0 %v1281
    %v1316 = vpop.f32.mrb[0].mxu0
    %v1317 = vadd.f32 0.0, %v1316
    %v1318 = vpop.f32.mrb[0].mxu0
    %v1319 = vpop.f32.mrb[0].mxu0
    %v1320 = vpop.f32.mrb[0].mxu0
    %1321 = vdwg.mxu0
    %v1322 = vpack.c.bf16 %v1317, %v1317
    %s1323 = scalar_lea.vmem %s4, 16
    %v1324 = vld [vmem:[%s1323] sm:$0xf]
    %v1325 = vld [vmem:[%s1323 + $0x4] sm:$0xf]
    %v1326 = vld [vmem:[%s1323 + $0x8] sm:$0xf]
    %v1327 = vld [vmem:[%s1323 + $0xc] sm:$0xf]
    %v1332 = vunpack.c.l.b16 %v1324
    %v1333 = vunpack.c.l.b16 %v1325
    %v1334 = vunpack.c.l.b16 %v1326
    %v1335 = vunpack.c.l.b16 %v1327
    %v1336 = vpack.c.b16 %v1333, %v1332
    %v1337 = vpack.c.b16 %v1335, %v1334
    %v1341 = vsel %vm797, %v1322, 0
    %1343 = vmatprep.subr.bf16.mxu0 0
    %1344 = vmatpush1.bf16.msra.mxu0 %v1336
    %1345 = vmatprep.subr.bf16.mxu0 0
    %1346 = vmatpush1.bf16.msra.mxu0 %v1337
    %1347 = vmatprep.subr.bf16.mxu0 0
    %1348 = vmatpush1.bf16.msra.mxu0 0
    %1349 = vmatprep.subr.bf16.mxu0 0
    %1350 = vmatpush1.bf16.msra.mxu0 0
    %1351 = vmatprep.subr.bf16.mxu0 0
    %1352 = vmatpush1.bf16.msra.mxu0 0
    %1353 = vmatprep.subr.bf16.mxu0 0
    %1354 = vmatpush1.bf16.msra.mxu0 0
    %1355 = vmatprep.subr.bf16.mxu0 0
    %1356 = vmatpush1.bf16.msra.mxu0 0
    %1357 = vmatprep.subr.bf16.mxu0 0
    %1358 = vmatpush1.bf16.msra.mxu0 0
    %1359 = vmatprep.subr.bf16.mxu0 0
    %1360 = vmatpush1.bf16.msra.mxu0 0
    %1361 = vmatprep.subr.bf16.mxu0 0
    %1362 = vmatpush1.bf16.msra.mxu0 0
    %1363 = vmatprep.subr.bf16.mxu0 0
    %1364 = vmatpush1.bf16.msra.mxu0 0
    %1365 = vmatprep.subr.bf16.mxu0 0
    %1366 = vmatpush1.bf16.msra.mxu0 0
    %1367 = vmatprep.subr.bf16.mxu0 0
    %1368 = vmatpush1.bf16.msra.mxu0 0
    %1369 = vmatprep.subr.bf16.mxu0 0
    %1370 = vmatpush1.bf16.msra.mxu0 0
    %1371 = vmatprep.subr.bf16.mxu0 0
    %1372 = vmatpush1.bf16.msra.mxu0 0
    %1373 = vmatprep.subr.bf16.mxu0 0
    %1374 = vmatpush1.bf16.msra.mxu0 0
    %1375 = vmatprep.mubr.bf16.mxu0 0
    %1376 = vmatmul.mubr.bf16.gmra.mrb[0].mxu0 %v1341
    %v1377 = vpop.f32.mrb[0].mxu0
    %v1378 = vadd.f32 0.0, %v1377
    %v1379 = vpop.f32.mrb[0].mxu0
    %v1380 = vpop.f32.mrb[0].mxu0
    %v1381 = vpop.f32.mrb[0].mxu0
    %1382 = vdwg.mxu0
    %v1387 = vunpack.c.l.b16 %v1276
    %v1388 = vunpack.c.l.b16 %v1277
    %v1389 = vunpack.c.l.b16 %v1278
    %v1390 = vunpack.c.l.b16 %v1279
    %v1391 = vpack.c.b16 %v1388, %v1387
    %v1392 = vpack.c.b16 %v1390, %v1389
    %v1396 = vsel %vm797, %v1275, 0
    %1398 = vmatprep.subr.bf16.mxu0 0
    %1399 = vmatpush1.bf16.msra.mxu0 %v1391
    %1400 = vmatprep.subr.bf16.mxu0 0
    %1401 = vmatpush1.bf16.msra.mxu0 %v1392
    %1402 = vmatprep.subr.bf16.mxu0 0
    %1403 = vmatpush1.bf16.msra.mxu0 0
    %1404 = vmatprep.subr.bf16.mxu0 0
    %1405 = vmatpush1.bf16.msra.mxu0 0
    %1406 = vmatprep.subr.bf16.mxu0 0
    %1407 = vmatpush1.bf16.msra.mxu0 0
    %1408 = vmatprep.subr.bf16.mxu0 0
    %1409 = vmatpush1.bf16.msra.mxu0 0
    %1410 = vmatprep.subr.bf16.mxu0 0
    %1411 = vmatpush1.bf16.msra.mxu0 0
    %1412 = vmatprep.subr.bf16.mxu0 0
    %1413 = vmatpush1.bf16.msra.mxu0 0
    %1414 = vmatprep.subr.bf16.mxu0 0
    %1415 = vmatpush1.bf16.msra.mxu0 0
    %1416 = vmatprep.subr.bf16.mxu0 0
    %1417 = vmatpush1.bf16.msra.mxu0 0
    %1418 = vmatprep.subr.bf16.mxu0 0
    %1419 = vmatpush1.bf16.msra.mxu0 0
    %1420 = vmatprep.subr.bf16.mxu0 0
    %1421 = vmatpush1.bf16.msra.mxu0 0
    %1422 = vmatprep.subr.bf16.mxu0 0
    %1423 = vmatpush1.bf16.msra.mxu0 0
    %1424 = vmatprep.subr.bf16.mxu0 0
    %1425 = vmatpush1.bf16.msra.mxu0 0
    %1426 = vmatprep.subr.bf16.mxu0 0
    %1427 = vmatpush1.bf16.msra.mxu0 0
    %1428 = vmatprep.subr.bf16.mxu0 0
    %1429 = vmatpush1.bf16.msra.mxu0 0
    %1430 = vmatprep.mubr.bf16.mxu0 0
    %1431 = vmatmul.mubr.bf16.gmra.mrb[0].mxu0 %v1396
    %v1432 = vpop.f32.mrb[0].mxu0
    %v1433 = vadd.f32 %v1378, %v1432
    %v1434 = vpop.f32.mrb[0].mxu0
    %v1435 = vpop.f32.mrb[0].mxu0
    %v1436 = vpop.f32.mrb[0].mxu0
    %1437 = vdwg.mxu0
    %s1438 = scalar_lea.vmem %s3, 8
    %v1439 = vld [vmem:[%s1438] sm:$0xf]
    %1440 = vmatprep.subr.bf16.mxu0 0
    %1441 = vmatpush1.bf16.msra.mxu0 %v1226
    %1442 = vmatprep.subr.bf16.mxu0 0
    %1443 = vmatpush1.bf16.msra.mxu0 %v1227
    %1444 = vmatprep.subr.bf16.mxu0 0
    %1445 = vmatpush1.bf16.msra.mxu0 %v1228
    %1446 = vmatprep.subr.bf16.mxu0 0
    %1447 = vmatpush1.bf16.msra.mxu0 %v1229
    %1448 = vmatprep.subr.bf16.mxu0 0
    %1449 = vmatpush1.bf16.msra.mxu0 %v1230
    %1450 = vmatprep.subr.bf16.mxu0 0
    %1451 = vmatpush1.bf16.msra.mxu0 %v1231
    %1452 = vmatprep.subr.bf16.mxu0 0
    %1453 = vmatpush1.bf16.msra.mxu0 %v1232
    %1454 = vmatprep.subr.bf16.mxu0 0
    %1455 = vmatpush1.bf16.msra.mxu0 %v1233
    %1456 = vmatprep.subr.bf16.mxu0 0
    %1457 = vmatpush1.bf16.msra.mxu0 0
    %1458 = vmatprep.subr.bf16.mxu0 0
    %1459 = vmatpush1.bf16.msra.mxu0 0
    %1460 = vmatprep.subr.bf16.mxu0 0
    %1461 = vmatpush1.bf16.msra.mxu0 0
    %1462 = vmatprep.subr.bf16.mxu0 0
    %1463 = vmatpush1.bf16.msra.mxu0 0
    %1464 = vmatprep.subr.bf16.mxu0 0
    %1465 = vmatpush1.bf16.msra.mxu0 0
    %1466 = vmatprep.subr.bf16.mxu0 0
    %1467 = vmatpush1.bf16.msra.mxu0 0
    %1468 = vmatprep.subr.bf16.mxu0 0
    %1469 = vmatpush1.bf16.msra.mxu0 0
    %1470 = vmatprep.subr.bf16.mxu0 0
    %1471 = vmatpush1.bf16.msra.mxu0 0
    %1472 = vmatprep.mubr.bf16.mxu0 0
    %1473 = vmatmul.mubr.bf16.gmra.mrb[0].mxu0 %v1439
    %v1474 = vpop.f32.mrb[0].mxu0
    %v1475 = vadd.f32 0.0, %v1474
    %v1476 = vpop.f32.mrb[0].mxu0
    %v1477 = vpop.f32.mrb[0].mxu0
    %v1478 = vpop.f32.mrb[0].mxu0
    %1479 = vdwg.mxu0
    %v1480 = vpack.c.bf16 %v1475, %v1475
    %s1481 = scalar_lea.vmem %s4, 32
    %v1482 = vld [vmem:[%s1481] sm:$0xf]
    %v1483 = vld [vmem:[%s1481 + $0x4] sm:$0xf]
    %v1484 = vld [vmem:[%s1481 + $0x8] sm:$0xf]
    %v1485 = vld [vmem:[%s1481 + $0xc] sm:$0xf]
    %v1490 = vunpack.c.l.b16 %v1482
    %v1491 = vunpack.c.l.b16 %v1483
    %v1492 = vunpack.c.l.b16 %v1484
    %v1493 = vunpack.c.l.b16 %v1485
    %v1494 = vpack.c.b16 %v1491, %v1490
    %v1495 = vpack.c.b16 %v1493, %v1492
    %v1499 = vsel %vm797, %v1480, 0
    %1501 = vmatprep.subr.bf16.mxu0 0
    %1502 = vmatpush1.bf16.msra.mxu0 %v1494
    %1503 = vmatprep.subr.bf16.mxu0 0
    %1504 = vmatpush1.bf16.msra.mxu0 %v1495
    %1505 = vmatprep.subr.bf16.mxu0 0
    %1506 = vmatpush1.bf16.msra.mxu0 0
    %1507 = vmatprep.subr.bf16.mxu0 0
    %1508 = vmatpush1.bf16.msra.mxu0 0
    %1509 = vmatprep.subr.bf16.mxu0 0
    %1510 = vmatpush1.bf16.msra.mxu0 0
    %1511 = vmatprep.subr.bf16.mxu0 0
    %1512 = vmatpush1.bf16.msra.mxu0 0
    %1513 = vmatprep.subr.bf16.mxu0 0
    %1514 = vmatpush1.bf16.msra.mxu0 0
    %1515 = vmatprep.subr.bf16.mxu0 0
    %1516 = vmatpush1.bf16.msra.mxu0 0
    %1517 = vmatprep.subr.bf16.mxu0 0
    %1518 = vmatpush1.bf16.msra.mxu0 0
    %1519 = vmatprep.subr.bf16.mxu0 0
    %1520 = vmatpush1.bf16.msra.mxu0 0
    %1521 = vmatprep.subr.bf16.mxu0 0
    %1522 = vmatpush1.bf16.msra.mxu0 0
    %1523 = vmatprep.subr.bf16.mxu0 0
    %1524 = vmatpush1.bf16.msra.mxu0 0
    %1525 = vmatprep.subr.bf16.mxu0 0
    %1526 = vmatpush1.bf16.msra.mxu0 0
    %1527 = vmatprep.subr.bf16.mxu0 0
    %1528 = vmatpush1.bf16.msra.mxu0 0
    %1529 = vmatprep.subr.bf16.mxu0 0
    %1530 = vmatpush1.bf16.msra.mxu0 0
    %1531 = vmatprep.subr.bf16.mxu0 0
    %1532 = vmatpush1.bf16.msra.mxu0 0
    %1533 = vmatprep.mubr.bf16.mxu0 0
    %1534 = vmatmul.mubr.bf16.gmra.mrb[0].mxu0 %v1499
    %v1535 = vpop.f32.mrb[0].mxu0
    %v1536 = vadd.f32 0.0, %v1535
    %v1537 = vpop.f32.mrb[0].mxu0
    %v1538 = vpop.f32.mrb[0].mxu0
    %v1539 = vpop.f32.mrb[0].mxu0
    %1540 = vdwg.mxu0
    %v1541 = vadd.f32 %v1433, %v1536
    %s1542 = scalar_lea.vmem %s3, 12
    %v1543 = vld [vmem:[%s1542] sm:$0xf]
    %1544 = vmatprep.subr.bf16.mxu0 0
    %1545 = vmatpush1.bf16.msra.mxu0 %v1226
    %1546 = vmatprep.subr.bf16.mxu0 0
    %1547 = vmatpush1.bf16.msra.mxu0 %v1227
    %1548 = vmatprep.subr.bf16.mxu0 0
    %1549 = vmatpush1.bf16.msra.mxu0 %v1228
    %1550 = vmatprep.subr.bf16.mxu0 0
    %1551 = vmatpush1.bf16.msra.mxu0 %v1229
    %1552 = vmatprep.subr.bf16.mxu0 0
    %1553 = vmatpush1.bf16.msra.mxu0 %v1230
    %1554 = vmatprep.subr.bf16.mxu0 0
    %1555 = vmatpush1.bf16.msra.mxu0 %v1231
    %1556 = vmatprep.subr.bf16.mxu0 0
    %1557 = vmatpush1.bf16.msra.mxu0 %v1232
    %1558 = vmatprep.subr.bf16.mxu0 0
    %1559 = vmatpush1.bf16.msra.mxu0 %v1233
    %1560 = vmatprep.subr.bf16.mxu0 0
    %1561 = vmatpush1.bf16.msra.mxu0 0
    %1562 = vmatprep.subr.bf16.mxu0 0
    %1563 = vmatpush1.bf16.msra.mxu0 0
    %1564 = vmatprep.subr.bf16.mxu0 0
    %1565 = vmatpush1.bf16.msra.mxu0 0
    %1566 = vmatprep.subr.bf16.mxu0 0
    %1567 = vmatpush1.bf16.msra.mxu0 0
    %1568 = vmatprep.subr.bf16.mxu0 0
    %1569 = vmatpush1.bf16.msra.mxu0 0
    %1570 = vmatprep.subr.bf16.mxu0 0
    %1571 = vmatpush1.bf16.msra.mxu0 0
    %1572 = vmatprep.subr.bf16.mxu0 0
    %1573 = vmatpush1.bf16.msra.mxu0 0
    %1574 = vmatprep.subr.bf16.mxu0 0
    %1575 = vmatpush1.bf16.msra.mxu0 0
    %1576 = vmatprep.mubr.bf16.mxu0 0
    %1577 = vmatmul.mubr.bf16.gmra.mrb[0].mxu0 %v1543
    %v1578 = vpop.f32.mrb[0].mxu0
    %v1579 = vadd.f32 0.0, %v1578
    %v1580 = vpop.f32.mrb[0].mxu0
    %v1581 = vpop.f32.mrb[0].mxu0
    %v1582 = vpop.f32.mrb[0].mxu0
    %1583 = vdwg.mxu0
    %v1584 = vpack.c.bf16 %v1579, %v1579
    %s1585 = scalar_lea.vmem %s4, 48
    %v1586 = vld [vmem:[%s1585] sm:$0xf]
    %v1587 = vld [vmem:[%s1585 + $0x4] sm:$0xf]
    %v1588 = vld [vmem:[%s1585 + $0x8] sm:$0xf]
    %v1589 = vld [vmem:[%s1585 + $0xc] sm:$0xf]
    %v1594 = vunpack.c.l.b16 %v1586
    %v1595 = vunpack.c.l.b16 %v1587
    %v1596 = vunpack.c.l.b16 %v1588
    %v1597 = vunpack.c.l.b16 %v1589
    %v1598 = vpack.c.b16 %v1595, %v1594
    %v1599 = vpack.c.b16 %v1597, %v1596
    %v1603 = vsel %vm797, %v1584, 0
    %1605 = vmatprep.subr.bf16.mxu0 0
    %1606 = vmatpush1.bf16.msra.mxu0 %v1598
    %1607 = vmatprep.subr.bf16.mxu0 0
    %1608 = vmatpush1.bf16.msra.mxu0 %v1599
    %1609 = vmatprep.subr.bf16.mxu0 0
    %1610 = vmatpush1.bf16.msra.mxu0 0
    %1611 = vmatprep.subr.bf16.mxu0 0
    %1612 = vmatpush1.bf16.msra.mxu0 0
    %1613 = vmatprep.subr.bf16.mxu0 0
    %1614 = vmatpush1.bf16.msra.mxu0 0
    %1615 = vmatprep.subr.bf16.mxu0 0
    %1616 = vmatpush1.bf16.msra.mxu0 0
    %1617 = vmatprep.subr.bf16.mxu0 0
    %1618 = vmatpush1.bf16.msra.mxu0 0
    %1619 = vmatprep.subr.bf16.mxu0 0
    %1620 = vmatpush1.bf16.msra.mxu0 0
    %1621 = vmatprep.subr.bf16.mxu0 0
    %1622 = vmatpush1.bf16.msra.mxu0 0
    %1623 = vmatprep.subr.bf16.mxu0 0
    %1624 = vmatpush1.bf16.msra.mxu0 0
    %1625 = vmatprep.subr.bf16.mxu0 0
    %1626 = vmatpush1.bf16.msra.mxu0 0
    %1627 = vmatprep.subr.bf16.mxu0 0
    %1628 = vmatpush1.bf16.msra.mxu0 0
    %1629 = vmatprep.subr.bf16.mxu0 0
    %1630 = vmatpush1.bf16.msra.mxu0 0
    %1631 = vmatprep.subr.bf16.mxu0 0
    %1632 = vmatpush1.bf16.msra.mxu0 0
    %1633 = vmatprep.subr.bf16.mxu0 0
    %1634 = vmatpush1.bf16.msra.mxu0 0
    %1635 = vmatprep.subr.bf16.mxu0 0
    %1636 = vmatpush1.bf16.msra.mxu0 0
    %1637 = vmatprep.mubr.bf16.mxu0 0
    %1638 = vmatmul.mubr.bf16.gmra.mrb[0].mxu0 %v1603
    %v1639 = vpop.f32.mrb[0].mxu0
    %v1640 = vadd.f32 0.0, %v1639
    %v1641 = vpop.f32.mrb[0].mxu0
    %v1642 = vpop.f32.mrb[0].mxu0
    %v1643 = vpop.f32.mrb[0].mxu0
    %1644 = vdwg.mxu0
    %v1645 = vadd.f32 %v1541, %v1640
    %s1646 = scalar_lea.vmem %s3, 16
    %v1647 = vld [vmem:[%s1646] sm:$0xf]
    %1648 = vmatprep.subr.bf16.mxu0 0
    %1649 = vmatpush1.bf16.msra.mxu0 %v1226
    %1650 = vmatprep.subr.bf16.mxu0 0
    %1651 = vmatpush1.bf16.msra.mxu0 %v1227
    %1652 = vmatprep.subr.bf16.mxu0 0
    %1653 = vmatpush1.bf16.msra.mxu0 %v1228
    %1654 = vmatprep.subr.bf16.mxu0 0
    %1655 = vmatpush1.bf16.msra.mxu0 %v1229
    %1656 = vmatprep.subr.bf16.mxu0 0
    %1657 = vmatpush1.bf16.msra.mxu0 %v1230
    %1658 = vmatprep.subr.bf16.mxu0 0
    %1659 = vmatpush1.bf16.msra.mxu0 %v1231
    %1660 = vmatprep.subr.bf16.mxu0 0
    %1661 = vmatpush1.bf16.msra.mxu0 %v1232
    %1662 = vmatprep.subr.bf16.mxu0 0
    %1663 = vmatpush1.bf16.msra.mxu0 %v1233
    %1664 = vmatprep.subr.bf16.mxu0 0
    %1665 = vmatpush1.bf16.msra.mxu0 0
    %1666 = vmatprep.subr.bf16.mxu0 0
    %1667 = vmatpush1.bf16.msra.mxu0 0
    %1668 = vmatprep.subr.bf16.mxu0 0
    %1669 = vmatpush1.bf16.msra.mxu0 0
    %1670 = vmatprep.subr.bf16.mxu0 0
    %1671 = vmatpush1.bf16.msra.mxu0 0
    %1672 = vmatprep.subr.bf16.mxu0 0
    %1673 = vmatpush1.bf16.msra.mxu0 0
    %1674 = vmatprep.subr.bf16.mxu0 0
    %1675 = vmatpush1.bf16.msra.mxu0 0
    %1676 = vmatprep.subr.bf16.mxu0 0
    %1677 = vmatpush1.bf16.msra.mxu0 0
    %1678 = vmatprep.subr.bf16.mxu0 0
    %1679 = vmatpush1.bf16.msra.mxu0 0
    %1680 = vmatprep.mubr.bf16.mxu0 0
    %1681 = vmatmul.mubr.bf16.gmra.mrb[0].mxu0 %v1647
    %v1682 = vpop.f32.mrb[0].mxu0
    %v1683 = vadd.f32 0.0, %v1682
    %v1684 = vpop.f32.mrb[0].mxu0
    %v1685 = vpop.f32.mrb[0].mxu0
    %v1686 = vpop.f32.mrb[0].mxu0
    %1687 = vdwg.mxu0
    %v1688 = vpack.c.bf16 %v1683, %v1683
    %s1689 = scalar_lea.vmem %s4, 64
    %v1690 = vld [vmem:[%s1689] sm:$0xf]
    %v1691 = vld [vmem:[%s1689 + $0x4] sm:$0xf]
    %v1692 = vld [vmem:[%s1689 + $0x8] sm:$0xf]
    %v1693 = vld [vmem:[%s1689 + $0xc] sm:$0xf]
    %v1698 = vunpack.c.l.b16 %v1690
    %v1699 = vunpack.c.l.b16 %v1691
    %v1700 = vunpack.c.l.b16 %v1692
    %v1701 = vunpack.c.l.b16 %v1693
    %v1702 = vpack.c.b16 %v1699, %v1698
    %v1703 = vpack.c.b16 %v1701, %v1700
    %v1707 = vsel %vm797, %v1688, 0
    %1709 = vmatprep.subr.bf16.mxu0 0
    %1710 = vmatpush1.bf16.msra.mxu0 %v1702
    %1711 = vmatprep.subr.bf16.mxu0 0
    %1712 = vmatpush1.bf16.msra.mxu0 %v1703
    %1713 = vmatprep.subr.bf16.mxu0 0
    %1714 = vmatpush1.bf16.msra.mxu0 0
    %1715 = vmatprep.subr.bf16.mxu0 0
    %1716 = vmatpush1.bf16.msra.mxu0 0
    %1717 = vmatprep.subr.bf16.mxu0 0
    %1718 = vmatpush1.bf16.msra.mxu0 0
    %1719 = vmatprep.subr.bf16.mxu0 0
    %1720 = vmatpush1.bf16.msra.mxu0 0
    %1721 = vmatprep.subr.bf16.mxu0 0
    %1722 = vmatpush1.bf16.msra.mxu0 0
    %1723 = vmatprep.subr.bf16.mxu0 0
    %1724 = vmatpush1.bf16.msra.mxu0 0
    %1725 = vmatprep.subr.bf16.mxu0 0
    %1726 = vmatpush1.bf16.msra.mxu0 0
    %1727 = vmatprep.subr.bf16.mxu0 0
    %1728 = vmatpush1.bf16.msra.mxu0 0
    %1729 = vmatprep.subr.bf16.mxu0 0
    %1730 = vmatpush1.bf16.msra.mxu0 0
    %1731 = vmatprep.subr.bf16.mxu0 0
    %1732 = vmatpush1.bf16.msra.mxu0 0
    %1733 = vmatprep.subr.bf16.mxu0 0
    %1734 = vmatpush1.bf16.msra.mxu0 0
    %1735 = vmatprep.subr.bf16.mxu0 0
    %1736 = vmatpush1.bf16.msra.mxu0 0
    %1737 = vmatprep.subr.bf16.mxu0 0
    %1738 = vmatpush1.bf16.msra.mxu0 0
    %1739 = vmatprep.subr.bf16.mxu0 0
    %1740 = vmatpush1.bf16.msra.mxu0 0
    %1741 = vmatprep.mubr.bf16.mxu0 0
    %1742 = vmatmul.mubr.bf16.gmra.mrb[0].mxu0 %v1707
    %v1743 = vpop.f32.mrb[0].mxu0
    %v1744 = vadd.f32 0.0, %v1743
    %v1745 = vpop.f32.mrb[0].mxu0
    %v1746 = vpop.f32.mrb[0].mxu0
    %v1747 = vpop.f32.mrb[0].mxu0
    %1748 = vdwg.mxu0
    %v1749 = vadd.f32 %v1645, %v1744
    %s1750 = scalar_lea.vmem %s3, 20
    %v1751 = vld [vmem:[%s1750] sm:$0xf]
    %1752 = vmatprep.subr.bf16.mxu0 0
    %1753 = vmatpush1.bf16.msra.mxu0 %v1226
    %1754 = vmatprep.subr.bf16.mxu0 0
    %1755 = vmatpush1.bf16.msra.mxu0 %v1227
    %1756 = vmatprep.subr.bf16.mxu0 0
    %1757 = vmatpush1.bf16.msra.mxu0 %v1228
    %1758 = vmatprep.subr.bf16.mxu0 0
    %1759 = vmatpush1.bf16.msra.mxu0 %v1229
    %1760 = vmatprep.subr.bf16.mxu0 0
    %1761 = vmatpush1.bf16.msra.mxu0 %v1230
    %1762 = vmatprep.subr.bf16.mxu0 0
    %1763 = vmatpush1.bf16.msra.mxu0 %v1231
    %1764 = vmatprep.subr.bf16.mxu0 0
    %1765 = vmatpush1.bf16.msra.mxu0 %v1232
    %1766 = vmatprep.subr.bf16.mxu0 0
    %1767 = vmatpush1.bf16.msra.mxu0 %v1233
    %1768 = vmatprep.subr.bf16.mxu0 0
    %1769 = vmatpush1.bf16.msra.mxu0 0
    %1770 = vmatprep.subr.bf16.mxu0 0
    %1771 = vmatpush1.bf16.msra.mxu0 0
    %1772 = vmatprep.subr.bf16.mxu0 0
    %1773 = vmatpush1.bf16.msra.mxu0 0
    %1774 = vmatprep.subr.bf16.mxu0 0
    %1775 = vmatpush1.bf16.msra.mxu0 0
    %1776 = vmatprep.subr.bf16.mxu0 0
    %1777 = vmatpush1.bf16.msra.mxu0 0
    %1778 = vmatprep.subr.bf16.mxu0 0
    %1779 = vmatpush1.bf16.msra.mxu0 0
    %1780 = vmatprep.subr.bf16.mxu0 0
    %1781 = vmatpush1.bf16.msra.mxu0 0
    %1782 = vmatprep.subr.bf16.mxu0 0
    %1783 = vmatpush1.bf16.msra.mxu0 0
    %1784 = vmatprep.mubr.bf16.mxu0 0
    %1785 = vmatmul.mubr.bf16.gmra.mrb[0].mxu0 %v1751
    %v1786 = vpop.f32.mrb[0].mxu0
    %v1787 = vadd.f32 0.0, %v1786
    %v1788 = vpop.f32.mrb[0].mxu0
    %v1789 = vpop.f32.mrb[0].mxu0
    %v1790 = vpop.f32.mrb[0].mxu0
    %1791 = vdwg.mxu0
    %v1792 = vpack.c.bf16 %v1787, %v1787
    %s1793 = scalar_lea.vmem %s4, 80
    %v1794 = vld [vmem:[%s1793] sm:$0xf]
    %v1795 = vld [vmem:[%s1793 + $0x4] sm:$0xf]
    %v1796 = vld [vmem:[%s1793 + $0x8] sm:$0xf]
    %v1797 = vld [vmem:[%s1793 + $0xc] sm:$0xf]
    %v1802 = vunpack.c.l.b16 %v1794
    %v1803 = vunpack.c.l.b16 %v1795
    %v1804 = vunpack.c.l.b16 %v1796
    %v1805 = vunpack.c.l.b16 %v1797
    %v1806 = vpack.c.b16 %v1803, %v1802
    %v1807 = vpack.c.b16 %v1805, %v1804
    %v1811 = vsel %vm797, %v1792, 0
    %1813 = vmatprep.subr.bf16.mxu0 0
    %1814 = vmatpush1.bf16.msra.mxu0 %v1806
    %1815 = vmatprep.subr.bf16.mxu0 0
    %1816 = vmatpush1.bf16.msra.mxu0 %v1807
    %1817 = vmatprep.subr.bf16.mxu0 0
    %1818 = vmatpush1.bf16.msra.mxu0 0
    %1819 = vmatprep.subr.bf16.mxu0 0
    %1820 = vmatpush1.bf16.msra.mxu0 0
    %1821 = vmatprep.subr.bf16.mxu0 0
    %1822 = vmatpush1.bf16.msra.mxu0 0
    %1823 = vmatprep.subr.bf16.mxu0 0
    %1824 = vmatpush1.bf16.msra.mxu0 0
    %1825 = vmatprep.subr.bf16.mxu0 0
    %1826 = vmatpush1.bf16.msra.mxu0 0
    %1827 = vmatprep.subr.bf16.mxu0 0
    %1828 = vmatpush1.bf16.msra.mxu0 0
    %1829 = vmatprep.subr.bf16.mxu0 0
    %1830 = vmatpush1.bf16.msra.mxu0 0
    %1831 = vmatprep.subr.bf16.mxu0 0
    %1832 = vmatpush1.bf16.msra.mxu0 0
    %1833 = vmatprep.subr.bf16.mxu0 0
    %1834 = vmatpush1.bf16.msra.mxu0 0
    %1835 = vmatprep.subr.bf16.mxu0 0
    %1836 = vmatpush1.bf16.msra.mxu0 0
    %1837 = vmatprep.subr.bf16.mxu0 0
    %1838 = vmatpush1.bf16.msra.mxu0 0
    %1839 = vmatprep.subr.bf16.mxu0 0
    %1840 = vmatpush1.bf16.msra.mxu0 0
    %1841 = vmatprep.subr.bf16.mxu0 0
    %1842 = vmatpush1.bf16.msra.mxu0 0
    %1843 = vmatprep.subr.bf16.mxu0 0
    %1844 = vmatpush1.bf16.msra.mxu0 0
    %1845 = vmatprep.mubr.bf16.mxu0 0
    %1846 = vmatmul.mubr.bf16.gmra.mrb[0].mxu0 %v1811
    %v1847 = vpop.f32.mrb[0].mxu0
    %v1848 = vadd.f32 0.0, %v1847
    %v1849 = vpop.f32.mrb[0].mxu0
    %v1850 = vpop.f32.mrb[0].mxu0
    %v1851 = vpop.f32.mrb[0].mxu0
    %1852 = vdwg.mxu0
    %v1853 = vadd.f32 %v1749, %v1848
    %s1854 = scalar_lea.vmem %s3, 24
    %v1855 = vld [vmem:[%s1854] sm:$0xf]
    %1856 = vmatprep.subr.bf16.mxu0 0
    %1857 = vmatpush1.bf16.msra.mxu0 %v1226
    %1858 = vmatprep.subr.bf16.mxu0 0
    %1859 = vmatpush1.bf16.msra.mxu0 %v1227
    %1860 = vmatprep.subr.bf16.mxu0 0
    %1861 = vmatpush1.bf16.msra.mxu0 %v1228
    %1862 = vmatprep.subr.bf16.mxu0 0
    %1863 = vmatpush1.bf16.msra.mxu0 %v1229
    %1864 = vmatprep.subr.bf16.mxu0 0
    %1865 = vmatpush1.bf16.msra.mxu0 %v1230
    %1866 = vmatprep.subr.bf16.mxu0 0
    %1867 = vmatpush1.bf16.msra.mxu0 %v1231
    %1868 = vmatprep.subr.bf16.mxu0 0
    %1869 = vmatpush1.bf16.msra.mxu0 %v1232
    %1870 = vmatprep.subr.bf16.mxu0 0
    %1871 = vmatpush1.bf16.msra.mxu0 %v1233
    %1872 = vmatprep.subr.bf16.mxu0 0
    %1873 = vmatpush1.bf16.msra.mxu0 0
    %1874 = vmatprep.subr.bf16.mxu0 0
    %1875 = vmatpush1.bf16.msra.mxu0 0
    %1876 = vmatprep.subr.bf16.mxu0 0
    %1877 = vmatpush1.bf16.msra.mxu0 0
    %1878 = vmatprep.subr.bf16.mxu0 0
    %1879 = vmatpush1.bf16.msra.mxu0 0
    %1880 = vmatprep.subr.bf16.mxu0 0
    %1881 = vmatpush1.bf16.msra.mxu0 0
    %1882 = vmatprep.subr.bf16.mxu0 0
    %1883 = vmatpush1.bf16.msra.mxu0 0
    %1884 = vmatprep.subr.bf16.mxu0 0
    %1885 = vmatpush1.bf16.msra.mxu0 0
    %1886 = vmatprep.subr.bf16.mxu0 0
    %1887 = vmatpush1.bf16.msra.mxu0 0
    %1888 = vmatprep.mubr.bf16.mxu0 0
    %1889 = vmatmul.mubr.bf16.gmra.mrb[0].mxu0 %v1855
    %v1890 = vpop.f32.mrb[0].mxu0
    %v1891 = vadd.f32 0.0, %v1890
    %v1892 = vpop.f32.mrb[0].mxu0
    %v1893 = vpop.f32.mrb[0].mxu0
    %v1894 = vpop.f32.mrb[0].mxu0
    %1895 = vdwg.mxu0
    %v1896 = vpack.c.bf16 %v1891, %v1891
    %s1897 = scalar_lea.vmem %s4, 96
    %v1898 = vld [vmem:[%s1897] sm:$0xf]
    %v1899 = vld [vmem:[%s1897 + $0x4] sm:$0xf]
    %v1900 = vld [vmem:[%s1897 + $0x8] sm:$0xf]
    %v1901 = vld [vmem:[%s1897 + $0xc] sm:$0xf]
    %v1906 = vunpack.c.l.b16 %v1898
    %v1907 = vunpack.c.l.b16 %v1899
    %v1908 = vunpack.c.l.b16 %v1900
    %v1909 = vunpack.c.l.b16 %v1901
    %v1910 = vpack.c.b16 %v1907, %v1906
    %v1911 = vpack.c.b16 %v1909, %v1908
    %v1915 = vsel %vm797, %v1896, 0
    %1917 = vmatprep.subr.bf16.mxu0 0
    %1918 = vmatpush1.bf16.msra.mxu0 %v1910
    %1919 = vmatprep.subr.bf16.mxu0 0
    %1920 = vmatpush1.bf16.msra.mxu0 %v1911
    %1921 = vmatprep.subr.bf16.mxu0 0
    %1922 = vmatpush1.bf16.msra.mxu0 0
    %1923 = vmatprep.subr.bf16.mxu0 0
    %1924 = vmatpush1.bf16.msra.mxu0 0
    %1925 = vmatprep.subr.bf16.mxu0 0
    %1926 = vmatpush1.bf16.msra.mxu0 0
    %1927 = vmatprep.subr.bf16.mxu0 0
    %1928 = vmatpush1.bf16.msra.mxu0 0
    %1929 = vmatprep.subr.bf16.mxu0 0
    %1930 = vmatpush1.bf16.msra.mxu0 0
    %1931 = vmatprep.subr.bf16.mxu0 0
    %1932 = vmatpush1.bf16.msra.mxu0 0
    %1933 = vmatprep.subr.bf16.mxu0 0
    %1934 = vmatpush1.bf16.msra.mxu0 0
    %1935 = vmatprep.subr.bf16.mxu0 0
    %1936 = vmatpush1.bf16.msra.mxu0 0
    %1937 = vmatprep.subr.bf16.mxu0 0
    %1938 = vmatpush1.bf16.msra.mxu0 0
    %1939 = vmatprep.subr.bf16.mxu0 0
    %1940 = vmatpush1.bf16.msra.mxu0 0
    %1941 = vmatprep.subr.bf16.mxu0 0
    %1942 = vmatpush1.bf16.msra.mxu0 0
    %1943 = vmatprep.subr.bf16.mxu0 0
    %1944 = vmatpush1.bf16.msra.mxu0 0
    %1945 = vmatprep.subr.bf16.mxu0 0
    %1946 = vmatpush1.bf16.msra.mxu0 0
    %1947 = vmatprep.subr.bf16.mxu0 0
    %1948 = vmatpush1.bf16.msra.mxu0 0
    %1949 = vmatprep.mubr.bf16.mxu0 0
    %1950 = vmatmul.mubr.bf16.gmra.mrb[0].mxu0 %v1915
    %v1951 = vpop.f32.mrb[0].mxu0
    %v1952 = vadd.f32 0.0, %v1951
    %v1953 = vpop.f32.mrb[0].mxu0
    %v1954 = vpop.f32.mrb[0].mxu0
    %v1955 = vpop.f32.mrb[0].mxu0
    %1956 = vdwg.mxu0
    %v1957 = vadd.f32 %v1853, %v1952
    %s1958 = scalar_lea.vmem %s3, 28
    %v1959 = vld [vmem:[%s1958] sm:$0xf]
    %1960 = vmatprep.subr.bf16.mxu0 0
    %1961 = vmatpush1.bf16.msra.mxu0 %v1226
    %1962 = vmatprep.subr.bf16.mxu0 0
    %1963 = vmatpush1.bf16.msra.mxu0 %v1227
    %1964 = vmatprep.subr.bf16.mxu0 0
    %1965 = vmatpush1.bf16.msra.mxu0 %v1228
    %1966 = vmatprep.subr.bf16.mxu0 0
    %1967 = vmatpush1.bf16.msra.mxu0 %v1229
    %1968 = vmatprep.subr.bf16.mxu0 0
    %1969 = vmatpush1.bf16.msra.mxu0 %v1230
    %1970 = vmatprep.subr.bf16.mxu0 0
    %1971 = vmatpush1.bf16.msra.mxu0 %v1231
    %1972 = vmatprep.subr.bf16.mxu0 0
    %1973 = vmatpush1.bf16.msra.mxu0 %v1232
    %1974 = vmatprep.subr.bf16.mxu0 0
    %1975 = vmatpush1.bf16.msra.mxu0 %v1233
    %1976 = vmatprep.subr.bf16.mxu0 0
    %1977 = vmatpush1.bf16.msra.mxu0 0
    %1978 = vmatprep.subr.bf16.mxu0 0
    %1979 = vmatpush1.bf16.msra.mxu0 0
    %1980 = vmatprep.subr.bf16.mxu0 0
    %1981 = vmatpush1.bf16.msra.mxu0 0
    %1982 = vmatprep.subr.bf16.mxu0 0
    %1983 = vmatpush1.bf16.msra.mxu0 0
    %1984 = vmatprep.subr.bf16.mxu0 0
    %1985 = vmatpush1.bf16.msra.mxu0 0
    %1986 = vmatprep.subr.bf16.mxu0 0
    %1987 = vmatpush1.bf16.msra.mxu0 0
    %1988 = vmatprep.subr.bf16.mxu0 0
    %1989 = vmatpush1.bf16.msra.mxu0 0
    %1990 = vmatprep.subr.bf16.mxu0 0
    %1991 = vmatpush1.bf16.msra.mxu0 0
    %1992 = vmatprep.mubr.bf16.mxu0 0
    %1993 = vmatmul.mubr.bf16.gmra.mrb[0].mxu0 %v1959
    %v1994 = vpop.f32.mrb[0].mxu0
    %v1995 = vadd.f32 0.0, %v1994
    %v1996 = vpop.f32.mrb[0].mxu0
    %v1997 = vpop.f32.mrb[0].mxu0
    %v1998 = vpop.f32.mrb[0].mxu0
    %1999 = vdwg.mxu0
    %v2000 = vpack.c.bf16 %v1995, %v1995
    %s2001 = scalar_lea.vmem %s4, 112
    %v2002 = vld [vmem:[%s2001] sm:$0xf]
    %v2003 = vld [vmem:[%s2001 + $0x4] sm:$0xf]
    %v2004 = vld [vmem:[%s2001 + $0x8] sm:$0xf]
    %v2005 = vld [vmem:[%s2001 + $0xc] sm:$0xf]
    %v2010 = vunpack.c.l.b16 %v2002
    %v2011 = vunpack.c.l.b16 %v2003
    %v2012 = vunpack.c.l.b16 %v2004
    %v2013 = vunpack.c.l.b16 %v2005
    %v2014 = vpack.c.b16 %v2011, %v2010
    %v2015 = vpack.c.b16 %v2013, %v2012
    %v2019 = vsel %vm797, %v2000, 0
    %2021 = vmatprep.subr.bf16.mxu0 0
    %2022 = vmatpush1.bf16.msra.mxu0 %v2014
    %2023 = vmatprep.subr.bf16.mxu0 0
    %2024 = vmatpush1.bf16.msra.mxu0 %v2015
    %2025 = vmatprep.subr.bf16.mxu0 0
    %2026 = vmatpush1.bf16.msra.mxu0 0
    %2027 = vmatprep.subr.bf16.mxu0 0
    %2028 = vmatpush1.bf16.msra.mxu0 0
    %2029 = vmatprep.subr.bf16.mxu0 0
    %2030 = vmatpush1.bf16.msra.mxu0 0
    %2031 = vmatprep.subr.bf16.mxu0 0
    %2032 = vmatpush1.bf16.msra.mxu0 0
    %2033 = vmatprep.subr.bf16.mxu0 0
    %2034 = vmatpush1.bf16.msra.mxu0 0
    %2035 = vmatprep.subr.bf16.mxu0 0
    %2036 = vmatpush1.bf16.msra.mxu0 0
    %2037 = vmatprep.subr.bf16.mxu0 0
    %2038 = vmatpush1.bf16.msra.mxu0 0
    %2039 = vmatprep.subr.bf16.mxu0 0
    %2040 = vmatpush1.bf16.msra.mxu0 0
    %2041 = vmatprep.subr.bf16.mxu0 0
    %2042 = vmatpush1.bf16.msra.mxu0 0
    %2043 = vmatprep.subr.bf16.mxu0 0
    %2044 = vmatpush1.bf16.msra.mxu0 0
    %2045 = vmatprep.subr.bf16.mxu0 0
    %2046 = vmatpush1.bf16.msra.mxu0 0
    %2047 = vmatprep.subr.bf16.mxu0 0
    %2048 = vmatpush1.bf16.msra.mxu0 0
    %2049 = vmatprep.subr.bf16.mxu0 0
    %2050 = vmatpush1.bf16.msra.mxu0 0
    %2051 = vmatprep.subr.bf16.mxu0 0
    %2052 = vmatpush1.bf16.msra.mxu0 0
    %2053 = vmatprep.mubr.bf16.mxu0 0
    %2054 = vmatmul.mubr.bf16.gmra.mrb[0].mxu0 %v2019
    %v2055 = vpop.f32.mrb[0].mxu0
    %v2056 = vadd.f32 0.0, %v2055
    %v2057 = vpop.f32.mrb[0].mxu0
    %v2058 = vpop.f32.mrb[0].mxu0
    %v2059 = vpop.f32.mrb[0].mxu0
    %2060 = vdwg.mxu0
    %v2061 = vadd.f32 %v1957, %v2056
    %s2062 = scalar_lea.vmem %s3, 32
    %v2063 = vld [vmem:[%s2062] sm:$0xf]
    %2064 = vmatprep.subr.bf16.mxu0 0
    %2065 = vmatpush1.bf16.msra.mxu0 %v1226
    %2066 = vmatprep.subr.bf16.mxu0 0
    %2067 = vmatpush1.bf16.msra.mxu0 %v1227
    %2068 = vmatprep.subr.bf16.mxu0 0
    %2069 = vmatpush1.bf16.msra.mxu0 %v1228
    %2070 = vmatprep.subr.bf16.mxu0 0
    %2071 = vmatpush1.bf16.msra.mxu0 %v1229
    %2072 = vmatprep.subr.bf16.mxu0 0
    %2073 = vmatpush1.bf16.msra.mxu0 %v1230
    %2074 = vmatprep.subr.bf16.mxu0 0
    %2075 = vmatpush1.bf16.msra.mxu0 %v1231
    %2076 = vmatprep.subr.bf16.mxu0 0
    %2077 = vmatpush1.bf16.msra.mxu0 %v1232
    %2078 = vmatprep.subr.bf16.mxu0 0
    %2079 = vmatpush1.bf16.msra.mxu0 %v1233
    %2080 = vmatprep.subr.bf16.mxu0 0
    %2081 = vmatpush1.bf16.msra.mxu0 0
    %2082 = vmatprep.subr.bf16.mxu0 0
    %2083 = vmatpush1.bf16.msra.mxu0 0
    %2084 = vmatprep.subr.bf16.mxu0 0
    %2085 = vmatpush1.bf16.msra.mxu0 0
    %2086 = vmatprep.subr.bf16.mxu0 0
    %2087 = vmatpush1.bf16.msra.mxu0 0
    %2088 = vmatprep.subr.bf16.mxu0 0
    %2089 = vmatpush1.bf16.msra.mxu0 0
    %2090 = vmatprep.subr.bf16.mxu0 0
    %2091 = vmatpush1.bf16.msra.mxu0 0
    %2092 = vmatprep.subr.bf16.mxu0 0
    %2093 = vmatpush1.bf16.msra.mxu0 0
    %2094 = vmatprep.subr.bf16.mxu0 0
    %2095 = vmatpush1.bf16.msra.mxu0 0
    %2096 = vmatprep.mubr.bf16.mxu0 0
    %2097 = vmatmul.mubr.bf16.gmra.mrb[0].mxu0 %v2063
    %v2098 = vpop.f32.mrb[0].mxu0
    %v2099 = vadd.f32 0.0, %v2098
    %v2100 = vpop.f32.mrb[0].mxu0
    %v2101 = vpop.f32.mrb[0].mxu0
    %v2102 = vpop.f32.mrb[0].mxu0
    %2103 = vdwg.mxu0
    %v2104 = vpack.c.bf16 %v2099, %v2099
    %s2105 = scalar_lea.vmem %s4, 128
    %v2106 = vld [vmem:[%s2105] sm:$0xf]
    %v2107 = vld [vmem:[%s2105 + $0x4] sm:$0xf]
    %v2108 = vld [vmem:[%s2105 + $0x8] sm:$0xf]
    %v2109 = vld [vmem:[%s2105 + $0xc] sm:$0xf]
    %v2114 = vunpack.c.l.b16 %v2106
    %v2115 = vunpack.c.l.b16 %v2107
    %v2116 = vunpack.c.l.b16 %v2108
    %v2117 = vunpack.c.l.b16 %v2109
    %v2118 = vpack.c.b16 %v2115, %v2114
    %v2119 = vpack.c.b16 %v2117, %v2116
    %v2123 = vsel %vm797, %v2104, 0
    %2125 = vmatprep.subr.bf16.mxu0 0
    %2126 = vmatpush1.bf16.msra.mxu0 %v2118
    %2127 = vmatprep.subr.bf16.mxu0 0
    %2128 = vmatpush1.bf16.msra.mxu0 %v2119
    %2129 = vmatprep.subr.bf16.mxu0 0
    %2130 = vmatpush1.bf16.msra.mxu0 0
    %2131 = vmatprep.subr.bf16.mxu0 0
    %2132 = vmatpush1.bf16.msra.mxu0 0
    %2133 = vmatprep.subr.bf16.mxu0 0
    %2134 = vmatpush1.bf16.msra.mxu0 0
    %2135 = vmatprep.subr.bf16.mxu0 0
    %2136 = vmatpush1.bf16.msra.mxu0 0
    %2137 = vmatprep.subr.bf16.mxu0 0
    %2138 = vmatpush1.bf16.msra.mxu0 0
    %2139 = vmatprep.subr.bf16.mxu0 0
    %2140 = vmatpush1.bf16.msra.mxu0 0
    %2141 = vmatprep.subr.bf16.mxu0 0
    %2142 = vmatpush1.bf16.msra.mxu0 0
    %2143 = vmatprep.subr.bf16.mxu0 0
    %2144 = vmatpush1.bf16.msra.mxu0 0
    %2145 = vmatprep.subr.bf16.mxu0 0
    %2146 = vmatpush1.bf16.msra.mxu0 0
    %2147 = vmatprep.subr.bf16.mxu0 0
    %2148 = vmatpush1.bf16.msra.mxu0 0
    %2149 = vmatprep.subr.bf16.mxu0 0
    %2150 = vmatpush1.bf16.msra.mxu0 0
    %2151 = vmatprep.subr.bf16.mxu0 0
    %2152 = vmatpush1.bf16.msra.mxu0 0
    %2153 = vmatprep.subr.bf16.mxu0 0
    %2154 = vmatpush1.bf16.msra.mxu0 0
    %2155 = vmatprep.subr.bf16.mxu0 0
    %2156 = vmatpush1.bf16.msra.mxu0 0
    %2157 = vmatprep.mubr.bf16.mxu0 0
    %2158 = vmatmul.mubr.bf16.gmra.mrb[0].mxu0 %v2123
    %v2159 = vpop.f32.mrb[0].mxu0
    %v2160 = vadd.f32 0.0, %v2159
    %v2161 = vpop.f32.mrb[0].mxu0
    %v2162 = vpop.f32.mrb[0].mxu0
    %v2163 = vpop.f32.mrb[0].mxu0
    %2164 = vdwg.mxu0
    %v2165 = vadd.f32 %v2061, %v2160
    %s2166 = scalar_lea.vmem %s3, 36
    %v2167 = vld [vmem:[%s2166] sm:$0xf]
    %2168 = vmatprep.subr.bf16.mxu0 0
    %2169 = vmatpush1.bf16.msra.mxu0 %v1226
    %2170 = vmatprep.subr.bf16.mxu0 0
    %2171 = vmatpush1.bf16.msra.mxu0 %v1227
    %2172 = vmatprep.subr.bf16.mxu0 0
    %2173 = vmatpush1.bf16.msra.mxu0 %v1228
    %2174 = vmatprep.subr.bf16.mxu0 0
    %2175 = vmatpush1.bf16.msra.mxu0 %v1229
    %2176 = vmatprep.subr.bf16.mxu0 0
    %2177 = vmatpush1.bf16.msra.mxu0 %v1230
    %2178 = vmatprep.subr.bf16.mxu0 0
    %2179 = vmatpush1.bf16.msra.mxu0 %v1231
    %2180 = vmatprep.subr.bf16.mxu0 0
    %2181 = vmatpush1.bf16.msra.mxu0 %v1232
    %2182 = vmatprep.subr.bf16.mxu0 0
    %2183 = vmatpush1.bf16.msra.mxu0 %v1233
    %2184 = vmatprep.subr.bf16.mxu0 0
    %2185 = vmatpush1.bf16.msra.mxu0 0
    %2186 = vmatprep.subr.bf16.mxu0 0
    %2187 = vmatpush1.bf16.msra.mxu0 0
    %2188 = vmatprep.subr.bf16.mxu0 0
    %2189 = vmatpush1.bf16.msra.mxu0 0
    %2190 = vmatprep.subr.bf16.mxu0 0
    %2191 = vmatpush1.bf16.msra.mxu0 0
    %2192 = vmatprep.subr.bf16.mxu0 0
    %2193 = vmatpush1.bf16.msra.mxu0 0
    %2194 = vmatprep.subr.bf16.mxu0 0
    %2195 = vmatpush1.bf16.msra.mxu0 0
    %2196 = vmatprep.subr.bf16.mxu0 0
    %2197 = vmatpush1.bf16.msra.mxu0 0
    %2198 = vmatprep.subr.bf16.mxu0 0
    %2199 = vmatpush1.bf16.msra.mxu0 0
    %2200 = vmatprep.mubr.bf16.mxu0 0
    %2201 = vmatmul.mubr.bf16.gmra.mrb[0].mxu0 %v2167
    %v2202 = vpop.f32.mrb[0].mxu0
    %v2203 = vadd.f32 0.0, %v2202
    %v2204 = vpop.f32.mrb[0].mxu0
    %v2205 = vpop.f32.mrb[0].mxu0
    %v2206 = vpop.f32.mrb[0].mxu0
    %2207 = vdwg.mxu0
    %v2208 = vpack.c.bf16 %v2203, %v2203
    %s2209 = scalar_lea.vmem %s4, 144
    %v2210 = vld [vmem:[%s2209] sm:$0xf]
    %v2211 = vld [vmem:[%s2209 + $0x4] sm:$0xf]
    %v2212 = vld [vmem:[%s2209 + $0x8] sm:$0xf]
    %v2213 = vld [vmem:[%s2209 + $0xc] sm:$0xf]
    %v2218 = vunpack.c.l.b16 %v2210
    %v2219 = vunpack.c.l.b16 %v2211
    %v2220 = vunpack.c.l.b16 %v2212
    %v2221 = vunpack.c.l.b16 %v2213
    %v2222 = vpack.c.b16 %v2219, %v2218
    %v2223 = vpack.c.b16 %v2221, %v2220
    %v2227 = vsel %vm797, %v2208, 0
    %2229 = vmatprep.subr.bf16.mxu0 0
    %2230 = vmatpush1.bf16.msra.mxu0 %v2222
    %2231 = vmatprep.subr.bf16.mxu0 0
    %2232 = vmatpush1.bf16.msra.mxu0 %v2223
    %2233 = vmatprep.subr.bf16.mxu0 0
    %2234 = vmatpush1.bf16.msra.mxu0 0
    %2235 = vmatprep.subr.bf16.mxu0 0
    %2236 = vmatpush1.bf16.msra.mxu0 0
    %2237 = vmatprep.subr.bf16.mxu0 0
    %2238 = vmatpush1.bf16.msra.mxu0 0
    %2239 = vmatprep.subr.bf16.mxu0 0
    %2240 = vmatpush1.bf16.msra.mxu0 0
    %2241 = vmatprep.subr.bf16.mxu0 0
    %2242 = vmatpush1.bf16.msra.mxu0 0
    %2243 = vmatprep.subr.bf16.mxu0 0
    %2244 = vmatpush1.bf16.msra.mxu0 0
    %2245 = vmatprep.subr.bf16.mxu0 0
    %2246 = vmatpush1.bf16.msra.mxu0 0
    %2247 = vmatprep.subr.bf16.mxu0 0
    %2248 = vmatpush1.bf16.msra.mxu0 0
    %2249 = vmatprep.subr.bf16.mxu0 0
    %2250 = vmatpush1.bf16.msra.mxu0 0
    %2251 = vmatprep.subr.bf16.mxu0 0
    %2252 = vmatpush1.bf16.msra.mxu0 0
    %2253 = vmatprep.subr.bf16.mxu0 0
    %2254 = vmatpush1.bf16.msra.mxu0 0
    %2255 = vmatprep.subr.bf16.mxu0 0
    %2256 = vmatpush1.bf16.msra.mxu0 0
    %2257 = vmatprep.subr.bf16.mxu0 0
    %2258 = vmatpush1.bf16.msra.mxu0 0
    %2259 = vmatprep.subr.bf16.mxu0 0
    %2260 = vmatpush1.bf16.msra.mxu0 0
    %2261 = vmatprep.mubr.bf16.mxu0 0
    %2262 = vmatmul.mubr.bf16.gmra.mrb[0].mxu0 %v2227
    %v2263 = vpop.f32.mrb[0].mxu0
    %v2264 = vadd.f32 0.0, %v2263
    %v2265 = vpop.f32.mrb[0].mxu0
    %v2266 = vpop.f32.mrb[0].mxu0
    %v2267 = vpop.f32.mrb[0].mxu0
    %2268 = vdwg.mxu0
    %v2269 = vadd.f32 %v2165, %v2264
    %s2270 = scalar_lea.vmem %s3, 40
    %v2271 = vld [vmem:[%s2270] sm:$0xf]
    %2272 = vmatprep.subr.bf16.mxu0 0
    %2273 = vmatpush1.bf16.msra.mxu0 %v1226
    %2274 = vmatprep.subr.bf16.mxu0 0
    %2275 = vmatpush1.bf16.msra.mxu0 %v1227
    %2276 = vmatprep.subr.bf16.mxu0 0
    %2277 = vmatpush1.bf16.msra.mxu0 %v1228
    %2278 = vmatprep.subr.bf16.mxu0 0
    %2279 = vmatpush1.bf16.msra.mxu0 %v1229
    %2280 = vmatprep.subr.bf16.mxu0 0
    %2281 = vmatpush1.bf16.msra.mxu0 %v1230
    %2282 = vmatprep.subr.bf16.mxu0 0
    %2283 = vmatpush1.bf16.msra.mxu0 %v1231
    %2284 = vmatprep.subr.bf16.mxu0 0
    %2285 = vmatpush1.bf16.msra.mxu0 %v1232
    %2286 = vmatprep.subr.bf16.mxu0 0
    %2287 = vmatpush1.bf16.msra.mxu0 %v1233
    %2288 = vmatprep.subr.bf16.mxu0 0
    %2289 = vmatpush1.bf16.msra.mxu0 0
    %2290 = vmatprep.subr.bf16.mxu0 0
    %2291 = vmatpush1.bf16.msra.mxu0 0
    %2292 = vmatprep.subr.bf16.mxu0 0
    %2293 = vmatpush1.bf16.msra.mxu0 0
    %2294 = vmatprep.subr.bf16.mxu0 0
    %2295 = vmatpush1.bf16.msra.mxu0 0
    %2296 = vmatprep.subr.bf16.mxu0 0
    %2297 = vmatpush1.bf16.msra.mxu0 0
    %2298 = vmatprep.subr.bf16.mxu0 0
    %2299 = vmatpush1.bf16.msra.mxu0 0
    %2300 = vmatprep.subr.bf16.mxu0 0
    %2301 = vmatpush1.bf16.msra.mxu0 0
    %2302 = vmatprep.subr.bf16.mxu0 0
    %2303 = vmatpush1.bf16.msra.mxu0 0
    %2304 = vmatprep.mubr.bf16.mxu0 0
    %2305 = vmatmul.mubr.bf16.gmra.mrb[0].mxu0 %v2271
    %v2306 = vpop.f32.mrb[0].mxu0
    %v2307 = vadd.f32 0.0, %v2306
    %v2308 = vpop.f32.mrb[0].mxu0
    %v2309 = vpop.f32.mrb[0].mxu0
    %v2310 = vpop.f32.mrb[0].mxu0
    %2311 = vdwg.mxu0
    %v2312 = vpack.c.bf16 %v2307, %v2307
    %s2313 = scalar_lea.vmem %s4, 160
    %v2314 = vld [vmem:[%s2313] sm:$0xf]
    %v2315 = vld [vmem:[%s2313 + $0x4] sm:$0xf]
    %v2316 = vld [vmem:[%s2313 + $0x8] sm:$0xf]
    %v2317 = vld [vmem:[%s2313 + $0xc] sm:$0xf]
    %v2322 = vunpack.c.l.b16 %v2314
    %v2323 = vunpack.c.l.b16 %v2315
    %v2324 = vunpack.c.l.b16 %v2316
    %v2325 = vunpack.c.l.b16 %v2317
    %v2326 = vpack.c.b16 %v2323, %v2322
    %v2327 = vpack.c.b16 %v2325, %v2324
    %v2331 = vsel %vm797, %v2312, 0
    %2333 = vmatprep.subr.bf16.mxu0 0
    %2334 = vmatpush1.bf16.msra.mxu0 %v2326
    %2335 = vmatprep.subr.bf16.mxu0 0
    %2336 = vmatpush1.bf16.msra.mxu0 %v2327
    %2337 = vmatprep.subr.bf16.mxu0 0
    %2338 = vmatpush1.bf16.msra.mxu0 0
    %2339 = vmatprep.subr.bf16.mxu0 0
    %2340 = vmatpush1.bf16.msra.mxu0 0
    %2341 = vmatprep.subr.bf16.mxu0 0
    %2342 = vmatpush1.bf16.msra.mxu0 0
    %2343 = vmatprep.subr.bf16.mxu0 0
    %2344 = vmatpush1.bf16.msra.mxu0 0
    %2345 = vmatprep.subr.bf16.mxu0 0
    %2346 = vmatpush1.bf16.msra.mxu0 0
    %2347 = vmatprep.subr.bf16.mxu0 0
    %2348 = vmatpush1.bf16.msra.mxu0 0
    %2349 = vmatprep.subr.bf16.mxu0 0
    %2350 = vmatpush1.bf16.msra.mxu0 0
    %2351 = vmatprep.subr.bf16.mxu0 0
    %2352 = vmatpush1.bf16.msra.mxu0 0
    %2353 = vmatprep.subr.bf16.mxu0 0
    %2354 = vmatpush1.bf16.msra.mxu0 0
    %2355 = vmatprep.subr.bf16.mxu0 0
    %2356 = vmatpush1.bf16.msra.mxu0 0
    %2357 = vmatprep.subr.bf16.mxu0 0
    %2358 = vmatpush1.bf16.msra.mxu0 0
    %2359 = vmatprep.subr.bf16.mxu0 0
    %2360 = vmatpush1.bf16.msra.mxu0 0
    %2361 = vmatprep.subr.bf16.mxu0 0
    %2362 = vmatpush1.bf16.msra.mxu0 0
    %2363 = vmatprep.subr.bf16.mxu0 0
    %2364 = vmatpush1.bf16.msra.mxu0 0
    %2365 = vmatprep.mubr.bf16.mxu0 0
    %2366 = vmatmul.mubr.bf16.gmra.mrb[0].mxu0 %v2331
    %v2367 = vpop.f32.mrb[0].mxu0
    %v2368 = vadd.f32 0.0, %v2367
    %v2369 = vpop.f32.mrb[0].mxu0
    %v2370 = vpop.f32.mrb[0].mxu0
    %v2371 = vpop.f32.mrb[0].mxu0
    %2372 = vdwg.mxu0
    %v2373 = vadd.f32 %v2269, %v2368
    %s2374 = scalar_lea.vmem %s3, 44
    %v2375 = vld [vmem:[%s2374] sm:$0xf]
    %2376 = vmatprep.subr.bf16.mxu0 0
    %2377 = vmatpush1.bf16.msra.mxu0 %v1226
    %2378 = vmatprep.subr.bf16.mxu0 0
    %2379 = vmatpush1.bf16.msra.mxu0 %v1227
    %2380 = vmatprep.subr.bf16.mxu0 0
    %2381 = vmatpush1.bf16.msra.mxu0 %v1228
    %2382 = vmatprep.subr.bf16.mxu0 0
    %2383 = vmatpush1.bf16.msra.mxu0 %v1229
    %2384 = vmatprep.subr.bf16.mxu0 0
    %2385 = vmatpush1.bf16.msra.mxu0 %v1230
    %2386 = vmatprep.subr.bf16.mxu0 0
    %2387 = vmatpush1.bf16.msra.mxu0 %v1231
    %2388 = vmatprep.subr.bf16.mxu0 0
    %2389 = vmatpush1.bf16.msra.mxu0 %v1232
    %2390 = vmatprep.subr.bf16.mxu0 0
    %2391 = vmatpush1.bf16.msra.mxu0 %v1233
    %2392 = vmatprep.subr.bf16.mxu0 0
    %2393 = vmatpush1.bf16.msra.mxu0 0
    %2394 = vmatprep.subr.bf16.mxu0 0
    %2395 = vmatpush1.bf16.msra.mxu0 0
    %2396 = vmatprep.subr.bf16.mxu0 0
    %2397 = vmatpush1.bf16.msra.mxu0 0
    %2398 = vmatprep.subr.bf16.mxu0 0
    %2399 = vmatpush1.bf16.msra.mxu0 0
    %2400 = vmatprep.subr.bf16.mxu0 0
    %2401 = vmatpush1.bf16.msra.mxu0 0
    %2402 = vmatprep.subr.bf16.mxu0 0
    %2403 = vmatpush1.bf16.msra.mxu0 0
    %2404 = vmatprep.subr.bf16.mxu0 0
    %2405 = vmatpush1.bf16.msra.mxu0 0
    %2406 = vmatprep.subr.bf16.mxu0 0
    %2407 = vmatpush1.bf16.msra.mxu0 0
    %2408 = vmatprep.mubr.bf16.mxu0 0
    %2409 = vmatmul.mubr.bf16.gmra.mrb[0].mxu0 %v2375
    %v2410 = vpop.f32.mrb[0].mxu0
    %v2411 = vadd.f32 0.0, %v2410
    %v2412 = vpop.f32.mrb[0].mxu0
    %v2413 = vpop.f32.mrb[0].mxu0
    %v2414 = vpop.f32.mrb[0].mxu0
    %2415 = vdwg.mxu0
    %v2416 = vpack.c.bf16 %v2411, %v2411
    %s2417 = scalar_lea.vmem %s4, 176
    %v2418 = vld [vmem:[%s2417] sm:$0xf]
    %v2419 = vld [vmem:[%s2417 + $0x4] sm:$0xf]
    %v2420 = vld [vmem:[%s2417 + $0x8] sm:$0xf]
    %v2421 = vld [vmem:[%s2417 + $0xc] sm:$0xf]
    %v2426 = vunpack.c.l.b16 %v2418
    %v2427 = vunpack.c.l.b16 %v2419
    %v2428 = vunpack.c.l.b16 %v2420
    %v2429 = vunpack.c.l.b16 %v2421
    %v2430 = vpack.c.b16 %v2427, %v2426
    %v2431 = vpack.c.b16 %v2429, %v2428
    %v2435 = vsel %vm797, %v2416, 0
    %2437 = vmatprep.subr.bf16.mxu0 0
    %2438 = vmatpush1.bf16.msra.mxu0 %v2430
    %2439 = vmatprep.subr.bf16.mxu0 0
    %2440 = vmatpush1.bf16.msra.mxu0 %v2431
    %2441 = vmatprep.subr.bf16.mxu0 0
    %2442 = vmatpush1.bf16.msra.mxu0 0
    %2443 = vmatprep.subr.bf16.mxu0 0
    %2444 = vmatpush1.bf16.msra.mxu0 0
    %2445 = vmatprep.subr.bf16.mxu0 0
    %2446 = vmatpush1.bf16.msra.mxu0 0
    %2447 = vmatprep.subr.bf16.mxu0 0
    %2448 = vmatpush1.bf16.msra.mxu0 0
    %2449 = vmatprep.subr.bf16.mxu0 0
    %2450 = vmatpush1.bf16.msra.mxu0 0
    %2451 = vmatprep.subr.bf16.mxu0 0
    %2452 = vmatpush1.bf16.msra.mxu0 0
    %2453 = vmatprep.subr.bf16.mxu0 0
    %2454 = vmatpush1.bf16.msra.mxu0 0
    %2455 = vmatprep.subr.bf16.mxu0 0
    %2456 = vmatpush1.bf16.msra.mxu0 0
    %2457 = vmatprep.subr.bf16.mxu0 0
    %2458 = vmatpush1.bf16.msra.mxu0 0
    %2459 = vmatprep.subr.bf16.mxu0 0
    %2460 = vmatpush1.bf16.msra.mxu0 0
    %2461 = vmatprep.subr.bf16.mxu0 0
    %2462 = vmatpush1.bf16.msra.mxu0 0
    %2463 = vmatprep.subr.bf16.mxu0 0
    %2464 = vmatpush1.bf16.msra.mxu0 0
    %2465 = vmatprep.subr.bf16.mxu0 0
    %2466 = vmatpush1.bf16.msra.mxu0 0
    %2467 = vmatprep.subr.bf16.mxu0 0
    %2468 = vmatpush1.bf16.msra.mxu0 0
    %2469 = vmatprep.mubr.bf16.mxu0 0
    %2470 = vmatmul.mubr.bf16.gmra.mrb[0].mxu0 %v2435
    %v2471 = vpop.f32.mrb[0].mxu0
    %v2472 = vadd.f32 0.0, %v2471
    %v2473 = vpop.f32.mrb[0].mxu0
    %v2474 = vpop.f32.mrb[0].mxu0
    %v2475 = vpop.f32.mrb[0].mxu0
    %2476 = vdwg.mxu0
    %v2477 = vadd.f32 %v2373, %v2472
    %s2478 = scalar_lea.vmem %s3, 48
    %v2479 = vld [vmem:[%s2478] sm:$0xf]
    %2480 = vmatprep.subr.bf16.mxu0 0
    %2481 = vmatpush1.bf16.msra.mxu0 %v1226
    %2482 = vmatprep.subr.bf16.mxu0 0
    %2483 = vmatpush1.bf16.msra.mxu0 %v1227
    %2484 = vmatprep.subr.bf16.mxu0 0
    %2485 = vmatpush1.bf16.msra.mxu0 %v1228
    %2486 = vmatprep.subr.bf16.mxu0 0
    %2487 = vmatpush1.bf16.msra.mxu0 %v1229
    %2488 = vmatprep.subr.bf16.mxu0 0
    %2489 = vmatpush1.bf16.msra.mxu0 %v1230
    %2490 = vmatprep.subr.bf16.mxu0 0
    %2491 = vmatpush1.bf16.msra.mxu0 %v1231
    %2492 = vmatprep.subr.bf16.mxu0 0
    %2493 = vmatpush1.bf16.msra.mxu0 %v1232
    %2494 = vmatprep.subr.bf16.mxu0 0
    %2495 = vmatpush1.bf16.msra.mxu0 %v1233
    %2496 = vmatprep.subr.bf16.mxu0 0
    %2497 = vmatpush1.bf16.msra.mxu0 0
    %2498 = vmatprep.subr.bf16.mxu0 0
    %2499 = vmatpush1.bf16.msra.mxu0 0
    %2500 = vmatprep.subr.bf16.mxu0 0
    %2501 = vmatpush1.bf16.msra.mxu0 0
    %2502 = vmatprep.subr.bf16.mxu0 0
    %2503 = vmatpush1.bf16.msra.mxu0 0
    %2504 = vmatprep.subr.bf16.mxu0 0
    %2505 = vmatpush1.bf16.msra.mxu0 0
    %2506 = vmatprep.subr.bf16.mxu0 0
    %2507 = vmatpush1.bf16.msra.mxu0 0
    %2508 = vmatprep.subr.bf16.mxu0 0
    %2509 = vmatpush1.bf16.msra.mxu0 0
    %2510 = vmatprep.subr.bf16.mxu0 0
    %2511 = vmatpush1.bf16.msra.mxu0 0
    %2512 = vmatprep.mubr.bf16.mxu0 0
    %2513 = vmatmul.mubr.bf16.gmra.mrb[0].mxu0 %v2479
    %v2514 = vpop.f32.mrb[0].mxu0
    %v2515 = vadd.f32 0.0, %v2514
    %v2516 = vpop.f32.mrb[0].mxu0
    %v2517 = vpop.f32.mrb[0].mxu0
    %v2518 = vpop.f32.mrb[0].mxu0
    %2519 = vdwg.mxu0
    %v2520 = vpack.c.bf16 %v2515, %v2515
    %s2521 = scalar_lea.vmem %s4, 192
    %v2522 = vld [vmem:[%s2521] sm:$0xf]
    %v2523 = vld [vmem:[%s2521 + $0x4] sm:$0xf]
    %v2524 = vld [vmem:[%s2521 + $0x8] sm:$0xf]
    %v2525 = vld [vmem:[%s2521 + $0xc] sm:$0xf]
    %v2530 = vunpack.c.l.b16 %v2522
    %v2531 = vunpack.c.l.b16 %v2523
    %v2532 = vunpack.c.l.b16 %v2524
    %v2533 = vunpack.c.l.b16 %v2525
    %v2534 = vpack.c.b16 %v2531, %v2530
    %v2535 = vpack.c.b16 %v2533, %v2532
    %v2539 = vsel %vm797, %v2520, 0
    %2541 = vmatprep.subr.bf16.mxu0 0
    %2542 = vmatpush1.bf16.msra.mxu0 %v2534
    %2543 = vmatprep.subr.bf16.mxu0 0
    %2544 = vmatpush1.bf16.msra.mxu0 %v2535
    %2545 = vmatprep.subr.bf16.mxu0 0
    %2546 = vmatpush1.bf16.msra.mxu0 0
    %2547 = vmatprep.subr.bf16.mxu0 0
    %2548 = vmatpush1.bf16.msra.mxu0 0
    %2549 = vmatprep.subr.bf16.mxu0 0
    %2550 = vmatpush1.bf16.msra.mxu0 0
    %2551 = vmatprep.subr.bf16.mxu0 0
    %2552 = vmatpush1.bf16.msra.mxu0 0
    %2553 = vmatprep.subr.bf16.mxu0 0
    %2554 = vmatpush1.bf16.msra.mxu0 0
    %2555 = vmatprep.subr.bf16.mxu0 0
    %2556 = vmatpush1.bf16.msra.mxu0 0
    %2557 = vmatprep.subr.bf16.mxu0 0
    %2558 = vmatpush1.bf16.msra.mxu0 0
    %2559 = vmatprep.subr.bf16.mxu0 0
    %2560 = vmatpush1.bf16.msra.mxu0 0
    %2561 = vmatprep.subr.bf16.mxu0 0
    %2562 = vmatpush1.bf16.msra.mxu0 0
    %2563 = vmatprep.subr.bf16.mxu0 0
    %2564 = vmatpush1.bf16.msra.mxu0 0
    %2565 = vmatprep.subr.bf16.mxu0 0
    %2566 = vmatpush1.bf16.msra.mxu0 0
    %2567 = vmatprep.subr.bf16.mxu0 0
    %2568 = vmatpush1.bf16.msra.mxu0 0
    %2569 = vmatprep.subr.bf16.mxu0 0
    %2570 = vmatpush1.bf16.msra.mxu0 0
    %2571 = vmatprep.subr.bf16.mxu0 0
    %2572 = vmatpush1.bf16.msra.mxu0 0
    %2573 = vmatprep.mubr.bf16.mxu0 0
    %2574 = vmatmul.mubr.bf16.gmra.mrb[0].mxu0 %v2539
    %v2575 = vpop.f32.mrb[0].mxu0
    %v2576 = vadd.f32 0.0, %v2575
    %v2577 = vpop.f32.mrb[0].mxu0
    %v2578 = vpop.f32.mrb[0].mxu0
    %v2579 = vpop.f32.mrb[0].mxu0
    %2580 = vdwg.mxu0
    %v2581 = vadd.f32 %v2477, %v2576
    %s2582 = scalar_lea.vmem %s3, 52
    %v2583 = vld [vmem:[%s2582] sm:$0xf]
    %2584 = vmatprep.subr.bf16.mxu0 0
    %2585 = vmatpush1.bf16.msra.mxu0 %v1226
    %2586 = vmatprep.subr.bf16.mxu0 0
    %2587 = vmatpush1.bf16.msra.mxu0 %v1227
    %2588 = vmatprep.subr.bf16.mxu0 0
    %2589 = vmatpush1.bf16.msra.mxu0 %v1228
    %2590 = vmatprep.subr.bf16.mxu0 0
    %2591 = vmatpush1.bf16.msra.mxu0 %v1229
    %2592 = vmatprep.subr.bf16.mxu0 0
    %2593 = vmatpush1.bf16.msra.mxu0 %v1230
    %2594 = vmatprep.subr.bf16.mxu0 0
    %2595 = vmatpush1.bf16.msra.mxu0 %v1231
    %2596 = vmatprep.subr.bf16.mxu0 0
    %2597 = vmatpush1.bf16.msra.mxu0 %v1232
    %2598 = vmatprep.subr.bf16.mxu0 0
    %2599 = vmatpush1.bf16.msra.mxu0 %v1233
    %2600 = vmatprep.subr.bf16.mxu0 0
    %2601 = vmatpush1.bf16.msra.mxu0 0
    %2602 = vmatprep.subr.bf16.mxu0 0
    %2603 = vmatpush1.bf16.msra.mxu0 0
    %2604 = vmatprep.subr.bf16.mxu0 0
    %2605 = vmatpush1.bf16.msra.mxu0 0
    %2606 = vmatprep.subr.bf16.mxu0 0
    %2607 = vmatpush1.bf16.msra.mxu0 0
    %2608 = vmatprep.subr.bf16.mxu0 0
    %2609 = vmatpush1.bf16.msra.mxu0 0
    %2610 = vmatprep.subr.bf16.mxu0 0
    %2611 = vmatpush1.bf16.msra.mxu0 0
    %2612 = vmatprep.subr.bf16.mxu0 0
    %2613 = vmatpush1.bf16.msra.mxu0 0
    %2614 = vmatprep.subr.bf16.mxu0 0
    %2615 = vmatpush1.bf16.msra.mxu0 0
    %2616 = vmatprep.mubr.bf16.mxu0 0
    %2617 = vmatmul.mubr.bf16.gmra.mrb[0].mxu0 %v2583
    %v2618 = vpop.f32.mrb[0].mxu0
    %v2619 = vadd.f32 0.0, %v2618
    %v2620 = vpop.f32.mrb[0].mxu0
    %v2621 = vpop.f32.mrb[0].mxu0
    %v2622 = vpop.f32.mrb[0].mxu0
    %2623 = vdwg.mxu0
    %v2624 = vpack.c.bf16 %v2619, %v2619
    %s2625 = scalar_lea.vmem %s4, 208
    %v2626 = vld [vmem:[%s2625] sm:$0xf]
    %v2627 = vld [vmem:[%s2625 + $0x4] sm:$0xf]
    %v2628 = vld [vmem:[%s2625 + $0x8] sm:$0xf]
    %v2629 = vld [vmem:[%s2625 + $0xc] sm:$0xf]
    %v2634 = vunpack.c.l.b16 %v2626
    %v2635 = vunpack.c.l.b16 %v2627
    %v2636 = vunpack.c.l.b16 %v2628
    %v2637 = vunpack.c.l.b16 %v2629
    %v2638 = vpack.c.b16 %v2635, %v2634
    %v2639 = vpack.c.b16 %v2637, %v2636
    %v2643 = vsel %vm797, %v2624, 0
    %2645 = vmatprep.subr.bf16.mxu0 0
    %2646 = vmatpush1.bf16.msra.mxu0 %v2638
    %2647 = vmatprep.subr.bf16.mxu0 0
    %2648 = vmatpush1.bf16.msra.mxu0 %v2639
    %2649 = vmatprep.subr.bf16.mxu0 0
    %2650 = vmatpush1.bf16.msra.mxu0 0
    %2651 = vmatprep.subr.bf16.mxu0 0
    %2652 = vmatpush1.bf16.msra.mxu0 0
    %2653 = vmatprep.subr.bf16.mxu0 0
    %2654 = vmatpush1.bf16.msra.mxu0 0
    %2655 = vmatprep.subr.bf16.mxu0 0
    %2656 = vmatpush1.bf16.msra.mxu0 0
    %2657 = vmatprep.subr.bf16.mxu0 0
    %2658 = vmatpush1.bf16.msra.mxu0 0
    %2659 = vmatprep.subr.bf16.mxu0 0
    %2660 = vmatpush1.bf16.msra.mxu0 0
    %2661 = vmatprep.subr.bf16.mxu0 0
    %2662 = vmatpush1.bf16.msra.mxu0 0
    %2663 = vmatprep.subr.bf16.mxu0 0
    %2664 = vmatpush1.bf16.msra.mxu0 0
    %2665 = vmatprep.subr.bf16.mxu0 0
    %2666 = vmatpush1.bf16.msra.mxu0 0
    %2667 = vmatprep.subr.bf16.mxu0 0
    %2668 = vmatpush1.bf16.msra.mxu0 0
    %2669 = vmatprep.subr.bf16.mxu0 0
    %2670 = vmatpush1.bf16.msra.mxu0 0
    %2671 = vmatprep.subr.bf16.mxu0 0
    %2672 = vmatpush1.bf16.msra.mxu0 0
    %2673 = vmatprep.subr.bf16.mxu0 0
    %2674 = vmatpush1.bf16.msra.mxu0 0
    %2675 = vmatprep.subr.bf16.mxu0 0
    %2676 = vmatpush1.bf16.msra.mxu0 0
    %2677 = vmatprep.mubr.bf16.mxu0 0
    %2678 = vmatmul.mubr.bf16.gmra.mrb[0].mxu0 %v2643
    %v2679 = vpop.f32.mrb[0].mxu0
    %v2680 = vadd.f32 0.0, %v2679
    %v2681 = vpop.f32.mrb[0].mxu0
    %v2682 = vpop.f32.mrb[0].mxu0
    %v2683 = vpop.f32.mrb[0].mxu0
    %2684 = vdwg.mxu0
    %v2685 = vadd.f32 %v2581, %v2680
    %s2686 = scalar_lea.vmem %s3, 56
    %v2687 = vld [vmem:[%s2686] sm:$0xf]
    %2688 = vmatprep.subr.bf16.mxu0 0
    %2689 = vmatpush1.bf16.msra.mxu0 %v1226
    %2690 = vmatprep.subr.bf16.mxu0 0
    %2691 = vmatpush1.bf16.msra.mxu0 %v1227
    %2692 = vmatprep.subr.bf16.mxu0 0
    %2693 = vmatpush1.bf16.msra.mxu0 %v1228
    %2694 = vmatprep.subr.bf16.mxu0 0
    %2695 = vmatpush1.bf16.msra.mxu0 %v1229
    %2696 = vmatprep.subr.bf16.mxu0 0
    %2697 = vmatpush1.bf16.msra.mxu0 %v1230
    %2698 = vmatprep.subr.bf16.mxu0 0
    %2699 = vmatpush1.bf16.msra.mxu0 %v1231
    %2700 = vmatprep.subr.bf16.mxu0 0
    %2701 = vmatpush1.bf16.msra.mxu0 %v1232
    %2702 = vmatprep.subr.bf16.mxu0 0
    %2703 = vmatpush1.bf16.msra.mxu0 %v1233
    %2704 = vmatprep.subr.bf16.mxu0 0
    %2705 = vmatpush1.bf16.msra.mxu0 0
    %2706 = vmatprep.subr.bf16.mxu0 0
    %2707 = vmatpush1.bf16.msra.mxu0 0
    %2708 = vmatprep.subr.bf16.mxu0 0
    %2709 = vmatpush1.bf16.msra.mxu0 0
    %2710 = vmatprep.subr.bf16.mxu0 0
    %2711 = vmatpush1.bf16.msra.mxu0 0
    %2712 = vmatprep.subr.bf16.mxu0 0
    %2713 = vmatpush1.bf16.msra.mxu0 0
    %2714 = vmatprep.subr.bf16.mxu0 0
    %2715 = vmatpush1.bf16.msra.mxu0 0
    %2716 = vmatprep.subr.bf16.mxu0 0
    %2717 = vmatpush1.bf16.msra.mxu0 0
    %2718 = vmatprep.subr.bf16.mxu0 0
    %2719 = vmatpush1.bf16.msra.mxu0 0
    %2720 = vmatprep.mubr.bf16.mxu0 0
    %2721 = vmatmul.mubr.bf16.gmra.mrb[0].mxu0 %v2687
    %v2722 = vpop.f32.mrb[0].mxu0
    %v2723 = vadd.f32 0.0, %v2722
    %v2724 = vpop.f32.mrb[0].mxu0
    %v2725 = vpop.f32.mrb[0].mxu0
    %v2726 = vpop.f32.mrb[0].mxu0
    %2727 = vdwg.mxu0
    %v2728 = vpack.c.bf16 %v2723, %v2723
    %s2729 = scalar_lea.vmem %s4, 224
    %v2730 = vld [vmem:[%s2729] sm:$0xf]
    %v2731 = vld [vmem:[%s2729 + $0x4] sm:$0xf]
    %v2732 = vld [vmem:[%s2729 + $0x8] sm:$0xf]
    %v2733 = vld [vmem:[%s2729 + $0xc] sm:$0xf]
    %v2738 = vunpack.c.l.b16 %v2730
    %v2739 = vunpack.c.l.b16 %v2731
    %v2740 = vunpack.c.l.b16 %v2732
    %v2741 = vunpack.c.l.b16 %v2733
    %v2742 = vpack.c.b16 %v2739, %v2738
    %v2743 = vpack.c.b16 %v2741, %v2740
    %v2747 = vsel %vm797, %v2728, 0
    %2749 = vmatprep.subr.bf16.mxu0 0
    %2750 = vmatpush1.bf16.msra.mxu0 %v2742
    %2751 = vmatprep.subr.bf16.mxu0 0
    %2752 = vmatpush1.bf16.msra.mxu0 %v2743
    %2753 = vmatprep.subr.bf16.mxu0 0
    %2754 = vmatpush1.bf16.msra.mxu0 0
    %2755 = vmatprep.subr.bf16.mxu0 0
    %2756 = vmatpush1.bf16.msra.mxu0 0
    %2757 = vmatprep.subr.bf16.mxu0 0
    %2758 = vmatpush1.bf16.msra.mxu0 0
    %2759 = vmatprep.subr.bf16.mxu0 0
    %2760 = vmatpush1.bf16.msra.mxu0 0
    %2761 = vmatprep.subr.bf16.mxu0 0
    %2762 = vmatpush1.bf16.msra.mxu0 0
    %2763 = vmatprep.subr.bf16.mxu0 0
    %2764 = vmatpush1.bf16.msra.mxu0 0
    %2765 = vmatprep.subr.bf16.mxu0 0
    %2766 = vmatpush1.bf16.msra.mxu0 0
    %2767 = vmatprep.subr.bf16.mxu0 0
    %2768 = vmatpush1.bf16.msra.mxu0 0
    %2769 = vmatprep.subr.bf16.mxu0 0
    %2770 = vmatpush1.bf16.msra.mxu0 0
    %2771 = vmatprep.subr.bf16.mxu0 0
    %2772 = vmatpush1.bf16.msra.mxu0 0
    %2773 = vmatprep.subr.bf16.mxu0 0
    %2774 = vmatpush1.bf16.msra.mxu0 0
    %2775 = vmatprep.subr.bf16.mxu0 0
    %2776 = vmatpush1.bf16.msra.mxu0 0
    %2777 = vmatprep.subr.bf16.mxu0 0
    %2778 = vmatpush1.bf16.msra.mxu0 0
    %2779 = vmatprep.subr.bf16.mxu0 0
    %2780 = vmatpush1.bf16.msra.mxu0 0
    %2781 = vmatprep.mubr.bf16.mxu0 0
    %2782 = vmatmul.mubr.bf16.gmra.mrb[0].mxu0 %v2747
    %v2783 = vpop.f32.mrb[0].mxu0
    %v2784 = vadd.f32 0.0, %v2783
    %v2785 = vpop.f32.mrb[0].mxu0
    %v2786 = vpop.f32.mrb[0].mxu0
    %v2787 = vpop.f32.mrb[0].mxu0
    %2788 = vdwg.mxu0
    %v2789 = vadd.f32 %v2685, %v2784
    %s2790 = scalar_lea.vmem %s3, 60
    %v2791 = vld [vmem:[%s2790] sm:$0xf]
    %2792 = vmatprep.subr.bf16.mxu0 0
    %2793 = vmatpush1.bf16.msra.mxu0 %v1226
    %2794 = vmatprep.subr.bf16.mxu0 0
    %2795 = vmatpush1.bf16.msra.mxu0 %v1227
    %2796 = vmatprep.subr.bf16.mxu0 0
    %2797 = vmatpush1.bf16.msra.mxu0 %v1228
    %2798 = vmatprep.subr.bf16.mxu0 0
    %2799 = vmatpush1.bf16.msra.mxu0 %v1229
    %2800 = vmatprep.subr.bf16.mxu0 0
    %2801 = vmatpush1.bf16.msra.mxu0 %v1230
    %2802 = vmatprep.subr.bf16.mxu0 0
    %2803 = vmatpush1.bf16.msra.mxu0 %v1231
    %2804 = vmatprep.subr.bf16.mxu0 0
    %2805 = vmatpush1.bf16.msra.mxu0 %v1232
    %2806 = vmatprep.subr.bf16.mxu0 0
    %2807 = vmatpush1.bf16.msra.mxu0 %v1233
    %2808 = vmatprep.subr.bf16.mxu0 0
    %2809 = vmatpush1.bf16.msra.mxu0 0
    %2810 = vmatprep.subr.bf16.mxu0 0
    %2811 = vmatpush1.bf16.msra.mxu0 0
    %2812 = vmatprep.subr.bf16.mxu0 0
    %2813 = vmatpush1.bf16.msra.mxu0 0
    %2814 = vmatprep.subr.bf16.mxu0 0
    %2815 = vmatpush1.bf16.msra.mxu0 0
    %2816 = vmatprep.subr.bf16.mxu0 0
    %2817 = vmatpush1.bf16.msra.mxu0 0
    %2818 = vmatprep.subr.bf16.mxu0 0
    %2819 = vmatpush1.bf16.msra.mxu0 0
    %2820 = vmatprep.subr.bf16.mxu0 0
    %2821 = vmatpush1.bf16.msra.mxu0 0
    %2822 = vmatprep.subr.bf16.mxu0 0
    %2823 = vmatpush1.bf16.msra.mxu0 0
    %2824 = vmatprep.mubr.bf16.mxu0 0
    %2825 = vmatmul.mubr.bf16.gmra.mrb[0].mxu0 %v2791
    %v2826 = vpop.f32.mrb[0].mxu0
    %v2827 = vadd.f32 0.0, %v2826
    %v2828 = vpop.f32.mrb[0].mxu0
    %v2829 = vpop.f32.mrb[0].mxu0
    %v2830 = vpop.f32.mrb[0].mxu0
    %2831 = vdwg.mxu0
    %v2832 = vpack.c.bf16 %v2827, %v2827
    %s2833 = scalar_lea.vmem %s4, 240
    %v2834 = vld [vmem:[%s2833] sm:$0xf]
    %v2835 = vld [vmem:[%s2833 + $0x4] sm:$0xf]
    %v2836 = vld [vmem:[%s2833 + $0x8] sm:$0xf]
    %v2837 = vld [vmem:[%s2833 + $0xc] sm:$0xf]
    %v2842 = vunpack.c.l.b16 %v2834
    %v2843 = vunpack.c.l.b16 %v2835
    %v2844 = vunpack.c.l.b16 %v2836
    %v2845 = vunpack.c.l.b16 %v2837
    %v2846 = vpack.c.b16 %v2843, %v2842
    %v2847 = vpack.c.b16 %v2845, %v2844
    %v2851 = vsel %vm797, %v2832, 0
    %2853 = vmatprep.subr.bf16.mxu0 0
    %2854 = vmatpush1.bf16.msra.mxu0 %v2846
    %2855 = vmatprep.subr.bf16.mxu0 0
    %2856 = vmatpush1.bf16.msra.mxu0 %v2847
    %2857 = vmatprep.subr.bf16.mxu0 0
    %2858 = vmatpush1.bf16.msra.mxu0 0
    %2859 = vmatprep.subr.bf16.mxu0 0
    %2860 = vmatpush1.bf16.msra.mxu0 0
    %2861 = vmatprep.subr.bf16.mxu0 0
    %2862 = vmatpush1.bf16.msra.mxu0 0
    %2863 = vmatprep.subr.bf16.mxu0 0
    %2864 = vmatpush1.bf16.msra.mxu0 0
    %2865 = vmatprep.subr.bf16.mxu0 0
    %2866 = vmatpush1.bf16.msra.mxu0 0
    %2867 = vmatprep.subr.bf16.mxu0 0
    %2868 = vmatpush1.bf16.msra.mxu0 0
    %2869 = vmatprep.subr.bf16.mxu0 0
    %2870 = vmatpush1.bf16.msra.mxu0 0
    %2871 = vmatprep.subr.bf16.mxu0 0
    %2872 = vmatpush1.bf16.msra.mxu0 0
    %2873 = vmatprep.subr.bf16.mxu0 0
    %2874 = vmatpush1.bf16.msra.mxu0 0
    %2875 = vmatprep.subr.bf16.mxu0 0
    %2876 = vmatpush1.bf16.msra.mxu0 0
    %2877 = vmatprep.subr.bf16.mxu0 0
    %2878 = vmatpush1.bf16.msra.mxu0 0
    %2879 = vmatprep.subr.bf16.mxu0 0
    %2880 = vmatpush1.bf16.msra.mxu0 0
    %2881 = vmatprep.subr.bf16.mxu0 0
    %2882 = vmatpush1.bf16.msra.mxu0 0
    %2883 = vmatprep.subr.bf16.mxu0 0
    %2884 = vmatpush1.bf16.msra.mxu0 0
    %2885 = vmatprep.mubr.bf16.mxu0 0
    %2886 = vmatmul.mubr.bf16.gmra.mrb[0].mxu0 %v2851
    %v2887 = vpop.f32.mrb[0].mxu0
    %v2888 = vadd.f32 0.0, %v2887
    %v2889 = vpop.f32.mrb[0].mxu0
    %v2890 = vpop.f32.mrb[0].mxu0
    %v2891 = vpop.f32.mrb[0].mxu0
    %2892 = vdwg.mxu0
    %v2893 = vadd.f32 %v2789, %v2888
    %s2894 = scalar_lea.vmem %s3, 64
    %v2895 = vld [vmem:[%s2894] sm:$0xf]
    %2896 = vmatprep.subr.bf16.mxu0 0
    %2897 = vmatpush1.bf16.msra.mxu0 %v1226
    %2898 = vmatprep.subr.bf16.mxu0 0
    %2899 = vmatpush1.bf16.msra.mxu0 %v1227
    %2900 = vmatprep.subr.bf16.mxu0 0
    %2901 = vmatpush1.bf16.msra.mxu0 %v1228
    %2902 = vmatprep.subr.bf16.mxu0 0
    %2903 = vmatpush1.bf16.msra.mxu0 %v1229
    %2904 = vmatprep.subr.bf16.mxu0 0
    %2905 = vmatpush1.bf16.msra.mxu0 %v1230
    %2906 = vmatprep.subr.bf16.mxu0 0
    %2907 = vmatpush1.bf16.msra.mxu0 %v1231
    %2908 = vmatprep.subr.bf16.mxu0 0
    %2909 = vmatpush1.bf16.msra.mxu0 %v1232
    %2910 = vmatprep.subr.bf16.mxu0 0
    %2911 = vmatpush1.bf16.msra.mxu0 %v1233
    %2912 = vmatprep.subr.bf16.mxu0 0
    %2913 = vmatpush1.bf16.msra.mxu0 0
    %2914 = vmatprep.subr.bf16.mxu0 0
    %2915 = vmatpush1.bf16.msra.mxu0 0
    %2916 = vmatprep.subr.bf16.mxu0 0
    %2917 = vmatpush1.bf16.msra.mxu0 0
    %2918 = vmatprep.subr.bf16.mxu0 0
    %2919 = vmatpush1.bf16.msra.mxu0 0
    %2920 = vmatprep.subr.bf16.mxu0 0
    %2921 = vmatpush1.bf16.msra.mxu0 0
    %2922 = vmatprep.subr.bf16.mxu0 0
    %2923 = vmatpush1.bf16.msra.mxu0 0
    %2924 = vmatprep.subr.bf16.mxu0 0
    %2925 = vmatpush1.bf16.msra.mxu0 0
    %2926 = vmatprep.subr.bf16.mxu0 0
    %2927 = vmatpush1.bf16.msra.mxu0 0
    %2928 = vmatprep.mubr.bf16.mxu0 0
    %2929 = vmatmul.mubr.bf16.gmra.mrb[0].mxu0 %v2895
    %v2930 = vpop.f32.mrb[0].mxu0
    %v2931 = vadd.f32 0.0, %v2930
    %v2932 = vpop.f32.mrb[0].mxu0
    %v2933 = vpop.f32.mrb[0].mxu0
    %v2934 = vpop.f32.mrb[0].mxu0
    %2935 = vdwg.mxu0
    %v2936 = vpack.c.bf16 %v2931, %v2931
    %s2937 = scalar_lea.vmem %s4, 256
    %v2938 = vld [vmem:[%s2937] sm:$0xf]
    %v2939 = vld [vmem:[%s2937 + $0x4] sm:$0xf]
    %v2940 = vld [vmem:[%s2937 + $0x8] sm:$0xf]
    %v2941 = vld [vmem:[%s2937 + $0xc] sm:$0xf]
    %v2946 = vunpack.c.l.b16 %v2938
    %v2947 = vunpack.c.l.b16 %v2939
    %v2948 = vunpack.c.l.b16 %v2940
    %v2949 = vunpack.c.l.b16 %v2941
    %v2950 = vpack.c.b16 %v2947, %v2946
    %v2951 = vpack.c.b16 %v2949, %v2948
    %v2955 = vsel %vm797, %v2936, 0
    %2957 = vmatprep.subr.bf16.mxu0 0
    %2958 = vmatpush1.bf16.msra.mxu0 %v2950
    %2959 = vmatprep.subr.bf16.mxu0 0
    %2960 = vmatpush1.bf16.msra.mxu0 %v2951
    %2961 = vmatprep.subr.bf16.mxu0 0
    %2962 = vmatpush1.bf16.msra.mxu0 0
    %2963 = vmatprep.subr.bf16.mxu0 0
    %2964 = vmatpush1.bf16.msra.mxu0 0
    %2965 = vmatprep.subr.bf16.mxu0 0
    %2966 = vmatpush1.bf16.msra.mxu0 0
    %2967 = vmatprep.subr.bf16.mxu0 0
    %2968 = vmatpush1.bf16.msra.mxu0 0
    %2969 = vmatprep.subr.bf16.mxu0 0
    %2970 = vmatpush1.bf16.msra.mxu0 0
    %2971 = vmatprep.subr.bf16.mxu0 0
    %2972 = vmatpush1.bf16.msra.mxu0 0
    %2973 = vmatprep.subr.bf16.mxu0 0
    %2974 = vmatpush1.bf16.msra.mxu0 0
    %2975 = vmatprep.subr.bf16.mxu0 0
    %2976 = vmatpush1.bf16.msra.mxu0 0
    %2977 = vmatprep.subr.bf16.mxu0 0
    %2978 = vmatpush1.bf16.msra.mxu0 0
    %2979 = vmatprep.subr.bf16.mxu0 0
    %2980 = vmatpush1.bf16.msra.mxu0 0
    %2981 = vmatprep.subr.bf16.mxu0 0
    %2982 = vmatpush1.bf16.msra.mxu0 0
    %2983 = vmatprep.subr.bf16.mxu0 0
    %2984 = vmatpush1.bf16.msra.mxu0 0
    %2985 = vmatprep.subr.bf16.mxu0 0
    %2986 = vmatpush1.bf16.msra.mxu0 0
    %2987 = vmatprep.subr.bf16.mxu0 0
    %2988 = vmatpush1.bf16.msra.mxu0 0
    %2989 = vmatprep.mubr.bf16.mxu0 0
    %2990 = vmatmul.mubr.bf16.gmra.mrb[0].mxu0 %v2955
    %v2991 = vpop.f32.mrb[0].mxu0
    %v2992 = vadd.f32 0.0, %v2991
    %v2993 = vpop.f32.mrb[0].mxu0
    %v2994 = vpop.f32.mrb[0].mxu0
    %v2995 = vpop.f32.mrb[0].mxu0
    %2996 = vdwg.mxu0
    %v2997 = vadd.f32 %v2893, %v2992
    %s2998 = scalar_lea.vmem %s3, 68
    %v2999 = vld [vmem:[%s2998] sm:$0xf]
    %3000 = vmatprep.subr.bf16.mxu0 0
    %3001 = vmatpush1.bf16.msra.mxu0 %v1226
    %3002 = vmatprep.subr.bf16.mxu0 0
    %3003 = vmatpush1.bf16.msra.mxu0 %v1227
    %3004 = vmatprep.subr.bf16.mxu0 0
    %3005 = vmatpush1.bf16.msra.mxu0 %v1228
    %3006 = vmatprep.subr.bf16.mxu0 0
    %3007 = vmatpush1.bf16.msra.mxu0 %v1229
    %3008 = vmatprep.subr.bf16.mxu0 0
    %3009 = vmatpush1.bf16.msra.mxu0 %v1230
    %3010 = vmatprep.subr.bf16.mxu0 0
    %3011 = vmatpush1.bf16.msra.mxu0 %v1231
    %3012 = vmatprep.subr.bf16.mxu0 0
    %3013 = vmatpush1.bf16.msra.mxu0 %v1232
    %3014 = vmatprep.subr.bf16.mxu0 0
    %3015 = vmatpush1.bf16.msra.mxu0 %v1233
    %3016 = vmatprep.subr.bf16.mxu0 0
    %3017 = vmatpush1.bf16.msra.mxu0 0
    %3018 = vmatprep.subr.bf16.mxu0 0
    %3019 = vmatpush1.bf16.msra.mxu0 0
    %3020 = vmatprep.subr.bf16.mxu0 0
    %3021 = vmatpush1.bf16.msra.mxu0 0
    %3022 = vmatprep.subr.bf16.mxu0 0
    %3023 = vmatpush1.bf16.msra.mxu0 0
    %3024 = vmatprep.subr.bf16.mxu0 0
    %3025 = vmatpush1.bf16.msra.mxu0 0
    %3026 = vmatprep.subr.bf16.mxu0 0
    %3027 = vmatpush1.bf16.msra.mxu0 0
    %3028 = vmatprep.subr.bf16.mxu0 0
    %3029 = vmatpush1.bf16.msra.mxu0 0
    %3030 = vmatprep.subr.bf16.mxu0 0
    %3031 = vmatpush1.bf16.msra.mxu0 0
    %3032 = vmatprep.mubr.bf16.mxu0 0
    %3033 = vmatmul.mubr.bf16.gmra.mrb[0].mxu0 %v2999
    %v3034 = vpop.f32.mrb[0].mxu0
    %v3035 = vadd.f32 0.0, %v3034
    %v3036 = vpop.f32.mrb[0].mxu0
    %v3037 = vpop.f32.mrb[0].mxu0
    %v3038 = vpop.f32.mrb[0].mxu0
    %3039 = vdwg.mxu0
    %v3040 = vpack.c.bf16 %v3035, %v3035
    %s3041 = scalar_lea.vmem %s4, 272
    %v3042 = vld [vmem:[%s3041] sm:$0xf]
    %v3043 = vld [vmem:[%s3041 + $0x4] sm:$0xf]
    %v3044 = vld [vmem:[%s3041 + $0x8] sm:$0xf]
    %v3045 = vld [vmem:[%s3041 + $0xc] sm:$0xf]
    %v3050 = vunpack.c.l.b16 %v3042
    %v3051 = vunpack.c.l.b16 %v3043
    %v3052 = vunpack.c.l.b16 %v3044
    %v3053 = vunpack.c.l.b16 %v3045
    %v3054 = vpack.c.b16 %v3051, %v3050
    %v3055 = vpack.c.b16 %v3053, %v3052
    %v3059 = vsel %vm797, %v3040, 0
    %3061 = vmatprep.subr.bf16.mxu0 0
    %3062 = vmatpush1.bf16.msra.mxu0 %v3054
    %3063 = vmatprep.subr.bf16.mxu0 0
    %3064 = vmatpush1.bf16.msra.mxu0 %v3055
    %3065 = vmatprep.subr.bf16.mxu0 0
    %3066 = vmatpush1.bf16.msra.mxu0 0
    %3067 = vmatprep.subr.bf16.mxu0 0
    %3068 = vmatpush1.bf16.msra.mxu0 0
    %3069 = vmatprep.subr.bf16.mxu0 0
    %3070 = vmatpush1.bf16.msra.mxu0 0
    %3071 = vmatprep.subr.bf16.mxu0 0
    %3072 = vmatpush1.bf16.msra.mxu0 0
    %3073 = vmatprep.subr.bf16.mxu0 0
    %3074 = vmatpush1.bf16.msra.mxu0 0
    %3075 = vmatprep.subr.bf16.mxu0 0
    %3076 = vmatpush1.bf16.msra.mxu0 0
    %3077 = vmatprep.subr.bf16.mxu0 0
    %3078 = vmatpush1.bf16.msra.mxu0 0
    %3079 = vmatprep.subr.bf16.mxu0 0
    %3080 = vmatpush1.bf16.msra.mxu0 0
    %3081 = vmatprep.subr.bf16.mxu0 0
    %3082 = vmatpush1.bf16.msra.mxu0 0
    %3083 = vmatprep.subr.bf16.mxu0 0
    %3084 = vmatpush1.bf16.msra.mxu0 0
    %3085 = vmatprep.subr.bf16.mxu0 0
    %3086 = vmatpush1.bf16.msra.mxu0 0
    %3087 = vmatprep.subr.bf16.mxu0 0
    %3088 = vmatpush1.bf16.msra.mxu0 0
    %3089 = vmatprep.subr.bf16.mxu0 0
    %3090 = vmatpush1.bf16.msra.mxu0 0
    %3091 = vmatprep.subr.bf16.mxu0 0
    %3092 = vmatpush1.bf16.msra.mxu0 0
    %3093 = vmatprep.mubr.bf16.mxu0 0
    %3094 = vmatmul.mubr.bf16.gmra.mrb[0].mxu0 %v3059
    %v3095 = vpop.f32.mrb[0].mxu0
    %v3096 = vadd.f32 0.0, %v3095
    %v3097 = vpop.f32.mrb[0].mxu0
    %v3098 = vpop.f32.mrb[0].mxu0
    %v3099 = vpop.f32.mrb[0].mxu0
    %3100 = vdwg.mxu0
    %v3101 = vadd.f32 %v2997, %v3096
    %s3102 = scalar_lea.vmem %s3, 72
    %v3103 = vld [vmem:[%s3102] sm:$0xf]
    %3104 = vmatprep.subr.bf16.mxu0 0
    %3105 = vmatpush1.bf16.msra.mxu0 %v1226
    %3106 = vmatprep.subr.bf16.mxu0 0
    %3107 = vmatpush1.bf16.msra.mxu0 %v1227
    %3108 = vmatprep.subr.bf16.mxu0 0
    %3109 = vmatpush1.bf16.msra.mxu0 %v1228
    %3110 = vmatprep.subr.bf16.mxu0 0
    %3111 = vmatpush1.bf16.msra.mxu0 %v1229
    %3112 = vmatprep.subr.bf16.mxu0 0
    %3113 = vmatpush1.bf16.msra.mxu0 %v1230
    %3114 = vmatprep.subr.bf16.mxu0 0
    %3115 = vmatpush1.bf16.msra.mxu0 %v1231
    %3116 = vmatprep.subr.bf16.mxu0 0
    %3117 = vmatpush1.bf16.msra.mxu0 %v1232
    %3118 = vmatprep.subr.bf16.mxu0 0
    %3119 = vmatpush1.bf16.msra.mxu0 %v1233
    %3120 = vmatprep.subr.bf16.mxu0 0
    %3121 = vmatpush1.bf16.msra.mxu0 0
    %3122 = vmatprep.subr.bf16.mxu0 0
    %3123 = vmatpush1.bf16.msra.mxu0 0
    %3124 = vmatprep.subr.bf16.mxu0 0
    %3125 = vmatpush1.bf16.msra.mxu0 0
    %3126 = vmatprep.subr.bf16.mxu0 0
    %3127 = vmatpush1.bf16.msra.mxu0 0
    %3128 = vmatprep.subr.bf16.mxu0 0
    %3129 = vmatpush1.bf16.msra.mxu0 0
    %3130 = vmatprep.subr.bf16.mxu0 0
    %3131 = vmatpush1.bf16.msra.mxu0 0
    %3132 = vmatprep.subr.bf16.mxu0 0
    %3133 = vmatpush1.bf16.msra.mxu0 0
    %3134 = vmatprep.subr.bf16.mxu0 0
    %3135 = vmatpush1.bf16.msra.mxu0 0
    %3136 = vmatprep.mubr.bf16.mxu0 0
    %3137 = vmatmul.mubr.bf16.gmra.mrb[0].mxu0 %v3103
    %v3138 = vpop.f32.mrb[0].mxu0
    %v3139 = vadd.f32 0.0, %v3138
    %v3140 = vpop.f32.mrb[0].mxu0
    %v3141 = vpop.f32.mrb[0].mxu0
    %v3142 = vpop.f32.mrb[0].mxu0
    %3143 = vdwg.mxu0
    %v3144 = vpack.c.bf16 %v3139, %v3139
    %s3145 = scalar_lea.vmem %s4, 288
    %v3146 = vld [vmem:[%s3145] sm:$0xf]
    %v3147 = vld [vmem:[%s3145 + $0x4] sm:$0xf]
    %v3148 = vld [vmem:[%s3145 + $0x8] sm:$0xf]
    %v3149 = vld [vmem:[%s3145 + $0xc] sm:$0xf]
    %v3154 = vunpack.c.l.b16 %v3146
    %v3155 = vunpack.c.l.b16 %v3147
    %v3156 = vunpack.c.l.b16 %v3148
    %v3157 = vunpack.c.l.b16 %v3149
    %v3158 = vpack.c.b16 %v3155, %v3154
    %v3159 = vpack.c.b16 %v3157, %v3156
    %v3163 = vsel %vm797, %v3144, 0
    %3165 = vmatprep.subr.bf16.mxu0 0
    %3166 = vmatpush1.bf16.msra.mxu0 %v3158
    %3167 = vmatprep.subr.bf16.mxu0 0
    %3168 = vmatpush1.bf16.msra.mxu0 %v3159
    %3169 = vmatprep.subr.bf16.mxu0 0
    %3170 = vmatpush1.bf16.msra.mxu0 0
    %3171 = vmatprep.subr.bf16.mxu0 0
    %3172 = vmatpush1.bf16.msra.mxu0 0
    %3173 = vmatprep.subr.bf16.mxu0 0
    %3174 = vmatpush1.bf16.msra.mxu0 0
    %3175 = vmatprep.subr.bf16.mxu0 0
    %3176 = vmatpush1.bf16.msra.mxu0 0
    %3177 = vmatprep.subr.bf16.mxu0 0
    %3178 = vmatpush1.bf16.msra.mxu0 0
    %3179 = vmatprep.subr.bf16.mxu0 0
    %3180 = vmatpush1.bf16.msra.mxu0 0
    %3181 = vmatprep.subr.bf16.mxu0 0
    %3182 = vmatpush1.bf16.msra.mxu0 0
    %3183 = vmatprep.subr.bf16.mxu0 0
    %3184 = vmatpush1.bf16.msra.mxu0 0
    %3185 = vmatprep.subr.bf16.mxu0 0
    %3186 = vmatpush1.bf16.msra.mxu0 0
    %3187 = vmatprep.subr.bf16.mxu0 0
    %3188 = vmatpush1.bf16.msra.mxu0 0
    %3189 = vmatprep.subr.bf16.mxu0 0
    %3190 = vmatpush1.bf16.msra.mxu0 0
    %3191 = vmatprep.subr.bf16.mxu0 0
    %3192 = vmatpush1.bf16.msra.mxu0 0
    %3193 = vmatprep.subr.bf16.mxu0 0
    %3194 = vmatpush1.bf16.msra.mxu0 0
    %3195 = vmatprep.subr.bf16.mxu0 0
    %3196 = vmatpush1.bf16.msra.mxu0 0
    %3197 = vmatprep.mubr.bf16.mxu0 0
    %3198 = vmatmul.mubr.bf16.gmra.mrb[0].mxu0 %v3163
    %v3199 = vpop.f32.mrb[0].mxu0
    %v3200 = vadd.f32 0.0, %v3199
    %v3201 = vpop.f32.mrb[0].mxu0
    %v3202 = vpop.f32.mrb[0].mxu0
    %v3203 = vpop.f32.mrb[0].mxu0
    %3204 = vdwg.mxu0
    %v3205 = vadd.f32 %v3101, %v3200
    %s3206 = scalar_lea.vmem %s3, 76
    %v3207 = vld [vmem:[%s3206] sm:$0xf]
    %3208 = vmatprep.subr.bf16.mxu0 0
    %3209 = vmatpush1.bf16.msra.mxu0 %v1226
    %3210 = vmatprep.subr.bf16.mxu0 0
    %3211 = vmatpush1.bf16.msra.mxu0 %v1227
    %3212 = vmatprep.subr.bf16.mxu0 0
    %3213 = vmatpush1.bf16.msra.mxu0 %v1228
    %3214 = vmatprep.subr.bf16.mxu0 0
    %3215 = vmatpush1.bf16.msra.mxu0 %v1229
    %3216 = vmatprep.subr.bf16.mxu0 0
    %3217 = vmatpush1.bf16.msra.mxu0 %v1230
    %3218 = vmatprep.subr.bf16.mxu0 0
    %3219 = vmatpush1.bf16.msra.mxu0 %v1231
    %3220 = vmatprep.subr.bf16.mxu0 0
    %3221 = vmatpush1.bf16.msra.mxu0 %v1232
    %3222 = vmatprep.subr.bf16.mxu0 0
    %3223 = vmatpush1.bf16.msra.mxu0 %v1233
    %3224 = vmatprep.subr.bf16.mxu0 0
    %3225 = vmatpush1.bf16.msra.mxu0 0
    %3226 = vmatprep.subr.bf16.mxu0 0
    %3227 = vmatpush1.bf16.msra.mxu0 0
    %3228 = vmatprep.subr.bf16.mxu0 0
    %3229 = vmatpush1.bf16.msra.mxu0 0
    %3230 = vmatprep.subr.bf16.mxu0 0
    %3231 = vmatpush1.bf16.msra.mxu0 0
    %3232 = vmatprep.subr.bf16.mxu0 0
    %3233 = vmatpush1.bf16.msra.mxu0 0
    %3234 = vmatprep.subr.bf16.mxu0 0
    %3235 = vmatpush1.bf16.msra.mxu0 0
    %3236 = vmatprep.subr.bf16.mxu0 0
    %3237 = vmatpush1.bf16.msra.mxu0 0
    %3238 = vmatprep.subr.bf16.mxu0 0
    %3239 = vmatpush1.bf16.msra.mxu0 0
    %3240 = vmatprep.mubr.bf16.mxu0 0
    %3241 = vmatmul.mubr.bf16.gmra.mrb[0].mxu0 %v3207
    %v3242 = vpop.f32.mrb[0].mxu0
    %v3243 = vadd.f32 0.0, %v3242
    %v3244 = vpop.f32.mrb[0].mxu0
    %v3245 = vpop.f32.mrb[0].mxu0
    %v3246 = vpop.f32.mrb[0].mxu0
    %3247 = vdwg.mxu0
    %v3248 = vpack.c.bf16 %v3243, %v3243
    %s3249 = scalar_lea.vmem %s4, 304
    %v3250 = vld [vmem:[%s3249] sm:$0xf]
    %v3251 = vld [vmem:[%s3249 + $0x4] sm:$0xf]
    %v3252 = vld [vmem:[%s3249 + $0x8] sm:$0xf]
    %v3253 = vld [vmem:[%s3249 + $0xc] sm:$0xf]
    %v3258 = vunpack.c.l.b16 %v3250
    %v3259 = vunpack.c.l.b16 %v3251
    %v3260 = vunpack.c.l.b16 %v3252
    %v3261 = vunpack.c.l.b16 %v3253
    %v3262 = vpack.c.b16 %v3259, %v3258
    %v3263 = vpack.c.b16 %v3261, %v3260
    %v3267 = vsel %vm797, %v3248, 0
    %3269 = vmatprep.subr.bf16.mxu0 0
    %3270 = vmatpush1.bf16.msra.mxu0 %v3262
    %3271 = vmatprep.subr.bf16.mxu0 0
    %3272 = vmatpush1.bf16.msra.mxu0 %v3263
    %3273 = vmatprep.subr.bf16.mxu0 0
    %3274 = vmatpush1.bf16.msra.mxu0 0
    %3275 = vmatprep.subr.bf16.mxu0 0
    %3276 = vmatpush1.bf16.msra.mxu0 0
    %3277 = vmatprep.subr.bf16.mxu0 0
    %3278 = vmatpush1.bf16.msra.mxu0 0
    %3279 = vmatprep.subr.bf16.mxu0 0
    %3280 = vmatpush1.bf16.msra.mxu0 0
    %3281 = vmatprep.subr.bf16.mxu0 0
    %3282 = vmatpush1.bf16.msra.mxu0 0
    %3283 = vmatprep.subr.bf16.mxu0 0
    %3284 = vmatpush1.bf16.msra.mxu0 0
    %3285 = vmatprep.subr.bf16.mxu0 0
    %3286 = vmatpush1.bf16.msra.mxu0 0
    %3287 = vmatprep.subr.bf16.mxu0 0
    %3288 = vmatpush1.bf16.msra.mxu0 0
    %3289 = vmatprep.subr.bf16.mxu0 0
    %3290 = vmatpush1.bf16.msra.mxu0 0
    %3291 = vmatprep.subr.bf16.mxu0 0
    %3292 = vmatpush1.bf16.msra.mxu0 0
    %3293 = vmatprep.subr.bf16.mxu0 0
    %3294 = vmatpush1.bf16.msra.mxu0 0
    %3295 = vmatprep.subr.bf16.mxu0 0
    %3296 = vmatpush1.bf16.msra.mxu0 0
    %3297 = vmatprep.subr.bf16.mxu0 0
    %3298 = vmatpush1.bf16.msra.mxu0 0
    %3299 = vmatprep.subr.bf16.mxu0 0
    %3300 = vmatpush1.bf16.msra.mxu0 0
    %3301 = vmatprep.mubr.bf16.mxu0 0
    %3302 = vmatmul.mubr.bf16.gmra.mrb[0].mxu0 %v3267
    %v3303 = vpop.f32.mrb[0].mxu0
    %v3304 = vadd.f32 0.0, %v3303
    %v3305 = vpop.f32.mrb[0].mxu0
    %v3306 = vpop.f32.mrb[0].mxu0
    %v3307 = vpop.f32.mrb[0].mxu0
    %3308 = vdwg.mxu0
    %v3309 = vadd.f32 %v3205, %v3304
    %s3310 = scalar_lea.vmem %s3, 80
    %v3311 = vld [vmem:[%s3310] sm:$0xf]
    %3312 = vmatprep.subr.bf16.mxu0 0
    %3313 = vmatpush1.bf16.msra.mxu0 %v1226
    %3314 = vmatprep.subr.bf16.mxu0 0
    %3315 = vmatpush1.bf16.msra.mxu0 %v1227
    %3316 = vmatprep.subr.bf16.mxu0 0
    %3317 = vmatpush1.bf16.msra.mxu0 %v1228
    %3318 = vmatprep.subr.bf16.mxu0 0
    %3319 = vmatpush1.bf16.msra.mxu0 %v1229
    %3320 = vmatprep.subr.bf16.mxu0 0
    %3321 = vmatpush1.bf16.msra.mxu0 %v1230
    %3322 = vmatprep.subr.bf16.mxu0 0
    %3323 = vmatpush1.bf16.msra.mxu0 %v1231
    %3324 = vmatprep.subr.bf16.mxu0 0
    %3325 = vmatpush1.bf16.msra.mxu0 %v1232
    %3326 = vmatprep.subr.bf16.mxu0 0
    %3327 = vmatpush1.bf16.msra.mxu0 %v1233
    %3328 = vmatprep.subr.bf16.mxu0 0
    %3329 = vmatpush1.bf16.msra.mxu0 0
    %3330 = vmatprep.subr.bf16.mxu0 0
    %3331 = vmatpush1.bf16.msra.mxu0 0
    %3332 = vmatprep.subr.bf16.mxu0 0
    %3333 = vmatpush1.bf16.msra.mxu0 0
    %3334 = vmatprep.subr.bf16.mxu0 0
    %3335 = vmatpush1.bf16.msra.mxu0 0
    %3336 = vmatprep.subr.bf16.mxu0 0
    %3337 = vmatpush1.bf16.msra.mxu0 0
    %3338 = vmatprep.subr.bf16.mxu0 0
    %3339 = vmatpush1.bf16.msra.mxu0 0
    %3340 = vmatprep.subr.bf16.mxu0 0
    %3341 = vmatpush1.bf16.msra.mxu0 0
    %3342 = vmatprep.subr.bf16.mxu0 0
    %3343 = vmatpush1.bf16.msra.mxu0 0
    %3344 = vmatprep.mubr.bf16.mxu0 0
    %3345 = vmatmul.mubr.bf16.gmra.mrb[0].mxu0 %v3311
    %v3346 = vpop.f32.mrb[0].mxu0
    %v3347 = vadd.f32 0.0, %v3346
    %v3348 = vpop.f32.mrb[0].mxu0
    %v3349 = vpop.f32.mrb[0].mxu0
    %v3350 = vpop.f32.mrb[0].mxu0
    %3351 = vdwg.mxu0
    %v3352 = vpack.c.bf16 %v3347, %v3347
    %s3353 = scalar_lea.vmem %s4, 320
    %v3354 = vld [vmem:[%s3353] sm:$0xf]
    %v3355 = vld [vmem:[%s3353 + $0x4] sm:$0xf]
    %v3356 = vld [vmem:[%s3353 + $0x8] sm:$0xf]
    %v3357 = vld [vmem:[%s3353 + $0xc] sm:$0xf]
    %v3362 = vunpack.c.l.b16 %v3354
    %v3363 = vunpack.c.l.b16 %v3355
    %v3364 = vunpack.c.l.b16 %v3356
    %v3365 = vunpack.c.l.b16 %v3357
    %v3366 = vpack.c.b16 %v3363, %v3362
    %v3367 = vpack.c.b16 %v3365, %v3364
    %v3371 = vsel %vm797, %v3352, 0
    %3373 = vmatprep.subr.bf16.mxu0 0
    %3374 = vmatpush1.bf16.msra.mxu0 %v3366
    %3375 = vmatprep.subr.bf16.mxu0 0
    %3376 = vmatpush1.bf16.msra.mxu0 %v3367
    %3377 = vmatprep.subr.bf16.mxu0 0
    %3378 = vmatpush1.bf16.msra.mxu0 0
    %3379 = vmatprep.subr.bf16.mxu0 0
    %3380 = vmatpush1.bf16.msra.mxu0 0
    %3381 = vmatprep.subr.bf16.mxu0 0
    %3382 = vmatpush1.bf16.msra.mxu0 0
    %3383 = vmatprep.subr.bf16.mxu0 0
    %3384 = vmatpush1.bf16.msra.mxu0 0
    %3385 = vmatprep.subr.bf16.mxu0 0
    %3386 = vmatpush1.bf16.msra.mxu0 0
    %3387 = vmatprep.subr.bf16.mxu0 0
    %3388 = vmatpush1.bf16.msra.mxu0 0
    %3389 = vmatprep.subr.bf16.mxu0 0
    %3390 = vmatpush1.bf16.msra.mxu0 0
    %3391 = vmatprep.subr.bf16.mxu0 0
    %3392 = vmatpush1.bf16.msra.mxu0 0
    %3393 = vmatprep.subr.bf16.mxu0 0
    %3394 = vmatpush1.bf16.msra.mxu0 0
    %3395 = vmatprep.subr.bf16.mxu0 0
    %3396 = vmatpush1.bf16.msra.mxu0 0
    %3397 = vmatprep.subr.bf16.mxu0 0
    %3398 = vmatpush1.bf16.msra.mxu0 0
    %3399 = vmatprep.subr.bf16.mxu0 0
    %3400 = vmatpush1.bf16.msra.mxu0 0
    %3401 = vmatprep.subr.bf16.mxu0 0
    %3402 = vmatpush1.bf16.msra.mxu0 0
    %3403 = vmatprep.subr.bf16.mxu0 0
    %3404 = vmatpush1.bf16.msra.mxu0 0
    %3405 = vmatprep.mubr.bf16.mxu0 0
    %3406 = vmatmul.mubr.bf16.gmra.mrb[0].mxu0 %v3371
    %v3407 = vpop.f32.mrb[0].mxu0
    %v3408 = vadd.f32 0.0, %v3407
    %v3409 = vpop.f32.mrb[0].mxu0
    %v3410 = vpop.f32.mrb[0].mxu0
    %v3411 = vpop.f32.mrb[0].mxu0
    %3412 = vdwg.mxu0
    %v3413 = vadd.f32 %v3309, %v3408
    %s3414 = scalar_lea.vmem %s3, 84
    %v3415 = vld [vmem:[%s3414] sm:$0xf]
    %3416 = vmatprep.subr.bf16.mxu0 0
    %3417 = vmatpush1.bf16.msra.mxu0 %v1226
    %3418 = vmatprep.subr.bf16.mxu0 0
    %3419 = vmatpush1.bf16.msra.mxu0 %v1227
    %3420 = vmatprep.subr.bf16.mxu0 0
    %3421 = vmatpush1.bf16.msra.mxu0 %v1228
    %3422 = vmatprep.subr.bf16.mxu0 0
    %3423 = vmatpush1.bf16.msra.mxu0 %v1229
    %3424 = vmatprep.subr.bf16.mxu0 0
    %3425 = vmatpush1.bf16.msra.mxu0 %v1230
    %3426 = vmatprep.subr.bf16.mxu0 0
    %3427 = vmatpush1.bf16.msra.mxu0 %v1231
    %3428 = vmatprep.subr.bf16.mxu0 0
    %3429 = vmatpush1.bf16.msra.mxu0 %v1232
    %3430 = vmatprep.subr.bf16.mxu0 0
    %3431 = vmatpush1.bf16.msra.mxu0 %v1233
    %3432 = vmatprep.subr.bf16.mxu0 0
    %3433 = vmatpush1.bf16.msra.mxu0 0
    %3434 = vmatprep.subr.bf16.mxu0 0
    %3435 = vmatpush1.bf16.msra.mxu0 0
    %3436 = vmatprep.subr.bf16.mxu0 0
    %3437 = vmatpush1.bf16.msra.mxu0 0
    %3438 = vmatprep.subr.bf16.mxu0 0
    %3439 = vmatpush1.bf16.msra.mxu0 0
    %3440 = vmatprep.subr.bf16.mxu0 0
    %3441 = vmatpush1.bf16.msra.mxu0 0
    %3442 = vmatprep.subr.bf16.mxu0 0
    %3443 = vmatpush1.bf16.msra.mxu0 0
    %3444 = vmatprep.subr.bf16.mxu0 0
    %3445 = vmatpush1.bf16.msra.mxu0 0
    %3446 = vmatprep.subr.bf16.mxu0 0
    %3447 = vmatpush1.bf16.msra.mxu0 0
    %3448 = vmatprep.mubr.bf16.mxu0 0
    %3449 = vmatmul.mubr.bf16.gmra.mrb[0].mxu0 %v3415
    %v3450 = vpop.f32.mrb[0].mxu0
    %v3451 = vadd.f32 0.0, %v3450
    %v3452 = vpop.f32.mrb[0].mxu0
    %v3453 = vpop.f32.mrb[0].mxu0
    %v3454 = vpop.f32.mrb[0].mxu0
    %3455 = vdwg.mxu0
    %v3456 = vpack.c.bf16 %v3451, %v3451
    %s3457 = scalar_lea.vmem %s4, 336
    %v3458 = vld [vmem:[%s3457] sm:$0xf]
    %v3459 = vld [vmem:[%s3457 + $0x4] sm:$0xf]
    %v3460 = vld [vmem:[%s3457 + $0x8] sm:$0xf]
    %v3461 = vld [vmem:[%s3457 + $0xc] sm:$0xf]
    %v3466 = vunpack.c.l.b16 %v3458
    %v3467 = vunpack.c.l.b16 %v3459
    %v3468 = vunpack.c.l.b16 %v3460
    %v3469 = vunpack.c.l.b16 %v3461
    %v3470 = vpack.c.b16 %v3467, %v3466
    %v3471 = vpack.c.b16 %v3469, %v3468
    %v3475 = vsel %vm797, %v3456, 0
    %3477 = vmatprep.subr.bf16.mxu0 0
    %3478 = vmatpush1.bf16.msra.mxu0 %v3470
    %3479 = vmatprep.subr.bf16.mxu0 0
    %3480 = vmatpush1.bf16.msra.mxu0 %v3471
    %3481 = vmatprep.subr.bf16.mxu0 0
    %3482 = vmatpush1.bf16.msra.mxu0 0
    %3483 = vmatprep.subr.bf16.mxu0 0
    %3484 = vmatpush1.bf16.msra.mxu0 0
    %3485 = vmatprep.subr.bf16.mxu0 0
    %3486 = vmatpush1.bf16.msra.mxu0 0
    %3487 = vmatprep.subr.bf16.mxu0 0
    %3488 = vmatpush1.bf16.msra.mxu0 0
    %3489 = vmatprep.subr.bf16.mxu0 0
    %3490 = vmatpush1.bf16.msra.mxu0 0
    %3491 = vmatprep.subr.bf16.mxu0 0
    %3492 = vmatpush1.bf16.msra.mxu0 0
    %3493 = vmatprep.subr.bf16.mxu0 0
    %3494 = vmatpush1.bf16.msra.mxu0 0
    %3495 = vmatprep.subr.bf16.mxu0 0
    %3496 = vmatpush1.bf16.msra.mxu0 0
    %3497 = vmatprep.subr.bf16.mxu0 0
    %3498 = vmatpush1.bf16.msra.mxu0 0
    %3499 = vmatprep.subr.bf16.mxu0 0
    %3500 = vmatpush1.bf16.msra.mxu0 0
    %3501 = vmatprep.subr.bf16.mxu0 0
    %3502 = vmatpush1.bf16.msra.mxu0 0
    %3503 = vmatprep.subr.bf16.mxu0 0
    %3504 = vmatpush1.bf16.msra.mxu0 0
    %3505 = vmatprep.subr.bf16.mxu0 0
    %3506 = vmatpush1.bf16.msra.mxu0 0
    %3507 = vmatprep.subr.bf16.mxu0 0
    %3508 = vmatpush1.bf16.msra.mxu0 0
    %3509 = vmatprep.mubr.bf16.mxu0 0
    %3510 = vmatmul.mubr.bf16.gmra.mrb[0].mxu0 %v3475
    %v3511 = vpop.f32.mrb[0].mxu0
    %v3512 = vadd.f32 0.0, %v3511
    %v3513 = vpop.f32.mrb[0].mxu0
    %v3514 = vpop.f32.mrb[0].mxu0
    %v3515 = vpop.f32.mrb[0].mxu0
    %3516 = vdwg.mxu0
    %v3517 = vadd.f32 %v3413, %v3512
    %s3518 = scalar_lea.vmem %s3, 88
    %v3519 = vld [vmem:[%s3518] sm:$0xf]
    %3520 = vmatprep.subr.bf16.mxu0 0
    %3521 = vmatpush1.bf16.msra.mxu0 %v1226
    %3522 = vmatprep.subr.bf16.mxu0 0
    %3523 = vmatpush1.bf16.msra.mxu0 %v1227
    %3524 = vmatprep.subr.bf16.mxu0 0
    %3525 = vmatpush1.bf16.msra.mxu0 %v1228
    %3526 = vmatprep.subr.bf16.mxu0 0
    %3527 = vmatpush1.bf16.msra.mxu0 %v1229
    %3528 = vmatprep.subr.bf16.mxu0 0
    %3529 = vmatpush1.bf16.msra.mxu0 %v1230
    %3530 = vmatprep.subr.bf16.mxu0 0
    %3531 = vmatpush1.bf16.msra.mxu0 %v1231
    %3532 = vmatprep.subr.bf16.mxu0 0
    %3533 = vmatpush1.bf16.msra.mxu0 %v1232
    %3534 = vmatprep.subr.bf16.mxu0 0
    %3535 = vmatpush1.bf16.msra.mxu0 %v1233
    %3536 = vmatprep.subr.bf16.mxu0 0
    %3537 = vmatpush1.bf16.msra.mxu0 0
    %3538 = vmatprep.subr.bf16.mxu0 0
    %3539 = vmatpush1.bf16.msra.mxu0 0
    %3540 = vmatprep.subr.bf16.mxu0 0
    %3541 = vmatpush1.bf16.msra.mxu0 0
    %3542 = vmatprep.subr.bf16.mxu0 0
    %3543 = vmatpush1.bf16.msra.mxu0 0
    %3544 = vmatprep.subr.bf16.mxu0 0
    %3545 = vmatpush1.bf16.msra.mxu0 0
    %3546 = vmatprep.subr.bf16.mxu0 0
    %3547 = vmatpush1.bf16.msra.mxu0 0
    %3548 = vmatprep.subr.bf16.mxu0 0
    %3549 = vmatpush1.bf16.msra.mxu0 0
    %3550 = vmatprep.subr.bf16.mxu0 0
    %3551 = vmatpush1.bf16.msra.mxu0 0
    %3552 = vmatprep.mubr.bf16.mxu0 0
    %3553 = vmatmul.mubr.bf16.gmra.mrb[0].mxu0 %v3519
    %v3554 = vpop.f32.mrb[0].mxu0
    %v3555 = vadd.f32 0.0, %v3554
    %v3556 = vpop.f32.mrb[0].mxu0
    %v3557 = vpop.f32.mrb[0].mxu0
    %v3558 = vpop.f32.mrb[0].mxu0
    %3559 = vdwg.mxu0
    %v3560 = vpack.c.bf16 %v3555, %v3555
    %s3561 = scalar_lea.vmem %s4, 352
    %v3562 = vld [vmem:[%s3561] sm:$0xf]
    %v3563 = vld [vmem:[%s3561 + $0x4] sm:$0xf]
    %v3564 = vld [vmem:[%s3561 + $0x8] sm:$0xf]
    %v3565 = vld [vmem:[%s3561 + $0xc] sm:$0xf]
    %v3570 = vunpack.c.l.b16 %v3562
    %v3571 = vunpack.c.l.b16 %v3563
    %v3572 = vunpack.c.l.b16 %v3564
    %v3573 = vunpack.c.l.b16 %v3565
    %v3574 = vpack.c.b16 %v3571, %v3570
    %v3575 = vpack.c.b16 %v3573, %v3572
    %v3579 = vsel %vm797, %v3560, 0
    %3581 = vmatprep.subr.bf16.mxu0 0
    %3582 = vmatpush1.bf16.msra.mxu0 %v3574
    %3583 = vmatprep.subr.bf16.mxu0 0
    %3584 = vmatpush1.bf16.msra.mxu0 %v3575
    %3585 = vmatprep.subr.bf16.mxu0 0
    %3586 = vmatpush1.bf16.msra.mxu0 0
    %3587 = vmatprep.subr.bf16.mxu0 0
    %3588 = vmatpush1.bf16.msra.mxu0 0
    %3589 = vmatprep.subr.bf16.mxu0 0
    %3590 = vmatpush1.bf16.msra.mxu0 0
    %3591 = vmatprep.subr.bf16.mxu0 0
    %3592 = vmatpush1.bf16.msra.mxu0 0
    %3593 = vmatprep.subr.bf16.mxu0 0
    %3594 = vmatpush1.bf16.msra.mxu0 0
    %3595 = vmatprep.subr.bf16.mxu0 0
    %3596 = vmatpush1.bf16.msra.mxu0 0
    %3597 = vmatprep.subr.bf16.mxu0 0
    %3598 = vmatpush1.bf16.msra.mxu0 0
    %3599 = vmatprep.subr.bf16.mxu0 0
    %3600 = vmatpush1.bf16.msra.mxu0 0
    %3601 = vmatprep.subr.bf16.mxu0 0
    %3602 = vmatpush1.bf16.msra.mxu0 0
    %3603 = vmatprep.subr.bf16.mxu0 0
    %3604 = vmatpush1.bf16.msra.mxu0 0
    %3605 = vmatprep.subr.bf16.mxu0 0
    %3606 = vmatpush1.bf16.msra.mxu0 0
    %3607 = vmatprep.subr.bf16.mxu0 0
    %3608 = vmatpush1.bf16.msra.mxu0 0
    %3609 = vmatprep.subr.bf16.mxu0 0
    %3610 = vmatpush1.bf16.msra.mxu0 0
    %3611 = vmatprep.subr.bf16.mxu0 0
    %3612 = vmatpush1.bf16.msra.mxu0 0
    %3613 = vmatprep.mubr.bf16.mxu0 0
    %3614 = vmatmul.mubr.bf16.gmra.mrb[0].mxu0 %v3579
    %v3615 = vpop.f32.mrb[0].mxu0
    %v3616 = vadd.f32 0.0, %v3615
    %v3617 = vpop.f32.mrb[0].mxu0
    %v3618 = vpop.f32.mrb[0].mxu0
    %v3619 = vpop.f32.mrb[0].mxu0
    %3620 = vdwg.mxu0
    %v3621 = vadd.f32 %v3517, %v3616
    %s3622 = scalar_lea.vmem %s3, 92
    %v3623 = vld [vmem:[%s3622] sm:$0xf]
    %3624 = vmatprep.subr.bf16.mxu0 0
    %3625 = vmatpush1.bf16.msra.mxu0 %v1226
    %3626 = vmatprep.subr.bf16.mxu0 0
    %3627 = vmatpush1.bf16.msra.mxu0 %v1227
    %3628 = vmatprep.subr.bf16.mxu0 0
    %3629 = vmatpush1.bf16.msra.mxu0 %v1228
    %3630 = vmatprep.subr.bf16.mxu0 0
    %3631 = vmatpush1.bf16.msra.mxu0 %v1229
    %3632 = vmatprep.subr.bf16.mxu0 0
    %3633 = vmatpush1.bf16.msra.mxu0 %v1230
    %3634 = vmatprep.subr.bf16.mxu0 0
    %3635 = vmatpush1.bf16.msra.mxu0 %v1231
    %3636 = vmatprep.subr.bf16.mxu0 0
    %3637 = vmatpush1.bf16.msra.mxu0 %v1232
    %3638 = vmatprep.subr.bf16.mxu0 0
    %3639 = vmatpush1.bf16.msra.mxu0 %v1233
    %3640 = vmatprep.subr.bf16.mxu0 0
    %3641 = vmatpush1.bf16.msra.mxu0 0
    %3642 = vmatprep.subr.bf16.mxu0 0
    %3643 = vmatpush1.bf16.msra.mxu0 0
    %3644 = vmatprep.subr.bf16.mxu0 0
    %3645 = vmatpush1.bf16.msra.mxu0 0
    %3646 = vmatprep.subr.bf16.mxu0 0
    %3647 = vmatpush1.bf16.msra.mxu0 0
    %3648 = vmatprep.subr.bf16.mxu0 0
    %3649 = vmatpush1.bf16.msra.mxu0 0
    %3650 = vmatprep.subr.bf16.mxu0 0
    %3651 = vmatpush1.bf16.msra.mxu0 0
    %3652 = vmatprep.subr.bf16.mxu0 0
    %3653 = vmatpush1.bf16.msra.mxu0 0
    %3654 = vmatprep.subr.bf16.mxu0 0
    %3655 = vmatpush1.bf16.msra.mxu0 0
    %3656 = vmatprep.mubr.bf16.mxu0 0
    %3657 = vmatmul.mubr.bf16.gmra.mrb[0].mxu0 %v3623
    %v3658 = vpop.f32.mrb[0].mxu0
    %v3659 = vadd.f32 0.0, %v3658
    %v3660 = vpop.f32.mrb[0].mxu0
    %v3661 = vpop.f32.mrb[0].mxu0
    %v3662 = vpop.f32.mrb[0].mxu0
    %3663 = vdwg.mxu0
    %v3664 = vpack.c.bf16 %v3659, %v3659
    %s3665 = scalar_lea.vmem %s4, 368
    %v3666 = vld [vmem:[%s3665] sm:$0xf]
    %v3667 = vld [vmem:[%s3665 + $0x4] sm:$0xf]
    %v3668 = vld [vmem:[%s3665 + $0x8] sm:$0xf]
    %v3669 = vld [vmem:[%s3665 + $0xc] sm:$0xf]
    %v3674 = vunpack.c.l.b16 %v3666
    %v3675 = vunpack.c.l.b16 %v3667
    %v3676 = vunpack.c.l.b16 %v3668
    %v3677 = vunpack.c.l.b16 %v3669
    %v3678 = vpack.c.b16 %v3675, %v3674
    %v3679 = vpack.c.b16 %v3677, %v3676
    %v3683 = vsel %vm797, %v3664, 0
    %3685 = vmatprep.subr.bf16.mxu0 0
    %3686 = vmatpush1.bf16.msra.mxu0 %v3678
    %3687 = vmatprep.subr.bf16.mxu0 0
    %3688 = vmatpush1.bf16.msra.mxu0 %v3679
    %3689 = vmatprep.subr.bf16.mxu0 0
    %3690 = vmatpush1.bf16.msra.mxu0 0
    %3691 = vmatprep.subr.bf16.mxu0 0
    %3692 = vmatpush1.bf16.msra.mxu0 0
    %3693 = vmatprep.subr.bf16.mxu0 0
    %3694 = vmatpush1.bf16.msra.mxu0 0
    %3695 = vmatprep.subr.bf16.mxu0 0
    %3696 = vmatpush1.bf16.msra.mxu0 0
    %3697 = vmatprep.subr.bf16.mxu0 0
    %3698 = vmatpush1.bf16.msra.mxu0 0
    %3699 = vmatprep.subr.bf16.mxu0 0
    %3700 = vmatpush1.bf16.msra.mxu0 0
    %3701 = vmatprep.subr.bf16.mxu0 0
    %3702 = vmatpush1.bf16.msra.mxu0 0
    %3703 = vmatprep.subr.bf16.mxu0 0
    %3704 = vmatpush1.bf16.msra.mxu0 0
    %3705 = vmatprep.subr.bf16.mxu0 0
    %3706 = vmatpush1.bf16.msra.mxu0 0
    %3707 = vmatprep.subr.bf16.mxu0 0
    %3708 = vmatpush1.bf16.msra.mxu0 0
    %3709 = vmatprep.subr.bf16.mxu0 0
    %3710 = vmatpush1.bf16.msra.mxu0 0
    %3711 = vmatprep.subr.bf16.mxu0 0
    %3712 = vmatpush1.bf16.msra.mxu0 0
    %3713 = vmatprep.subr.bf16.mxu0 0
    %3714 = vmatpush1.bf16.msra.mxu0 0
    %3715 = vmatprep.subr.bf16.mxu0 0
    %3716 = vmatpush1.bf16.msra.mxu0 0
    %3717 = vmatprep.mubr.bf16.mxu0 0
    %3718 = vmatmul.mubr.bf16.gmra.mrb[0].mxu0 %v3683
    %v3719 = vpop.f32.mrb[0].mxu0
    %v3720 = vadd.f32 0.0, %v3719
    %v3721 = vpop.f32.mrb[0].mxu0
    %v3722 = vpop.f32.mrb[0].mxu0
    %v3723 = vpop.f32.mrb[0].mxu0
    %3724 = vdwg.mxu0
    %v3725 = vadd.f32 %v3621, %v3720
    %s3726 = scalar_lea.vmem %s3, 96
    %v3727 = vld [vmem:[%s3726] sm:$0xf]
    %3728 = vmatprep.subr.bf16.mxu0 0
    %3729 = vmatpush1.bf16.msra.mxu0 %v1226
    %3730 = vmatprep.subr.bf16.mxu0 0
    %3731 = vmatpush1.bf16.msra.mxu0 %v1227
    %3732 = vmatprep.subr.bf16.mxu0 0
    %3733 = vmatpush1.bf16.msra.mxu0 %v1228
    %3734 = vmatprep.subr.bf16.mxu0 0
    %3735 = vmatpush1.bf16.msra.mxu0 %v1229
    %3736 = vmatprep.subr.bf16.mxu0 0
    %3737 = vmatpush1.bf16.msra.mxu0 %v1230
    %3738 = vmatprep.subr.bf16.mxu0 0
    %3739 = vmatpush1.bf16.msra.mxu0 %v1231
    %3740 = vmatprep.subr.bf16.mxu0 0
    %3741 = vmatpush1.bf16.msra.mxu0 %v1232
    %3742 = vmatprep.subr.bf16.mxu0 0
    %3743 = vmatpush1.bf16.msra.mxu0 %v1233
    %3744 = vmatprep.subr.bf16.mxu0 0
    %3745 = vmatpush1.bf16.msra.mxu0 0
    %3746 = vmatprep.subr.bf16.mxu0 0
    %3747 = vmatpush1.bf16.msra.mxu0 0
    %3748 = vmatprep.subr.bf16.mxu0 0
    %3749 = vmatpush1.bf16.msra.mxu0 0
    %3750 = vmatprep.subr.bf16.mxu0 0
    %3751 = vmatpush1.bf16.msra.mxu0 0
    %3752 = vmatprep.subr.bf16.mxu0 0
    %3753 = vmatpush1.bf16.msra.mxu0 0
    %3754 = vmatprep.subr.bf16.mxu0 0
    %3755 = vmatpush1.bf16.msra.mxu0 0
    %3756 = vmatprep.subr.bf16.mxu0 0
    %3757 = vmatpush1.bf16.msra.mxu0 0
    %3758 = vmatprep.subr.bf16.mxu0 0
    %3759 = vmatpush1.bf16.msra.mxu0 0
    %3760 = vmatprep.mubr.bf16.mxu0 0
    %3761 = vmatmul.mubr.bf16.gmra.mrb[0].mxu0 %v3727
    %v3762 = vpop.f32.mrb[0].mxu0
    %v3763 = vadd.f32 0.0, %v3762
    %v3764 = vpop.f32.mrb[0].mxu0
    %v3765 = vpop.f32.mrb[0].mxu0
    %v3766 = vpop.f32.mrb[0].mxu0
    %3767 = vdwg.mxu0
    %v3768 = vpack.c.bf16 %v3763, %v3763
    %s3769 = scalar_lea.vmem %s4, 384
    %v3770 = vld [vmem:[%s3769] sm:$0xf]
    %v3771 = vld [vmem:[%s3769 + $0x4] sm:$0xf]
    %v3772 = vld [vmem:[%s3769 + $0x8] sm:$0xf]
    %v3773 = vld [vmem:[%s3769 + $0xc] sm:$0xf]
    %v3778 = vunpack.c.l.b16 %v3770
    %v3779 = vunpack.c.l.b16 %v3771
    %v3780 = vunpack.c.l.b16 %v3772
    %v3781 = vunpack.c.l.b16 %v3773
    %v3782 = vpack.c.b16 %v3779, %v3778
    %v3783 = vpack.c.b16 %v3781, %v3780
    %v3787 = vsel %vm797, %v3768, 0
    %3789 = vmatprep.subr.bf16.mxu0 0
    %3790 = vmatpush1.bf16.msra.mxu0 %v3782
    %3791 = vmatprep.subr.bf16.mxu0 0
    %3792 = vmatpush1.bf16.msra.mxu0 %v3783
    %3793 = vmatprep.subr.bf16.mxu0 0
    %3794 = vmatpush1.bf16.msra.mxu0 0
    %3795 = vmatprep.subr.bf16.mxu0 0
    %3796 = vmatpush1.bf16.msra.mxu0 0
    %3797 = vmatprep.subr.bf16.mxu0 0
    %3798 = vmatpush1.bf16.msra.mxu0 0
    %3799 = vmatprep.subr.bf16.mxu0 0
    %3800 = vmatpush1.bf16.msra.mxu0 0
    %3801 = vmatprep.subr.bf16.mxu0 0
    %3802 = vmatpush1.bf16.msra.mxu0 0
    %3803 = vmatprep.subr.bf16.mxu0 0
    %3804 = vmatpush1.bf16.msra.mxu0 0
    %3805 = vmatprep.subr.bf16.mxu0 0
    %3806 = vmatpush1.bf16.msra.mxu0 0
    %3807 = vmatprep.subr.bf16.mxu0 0
    %3808 = vmatpush1.bf16.msra.mxu0 0
    %3809 = vmatprep.subr.bf16.mxu0 0
    %3810 = vmatpush1.bf16.msra.mxu0 0
    %3811 = vmatprep.subr.bf16.mxu0 0
    %3812 = vmatpush1.bf16.msra.mxu0 0
    %3813 = vmatprep.subr.bf16.mxu0 0
    %3814 = vmatpush1.bf16.msra.mxu0 0
    %3815 = vmatprep.subr.bf16.mxu0 0
    %3816 = vmatpush1.bf16.msra.mxu0 0
    %3817 = vmatprep.subr.bf16.mxu0 0
    %3818 = vmatpush1.bf16.msra.mxu0 0
    %3819 = vmatprep.subr.bf16.mxu0 0
    %3820 = vmatpush1.bf16.msra.mxu0 0
    %3821 = vmatprep.mubr.bf16.mxu0 0
    %3822 = vmatmul.mubr.bf16.gmra.mrb[0].mxu0 %v3787
    %v3823 = vpop.f32.mrb[0].mxu0
    %v3824 = vadd.f32 0.0, %v3823
    %v3825 = vpop.f32.mrb[0].mxu0
    %v3826 = vpop.f32.mrb[0].mxu0
    %v3827 = vpop.f32.mrb[0].mxu0
    %3828 = vdwg.mxu0
    %v3829 = vadd.f32 %v3725, %v3824
    %v3830 = vld [vmem:[%s5] sm:$0x1]
    %v3832 = vlaneseq
    %v3833 = vshrl.u32 %v3832, 7
    %v3834 = vsub.s32 0, %v3833
    %v3835 = vrot.slane %v3830, %v3834
    %v3837 = vadd.f32 %v3829, %v3835
    %v3838 = vmax.f32 %v3837, 0.0
    %v3839 = vpack.c.bf16 %v3838, %v3838
    %v3840 = vld [vmem:[%s6] sm:$0x1]
    %vm3841 = vcmask 64512
    %v3843 = vsel %vm3841, %v3840, 0
    %vm3845 = vcmask 1043456
    %v3847 = vsel %vm3845, %v3839, 0
    %3849 = vmatprep.subr.bf16.mxu0 0
    %3850 = vmatpush1.bf16.msra.mxu0 %v3847
    %3851 = vmatprep.subr.bf16.mxu0 0
    %3852 = vmatpush1.bf16.msra.mxu0 0
    %3853 = vmatprep.subr.bf16.mxu0 0
    %3854 = vmatpush1.bf16.msra.mxu0 0
    %3855 = vmatprep.subr.bf16.mxu0 0
    %3856 = vmatpush1.bf16.msra.mxu0 0
    %3857 = vmatprep.subr.bf16.mxu0 0
    %3858 = vmatpush1.bf16.msra.mxu0 0
    %3859 = vmatprep.subr.bf16.mxu0 0
    %3860 = vmatpush1.bf16.msra.mxu0 0
    %3861 = vmatprep.subr.bf16.mxu0 0
    %3862 = vmatpush1.bf16.msra.mxu0 0
    %3863 = vmatprep.subr.bf16.mxu0 0
    %3864 = vmatpush1.bf16.msra.mxu0 0
    %3865 = vmatprep.subr.bf16.mxu0 0
    %3866 = vmatpush1.bf16.msra.mxu0 0
    %3867 = vmatprep.subr.bf16.mxu0 0
    %3868 = vmatpush1.bf16.msra.mxu0 0
    %3869 = vmatprep.subr.bf16.mxu0 0
    %3870 = vmatpush1.bf16.msra.mxu0 0
    %3871 = vmatprep.subr.bf16.mxu0 0
    %3872 = vmatpush1.bf16.msra.mxu0 0
    %3873 = vmatprep.subr.bf16.mxu0 0
    %3874 = vmatpush1.bf16.msra.mxu0 0
    %3875 = vmatprep.subr.bf16.mxu0 0
    %3876 = vmatpush1.bf16.msra.mxu0 0
    %3877 = vmatprep.subr.bf16.mxu0 0
    %3878 = vmatpush1.bf16.msra.mxu0 0
    %3879 = vmatprep.subr.bf16.mxu0 0
    %3880 = vmatpush1.bf16.msra.mxu0 0
    %3881 = vmatprep.mubr.bf16.mxu0 0
    %3882 = vmatmul.mubr.bf16.gmra.mrb[0].mxu0 %v3843
    %v3883 = vpop.f32.mrb[0].mxu0
    %v3884 = vadd.f32 0.0, %v3883
    %v3885 = vpop.f32.mrb[0].mxu0
    %v3886 = vpop.f32.mrb[0].mxu0
    %v3887 = vpop.f32.mrb[0].mxu0
    %3888 = vdwg.mxu0
    %v3889 = vpack.c.bf16 %v3884, %v3884
    %v3890 = vld [vmem:[%s7] sm:$0xff]
    %v3891 = vld [vmem:[%s7 + $0x8] sm:$0xff]
    %v3892 = vld [vmem:[%s7 + $0x10] sm:$0xff]
    %v3893 = vld [vmem:[%s7 + $0x18] sm:$0xff]
    %v3894 = vld [vmem:[%s7 + $0x20] sm:$0xff]
    %v3895 = vld [vmem:[%s7 + $0x28] sm:$0xff]
    %v3896 = vld [vmem:[%s7 + $0x30] sm:$0xff]
    %v3897 = vld [vmem:[%s7 + $0x38] sm:$0xff]
    %s3898 = scalar_lea.vmem %s6, 1
    %v3899 = vld [vmem:[%s3898] sm:$0x1]
    %v3901 = vsel %vm3841, %v3899, 0
    %3903 = vmatprep.subr.bf16.mxu0 0
    %3904 = vmatpush1.bf16.msra.mxu0 %v3847
    %3905 = vmatprep.subr.bf16.mxu0 0
    %3906 = vmatpush1.bf16.msra.mxu0 0
    %3907 = vmatprep.subr.bf16.mxu0 0
    %3908 = vmatpush1.bf16.msra.mxu0 0
    %3909 = vmatprep.subr.bf16.mxu0 0
    %3910 = vmatpush1.bf16.msra.mxu0 0
    %3911 = vmatprep.subr.bf16.mxu0 0
    %3912 = vmatpush1.bf16.msra.mxu0 0
    %3913 = vmatprep.subr.bf16.mxu0 0
    %3914 = vmatpush1.bf16.msra.mxu0 0
    %3915 = vmatprep.subr.bf16.mxu0 0
    %3916 = vmatpush1.bf16.msra.mxu0 0
    %3917 = vmatprep.subr.bf16.mxu0 0
    %3918 = vmatpush1.bf16.msra.mxu0 0
    %3919 = vmatprep.subr.bf16.mxu0 0
    %3920 = vmatpush1.bf16.msra.mxu0 0
    %3921 = vmatprep.subr.bf16.mxu0 0
    %3922 = vmatpush1.bf16.msra.mxu0 0
    %3923 = vmatprep.subr.bf16.mxu0 0
    %3924 = vmatpush1.bf16.msra.mxu0 0
    %3925 = vmatprep.subr.bf16.mxu0 0
    %3926 = vmatpush1.bf16.msra.mxu0 0
    %3927 = vmatprep.subr.bf16.mxu0 0
    %3928 = vmatpush1.bf16.msra.mxu0 0
    %3929 = vmatprep.subr.bf16.mxu0 0
    %3930 = vmatpush1.bf16.msra.mxu0 0
    %3931 = vmatprep.subr.bf16.mxu0 0
    %3932 = vmatpush1.bf16.msra.mxu0 0
    %3933 = vmatprep.subr.bf16.mxu0 0
    %3934 = vmatpush1.bf16.msra.mxu0 0
    %3935 = vmatprep.mubr.bf16.mxu0 0
    %3936 = vmatmul.mubr.bf16.gmra.mrb[0].mxu0 %v3901
    %v3937 = vpop.f32.mrb[0].mxu0
    %v3938 = vadd.f32 0.0, %v3937
    %v3939 = vpop.f32.mrb[0].mxu0
    %v3940 = vpop.f32.mrb[0].mxu0
    %v3941 = vpop.f32.mrb[0].mxu0
    %3942 = vdwg.mxu0
    %v3943 = vpack.c.bf16 %v3938, %v3938
    %s3944 = scalar_lea.vmem %s7, 64
    %v3945 = vld [vmem:[%s3944] sm:$0xff]
    %v3946 = vld [vmem:[%s3944 + $0x8] sm:$0xff]
    %v3947 = vld [vmem:[%s3944 + $0x10] sm:$0xff]
    %v3948 = vld [vmem:[%s3944 + $0x18] sm:$0xff]
    %v3949 = vld [vmem:[%s3944 + $0x20] sm:$0xff]
    %v3950 = vld [vmem:[%s3944 + $0x28] sm:$0xff]
    %v3951 = vld [vmem:[%s3944 + $0x30] sm:$0xff]
    %v3952 = vld [vmem:[%s3944 + $0x38] sm:$0xff]
    %v3961 = vunpack.c.l.b16 %v3945
    %v3962 = vunpack.c.h.b16 %v3945
    %v3963 = vunpack.c.l.b16 %v3946
    %v3964 = vunpack.c.h.b16 %v3946
    %v3965 = vunpack.c.l.b16 %v3947
    %v3966 = vunpack.c.h.b16 %v3947
    %v3967 = vunpack.c.l.b16 %v3948
    %v3968 = vunpack.c.h.b16 %v3948
    %v3969 = vunpack.c.l.b16 %v3949
    %v3970 = vunpack.c.h.b16 %v3949
    %v3971 = vunpack.c.l.b16 %v3950
    %v3972 = vunpack.c.h.b16 %v3950
    %v3973 = vunpack.c.l.b16 %v3951
    %v3974 = vunpack.c.h.b16 %v3951
    %v3975 = vunpack.c.l.b16 %v3952
    %v3976 = vunpack.c.h.b16 %v3952
    %v3977 = vpack.c.b16 %v3963, %v3961
    %v3978 = vpack.c.b16 %v3964, %v3962
    %v3979 = vpack.c.b16 %v3967, %v3965
    %v3980 = vpack.c.b16 %v3968, %v3966
    %v3981 = vpack.c.b16 %v3971, %v3969
    %v3982 = vpack.c.b16 %v3972, %v3970
    %v3983 = vpack.c.b16 %v3975, %v3973
    %v3984 = vpack.c.b16 %v3976, %v3974
    %vm3993 = vcmask 523264
    %v3995 = vsel %vm3993, %v3943, 0
    %3997 = vmatprep.subr.bf16.mxu0 %v3978
    %3998 = vmatpush1.bf16.msra.mxu0 %v3977
    %3999 = vmatprep.subr.bf16.mxu0 %v3980
    %4000 = vmatpush1.bf16.msra.mxu0 %v3979
    %4001 = vmatprep.subr.bf16.mxu0 %v3982
    %4002 = vmatpush1.bf16.msra.mxu0 %v3981
    %4003 = vmatprep.subr.bf16.mxu0 %v3984
    %4004 = vmatpush1.bf16.msra.mxu0 %v3983
    %4005 = vmatprep.subr.bf16.mxu0 0
    %4006 = vmatpush1.bf16.msra.mxu0 0
    %4007 = vmatprep.subr.bf16.mxu0 0
    %4008 = vmatpush1.bf16.msra.mxu0 0
    %4009 = vmatprep.subr.bf16.mxu0 0
    %4010 = vmatpush1.bf16.msra.mxu0 0
    %4011 = vmatprep.subr.bf16.mxu0 0
    %4012 = vmatpush1.bf16.msra.mxu0 0
    %4013 = vmatprep.subr.bf16.mxu0 0
    %4014 = vmatpush1.bf16.msra.mxu0 0
    %4015 = vmatprep.subr.bf16.mxu0 0
    %4016 = vmatpush1.bf16.msra.mxu0 0
    %4017 = vmatprep.subr.bf16.mxu0 0
    %4018 = vmatpush1.bf16.msra.mxu0 0
    %4019 = vmatprep.subr.bf16.mxu0 0
    %4020 = vmatpush1.bf16.msra.mxu0 0
    %4021 = vmatprep.subr.bf16.mxu0 0
    %4022 = vmatpush1.bf16.msra.mxu0 0
    %4023 = vmatprep.subr.bf16.mxu0 0
    %4024 = vmatpush1.bf16.msra.mxu0 0
    %4025 = vmatprep.subr.bf16.mxu0 0
    %4026 = vmatpush1.bf16.msra.mxu0 0
    %4027 = vmatprep.subr.bf16.mxu0 0
    %4028 = vmatpush1.bf16.msra.mxu0 0
    %4029 = vmatprep.mubr.bf16.mxu0 0
    %4030 = vmatmul.mubr.bf16.gmra.mrb[0].mxu0 %v3995
    %v4031 = vpop.f32.mrb[0].mxu0
    %v4032 = vadd.f32 0.0, %v4031
    %v4033 = vpop.f32.mrb[0].mxu0
    %v4034 = vadd.f32 0.0, %v4033
    %v4035 = vpop.f32.mrb[0].mxu0
    %v4036 = vpop.f32.mrb[0].mxu0
    %4037 = vdwg.mxu0
    %v4046 = vunpack.c.l.b16 %v3890
    %v4047 = vunpack.c.h.b16 %v3890
    %v4048 = vunpack.c.l.b16 %v3891
    %v4049 = vunpack.c.h.b16 %v3891
    %v4050 = vunpack.c.l.b16 %v3892
    %v4051 = vunpack.c.h.b16 %v3892
    %v4052 = vunpack.c.l.b16 %v3893
    %v4053 = vunpack.c.h.b16 %v3893
    %v4054 = vunpack.c.l.b16 %v3894
    %v4055 = vunpack.c.h.b16 %v3894
    %v4056 = vunpack.c.l.b16 %v3895
    %v4057 = vunpack.c.h.b16 %v3895
    %v4058 = vunpack.c.l.b16 %v3896
    %v4059 = vunpack.c.h.b16 %v3896
    %v4060 = vunpack.c.l.b16 %v3897
    %v4061 = vunpack.c.h.b16 %v3897
    %v4062 = vpack.c.b16 %v4048, %v4046
    %v4063 = vpack.c.b16 %v4049, %v4047
    %v4064 = vpack.c.b16 %v4052, %v4050
    %v4065 = vpack.c.b16 %v4053, %v4051
    %v4066 = vpack.c.b16 %v4056, %v4054
    %v4067 = vpack.c.b16 %v4057, %v4055
    %v4068 = vpack.c.b16 %v4060, %v4058
    %v4069 = vpack.c.b16 %v4061, %v4059
    %v4079 = vsel %vm3993, %v3889, 0
    %4081 = vmatprep.subr.bf16.mxu0 %v4063
    %4082 = vmatpush1.bf16.msra.mxu0 %v4062
    %4083 = vmatprep.subr.bf16.mxu0 %v4065
    %4084 = vmatpush1.bf16.msra.mxu0 %v4064
    %4085 = vmatprep.subr.bf16.mxu0 %v4067
    %4086 = vmatpush1.bf16.msra.mxu0 %v4066
    %4087 = vmatprep.subr.bf16.mxu0 %v4069
    %4088 = vmatpush1.bf16.msra.mxu0 %v4068
    %4089 = vmatprep.subr.bf16.mxu0 0
    %4090 = vmatpush1.bf16.msra.mxu0 0
    %4091 = vmatprep.subr.bf16.mxu0 0
    %4092 = vmatpush1.bf16.msra.mxu0 0
    %4093 = vmatprep.subr.bf16.mxu0 0
    %4094 = vmatpush1.bf16.msra.mxu0 0
    %4095 = vmatprep.subr.bf16.mxu0 0
    %4096 = vmatpush1.bf16.msra.mxu0 0
    %4097 = vmatprep.subr.bf16.mxu0 0
    %4098 = vmatpush1.bf16.msra.mxu0 0
    %4099 = vmatprep.subr.bf16.mxu0 0
    %4100 = vmatpush1.bf16.msra.mxu0 0
    %4101 = vmatprep.subr.bf16.mxu0 0
    %4102 = vmatpush1.bf16.msra.mxu0 0
    %4103 = vmatprep.subr.bf16.mxu0 0
    %4104 = vmatpush1.bf16.msra.mxu0 0
    %4105 = vmatprep.subr.bf16.mxu0 0
    %4106 = vmatpush1.bf16.msra.mxu0 0
    %4107 = vmatprep.subr.bf16.mxu0 0
    %4108 = vmatpush1.bf16.msra.mxu0 0
    %4109 = vmatprep.subr.bf16.mxu0 0
    %4110 = vmatpush1.bf16.msra.mxu0 0
    %4111 = vmatprep.subr.bf16.mxu0 0
    %4112 = vmatpush1.bf16.msra.mxu0 0
    %4113 = vmatprep.mubr.bf16.mxu0 0
    %4114 = vmatmul.mubr.bf16.gmra.mrb[0].mxu0 %v4079
    %v4115 = vpop.f32.mrb[0].mxu0
    %v4116 = vadd.f32 %v4032, %v4115
    %v4117 = vpop.f32.mrb[0].mxu0
    %v4118 = vadd.f32 %v4034, %v4117
    %v4119 = vpop.f32.mrb[0].mxu0
    %v4120 = vpop.f32.mrb[0].mxu0
    %4121 = vdwg.mxu0
    %s4122 = scalar_lea.vmem %s6, 2
    %v4123 = vld [vmem:[%s4122] sm:$0x1]
    %v4125 = vsel %vm3841, %v4123, 0
    %4127 = vmatprep.subr.bf16.mxu0 0
    %4128 = vmatpush1.bf16.msra.mxu0 %v3847
    %4129 = vmatprep.subr.bf16.mxu0 0
    %4130 = vmatpush1.bf16.msra.mxu0 0
    %4131 = vmatprep.subr.bf16.mxu0 0
    %4132 = vmatpush1.bf16.msra.mxu0 0
    %4133 = vmatprep.subr.bf16.mxu0 0
    %4134 = vmatpush1.bf16.msra.mxu0 0
    %4135 = vmatprep.subr.bf16.mxu0 0
    %4136 = vmatpush1.bf16.msra.mxu0 0
    %4137 = vmatprep.subr.bf16.mxu0 0
    %4138 = vmatpush1.bf16.msra.mxu0 0
    %4139 = vmatprep.subr.bf16.mxu0 0
    %4140 = vmatpush1.bf16.msra.mxu0 0
    %4141 = vmatprep.subr.bf16.mxu0 0
    %4142 = vmatpush1.bf16.msra.mxu0 0
    %4143 = vmatprep.subr.bf16.mxu0 0
    %4144 = vmatpush1.bf16.msra.mxu0 0
    %4145 = vmatprep.subr.bf16.mxu0 0
    %4146 = vmatpush1.bf16.msra.mxu0 0
    %4147 = vmatprep.subr.bf16.mxu0 0
    %4148 = vmatpush1.bf16.msra.mxu0 0
    %4149 = vmatprep.subr.bf16.mxu0 0
    %4150 = vmatpush1.bf16.msra.mxu0 0
    %4151 = vmatprep.subr.bf16.mxu0 0
    %4152 = vmatpush1.bf16.msra.mxu0 0
    %4153 = vmatprep.subr.bf16.mxu0 0
    %4154 = vmatpush1.bf16.msra.mxu0 0
    %4155 = vmatprep.subr.bf16.mxu0 0
    %4156 = vmatpush1.bf16.msra.mxu0 0
    %4157 = vmatprep.subr.bf16.mxu0 0
    %4158 = vmatpush1.bf16.msra.mxu0 0
    %4159 = vmatprep.mubr.bf16.mxu0 0
    %4160 = vmatmul.mubr.bf16.gmra.mrb[0].mxu0 %v4125
    %v4161 = vpop.f32.mrb[0].mxu0
    %v4162 = vadd.f32 0.0, %v4161
    %v4163 = vpop.f32.mrb[0].mxu0
    %v4164 = vpop.f32.mrb[0].mxu0
    %v4165 = vpop.f32.mrb[0].mxu0
    %4166 = vdwg.mxu0
    %v4167 = vpack.c.bf16 %v4162, %v4162
    %s4168 = scalar_lea.vmem %s7, 128
    %v4169 = vld [vmem:[%s4168] sm:$0xff]
    %v4170 = vld [vmem:[%s4168 + $0x8] sm:$0xff]
    %v4171 = vld [vmem:[%s4168 + $0x10] sm:$0xff]
    %v4172 = vld [vmem:[%s4168 + $0x18] sm:$0xff]
    %v4173 = vld [vmem:[%s4168 + $0x20] sm:$0xff]
    %v4174 = vld [vmem:[%s4168 + $0x28] sm:$0xff]
    %v4175 = vld [vmem:[%s4168 + $0x30] sm:$0xff]
    %v4176 = vld [vmem:[%s4168 + $0x38] sm:$0xff]
    %v4185 = vunpack.c.l.b16 %v4169
    %v4186 = vunpack.c.h.b16 %v4169
    %v4187 = vunpack.c.l.b16 %v4170
    %v4188 = vunpack.c.h.b16 %v4170
    %v4189 = vunpack.c.l.b16 %v4171
    %v4190 = vunpack.c.h.b16 %v4171
    %v4191 = vunpack.c.l.b16 %v4172
    %v4192 = vunpack.c.h.b16 %v4172
    %v4193 = vunpack.c.l.b16 %v4173
    %v4194 = vunpack.c.h.b16 %v4173
    %v4195 = vunpack.c.l.b16 %v4174
    %v4196 = vunpack.c.h.b16 %v4174
    %v4197 = vunpack.c.l.b16 %v4175
    %v4198 = vunpack.c.h.b16 %v4175
    %v4199 = vunpack.c.l.b16 %v4176
    %v4200 = vunpack.c.h.b16 %v4176
    %v4201 = vpack.c.b16 %v4187, %v4185
    %v4202 = vpack.c.b16 %v4188, %v4186
    %v4203 = vpack.c.b16 %v4191, %v4189
    %v4204 = vpack.c.b16 %v4192, %v4190
    %v4205 = vpack.c.b16 %v4195, %v4193
    %v4206 = vpack.c.b16 %v4196, %v4194
    %v4207 = vpack.c.b16 %v4199, %v4197
    %v4208 = vpack.c.b16 %v4200, %v4198
    %v4218 = vsel %vm3993, %v4167, 0
    %4220 = vmatprep.subr.bf16.mxu0 %v4202
    %4221 = vmatpush1.bf16.msra.mxu0 %v4201
    %4222 = vmatprep.subr.bf16.mxu0 %v4204
    %4223 = vmatpush1.bf16.msra.mxu0 %v4203
    %4224 = vmatprep.subr.bf16.mxu0 %v4206
    %4225 = vmatpush1.bf16.msra.mxu0 %v4205
    %4226 = vmatprep.subr.bf16.mxu0 %v4208
    %4227 = vmatpush1.bf16.msra.mxu0 %v4207
    %4228 = vmatprep.subr.bf16.mxu0 0
    %4229 = vmatpush1.bf16.msra.mxu0 0
    %4230 = vmatprep.subr.bf16.mxu0 0
    %4231 = vmatpush1.bf16.msra.mxu0 0
    %4232 = vmatprep.subr.bf16.mxu0 0
    %4233 = vmatpush1.bf16.msra.mxu0 0
    %4234 = vmatprep.subr.bf16.mxu0 0
    %4235 = vmatpush1.bf16.msra.mxu0 0
    %4236 = vmatprep.subr.bf16.mxu0 0
    %4237 = vmatpush1.bf16.msra.mxu0 0
    %4238 = vmatprep.subr.bf16.mxu0 0
    %4239 = vmatpush1.bf16.msra.mxu0 0
    %4240 = vmatprep.subr.bf16.mxu0 0
    %4241 = vmatpush1.bf16.msra.mxu0 0
    %4242 = vmatprep.subr.bf16.mxu0 0
    %4243 = vmatpush1.bf16.msra.mxu0 0
    %4244 = vmatprep.subr.bf16.mxu0 0
    %4245 = vmatpush1.bf16.msra.mxu0 0
    %4246 = vmatprep.subr.bf16.mxu0 0
    %4247 = vmatpush1.bf16.msra.mxu0 0
    %4248 = vmatprep.subr.bf16.mxu0 0
    %4249 = vmatpush1.bf16.msra.mxu0 0
    %4250 = vmatprep.subr.bf16.mxu0 0
    %4251 = vmatpush1.bf16.msra.mxu0 0
    %4252 = vmatprep.mubr.bf16.mxu0 0
    %4253 = vmatmul.mubr.bf16.gmra.mrb[0].mxu0 %v4218
    %v4254 = vpop.f32.mrb[0].mxu0
    %v4255 = vadd.f32 0.0, %v4254
    %v4256 = vpop.f32.mrb[0].mxu0
    %v4257 = vadd.f32 0.0, %v4256
    %v4258 = vpop.f32.mrb[0].mxu0
    %v4259 = vpop.f32.mrb[0].mxu0
    %4260 = vdwg.mxu0
    %v4261 = vadd.f32 %v4116, %v4255
    %v4262 = vadd.f32 %v4118, %v4257
    %s4263 = scalar_lea.vmem %s6, 3
    %v4264 = vld [vmem:[%s4263] sm:$0x1]
    %v4266 = vsel %vm3841, %v4264, 0
    %4268 = vmatprep.subr.bf16.mxu0 0
    %4269 = vmatpush1.bf16.msra.mxu0 %v3847
    %4270 = vmatprep.subr.bf16.mxu0 0
    %4271 = vmatpush1.bf16.msra.mxu0 0
    %4272 = vmatprep.subr.bf16.mxu0 0
    %4273 = vmatpush1.bf16.msra.mxu0 0
    %4274 = vmatprep.subr.bf16.mxu0 0
    %4275 = vmatpush1.bf16.msra.mxu0 0
    %4276 = vmatprep.subr.bf16.mxu0 0
    %4277 = vmatpush1.bf16.msra.mxu0 0
    %4278 = vmatprep.subr.bf16.mxu0 0
    %4279 = vmatpush1.bf16.msra.mxu0 0
    %4280 = vmatprep.subr.bf16.mxu0 0
    %4281 = vmatpush1.bf16.msra.mxu0 0
    %4282 = vmatprep.subr.bf16.mxu0 0
    %4283 = vmatpush1.bf16.msra.mxu0 0
    %4284 = vmatprep.subr.bf16.mxu0 0
    %4285 = vmatpush1.bf16.msra.mxu0 0
    %4286 = vmatprep.subr.bf16.mxu0 0
    %4287 = vmatpush1.bf16.msra.mxu0 0
    %4288 = vmatprep.subr.bf16.mxu0 0
    %4289 = vmatpush1.bf16.msra.mxu0 0
    %4290 = vmatprep.subr.bf16.mxu0 0
    %4291 = vmatpush1.bf16.msra.mxu0 0
    %4292 = vmatprep.subr.bf16.mxu0 0
    %4293 = vmatpush1.bf16.msra.mxu0 0
    %4294 = vmatprep.subr.bf16.mxu0 0
    %4295 = vmatpush1.bf16.msra.mxu0 0
    %4296 = vmatprep.subr.bf16.mxu0 0
    %4297 = vmatpush1.bf16.msra.mxu0 0
    %4298 = vmatprep.subr.bf16.mxu0 0
    %4299 = vmatpush1.bf16.msra.mxu0 0
    %4300 = vmatprep.mubr.bf16.mxu0 0
    %4301 = vmatmul.mubr.bf16.gmra.mrb[0].mxu0 %v4266
    %v4302 = vpop.f32.mrb[0].mxu0
    %v4303 = vadd.f32 0.0, %v4302
    %v4304 = vpop.f32.mrb[0].mxu0
    %v4305 = vpop.f32.mrb[0].mxu0
    %v4306 = vpop.f32.mrb[0].mxu0
    %4307 = vdwg.mxu0
    %v4308 = vpack.c.bf16 %v4303, %v4303
    %s4309 = scalar_lea.vmem %s7, 192
    %v4310 = vld [vmem:[%s4309] sm:$0xff]
    %v4311 = vld [vmem:[%s4309 + $0x8] sm:$0xff]
    %v4312 = vld [vmem:[%s4309 + $0x10] sm:$0xff]
    %v4313 = vld [vmem:[%s4309 + $0x18] sm:$0xff]
    %v4314 = vld [vmem:[%s4309 + $0x20] sm:$0xff]
    %v4315 = vld [vmem:[%s4309 + $0x28] sm:$0xff]
    %v4316 = vld [vmem:[%s4309 + $0x30] sm:$0xff]
    %v4317 = vld [vmem:[%s4309 + $0x38] sm:$0xff]
    %v4326 = vunpack.c.l.b16 %v4310
    %v4327 = vunpack.c.h.b16 %v4310
    %v4328 = vunpack.c.l.b16 %v4311
    %v4329 = vunpack.c.h.b16 %v4311
    %v4330 = vunpack.c.l.b16 %v4312
    %v4331 = vunpack.c.h.b16 %v4312
    %v4332 = vunpack.c.l.b16 %v4313
    %v4333 = vunpack.c.h.b16 %v4313
    %v4334 = vunpack.c.l.b16 %v4314
    %v4335 = vunpack.c.h.b16 %v4314
    %v4336 = vunpack.c.l.b16 %v4315
    %v4337 = vunpack.c.h.b16 %v4315
    %v4338 = vunpack.c.l.b16 %v4316
    %v4339 = vunpack.c.h.b16 %v4316
    %v4340 = vunpack.c.l.b16 %v4317
    %v4341 = vunpack.c.h.b16 %v4317
    %v4342 = vpack.c.b16 %v4328, %v4326
    %v4343 = vpack.c.b16 %v4329, %v4327
    %v4344 = vpack.c.b16 %v4332, %v4330
    %v4345 = vpack.c.b16 %v4333, %v4331
    %v4346 = vpack.c.b16 %v4336, %v4334
    %v4347 = vpack.c.b16 %v4337, %v4335
    %v4348 = vpack.c.b16 %v4340, %v4338
    %v4349 = vpack.c.b16 %v4341, %v4339
    %v4359 = vsel %vm3993, %v4308, 0
    %4361 = vmatprep.subr.bf16.mxu0 %v4343
    %4362 = vmatpush1.bf16.msra.mxu0 %v4342
    %4363 = vmatprep.subr.bf16.mxu0 %v4345
    %4364 = vmatpush1.bf16.msra.mxu0 %v4344
    %4365 = vmatprep.subr.bf16.mxu0 %v4347
    %4366 = vmatpush1.bf16.msra.mxu0 %v4346
    %4367 = vmatprep.subr.bf16.mxu0 %v4349
    %4368 = vmatpush1.bf16.msra.mxu0 %v4348
    %4369 = vmatprep.subr.bf16.mxu0 0
    %4370 = vmatpush1.bf16.msra.mxu0 0
    %4371 = vmatprep.subr.bf16.mxu0 0
    %4372 = vmatpush1.bf16.msra.mxu0 0
    %4373 = vmatprep.subr.bf16.mxu0 0
    %4374 = vmatpush1.bf16.msra.mxu0 0
    %4375 = vmatprep.subr.bf16.mxu0 0
    %4376 = vmatpush1.bf16.msra.mxu0 0
    %4377 = vmatprep.subr.bf16.mxu0 0
    %4378 = vmatpush1.bf16.msra.mxu0 0
    %4379 = vmatprep.subr.bf16.mxu0 0
    %4380 = vmatpush1.bf16.msra.mxu0 0
    %4381 = vmatprep.subr.bf16.mxu0 0
    %4382 = vmatpush1.bf16.msra.mxu0 0
    %4383 = vmatprep.subr.bf16.mxu0 0
    %4384 = vmatpush1.bf16.msra.mxu0 0
    %4385 = vmatprep.subr.bf16.mxu0 0
    %4386 = vmatpush1.bf16.msra.mxu0 0
    %4387 = vmatprep.subr.bf16.mxu0 0
    %4388 = vmatpush1.bf16.msra.mxu0 0
    %4389 = vmatprep.subr.bf16.mxu0 0
    %4390 = vmatpush1.bf16.msra.mxu0 0
    %4391 = vmatprep.subr.bf16.mxu0 0
    %4392 = vmatpush1.bf16.msra.mxu0 0
    %4393 = vmatprep.mubr.bf16.mxu0 0
    %4394 = vmatmul.mubr.bf16.gmra.mrb[0].mxu0 %v4359
    %v4395 = vpop.f32.mrb[0].mxu0
    %v4396 = vadd.f32 0.0, %v4395
    %v4397 = vpop.f32.mrb[0].mxu0
    %v4398 = vadd.f32 0.0, %v4397
    %v4399 = vpop.f32.mrb[0].mxu0
    %v4400 = vpop.f32.mrb[0].mxu0
    %4401 = vdwg.mxu0
    %v4402 = vadd.f32 %v4261, %v4396
    %v4403 = vadd.f32 %v4262, %v4398
    %v4404 = vld [vmem:[%s8] sm:$0x3]
    %v4406 = vlaneseq
    %v4407 = vshrl.u32 %v4406, 7
    %v4408 = vsub.s32 0, %v4407
    %v4409 = vrot.slane %v4404, %v4408
    %v4410 = vlaneseq
    %v4411 = vshrl.u32 %v4410, 7
    %v4412 = vsub.s32 1, %v4411
    %v4413 = vrot.slane %v4404, %v4412
    %v4416 = vadd.f32 %v4402, %v4409
    %v4417 = vadd.f32 %v4403, %v4413
    %v4418 = vmax.f32 %v4416, 0.0
    %v4419 = vmax.f32 %v4417, 0.0
    %v4420 = vpack.c.bf16 %v4418, %v4418
    %v4421 = vpack.c.bf16 %v4419, %v4419
    %v4422 = vld [vmem:[%s9] sm:$0xff]
    %v4423 = vld [vmem:[%s9 + $0x8] sm:$0xff]
    %v4424 = vld [vmem:[%s9 + $0x10] sm:$0xff]
    %v4425 = vld [vmem:[%s9 + $0x18] sm:$0xff]
    %v4426 = vld [vmem:[%s9 + $0x20] sm:$0xff]
    %v4427 = vld [vmem:[%s9 + $0x28] sm:$0xff]
    %v4428 = vld [vmem:[%s9 + $0x30] sm:$0xff]
    %v4429 = vld [vmem:[%s9 + $0x38] sm:$0xff]
    %v4430 = vld [vmem:[%s9 + $0x40] sm:$0xff]
    %v4431 = vld [vmem:[%s9 + $0x48] sm:$0xff]
    %v4432 = vld [vmem:[%s9 + $0x50] sm:$0xff]
    %v4433 = vld [vmem:[%s9 + $0x58] sm:$0xff]
    %v4434 = vld [vmem:[%s9 + $0x60] sm:$0xff]
    %v4435 = vld [vmem:[%s9 + $0x68] sm:$0xff]
    %v4436 = vld [vmem:[%s9 + $0x70] sm:$0xff]
    %v4437 = vld [vmem:[%s9 + $0x78] sm:$0xff]
    %v4438 = vld [vmem:[%s9 + $0x80] sm:$0xff]
    %v4439 = vld [vmem:[%s9 + $0x88] sm:$0xff]
    %v4440 = vld [vmem:[%s9 + $0x90] sm:$0xff]
    %v4441 = vld [vmem:[%s9 + $0x98] sm:$0xff]
    %v4442 = vld [vmem:[%s9 + $0xa0] sm:$0xff]
    %v4443 = vld [vmem:[%s9 + $0xa8] sm:$0xff]
    %v4444 = vld [vmem:[%s9 + $0xb0] sm:$0xff]
    %v4445 = vld [vmem:[%s9 + $0xb8] sm:$0xff]
    %v4446 = vld [vmem:[%s9 + $0xc0] sm:$0xff]
    %v4447 = vld [vmem:[%s10] sm:$0x3]
    %v4449 = vlaneseq
    %v4450 = vshrl.u32 %v4449, 7
    %v4451 = vsub.s32 0, %v4450
    %v4452 = vrot.slane %v4447, %v4451
    %v4453 = vlaneseq
    %v4454 = vshrl.u32 %v4453, 7
    %v4455 = vsub.s32 1, %v4454
    %v4456 = vrot.slane %v4447, %v4455
    %v4484 = vunpack.c.l.b16 %v4422
    %v4485 = vunpack.c.h.b16 %v4422
    %v4486 = vunpack.c.l.b16 %v4423
    %v4487 = vunpack.c.h.b16 %v4423
    %v4488 = vunpack.c.l.b16 %v4424
    %v4489 = vunpack.c.h.b16 %v4424
    %v4490 = vunpack.c.l.b16 %v4425
    %v4491 = vunpack.c.h.b16 %v4425
    %v4492 = vunpack.c.l.b16 %v4426
    %v4493 = vunpack.c.h.b16 %v4426
    %v4494 = vunpack.c.l.b16 %v4427
    %v4495 = vunpack.c.h.b16 %v4427
    %v4496 = vunpack.c.l.b16 %v4428
    %v4497 = vunpack.c.h.b16 %v4428
    %v4498 = vunpack.c.l.b16 %v4429
    %v4499 = vunpack.c.h.b16 %v4429
    %v4500 = vunpack.c.l.b16 %v4430
    %v4501 = vunpack.c.h.b16 %v4430
    %v4502 = vunpack.c.l.b16 %v4431
    %v4503 = vunpack.c.h.b16 %v4431
    %v4504 = vunpack.c.l.b16 %v4432
    %v4505 = vunpack.c.h.b16 %v4432
    %v4506 = vunpack.c.l.b16 %v4433
    %v4507 = vunpack.c.h.b16 %v4433
    %v4508 = vunpack.c.l.b16 %v4434
    %v4509 = vunpack.c.h.b16 %v4434
    %v4510 = vunpack.c.l.b16 %v4435
    %v4511 = vunpack.c.h.b16 %v4435
    %v4512 = vunpack.c.l.b16 %v4436
    %v4513 = vunpack.c.h.b16 %v4436
    %v4514 = vunpack.c.l.b16 %v4437
    %v4515 = vunpack.c.h.b16 %v4437
    %v4516 = vunpack.c.l.b16 %v4438
    %v4517 = vunpack.c.h.b16 %v4438
    %v4518 = vunpack.c.l.b16 %v4439
    %v4519 = vunpack.c.h.b16 %v4439
    %v4520 = vunpack.c.l.b16 %v4440
    %v4521 = vunpack.c.h.b16 %v4440
    %v4522 = vunpack.c.l.b16 %v4441
    %v4523 = vunpack.c.h.b16 %v4441
    %v4524 = vunpack.c.l.b16 %v4442
    %v4525 = vunpack.c.h.b16 %v4442
    %v4526 = vunpack.c.l.b16 %v4443
    %v4527 = vunpack.c.h.b16 %v4443
    %v4528 = vunpack.c.l.b16 %v4444
    %v4529 = vunpack.c.h.b16 %v4444
    %v4530 = vunpack.c.l.b16 %v4445
    %v4531 = vunpack.c.h.b16 %v4445
    %v4532 = vunpack.c.l.b16 %v4446
    %v4533 = vunpack.c.h.b16 %v4446
    %v4534 = vpack.c.b16 %v4486, %v4484
    %v4535 = vpack.c.b16 %v4487, %v4485
    %v4536 = vpack.c.b16 %v4490, %v4488
    %v4537 = vpack.c.b16 %v4491, %v4489
    %v4538 = vpack.c.b16 %v4494, %v4492
    %v4539 = vpack.c.b16 %v4495, %v4493
    %v4540 = vpack.c.b16 %v4498, %v4496
    %v4541 = vpack.c.b16 %v4499, %v4497
    %v4542 = vpack.c.b16 %v4502, %v4500
    %v4543 = vpack.c.b16 %v4503, %v4501
    %v4544 = vpack.c.b16 %v4506, %v4504
    %v4545 = vpack.c.b16 %v4507, %v4505
    %v4546 = vpack.c.b16 %v4510, %v4508
    %v4547 = vpack.c.b16 %v4511, %v4509
    %v4548 = vpack.c.b16 %v4514, %v4512
    %v4549 = vpack.c.b16 %v4515, %v4513
    %v4550 = vpack.c.b16 %v4518, %v4516
    %v4551 = vpack.c.b16 %v4519, %v4517
    %v4552 = vpack.c.b16 %v4522, %v4520
    %v4553 = vpack.c.b16 %v4523, %v4521
    %v4554 = vpack.c.b16 %v4526, %v4524
    %v4555 = vpack.c.b16 %v4527, %v4525
    %v4556 = vpack.c.b16 %v4530, %v4528
    %v4557 = vpack.c.b16 %v4531, %v4529
    %v4558 = vpack.c.b16 %v4532, %v4532
    %v4559 = vpack.c.b16 %v4533, %v4533
    %vm4584 = vcmask 588800
    %v4586 = vsel %vm4584, %v4421, 0
    %v4589 = vsel %vm3845, %v4558, 0
    %v4592 = vsel %vm3845, %v4559, 0
    %4594 = vmatprep.subr.bf16.mxu0 %v4535
    %4595 = vmatpush1.bf16.msra.mxu0 %v4534
    %4596 = vmatprep.subr.bf16.mxu0 %v4537
    %4597 = vmatpush1.bf16.msra.mxu0 %v4536
    %4598 = vmatprep.subr.bf16.mxu0 %v4539
    %4599 = vmatpush1.bf16.msra.mxu0 %v4538
    %4600 = vmatprep.subr.bf16.mxu0 %v4541
    %4601 = vmatpush1.bf16.msra.mxu0 %v4540
    %4602 = vmatprep.subr.bf16.mxu0 %v4543
    %4603 = vmatpush1.bf16.msra.mxu0 %v4542
    %4604 = vmatprep.subr.bf16.mxu0 %v4545
    %4605 = vmatpush1.bf16.msra.mxu0 %v4544
    %4606 = vmatprep.subr.bf16.mxu0 %v4547
    %4607 = vmatpush1.bf16.msra.mxu0 %v4546
    %4608 = vmatprep.subr.bf16.mxu0 %v4549
    %4609 = vmatpush1.bf16.msra.mxu0 %v4548
    %4610 = vmatprep.subr.bf16.mxu0 %v4551
    %4611 = vmatpush1.bf16.msra.mxu0 %v4550
    %4612 = vmatprep.subr.bf16.mxu0 %v4553
    %4613 = vmatpush1.bf16.msra.mxu0 %v4552
    %4614 = vmatprep.subr.bf16.mxu0 %v4555
    %4615 = vmatpush1.bf16.msra.mxu0 %v4554
    %4616 = vmatprep.subr.bf16.mxu0 %v4557
    %4617 = vmatpush1.bf16.msra.mxu0 %v4556
    %4618 = vmatprep.subr.bf16.mxu0 %v4592
    %4619 = vmatpush1.bf16.msra.mxu0 %v4589
    %4620 = vmatprep.subr.bf16.mxu0 0
    %4621 = vmatpush1.bf16.msra.mxu0 0
    %4622 = vmatprep.subr.bf16.mxu0 0
    %4623 = vmatpush1.bf16.msra.mxu0 0
    %4624 = vmatprep.subr.bf16.mxu0 0
    %4625 = vmatpush1.bf16.msra.mxu0 0
    %4626 = vmatprep.mubr.bf16.mxu0 %v4586
    %4627 = vmatmul.mubr.bf16.gmra.mrb[0].mxu0 %v4420
    %v4628 = vpop.f32.mrb[0].mxu0
    %v4629 = vadd.f32 %v4452, %v4628
    %v4630 = vpop.f32.mrb[0].mxu0
    %v4631 = vadd.f32 %v4456, %v4630
    %v4632 = vpop.f32.mrb[0].mxu0
    %v4633 = vpop.f32.mrb[0].mxu0
    %4634 = vdwg.mxu0
    %v4635 = vmax.f32 %v4629, 0.0
    %v4636 = vmax.f32 %v4631, 0.0
    %v4637 = vpack.c.bf16 %v4635, %v4635
    %v4638 = vpack.c.bf16 %v4636, %v4636
    %v4639 = vld [vmem:[%s11] sm:$0xf]
    %v4640 = vld [vmem:[%s11 + $0x4] sm:$0xf]
    %v4641 = vld [vmem:[%s11 + $0x8] sm:$0xf]
    %v4642 = vld [vmem:[%s11 + $0xc] sm:$0xf]
    %v4643 = vld [vmem:[%s11 + $0x10] sm:$0xf]
    %v4644 = vld [vmem:[%s11 + $0x14] sm:$0xf]
    %v4645 = vld [vmem:[%s11 + $0x18] sm:$0xf]
    %v4646 = vld [vmem:[%s11 + $0x1c] sm:$0xf]
    %v4647 = vld [vmem:[%s11 + $0x20] sm:$0xf]
    %v4648 = vld [vmem:[%s11 + $0x24] sm:$0xf]
    %v4649 = vld [vmem:[%s11 + $0x28] sm:$0xf]
    %v4650 = vld [vmem:[%s11 + $0x2c] sm:$0xf]
    %v4651 = vld [vmem:[%s11 + $0x30] sm:$0xf]
    %v4652 = vld [vmem:[%s11 + $0x34] sm:$0xf]
    %v4653 = vld [vmem:[%s11 + $0x38] sm:$0xf]
    %v4654 = vld [vmem:[%s11 + $0x3c] sm:$0xf]
    %v4655 = vld [vmem:[%s11 + $0x40] sm:$0xf]
    %v4656 = vld [vmem:[%s11 + $0x44] sm:$0xf]
    %v4657 = vld [vmem:[%s11 + $0x48] sm:$0xf]
    %v4658 = vld [vmem:[%s11 + $0x4c] sm:$0xf]
    %v4659 = vld [vmem:[%s11 + $0x50] sm:$0xf]
    %v4660 = vld [vmem:[%s11 + $0x54] sm:$0xf]
    %v4661 = vld [vmem:[%s11 + $0x58] sm:$0xf]
    %v4662 = vld [vmem:[%s11 + $0x5c] sm:$0xf]
    %v4663 = vld [vmem:[%s11 + $0x60] sm:$0xf]
    %v4664 = vld [vmem:[%s12] sm:$0x1]
    %v4666 = vlaneseq
    %v4667 = vshrl.u32 %v4666, 7
    %v4668 = vsub.s32 0, %v4667
    %v4669 = vrot.slane %v4664, %v4668
    %v4696 = vunpack.c.l.b16 %v4639
    %v4697 = vunpack.c.l.b16 %v4640
    %v4698 = vunpack.c.l.b16 %v4641
    %v4699 = vunpack.c.l.b16 %v4642
    %v4700 = vunpack.c.l.b16 %v4643
    %v4701 = vunpack.c.l.b16 %v4644
    %v4702 = vunpack.c.l.b16 %v4645
    %v4703 = vunpack.c.l.b16 %v4646
    %v4704 = vunpack.c.l.b16 %v4647
    %v4705 = vunpack.c.l.b16 %v4648
    %v4706 = vunpack.c.l.b16 %v4649
    %v4707 = vunpack.c.l.b16 %v4650
    %v4708 = vunpack.c.l.b16 %v4651
    %v4709 = vunpack.c.l.b16 %v4652
    %v4710 = vunpack.c.l.b16 %v4653
    %v4711 = vunpack.c.l.b16 %v4654
    %v4712 = vunpack.c.l.b16 %v4655
    %v4713 = vunpack.c.l.b16 %v4656
    %v4714 = vunpack.c.l.b16 %v4657
    %v4715 = vunpack.c.l.b16 %v4658
    %v4716 = vunpack.c.l.b16 %v4659
    %v4717 = vunpack.c.l.b16 %v4660
    %v4718 = vunpack.c.l.b16 %v4661
    %v4719 = vunpack.c.l.b16 %v4662
    %v4720 = vunpack.c.l.b16 %v4663
    %v4721 = vpack.c.b16 %v4697, %v4696
    %v4722 = vpack.c.b16 %v4699, %v4698
    %v4723 = vpack.c.b16 %v4701, %v4700
    %v4724 = vpack.c.b16 %v4703, %v4702
    %v4725 = vpack.c.b16 %v4705, %v4704
    %v4726 = vpack.c.b16 %v4707, %v4706
    %v4727 = vpack.c.b16 %v4709, %v4708
    %v4728 = vpack.c.b16 %v4711, %v4710
    %v4729 = vpack.c.b16 %v4713, %v4712
    %v4730 = vpack.c.b16 %v4715, %v4714
    %v4731 = vpack.c.b16 %v4717, %v4716
    %v4732 = vpack.c.b16 %v4719, %v4718
    %v4733 = vpack.c.b16 %v4720, %v4720
    %v4747 = vsel %vm4584, %v4638, 0
    %v4750 = vsel %vm3845, %v4733, 0
    %4752 = vmatprep.subr.bf16.mxu0 0
    %4753 = vmatpush1.bf16.msra.mxu0 %v4721
    %4754 = vmatprep.subr.bf16.mxu0 0
    %4755 = vmatpush1.bf16.msra.mxu0 %v4722
    %4756 = vmatprep.subr.bf16.mxu0 0
    %4757 = vmatpush1.bf16.msra.mxu0 %v4723
    %4758 = vmatprep.subr.bf16.mxu0 0
    %4759 = vmatpush1.bf16.msra.mxu0 %v4724
    %4760 = vmatprep.subr.bf16.mxu0 0
    %4761 = vmatpush1.bf16.msra.mxu0 %v4725
    %4762 = vmatprep.subr.bf16.mxu0 0
    %4763 = vmatpush1.bf16.msra.mxu0 %v4726
    %4764 = vmatprep.subr.bf16.mxu0 0
    %4765 = vmatpush1.bf16.msra.mxu0 %v4727
    %4766 = vmatprep.subr.bf16.mxu0 0
    %4767 = vmatpush1.bf16.msra.mxu0 %v4728
    %4768 = vmatprep.subr.bf16.mxu0 0
    %4769 = vmatpush1.bf16.msra.mxu0 %v4729
    %4770 = vmatprep.subr.bf16.mxu0 0
    %4771 = vmatpush1.bf16.msra.mxu0 %v4730
    %4772 = vmatprep.subr.bf16.mxu0 0
    %4773 = vmatpush1.bf16.msra.mxu0 %v4731
    %4774 = vmatprep.subr.bf16.mxu0 0
    %4775 = vmatpush1.bf16.msra.mxu0 %v4732
    %4776 = vmatprep.subr.bf16.mxu0 0
    %4777 = vmatpush1.bf16.msra.mxu0 %v4750
    %4778 = vmatprep.subr.bf16.mxu0 0
    %4779 = vmatpush1.bf16.msra.mxu0 0
    %4780 = vmatprep.subr.bf16.mxu0 0
    %4781 = vmatpush1.bf16.msra.mxu0 0
    %4782 = vmatprep.subr.bf16.mxu0 0
    %4783 = vmatpush1.bf16.msra.mxu0 0
    %4784 = vmatprep.mubr.bf16.mxu0 %v4747
    %4785 = vmatmul.mubr.bf16.gmra.mrb[0].mxu0 %v4637
    %v4786 = vpop.f32.mrb[0].mxu0
    %v4787 = vadd.f32 %v4669, %v4786
    %v4788 = vpop.f32.mrb[0].mxu0
    %v4789 = vpop.f32.mrb[0].mxu0
    %v4790 = vpop.f32.mrb[0].mxu0
    %4791 = vdwg.mxu0
    %vm4792 = vcmask 74752
    %v4793 = vsel %vm4792, %v4787, -inf
    %4794 = vmax.xlane.f32.xlu0 %v4793
    %v4795 = vpop.xlane.xlu0 %4794
    %v4796 = vsub.f32 %v4787, %v4795
    %v4797 = vmul.f32 %v4796, 1.442695
    %v4798 = vpow.pop %v4797
    %v4799 = vsel %vm4792, %v4798, 0.0
    %4800 = vadd.xlane.f32.xlu0 %v4799
    %v4801 = vpop.xlane.xlu0 %4800
    %v4802 = vlog2.pop %v4801
    %v4803 = vmul.f32 %v4802, 0.6931472
    %v4804 = vsub.f32 %v4796, %v4803
    %4805 = vst.msk [vmem:[#allocation2] sm:$0x3] %vm4792, %v4804
    // Predicated region
    $region54: #{lenet_forward.5} parent=1 // pred_check
      _
    $region55: #{lenet_forward.5} parent=1 // pred_check_branch
      %4807 = sbr.rel (0) target = $region57
    $region56: #{lenet_forward.5} parent=1 // pred_region
      %s4809 = ssub.s32 32, 32
      %4810 = vsyncadd [#allocation3], %s4809
      %s4812 = sshll.u32 [#allocation2], 4
      %s4813 = int_to_ptr.vmem [resolvable:$true] %s4812
      %4815 = dma.vmem_to_hbm [thread:$0]  %s4813, 32, %s13, [#allocation3]
    $region57: #{lenet_forward.5} parent=1 // pred_fallthru
      _
    // Predicated region
    $region58: #{lenet_forward.5} parent=1 // pred_check
      _
    $region59: #{lenet_forward.5} parent=1 // pred_check_branch
      %4817 = sbr.rel (0) target = $region61
    $region60: #{lenet_forward.5} parent=1 // pred_region
      %4818 = dma.done [#allocation3], 32
    $region61: #{lenet_forward.5} parent=1 // pred_fallthru
      _
    %4819 = vsyncpa [#allocation3], 1

</llo_original>
